<compile_context>
chip_gen: v6e
topology: v6e:2x2x1
jax: 0.10.0
libtpu: 0.0.40
codegen_flags: <defaults>
</compile_context>

<pallas_src>
import functools

import jax
import jax.numpy as jnp
from jax import lax
from jax.experimental import pallas as pl
from jax.experimental.pallas import tpu as pltpu


# --------------------------------------------------------------------------------------
# Kernel
# --------------------------------------------------------------------------------------
def _decoder_kernel(H, B, mxu_dtype,
                    x_ref, enc_ref, mask_ref, ench_ref,
                    wih0_ref, bih0_ref, whh0_ref, bhh0_ref,
                    wih1_ref, bih1_ref, whh1_ref, bhh1_ref,
                    watt_ref, batt_ref,
                    out_ref, gx0_ref):
    LB = x_ref.shape[0]
    L = LB // B
    H2 = 2 * H

    # ---- layer-0 input-gate matmuls hoisted out of the recurrence (one MXU pass) ------
    # x already carries the folded feature-flip for the backward direction (in wih0).
    gx0_ref[...] = (jnp.dot(x_ref[...], wih0_ref[...],
                            preferred_element_type=jnp.float32) + bih0_ref[...])

    def gates(gx, gh, h):
        # Gate-interleaved packing: lanes [r_f r_b | z_f z_b | n_f n_b]; carries are
        # [h_f || h_b], so every op below covers both directions in one 2H-lane pass.
        r = jax.nn.sigmoid(gx[:, :H2] + gh[:, :H2])
        z = jax.nn.sigmoid(gx[:, H2:2 * H2] + gh[:, H2:2 * H2])
        n = jnp.tanh(gx[:, 2 * H2:] + r * gh[:, 2 * H2:])
        return (1.0 - z) * n + z * h

    def step(t, carry):
        h0, h1 = carry                                   # (B, 2H) f32, [fwd || bwd] lanes

        # ---- layer 0: hidden matmul only (input matmul precomputed above) ----
        gx0 = gx0_ref[pl.ds(t * B, B), :]                # (B, 6H) f32
        gh0 = jnp.dot(h0.astype(mxu_dtype), whh0_ref[...],
                      preferred_element_type=jnp.float32) + bhh0_ref[...]
        h0 = gates(gx0, gh0, h0)

        # ---- layer 1: fused fwd/bwd block-diagonal input + hidden matmuls ----
        gx1 = jnp.dot(h0.astype(mxu_dtype), wih1_ref[...],
                      preferred_element_type=jnp.float32) + bih1_ref[...]
        gh1 = jnp.dot(h1.astype(mxu_dtype), whh1_ref[...],
                      preferred_element_type=jnp.float32) + bhh1_ref[...]
        h1 = gates(gx1, gh1, h1)                         # == concat([h1_f, h1_b], -1)

        # ---- Luong dot attention over encoder_out, routed through the MXU ----
        hq = h1.astype(mxu_dtype)                        # (B, 2H)
        enc = enc_ref[...]                               # (B*S, 2H)
        # Flattened-batch scores; cross-batch pairs killed by the additive -1e9 mask.
        scores = lax.dot_general(hq, enc, (((1,), (1,)), ((), ())),
                                 preferred_element_type=jnp.float32)    # (B, B*S)
        scores = scores + mask_ref[...]
        scores = scores - jnp.max(scores, axis=-1, keepdims=True)
        e = jnp.exp(scores)
        attn = e * pl.reciprocal(jnp.sum(e, axis=-1, keepdims=True), approx=True)
        ctx = jnp.dot(attn.astype(mxu_dtype), enc,
                      preferred_element_type=jnp.float32)               # (B, 2H)

        # Fused attention output: one (B, 4H) @ (4H, 2H) MXU pass.
        cq = jnp.concatenate([ctx.astype(mxu_dtype), hq], axis=-1)      # (B, 4H)
        h = jnp.tanh(jnp.dot(cq, watt_ref[...],
                             preferred_element_type=jnp.float32) + batt_ref[...])

        # Lane-dense store: one (1, B*2H) row per step (128 lanes at the test shape).
        hrow = jnp.concatenate([h[b:b + 1, :] for b in range(B)], axis=-1)
        out_ref[pl.ds(t, 1), :] = hrow
        return (h0, h1)

    # encoder_h is already [h_f0 || h_b0] == the packed carry layout.
    h_init = ench_ref[...]                               # (B, 2H) f32
    unroll = True if L <= 16 else 8
    lax.fori_loop(0, L, step, (h_init, h_init), unroll=unroll)


# --------------------------------------------------------------------------------------
# Weight packing helpers (trace-time, tiny XLA ops in the wrapper)
# --------------------------------------------------------------------------------------
def _pack_gate_cols(w_f, w_b, H):
    """(.., 3H) fwd/bwd, gate order (r,z,n) -> (.., 6H) with [r_f r_b z_f z_b n_f n_b]."""
    cols = []
    for g in range(3):
        cols.append(w_f[..., g * H:(g + 1) * H])
        cols.append(w_b[..., g * H:(g + 1) * H])
    return jnp.concatenate(cols, axis=-1)


def _pack_blockdiag(w_f, w_b, H):
    """(H, 3H) fwd/bwd -> (2H, 6H) block-diagonal with gate-interleaved columns."""
    zero = jnp.zeros((H, H), w_f.dtype)
    top = jnp.concatenate([w_f[:, :H], zero, w_f[:, H:2 * H], zero, w_f[:, 2 * H:], zero],
                          axis=1)
    bot = jnp.concatenate([zero, w_b[:, :H], zero, w_b[:, H:2 * H], zero, w_b[:, 2 * H:]],
                          axis=1)
    return jnp.concatenate([top, bot], axis=0)


# --------------------------------------------------------------------------------------
# Wrapper
# --------------------------------------------------------------------------------------
def modal_attention_bidir_gru_decoder(inp, encoder_out, encoder_h, params, *,
                                      mxu_dtype=jnp.bfloat16):
    B, L, I = inp.shape
    S = encoder_out.shape[1]
    H2 = encoder_h.shape[-1]
    H = H2 // 2
    md = mxu_dtype

    # ---- fwd/bwd-fused, gate-interleaved parameter packing ----
    # Feature flip of reverse_input() folded into the backward layer-0 input weights.
    wih0_pk = _pack_gate_cols(params["wih0"][0], params["wih0"][1][::-1, :], H)   # (I, 6H)
    bih0_pk = _pack_gate_cols(params["bih0"][0], params["bih0"][1], H)            # (1, 6H)
    whh0_pk = _pack_blockdiag(params["whh0"][0], params["whh0"][1], H)            # (2H,6H)
    bhh0_pk = _pack_gate_cols(params["bhh0"][0], params["bhh0"][1], H)
    wih1_pk = _pack_blockdiag(params["wih1"][0], params["wih1"][1], H)
    bih1_pk = _pack_gate_cols(params["bih1"][0], params["bih1"][1], H)
    whh1_pk = _pack_blockdiag(params["whh1"][0], params["whh1"][1], H)
    bhh1_pk = _pack_gate_cols(params["bhh1"][0], params["bhh1"][1], H)
    watt = jnp.concatenate([params["watt_c"], params["watt_h"]], axis=0)          # (4H,2H)
    batt = params["batt"]                                                          # (1, 2H)

    # Time-major, batch-flattened input for the hoisted layer-0 matmul.
    x_lb = jnp.transpose(inp, (1, 0, 2)).reshape(L * B, I)
    # Flattened encoder + additive mask so attention is a plain 2-D MXU matmul per step.
    enc_flat = encoder_out.reshape(B * S, H2)
    col_b = jnp.arange(B * S) // S
    mask = jnp.where(col_b[None, :] == jnp.arange(B)[:, None],
                     0.0, -1e9).astype(jnp.float32)                                # (B,B*S)

    kernel = functools.partial(_decoder_kernel, H, B, md)
    out_flat = pl.pallas_call(
        kernel,
        out_shape=jax.ShapeDtypeStruct((L, B * H2), jnp.float32),
        scratch_shapes=[pltpu.VMEM((L * B, 6 * H), jnp.float32)],   # precomputed GX0
        compiler_params=pltpu.CompilerParams(vmem_limit_bytes=32 * 1024 * 1024),
    )(x_lb.astype(md), enc_flat.astype(md), mask, encoder_h.astype(jnp.float32),
      wih0_pk.astype(md), bih0_pk.astype(jnp.float32),
      whh0_pk.astype(md), bhh0_pk.astype(jnp.float32),
      wih1_pk.astype(md), bih1_pk.astype(jnp.float32),
      whh1_pk.astype(md), bhh1_pk.astype(jnp.float32),
      watt.astype(md), batt.astype(jnp.float32))

    out = out_flat.reshape(L, B, H2).transpose(1, 0, 2)             # (B, L, 2H)
    return out, out[:, -1, :]


# --------------------------------------------------------------------------------------
# Pure-JAX reference (exact softmax divide, f32 throughout)
# --------------------------------------------------------------------------------------
def reference_jax(inp, encoder_out, encoder_h, p):
    H2 = encoder_h.shape[-1]
    H = H2 // 2

    def gru(x, h, wih, bih, whh, bhh):
        gx = x @ wih + bih
        gh = h @ whh + bhh
        r = jax.nn.sigmoid(gx[:, :H] + gh[:, :H])
        z = jax.nn.sigmoid(gx[:, H:2 * H] + gh[:, H:2 * H])
        n = jnp.tanh(gx[:, 2 * H:] + r * gh[:, 2 * H:])
        return (1.0 - z) * n + z * h

    h0_f = h1_f = encoder_h[:, :H]
    h0_b = h1_b = encoder_h[:, H:]
    outs = []
    h = None
    for i in range(inp.shape[1]):
        x = inp[:, i, :]
        xr = x[:, ::-1]
        h0_f = gru(x,    h0_f, p["wih0"][0], p["bih0"][0], p["whh0"][0], p["bhh0"][0])
        h0_b = gru(xr,   h0_b, p["wih0"][1], p["bih0"][1], p["whh0"][1], p["bhh0"][1])
        h1_f = gru(h0_f, h1_f, p["wih1"][0], p["bih1"][0], p["whh1"][0], p["bhh1"][0])
        h1_b = gru(h0_b, h1_b, p["wih1"][1], p["bih1"][1], p["whh1"][1], p["bhh1"][1])
        hc = jnp.concatenate([h1_f, h1_b], axis=-1)
        scores = jnp.einsum("bsh,bh->bs", encoder_out, hc)
        attn = jax.nn.softmax(scores, axis=-1)
        ctx = jnp.einsum("bs,bsh->bh", attn, encoder_out)
        h = jnp.tanh(ctx @ p["watt_c"] + hc @ p["watt_h"] + p["batt"])
        outs.append(h)
    return jnp.stack(outs, axis=1), h


def init_params(key, input_size, hidden_size):
    """Per-cell weights as (in, 3H), gate order (r, z, n); index 0=fwd, 1=bwd."""
    H, I = hidden_size, input_size
    k = 1.0 / jnp.sqrt(jnp.float32(H))  # PyTorch default uniform(-1/sqrt(H), 1/sqrt(H))
    keys = jax.random.split(key, 11)
    u = lambda kk, shape: jax.random.uniform(kk, shape, jnp.float32, -k, k)
    return {
        "wih0": u(keys[0], (2, I, 3 * H)), "bih0": u(keys[1], (2, 1, 3 * H)),
        "whh0": u(keys[2], (2, H, 3 * H)), "bhh0": u(keys[3], (2, 1, 3 * H)),
        "wih1": u(keys[4], (2, H, 3 * H)), "bih1": u(keys[5], (2, 1, 3 * H)),
        "whh1": u(keys[6], (2, H, 3 * H)), "bhh1": u(keys[7], (2, 1, 3 * H)),
        "watt_c": u(keys[8], (2 * H, 2 * H)), "watt_h": u(keys[9], (2 * H, 2 * H)),
        "batt": u(keys[10], (1, 2 * H)),
    }


if __name__ == "__main__":
    B, L, I, H, S = 2, 8, 16, 32, 8   # batch, seq_len, input_size, hidden, enc_seq

    key = jax.random.PRNGKey(0)
    k_in, k_enc, k_h, k_p = jax.random.split(key, 4)
    inp = jax.random.normal(k_in, (B, L, I), jnp.float32)
    encoder_out = jax.random.normal(k_enc, (B, S, 2 * H), jnp.float32)   # (B, S, 2H)
    encoder_h = jax.random.normal(k_h, (B, 2 * H), jnp.float32)          # (B, 2H)
    params = init_params(k_p, I, H)

    out_ref, h_ref = reference_jax(inp, encoder_out, encoder_h, params)

    # f32 MXU feeds: exact-semantics check against the reference (approx reciprocal in
    # the softmax is the only deliberate deviation -> 5e-3 tolerance).
    run_f32 = jax.jit(functools.partial(modal_attention_bidir_gru_decoder,
                                        mxu_dtype=jnp.float32))
    out32, h32 = run_f32(inp, encoder_out, encoder_h, params)
    out32 = jax.block_until_ready(out32)
    h32 = jax.block_until_ready(h32)
    assert out32.shape == (B, L, 2 * H) and h32.shape == (B, 2 * H)
    assert jnp.allclose(out32, out_ref, atol=5e-3, rtol=5e-3)
    assert jnp.allclose(h32, h_ref, atol=5e-3, rtol=5e-3)

    # bf16 MXU feeds (v6e/v7x perf path): recurrent bf16 rounding accumulates over the
    # L-step GRU chain, so only a loose sanity bound vs the f32 reference is asserted.
    run_bf16 = jax.jit(functools.partial(modal_attention_bidir_gru_decoder,
                                         mxu_dtype=jnp.bfloat16))
    outbf, hbf = run_bf16(inp, encoder_out, encoder_h, params)
    outbf = jax.block_until_ready(outbf)
    hbf = jax.block_until_ready(hbf)
    assert outbf.shape == (B, L, 2 * H) and hbf.shape == (B, 2 * H)
    assert bool(jnp.all(jnp.isfinite(outbf)))
    assert float(jnp.max(jnp.abs(outbf - out_ref))) < 0.25

    print("KERNEL_OK")
</pallas_src>

<mosaic_0001>
module attributes {stable_mosaic.version = 11 : i64} {
  func.func @_decoder_kernel(%arg0: memref<16x16xf32, #tpu.memory_space<vmem>>, %arg1: memref<16x64xf32, #tpu.memory_space<vmem>>, %arg2: memref<2x16xf32, #tpu.memory_space<vmem>>, %arg3: memref<2x64xf32, #tpu.memory_space<vmem>>, %arg4: memref<16x192xf32, #tpu.memory_space<vmem>>, %arg5: memref<1x192xf32, #tpu.memory_space<vmem>>, %arg6: memref<64x192xf32, #tpu.memory_space<vmem>>, %arg7: memref<1x192xf32, #tpu.memory_space<vmem>>, %arg8: memref<64x192xf32, #tpu.memory_space<vmem>>, %arg9: memref<1x192xf32, #tpu.memory_space<vmem>>, %arg10: memref<64x192xf32, #tpu.memory_space<vmem>>, %arg11: memref<1x192xf32, #tpu.memory_space<vmem>>, %arg12: memref<128x64xf32, #tpu.memory_space<vmem>>, %arg13: memref<1x64xf32, #tpu.memory_space<vmem>>, %arg14: memref<8x128xf32, #tpu.memory_space<vmem>>, %arg15: memref<16x192xf32, #tpu.memory_space<vmem>>) attributes {dimension_semantics = [], scalar_prefetch = 0 : i64, scratch_operands = 1 : i64, tpu.core_type = #tpu.core_type<tc>} {
    %c0 = arith.constant 0 : index
    %c0_0 = arith.constant 0 : index
    %0 = vector.load %arg0[%c0, %c0_0] : memref<16x16xf32, #tpu.memory_space<vmem>>, vector<16x16xf32>
    %c0_1 = arith.constant 0 : index
    %c0_2 = arith.constant 0 : index
    %1 = vector.load %arg4[%c0_1, %c0_2] : memref<16x192xf32, #tpu.memory_space<vmem>>, vector<16x192xf32>
    %cst = arith.constant dense<0.000000e+00> : vector<16x192xf32>
    %2 = tpu.matmul %0, %1, %cst {dimension_numbers = #tpu.dot_dimension_numbers<[1], [0], [0], [1], [0, 0, 1, 1], [], []>} : vector<16x16xf32>, vector<16x192xf32>, vector<16x192xf32> -> vector<16x192xf32>
    %c0_3 = arith.constant 0 : index
    %c0_4 = arith.constant 0 : index
    %3 = vector.load %arg5[%c0_3, %c0_4] : memref<1x192xf32, #tpu.memory_space<vmem>>, vector<1x192xf32>
    %4 = vector.broadcast %3 : vector<1x192xf32> to vector<16x192xf32>
    %5 = arith.addf %2, %4 : vector<16x192xf32>
    %c0_5 = arith.constant 0 : index
    %c0_6 = arith.constant 0 : index
    %6 = vector.load %arg15[%c0_5, %c0_6] : memref<16x192xf32, #tpu.memory_space<vmem>>, vector<16x192xf32>
    tpu.vector_store %arg15[%c0_5, %c0_6], %5 {strides = array<i32>} : memref<16x192xf32, #tpu.memory_space<vmem>>, vector<16x192xf32>,
    %c0_7 = arith.constant 0 : index
    %c0_8 = arith.constant 0 : index
    %7 = vector.load %arg3[%c0_7, %c0_8] : memref<2x64xf32, #tpu.memory_space<vmem>>, vector<2x64xf32>
    %c0_i32 = arith.constant 0 : i32
    %c2_i32 = arith.constant 2 : i32
    %8 = arith.muli %c0_i32, %c2_i32 : i32
    %9 = arith.index_cast %8 : i32 to index
    %c0_9 = arith.constant 0 : index
    %10 = vector.load %arg15[%9, %c0_9] : memref<16x192xf32, #tpu.memory_space<vmem>>, vector<2x192xf32>
    %c0_10 = arith.constant 0 : index
    %c0_11 = arith.constant 0 : index
    %11 = vector.load %arg6[%c0_10, %c0_11] : memref<64x192xf32, #tpu.memory_space<vmem>>, vector<64x192xf32>
    %cst_12 = arith.constant dense<0.000000e+00> : vector<2x192xf32>
    %12 = tpu.matmul %7, %11, %cst_12 {dimension_numbers = #tpu.dot_dimension_numbers<[1], [0], [0], [1], [0, 0, 1, 1], [], []>} : vector<2x64xf32>, vector<64x192xf32>, vector<2x192xf32> -> vector<2x192xf32>
    %c0_13 = arith.constant 0 : index
    %c0_14 = arith.constant 0 : index
    %13 = vector.load %arg7[%c0_13, %c0_14] : memref<1x192xf32, #tpu.memory_space<vmem>>, vector<1x192xf32>
    %14 = vector.broadcast %13 : vector<1x192xf32> to vector<2x192xf32>
    %15 = arith.addf %12, %14 : vector<2x192xf32>
    %16 = vector.extract_strided_slice %10 {offsets = [0, 0], sizes = [2, 64], strides = [1, 1]} : vector<2x192xf32> to vector<2x64xf32>
    %17 = vector.extract_strided_slice %15 {offsets = [0, 0], sizes = [2, 64], strides = [1, 1]} : vector<2x192xf32> to vector<2x64xf32>
    %18 = arith.addf %16, %17 : vector<2x64xf32>
    %19 = arith.negf %18 : vector<2x64xf32>
    %20 = math.exp %19 : vector<2x64xf32>
    %cst_15 = arith.constant 1.000000e+00 : f32
    %21 = vector.broadcast %cst_15 : f32 to vector<2x64xf32>
    %22 = arith.addf %21, %20 : vector<2x64xf32>
    %23 = arith.divf %21, %22 : vector<2x64xf32>
    %24 = vector.extract_strided_slice %10 {offsets = [0, 64], sizes = [2, 64], strides = [1, 1]} : vector<2x192xf32> to vector<2x64xf32>
    %25 = vector.extract_strided_slice %15 {offsets = [0, 64], sizes = [2, 64], strides = [1, 1]} : vector<2x192xf32> to vector<2x64xf32>
    %26 = arith.addf %24, %25 : vector<2x64xf32>
    %27 = arith.negf %26 : vector<2x64xf32>
    %28 = math.exp %27 : vector<2x64xf32>
    %cst_16 = arith.constant 1.000000e+00 : f32
    %29 = vector.broadcast %cst_16 : f32 to vector<2x64xf32>
    %30 = arith.addf %29, %28 : vector<2x64xf32>
    %31 = arith.divf %29, %30 : vector<2x64xf32>
    %32 = vector.extract_strided_slice %10 {offsets = [0, 128], sizes = [2, 64], strides = [1, 1]} : vector<2x192xf32> to vector<2x64xf32>
    %33 = vector.extract_strided_slice %15 {offsets = [0, 128], sizes = [2, 64], strides = [1, 1]} : vector<2x192xf32> to vector<2x64xf32>
    %34 = arith.mulf %23, %33 : vector<2x64xf32>
    %35 = arith.addf %32, %34 : vector<2x64xf32>
    %36 = math.tanh %35 : vector<2x64xf32>
    %cst_17 = arith.constant 1.000000e+00 : f32
    %37 = vector.broadcast %cst_17 : f32 to vector<2x64xf32>
    %38 = arith.subf %37, %31 : vector<2x64xf32>
    %39 = arith.mulf %38, %36 : vector<2x64xf32>
    %40 = arith.mulf %31, %7 : vector<2x64xf32>
    %41 = arith.addf %39, %40 : vector<2x64xf32>
    %c0_18 = arith.constant 0 : index
    %c0_19 = arith.constant 0 : index
    %42 = vector.load %arg8[%c0_18, %c0_19] : memref<64x192xf32, #tpu.memory_space<vmem>>, vector<64x192xf32>
    %cst_20 = arith.constant dense<0.000000e+00> : vector<2x192xf32>
    %43 = tpu.matmul %41, %42, %cst_20 {dimension_numbers = #tpu.dot_dimension_numbers<[1], [0], [0], [1], [0, 0, 1, 1], [], []>} : vector<2x64xf32>, vector<64x192xf32>, vector<2x192xf32> -> vector<2x192xf32>
    %c0_21 = arith.constant 0 : index
    %c0_22 = arith.constant 0 : index
    %44 = vector.load %arg9[%c0_21, %c0_22] : memref<1x192xf32, #tpu.memory_space<vmem>>, vector<1x192xf32>
    %45 = vector.broadcast %44 : vector<1x192xf32> to vector<2x192xf32>
    %46 = arith.addf %43, %45 : vector<2x192xf32>
    %c0_23 = arith.constant 0 : index
    %c0_24 = arith.constant 0 : index
    %47 = vector.load %arg10[%c0_23, %c0_24] : memref<64x192xf32, #tpu.memory_space<vmem>>, vector<64x192xf32>
    %cst_25 = arith.constant dense<0.000000e+00> : vector<2x192xf32>
    %48 = tpu.matmul %7, %47, %cst_25 {dimension_numbers = #tpu.dot_dimension_numbers<[1], [0], [0], [1], [0, 0, 1, 1], [], []>} : vector<2x64xf32>, vector<64x192xf32>, vector<2x192xf32> -> vector<2x192xf32>
    %c0_26 = arith.constant 0 : index
    %c0_27 = arith.constant 0 : index
    %49 = vector.load %arg11[%c0_26, %c0_27] : memref<1x192xf32, #tpu.memory_space<vmem>>, vector<1x192xf32>
    %50 = vector.broadcast %49 : vector<1x192xf32> to vector<2x192xf32>
    %51 = arith.addf %48, %50 : vector<2x192xf32>
    %52 = vector.extract_strided_slice %46 {offsets = [0, 0], sizes = [2, 64], strides = [1, 1]} : vector<2x192xf32> to vector<2x64xf32>
    %53 = vector.extract_strided_slice %51 {offsets = [0, 0], sizes = [2, 64], strides = [1, 1]} : vector<2x192xf32> to vector<2x64xf32>
    %54 = arith.addf %52, %53 : vector<2x64xf32>
    %55 = arith.negf %54 : vector<2x64xf32>
    %56 = math.exp %55 : vector<2x64xf32>
    %cst_28 = arith.constant 1.000000e+00 : f32
    %57 = vector.broadcast %cst_28 : f32 to vector<2x64xf32>
    %58 = arith.addf %57, %56 : vector<2x64xf32>
    %59 = arith.divf %57, %58 : vector<2x64xf32>
    %60 = vector.extract_strided_slice %46 {offsets = [0, 64], sizes = [2, 64], strides = [1, 1]} : vector<2x192xf32> to vector<2x64xf32>
    %61 = vector.extract_strided_slice %51 {offsets = [0, 64], sizes = [2, 64], strides = [1, 1]} : vector<2x192xf32> to vector<2x64xf32>
    %62 = arith.addf %60, %61 : vector<2x64xf32>
    %63 = arith.negf %62 : vector<2x64xf32>
    %64 = math.exp %63 : vector<2x64xf32>
    %cst_29 = arith.constant 1.000000e+00 : f32
    %65 = vector.broadcast %cst_29 : f32 to vector<2x64xf32>
    %66 = arith.addf %65, %64 : vector<2x64xf32>
    %67 = arith.divf %65, %66 : vector<2x64xf32>
    %68 = vector.extract_strided_slice %46 {offsets = [0, 128], sizes = [2, 64], strides = [1, 1]} : vector<2x192xf32> to vector<2x64xf32>
    %69 = vector.extract_strided_slice %51 {offsets = [0, 128], sizes = [2, 64], strides = [1, 1]} : vector<2x192xf32> to vector<2x64xf32>
    %70 = arith.mulf %59, %69 : vector<2x64xf32>
    %71 = arith.addf %68, %70 : vector<2x64xf32>
    %72 = math.tanh %71 : vector<2x64xf32>
    %cst_30 = arith.constant 1.000000e+00 : f32
    %73 = vector.broadcast %cst_30 : f32 to vector<2x64xf32>
    %74 = arith.subf %73, %67 : vector<2x64xf32>
    %75 = arith.mulf %74, %72 : vector<2x64xf32>
    %76 = arith.mulf %67, %7 : vector<2x64xf32>
    %77 = arith.addf %75, %76 : vector<2x64xf32>
    %c0_31 = arith.constant 0 : index
    %c0_32 = arith.constant 0 : index
    %78 = vector.load %arg1[%c0_31, %c0_32] : memref<16x64xf32, #tpu.memory_space<vmem>>, vector<16x64xf32>
    %cst_33 = arith.constant dense<0.000000e+00> : vector<2x16xf32>
    %79 = tpu.matmul %77, %78, %cst_33 {dimension_numbers = #tpu.dot_dimension_numbers<[1], [1], [0], [0], [0, 0, 1, 0], [], []>} : vector<2x64xf32>, vector<16x64xf32>, vector<2x16xf32> -> vector<2x16xf32>
    %c0_34 = arith.constant 0 : index
    %c0_35 = arith.constant 0 : index
    %80 = vector.load %arg2[%c0_34, %c0_35] : memref<2x16xf32, #tpu.memory_space<vmem>>, vector<2x16xf32>
    %81 = arith.addf %79, %80 : vector<2x16xf32>
    %cst_36 = arith.constant dense<0xFF800000> : vector<2xf32>
    %82 = vector.multi_reduction <maximumf>, %81, %cst_36 [1] : vector<2x16xf32> to vector<2xf32>
    %83 = vector.shape_cast %82 : vector<2xf32> to vector<2x1xf32>
    %84 = vector.broadcast %83 : vector<2x1xf32> to vector<2x16xf32>
    %85 = arith.subf %81, %84 : vector<2x16xf32>
    %86 = math.exp %85 : vector<2x16xf32>
    %cst_37 = arith.constant dense<0.000000e+00> : vector<2xf32>
    %87 = vector.multi_reduction <add>, %86, %cst_37 [1] : vector<2x16xf32> to vector<2xf32>
    %88 = vector.shape_cast %87 : vector<2xf32> to vector<2x1xf32>
    %89 = tpu.reciprocal %88 {approx = true} : vector<2x1xf32> -> vector<2x1xf32>
    %90 = vector.broadcast %89 : vector<2x1xf32> to vector<2x16xf32>
    %91 = arith.mulf %86, %90 : vector<2x16xf32>
    %cst_38 = arith.constant dense<0.000000e+00> : vector<2x64xf32>
    %92 = tpu.matmul %91, %78, %cst_38 {dimension_numbers = #tpu.dot_dimension_numbers<[1], [0], [0], [1], [0, 0, 1, 1], [], []>} : vector<2x16xf32>, vector<16x64xf32>, vector<2x64xf32> -> vector<2x64xf32>
    %93 = tpu.concatenate %92, %77 in 1 : vector<2x64xf32>, vector<2x64xf32> -> vector<2x128xf32>
    %c0_39 = arith.constant 0 : index
    %c0_40 = arith.constant 0 : index
    %94 = vector.load %arg12[%c0_39, %c0_40] : memref<128x64xf32, #tpu.memory_space<vmem>>, vector<128x64xf32>
    %cst_41 = arith.constant dense<0.000000e+00> : vector<2x64xf32>
    %95 = tpu.matmul %93, %94, %cst_41 {dimension_numbers = #tpu.dot_dimension_numbers<[1], [0], [0], [1], [0, 0, 1, 1], [], []>} : vector<2x128xf32>, vector<128x64xf32>, vector<2x64xf32> -> vector<2x64xf32>
    %c0_42 = arith.constant 0 : index
    %c0_43 = arith.constant 0 : index
    %96 = vector.load %arg13[%c0_42, %c0_43] : memref<1x64xf32, #tpu.memory_space<vmem>>, vector<1x64xf32>
    %97 = vector.broadcast %96 : vector<1x64xf32> to vector<2x64xf32>
    %98 = arith.addf %95, %97 : vector<2x64xf32>
    %99 = math.tanh %98 : vector<2x64xf32>
    %100 = vector.extract_strided_slice %99 {offsets = [0, 0], sizes = [1, 64], strides = [1, 1]} : vector<2x64xf32> to vector<1x64xf32>
    %101 = vector.extract_strided_slice %99 {offsets = [1, 0], sizes = [1, 64], strides = [1, 1]} : vector<2x64xf32> to vector<1x64xf32>
    %102 = tpu.concatenate %100, %101 in 1 : vector<1x64xf32>, vector<1x64xf32> -> vector<1x128xf32>
    %103 = arith.index_cast %c0_i32 : i32 to index
    %c0_44 = arith.constant 0 : index
    %104 = vector.load %arg14[%103, %c0_44] : memref<8x128xf32, #tpu.memory_space<vmem>>, vector<1x128xf32>
    tpu.vector_store %arg14[%103, %c0_44], %102 {strides = array<i32>} : memref<8x128xf32, #tpu.memory_space<vmem>>, vector<1x128xf32>,
    %c1_i32 = arith.constant 1 : i32
    %c2_i32_45 = arith.constant 2 : i32
    %105 = arith.muli %c1_i32, %c2_i32_45 : i32
    %106 = arith.index_cast %105 : i32 to index
    %c0_46 = arith.constant 0 : index
    %107 = vector.load %arg15[%106, %c0_46] : memref<16x192xf32, #tpu.memory_space<vmem>>, vector<2x192xf32>
    %c0_47 = arith.constant 0 : index
    %c0_48 = arith.constant 0 : index
    %108 = vector.load %arg6[%c0_47, %c0_48] : memref<64x192xf32, #tpu.memory_space<vmem>>, vector<64x192xf32>
    %cst_49 = arith.constant dense<0.000000e+00> : vector<2x192xf32>
    %109 = tpu.matmul %41, %108, %cst_49 {dimension_numbers = #tpu.dot_dimension_numbers<[1], [0], [0], [1], [0, 0, 1, 1], [], []>} : vector<2x64xf32>, vector<64x192xf32>, vector<2x192xf32> -> vector<2x192xf32>
    %c0_50 = arith.constant 0 : index
    %c0_51 = arith.constant 0 : index
    %110 = vector.load %arg7[%c0_50, %c0_51] : memref<1x192xf32, #tpu.memory_space<vmem>>, vector<1x192xf32>
    %111 = vector.broadcast %110 : vector<1x192xf32> to vector<2x192xf32>
    %112 = arith.addf %109, %111 : vector<2x192xf32>
    %113 = vector.extract_strided_slice %107 {offsets = [0, 0], sizes = [2, 64], strides = [1, 1]} : vector<2x192xf32> to vector<2x64xf32>
    %114 = vector.extract_strided_slice %112 {offsets = [0, 0], sizes = [2, 64], strides = [1, 1]} : vector<2x192xf32> to vector<2x64xf32>
    %115 = arith.addf %113, %114 : vector<2x64xf32>
    %116 = arith.negf %115 : vector<2x64xf32>
    %117 = math.exp %116 : vector<2x64xf32>
    %cst_52 = arith.constant 1.000000e+00 : f32
    %118 = vector.broadcast %cst_52 : f32 to vector<2x64xf32>
    %119 = arith.addf %118, %117 : vector<2x64xf32>
    %120 = arith.divf %118, %119 : vector<2x64xf32>
    %121 = vector.extract_strided_slice %107 {offsets = [0, 64], sizes = [2, 64], strides = [1, 1]} : vector<2x192xf32> to vector<2x64xf32>
    %122 = vector.extract_strided_slice %112 {offsets = [0, 64], sizes = [2, 64], strides = [1, 1]} : vector<2x192xf32> to vector<2x64xf32>
    %123 = arith.addf %121, %122 : vector<2x64xf32>
    %124 = arith.negf %123 : vector<2x64xf32>
    %125 = math.exp %124 : vector<2x64xf32>
    %cst_53 = arith.constant 1.000000e+00 : f32
    %126 = vector.broadcast %cst_53 : f32 to vector<2x64xf32>
    %127 = arith.addf %126, %125 : vector<2x64xf32>
    %128 = arith.divf %126, %127 : vector<2x64xf32>
    %129 = vector.extract_strided_slice %107 {offsets = [0, 128], sizes = [2, 64], strides = [1, 1]} : vector<2x192xf32> to vector<2x64xf32>
    %130 = vector.extract_strided_slice %112 {offsets = [0, 128], sizes = [2, 64], strides = [1, 1]} : vector<2x192xf32> to vector<2x64xf32>
    %131 = arith.mulf %120, %130 : vector<2x64xf32>
    %132 = arith.addf %129, %131 : vector<2x64xf32>
    %133 = math.tanh %132 : vector<2x64xf32>
    %cst_54 = arith.constant 1.000000e+00 : f32
    %134 = vector.broadcast %cst_54 : f32 to vector<2x64xf32>
    %135 = arith.subf %134, %128 : vector<2x64xf32>
    %136 = arith.mulf %135, %133 : vector<2x64xf32>
    %137 = arith.mulf %128, %41 : vector<2x64xf32>
    %138 = arith.addf %136, %137 : vector<2x64xf32>
    %c0_55 = arith.constant 0 : index
    %c0_56 = arith.constant 0 : index
    %139 = vector.load %arg8[%c0_55, %c0_56] : memref<64x192xf32, #tpu.memory_space<vmem>>, vector<64x192xf32>
    %cst_57 = arith.constant dense<0.000000e+00> : vector<2x192xf32>
    %140 = tpu.matmul %138, %139, %cst_57 {dimension_numbers = #tpu.dot_dimension_numbers<[1], [0], [0], [1], [0, 0, 1, 1], [], []>} : vector<2x64xf32>, vector<64x192xf32>, vector<2x192xf32> -> vector<2x192xf32>
    %c0_58 = arith.constant 0 : index
    %c0_59 = arith.constant 0 : index
    %141 = vector.load %arg9[%c0_58, %c0_59] : memref<1x192xf32, #tpu.memory_space<vmem>>, vector<1x192xf32>
    %142 = vector.broadcast %141 : vector<1x192xf32> to vector<2x192xf32>
    %143 = arith.addf %140, %142 : vector<2x192xf32>
    %c0_60 = arith.constant 0 : index
    %c0_61 = arith.constant 0 : index
    %144 = vector.load %arg10[%c0_60, %c0_61] : memref<64x192xf32, #tpu.memory_space<vmem>>, vector<64x192xf32>
    %cst_62 = arith.constant dense<0.000000e+00> : vector<2x192xf32>
    %145 = tpu.matmul %77, %144, %cst_62 {dimension_numbers = #tpu.dot_dimension_numbers<[1], [0], [0], [1], [0, 0, 1, 1], [], []>} : vector<2x64xf32>, vector<64x192xf32>, vector<2x192xf32> -> vector<2x192xf32>
    %c0_63 = arith.constant 0 : index
    %c0_64 = arith.constant 0 : index
    %146 = vector.load %arg11[%c0_63, %c0_64] : memref<1x192xf32, #tpu.memory_space<vmem>>, vector<1x192xf32>
    %147 = vector.broadcast %146 : vector<1x192xf32> to vector<2x192xf32>
    %148 = arith.addf %145, %147 : vector<2x192xf32>
    %149 = vector.extract_strided_slice %143 {offsets = [0, 0], sizes = [2, 64], strides = [1, 1]} : vector<2x192xf32> to vector<2x64xf32>
    %150 = vector.extract_strided_slice %148 {offsets = [0, 0], sizes = [2, 64], strides = [1, 1]} : vector<2x192xf32> to vector<2x64xf32>
    %151 = arith.addf %149, %150 : vector<2x64xf32>
    %152 = arith.negf %151 : vector<2x64xf32>
    %153 = math.exp %152 : vector<2x64xf32>
    %cst_65 = arith.constant 1.000000e+00 : f32
    %154 = vector.broadcast %cst_65 : f32 to vector<2x64xf32>
    %155 = arith.addf %154, %153 : vector<2x64xf32>
    %156 = arith.divf %154, %155 : vector<2x64xf32>
    %157 = vector.extract_strided_slice %143 {offsets = [0, 64], sizes = [2, 64], strides = [1, 1]} : vector<2x192xf32> to vector<2x64xf32>
    %158 = vector.extract_strided_slice %148 {offsets = [0, 64], sizes = [2, 64], strides = [1, 1]} : vector<2x192xf32> to vector<2x64xf32>
    %159 = arith.addf %157, %158 : vector<2x64xf32>
    %160 = arith.negf %159 : vector<2x64xf32>
    %161 = math.exp %160 : vector<2x64xf32>
    %cst_66 = arith.constant 1.000000e+00 : f32
    %162 = vector.broadcast %cst_66 : f32 to vector<2x64xf32>
    %163 = arith.addf %162, %161 : vector<2x64xf32>
    %164 = arith.divf %162, %163 : vector<2x64xf32>
    %165 = vector.extract_strided_slice %143 {offsets = [0, 128], sizes = [2, 64], strides = [1, 1]} : vector<2x192xf32> to vector<2x64xf32>
    %166 = vector.extract_strided_slice %148 {offsets = [0, 128], sizes = [2, 64], strides = [1, 1]} : vector<2x192xf32> to vector<2x64xf32>
    %167 = arith.mulf %156, %166 : vector<2x64xf32>
    %168 = arith.addf %165, %167 : vector<2x64xf32>
    %169 = math.tanh %168 : vector<2x64xf32>
    %cst_67 = arith.constant 1.000000e+00 : f32
    %170 = vector.broadcast %cst_67 : f32 to vector<2x64xf32>
    %171 = arith.subf %170, %164 : vector<2x64xf32>
    %172 = arith.mulf %171, %169 : vector<2x64xf32>
    %173 = arith.mulf %164, %77 : vector<2x64xf32>
    %174 = arith.addf %172, %173 : vector<2x64xf32>
    %c0_68 = arith.constant 0 : index
    %c0_69 = arith.constant 0 : index
    %175 = vector.load %arg1[%c0_68, %c0_69] : memref<16x64xf32, #tpu.memory_space<vmem>>, vector<16x64xf32>
    %cst_70 = arith.constant dense<0.000000e+00> : vector<2x16xf32>
    %176 = tpu.matmul %174, %175, %cst_70 {dimension_numbers = #tpu.dot_dimension_numbers<[1], [1], [0], [0], [0, 0, 1, 0], [], []>} : vector<2x64xf32>, vector<16x64xf32>, vector<2x16xf32> -> vector<2x16xf32>
    %c0_71 = arith.constant 0 : index
    %c0_72 = arith.constant 0 : index
    %177 = vector.load %arg2[%c0_71, %c0_72] : memref<2x16xf32, #tpu.memory_space<vmem>>, vector<2x16xf32>
    %178 = arith.addf %176, %177 : vector<2x16xf32>
    %cst_73 = arith.constant dense<0xFF800000> : vector<2xf32>
    %179 = vector.multi_reduction <maximumf>, %178, %cst_73 [1] : vector<2x16xf32> to vector<2xf32>
    %180 = vector.shape_cast %179 : vector<2xf32> to vector<2x1xf32>
    %181 = vector.broadcast %180 : vector<2x1xf32> to vector<2x16xf32>
    %182 = arith.subf %178, %181 : vector<2x16xf32>
    %183 = math.exp %182 : vector<2x16xf32>
    %cst_74 = arith.constant dense<0.000000e+00> : vector<2xf32>
    %184 = vector.multi_reduction <add>, %183, %cst_74 [1] : vector<2x16xf32> to vector<2xf32>
    %185 = vector.shape_cast %184 : vector<2xf32> to vector<2x1xf32>
    %186 = tpu.reciprocal %185 {approx = true} : vector<2x1xf32> -> vector<2x1xf32>
    %187 = vector.broadcast %186 : vector<2x1xf32> to vector<2x16xf32>
    %188 = arith.mulf %183, %187 : vector<2x16xf32>
    %cst_75 = arith.constant dense<0.000000e+00> : vector<2x64xf32>
    %189 = tpu.matmul %188, %175, %cst_75 {dimension_numbers = #tpu.dot_dimension_numbers<[1], [0], [0], [1], [0, 0, 1, 1], [], []>} : vector<2x16xf32>, vector<16x64xf32>, vector<2x64xf32> -> vector<2x64xf32>
    %190 = tpu.concatenate %189, %174 in 1 : vector<2x64xf32>, vector<2x64xf32> -> vector<2x128xf32>
    %c0_76 = arith.constant 0 : index
    %c0_77 = arith.constant 0 : index
    %191 = vector.load %arg12[%c0_76, %c0_77] : memref<128x64xf32, #tpu.memory_space<vmem>>, vector<128x64xf32>
    %cst_78 = arith.constant dense<0.000000e+00> : vector<2x64xf32>
    %192 = tpu.matmul %190, %191, %cst_78 {dimension_numbers = #tpu.dot_dimension_numbers<[1], [0], [0], [1], [0, 0, 1, 1], [], []>} : vector<2x128xf32>, vector<128x64xf32>, vector<2x64xf32> -> vector<2x64xf32>
    %c0_79 = arith.constant 0 : index
    %c0_80 = arith.constant 0 : index
    %193 = vector.load %arg13[%c0_79, %c0_80] : memref<1x64xf32, #tpu.memory_space<vmem>>, vector<1x64xf32>
    %194 = vector.broadcast %193 : vector<1x64xf32> to vector<2x64xf32>
    %195 = arith.addf %192, %194 : vector<2x64xf32>
    %196 = math.tanh %195 : vector<2x64xf32>
    %197 = vector.extract_strided_slice %196 {offsets = [0, 0], sizes = [1, 64], strides = [1, 1]} : vector<2x64xf32> to vector<1x64xf32>
    %198 = vector.extract_strided_slice %196 {offsets = [1, 0], sizes = [1, 64], strides = [1, 1]} : vector<2x64xf32> to vector<1x64xf32>
    %199 = tpu.concatenate %197, %198 in 1 : vector<1x64xf32>, vector<1x64xf32> -> vector<1x128xf32>
    %200 = arith.index_cast %c1_i32 : i32 to index
    %c0_81 = arith.constant 0 : index
    %201 = vector.load %arg14[%200, %c0_81] : memref<8x128xf32, #tpu.memory_space<vmem>>, vector<1x128xf32>
    tpu.vector_store %arg14[%200, %c0_81], %199 {strides = array<i32>} : memref<8x128xf32, #tpu.memory_space<vmem>>, vector<1x128xf32>,
    %c2_i32_82 = arith.constant 2 : i32
    %c2_i32_83 = arith.constant 2 : i32
    %202 = arith.muli %c2_i32_82, %c2_i32_83 : i32
    %203 = arith.index_cast %202 : i32 to index
    %c0_84 = arith.constant 0 : index
    %204 = vector.load %arg15[%203, %c0_84] : memref<16x192xf32, #tpu.memory_space<vmem>>, vector<2x192xf32>
    %c0_85 = arith.constant 0 : index
    %c0_86 = arith.constant 0 : index
    %205 = vector.load %arg6[%c0_85, %c0_86] : memref<64x192xf32, #tpu.memory_space<vmem>>, vector<64x192xf32>
    %cst_87 = arith.constant dense<0.000000e+00> : vector<2x192xf32>
    %206 = tpu.matmul %138, %205, %cst_87 {dimension_numbers = #tpu.dot_dimension_numbers<[1], [0], [0], [1], [0, 0, 1, 1], [], []>} : vector<2x64xf32>, vector<64x192xf32>, vector<2x192xf32> -> vector<2x192xf32>
    %c0_88 = arith.constant 0 : index
    %c0_89 = arith.constant 0 : index
    %207 = vector.load %arg7[%c0_88, %c0_89] : memref<1x192xf32, #tpu.memory_space<vmem>>, vector<1x192xf32>
    %208 = vector.broadcast %207 : vector<1x192xf32> to vector<2x192xf32>
    %209 = arith.addf %206, %208 : vector<2x192xf32>
    %210 = vector.extract_strided_slice %204 {offsets = [0, 0], sizes = [2, 64], strides = [1, 1]} : vector<2x192xf32> to vector<2x64xf32>
    %211 = vector.extract_strided_slice %209 {offsets = [0, 0], sizes = [2, 64], strides = [1, 1]} : vector<2x192xf32> to vector<2x64xf32>
    %212 = arith.addf %210, %211 : vector<2x64xf32>
    %213 = arith.negf %212 : vector<2x64xf32>
    %214 = math.exp %213 : vector<2x64xf32>
    %cst_90 = arith.constant 1.000000e+00 : f32
    %215 = vector.broadcast %cst_90 : f32 to vector<2x64xf32>
    %216 = arith.addf %215, %214 : vector<2x64xf32>
    %217 = arith.divf %215, %216 : vector<2x64xf32>
    %218 = vector.extract_strided_slice %204 {offsets = [0, 64], sizes = [2, 64], strides = [1, 1]} : vector<2x192xf32> to vector<2x64xf32>
    %219 = vector.extract_strided_slice %209 {offsets = [0, 64], sizes = [2, 64], strides = [1, 1]} : vector<2x192xf32> to vector<2x64xf32>
    %220 = arith.addf %218, %219 : vector<2x64xf32>
    %221 = arith.negf %220 : vector<2x64xf32>
    %222 = math.exp %221 : vector<2x64xf32>
    %cst_91 = arith.constant 1.000000e+00 : f32
    %223 = vector.broadcast %cst_91 : f32 to vector<2x64xf32>
    %224 = arith.addf %223, %222 : vector<2x64xf32>
    %225 = arith.divf %223, %224 : vector<2x64xf32>
    %226 = vector.extract_strided_slice %204 {offsets = [0, 128], sizes = [2, 64], strides = [1, 1]} : vector<2x192xf32> to vector<2x64xf32>
    %227 = vector.extract_strided_slice %209 {offsets = [0, 128], sizes = [2, 64], strides = [1, 1]} : vector<2x192xf32> to vector<2x64xf32>
    %228 = arith.mulf %217, %227 : vector<2x64xf32>
    %229 = arith.addf %226, %228 : vector<2x64xf32>
    %230 = math.tanh %229 : vector<2x64xf32>
    %cst_92 = arith.constant 1.000000e+00 : f32
    %231 = vector.broadcast %cst_92 : f32 to vector<2x64xf32>
    %232 = arith.subf %231, %225 : vector<2x64xf32>
    %233 = arith.mulf %232, %230 : vector<2x64xf32>
    %234 = arith.mulf %225, %138 : vector<2x64xf32>
    %235 = arith.addf %233, %234 : vector<2x64xf32>
    %c0_93 = arith.constant 0 : index
    %c0_94 = arith.constant 0 : index
    %236 = vector.load %arg8[%c0_93, %c0_94] : memref<64x192xf32, #tpu.memory_space<vmem>>, vector<64x192xf32>
    %cst_95 = arith.constant dense<0.000000e+00> : vector<2x192xf32>
    %237 = tpu.matmul %235, %236, %cst_95 {dimension_numbers = #tpu.dot_dimension_numbers<[1], [0], [0], [1], [0, 0, 1, 1], [], []>} : vector<2x64xf32>, vector<64x192xf32>, vector<2x192xf32> -> vector<2x192xf32>
    %c0_96 = arith.constant 0 : index
    %c0_97 = arith.constant 0 : index
    %238 = vector.load %arg9[%c0_96, %c0_97] : memref<1x192xf32, #tpu.memory_space<vmem>>, vector<1x192xf32>
    %239 = vector.broadcast %238 : vector<1x192xf32> to vector<2x192xf32>
    %240 = arith.addf %237, %239 : vector<2x192xf32>
    %c0_98 = arith.constant 0 : index
    %c0_99 = arith.constant 0 : index
    %241 = vector.load %arg10[%c0_98, %c0_99] : memref<64x192xf32, #tpu.memory_space<vmem>>, vector<64x192xf32>
    %cst_100 = arith.constant dense<0.000000e+00> : vector<2x192xf32>
    %242 = tpu.matmul %174, %241, %cst_100 {dimension_numbers = #tpu.dot_dimension_numbers<[1], [0], [0], [1], [0, 0, 1, 1], [], []>} : vector<2x64xf32>, vector<64x192xf32>, vector<2x192xf32> -> vector<2x192xf32>
    %c0_101 = arith.constant 0 : index
    %c0_102 = arith.constant 0 : index
    %243 = vector.load %arg11[%c0_101, %c0_102] : memref<1x192xf32, #tpu.memory_space<vmem>>, vector<1x192xf32>
    %244 = vector.broadcast %243 : vector<1x192xf32> to vector<2x192xf32>
    %245 = arith.addf %242, %244 : vector<2x192xf32>
    %246 = vector.extract_strided_slice %240 {offsets = [0, 0], sizes = [2, 64], strides = [1, 1]} : vector<2x192xf32> to vector<2x64xf32>
    %247 = vector.extract_strided_slice %245 {offsets = [0, 0], sizes = [2, 64], strides = [1, 1]} : vector<2x192xf32> to vector<2x64xf32>
    %248 = arith.addf %246, %247 : vector<2x64xf32>
    %249 = arith.negf %248 : vector<2x64xf32>
    %250 = math.exp %249 : vector<2x64xf32>
    %cst_103 = arith.constant 1.000000e+00 : f32
    %251 = vector.broadcast %cst_103 : f32 to vector<2x64xf32>
    %252 = arith.addf %251, %250 : vector<2x64xf32>
    %253 = arith.divf %251, %252 : vector<2x64xf32>
    %254 = vector.extract_strided_slice %240 {offsets = [0, 64], sizes = [2, 64], strides = [1, 1]} : vector<2x192xf32> to vector<2x64xf32>
    %255 = vector.extract_strided_slice %245 {offsets = [0, 64], sizes = [2, 64], strides = [1, 1]} : vector<2x192xf32> to vector<2x64xf32>
    %256 = arith.addf %254, %255 : vector<2x64xf32>
    %257 = arith.negf %256 : vector<2x64xf32>
    %258 = math.exp %257 : vector<2x64xf32>
    %cst_104 = arith.constant 1.000000e+00 : f32
    %259 = vector.broadcast %cst_104 : f32 to vector<2x64xf32>
    %260 = arith.addf %259, %258 : vector<2x64xf32>
    %261 = arith.divf %259, %260 : vector<2x64xf32>
    %262 = vector.extract_strided_slice %240 {offsets = [0, 128], sizes = [2, 64], strides = [1, 1]} : vector<2x192xf32> to vector<2x64xf32>
    %263 = vector.extract_strided_slice %245 {offsets = [0, 128], sizes = [2, 64], strides = [1, 1]} : vector<2x192xf32> to vector<2x64xf32>
    %264 = arith.mulf %253, %263 : vector<2x64xf32>
    %265 = arith.addf %262, %264 : vector<2x64xf32>
    %266 = math.tanh %265 : vector<2x64xf32>
    %cst_105 = arith.constant 1.000000e+00 : f32
    %267 = vector.broadcast %cst_105 : f32 to vector<2x64xf32>
    %268 = arith.subf %267, %261 : vector<2x64xf32>
    %269 = arith.mulf %268, %266 : vector<2x64xf32>
    %270 = arith.mulf %261, %174 : vector<2x64xf32>
    %271 = arith.addf %269, %270 : vector<2x64xf32>
    %c0_106 = arith.constant 0 : index
    %c0_107 = arith.constant 0 : index
    %272 = vector.load %arg1[%c0_106, %c0_107] : memref<16x64xf32, #tpu.memory_space<vmem>>, vector<16x64xf32>
    %cst_108 = arith.constant dense<0.000000e+00> : vector<2x16xf32>
    %273 = tpu.matmul %271, %272, %cst_108 {dimension_numbers = #tpu.dot_dimension_numbers<[1], [1], [0], [0], [0, 0, 1, 0], [], []>} : vector<2x64xf32>, vector<16x64xf32>, vector<2x16xf32> -> vector<2x16xf32>
    %c0_109 = arith.constant 0 : index
    %c0_110 = arith.constant 0 : index
    %274 = vector.load %arg2[%c0_109, %c0_110] : memref<2x16xf32, #tpu.memory_space<vmem>>, vector<2x16xf32>
    %275 = arith.addf %273, %274 : vector<2x16xf32>
    %cst_111 = arith.constant dense<0xFF800000> : vector<2xf32>
    %276 = vector.multi_reduction <maximumf>, %275, %cst_111 [1] : vector<2x16xf32> to vector<2xf32>
    %277 = vector.shape_cast %276 : vector<2xf32> to vector<2x1xf32>
    %278 = vector.broadcast %277 : vector<2x1xf32> to vector<2x16xf32>
    %279 = arith.subf %275, %278 : vector<2x16xf32>
    %280 = math.exp %279 : vector<2x16xf32>
    %cst_112 = arith.constant dense<0.000000e+00> : vector<2xf32>
    %281 = vector.multi_reduction <add>, %280, %cst_112 [1] : vector<2x16xf32> to vector<2xf32>
    %282 = vector.shape_cast %281 : vector<2xf32> to vector<2x1xf32>
    %283 = tpu.reciprocal %282 {approx = true} : vector<2x1xf32> -> vector<2x1xf32>
    %284 = vector.broadcast %283 : vector<2x1xf32> to vector<2x16xf32>
    %285 = arith.mulf %280, %284 : vector<2x16xf32>
    %cst_113 = arith.constant dense<0.000000e+00> : vector<2x64xf32>
    %286 = tpu.matmul %285, %272, %cst_113 {dimension_numbers = #tpu.dot_dimension_numbers<[1], [0], [0], [1], [0, 0, 1, 1], [], []>} : vector<2x16xf32>, vector<16x64xf32>, vector<2x64xf32> -> vector<2x64xf32>
    %287 = tpu.concatenate %286, %271 in 1 : vector<2x64xf32>, vector<2x64xf32> -> vector<2x128xf32>
    %c0_114 = arith.constant 0 : index
    %c0_115 = arith.constant 0 : index
    %288 = vector.load %arg12[%c0_114, %c0_115] : memref<128x64xf32, #tpu.memory_space<vmem>>, vector<128x64xf32>
    %cst_116 = arith.constant dense<0.000000e+00> : vector<2x64xf32>
    %289 = tpu.matmul %287, %288, %cst_116 {dimension_numbers = #tpu.dot_dimension_numbers<[1], [0], [0], [1], [0, 0, 1, 1], [], []>} : vector<2x128xf32>, vector<128x64xf32>, vector<2x64xf32> -> vector<2x64xf32>
    %c0_117 = arith.constant 0 : index
    %c0_118 = arith.constant 0 : index
    %290 = vector.load %arg13[%c0_117, %c0_118] : memref<1x64xf32, #tpu.memory_space<vmem>>, vector<1x64xf32>
    %291 = vector.broadcast %290 : vector<1x64xf32> to vector<2x64xf32>
    %292 = arith.addf %289, %291 : vector<2x64xf32>
    %293 = math.tanh %292 : vector<2x64xf32>
    %294 = vector.extract_strided_slice %293 {offsets = [0, 0], sizes = [1, 64], strides = [1, 1]} : vector<2x64xf32> to vector<1x64xf32>
    %295 = vector.extract_strided_slice %293 {offsets = [1, 0], sizes = [1, 64], strides = [1, 1]} : vector<2x64xf32> to vector<1x64xf32>
    %296 = tpu.concatenate %294, %295 in 1 : vector<1x64xf32>, vector<1x64xf32> -> vector<1x128xf32>
    %297 = arith.index_cast %c2_i32_82 : i32 to index
    %c0_119 = arith.constant 0 : index
    %298 = vector.load %arg14[%297, %c0_119] : memref<8x128xf32, #tpu.memory_space<vmem>>, vector<1x128xf32>
    tpu.vector_store %arg14[%297, %c0_119], %296 {strides = array<i32>} : memref<8x128xf32, #tpu.memory_space<vmem>>, vector<1x128xf32>,
    %c3_i32 = arith.constant 3 : i32
    %c2_i32_120 = arith.constant 2 : i32
    %299 = arith.muli %c3_i32, %c2_i32_120 : i32
    %300 = arith.index_cast %299 : i32 to index
    %c0_121 = arith.constant 0 : index
    %301 = vector.load %arg15[%300, %c0_121] : memref<16x192xf32, #tpu.memory_space<vmem>>, vector<2x192xf32>
    %c0_122 = arith.constant 0 : index
    %c0_123 = arith.constant 0 : index
    %302 = vector.load %arg6[%c0_122, %c0_123] : memref<64x192xf32, #tpu.memory_space<vmem>>, vector<64x192xf32>
    %cst_124 = arith.constant dense<0.000000e+00> : vector<2x192xf32>
    %303 = tpu.matmul %235, %302, %cst_124 {dimension_numbers = #tpu.dot_dimension_numbers<[1], [0], [0], [1], [0, 0, 1, 1], [], []>} : vector<2x64xf32>, vector<64x192xf32>, vector<2x192xf32> -> vector<2x192xf32>
    %c0_125 = arith.constant 0 : index
    %c0_126 = arith.constant 0 : index
    %304 = vector.load %arg7[%c0_125, %c0_126] : memref<1x192xf32, #tpu.memory_space<vmem>>, vector<1x192xf32>
    %305 = vector.broadcast %304 : vector<1x192xf32> to vector<2x192xf32>
    %306 = arith.addf %303, %305 : vector<2x192xf32>
    %307 = vector.extract_strided_slice %301 {offsets = [0, 0], sizes = [2, 64], strides = [1, 1]} : vector<2x192xf32> to vector<2x64xf32>
    %308 = vector.extract_strided_slice %306 {offsets = [0, 0], sizes = [2, 64], strides = [1, 1]} : vector<2x192xf32> to vector<2x64xf32>
    %309 = arith.addf %307, %308 : vector<2x64xf32>
    %310 = arith.negf %309 : vector<2x64xf32>
    %311 = math.exp %310 : vector<2x64xf32>
    %cst_127 = arith.constant 1.000000e+00 : f32
    %312 = vector.broadcast %cst_127 : f32 to vector<2x64xf32>
    %313 = arith.addf %312, %311 : vector<2x64xf32>
    %314 = arith.divf %312, %313 : vector<2x64xf32>
    %315 = vector.extract_strided_slice %301 {offsets = [0, 64], sizes = [2, 64], strides = [1, 1]} : vector<2x192xf32> to vector<2x64xf32>
    %316 = vector.extract_strided_slice %306 {offsets = [0, 64], sizes = [2, 64], strides = [1, 1]} : vector<2x192xf32> to vector<2x64xf32>
    %317 = arith.addf %315, %316 : vector<2x64xf32>
    %318 = arith.negf %317 : vector<2x64xf32>
    %319 = math.exp %318 : vector<2x64xf32>
    %cst_128 = arith.constant 1.000000e+00 : f32
    %320 = vector.broadcast %cst_128 : f32 to vector<2x64xf32>
    %321 = arith.addf %320, %319 : vector<2x64xf32>
    %322 = arith.divf %320, %321 : vector<2x64xf32>
    %323 = vector.extract_strided_slice %301 {offsets = [0, 128], sizes = [2, 64], strides = [1, 1]} : vector<2x192xf32> to vector<2x64xf32>
    %324 = vector.extract_strided_slice %306 {offsets = [0, 128], sizes = [2, 64], strides = [1, 1]} : vector<2x192xf32> to vector<2x64xf32>
    %325 = arith.mulf %314, %324 : vector<2x64xf32>
    %326 = arith.addf %323, %325 : vector<2x64xf32>
    %327 = math.tanh %326 : vector<2x64xf32>
    %cst_129 = arith.constant 1.000000e+00 : f32
    %328 = vector.broadcast %cst_129 : f32 to vector<2x64xf32>
    %329 = arith.subf %328, %322 : vector<2x64xf32>
    %330 = arith.mulf %329, %327 : vector<2x64xf32>
    %331 = arith.mulf %322, %235 : vector<2x64xf32>
    %332 = arith.addf %330, %331 : vector<2x64xf32>
    %c0_130 = arith.constant 0 : index
    %c0_131 = arith.constant 0 : index
    %333 = vector.load %arg8[%c0_130, %c0_131] : memref<64x192xf32, #tpu.memory_space<vmem>>, vector<64x192xf32>
    %cst_132 = arith.constant dense<0.000000e+00> : vector<2x192xf32>
    %334 = tpu.matmul %332, %333, %cst_132 {dimension_numbers = #tpu.dot_dimension_numbers<[1], [0], [0], [1], [0, 0, 1, 1], [], []>} : vector<2x64xf32>, vector<64x192xf32>, vector<2x192xf32> -> vector<2x192xf32>
    %c0_133 = arith.constant 0 : index
    %c0_134 = arith.constant 0 : index
    %335 = vector.load %arg9[%c0_133, %c0_134] : memref<1x192xf32, #tpu.memory_space<vmem>>, vector<1x192xf32>
    %336 = vector.broadcast %335 : vector<1x192xf32> to vector<2x192xf32>
    %337 = arith.addf %334, %336 : vector<2x192xf32>
    %c0_135 = arith.constant 0 : index
    %c0_136 = arith.constant 0 : index
    %338 = vector.load %arg10[%c0_135, %c0_136] : memref<64x192xf32, #tpu.memory_space<vmem>>, vector<64x192xf32>
    %cst_137 = arith.constant dense<0.000000e+00> : vector<2x192xf32>
    %339 = tpu.matmul %271, %338, %cst_137 {dimension_numbers = #tpu.dot_dimension_numbers<[1], [0], [0], [1], [0, 0, 1, 1], [], []>} : vector<2x64xf32>, vector<64x192xf32>, vector<2x192xf32> -> vector<2x192xf32>
    %c0_138 = arith.constant 0 : index
    %c0_139 = arith.constant 0 : index
    %340 = vector.load %arg11[%c0_138, %c0_139] : memref<1x192xf32, #tpu.memory_space<vmem>>, vector<1x192xf32>
    %341 = vector.broadcast %340 : vector<1x192xf32> to vector<2x192xf32>
    %342 = arith.addf %339, %341 : vector<2x192xf32>
    %343 = vector.extract_strided_slice %337 {offsets = [0, 0], sizes = [2, 64], strides = [1, 1]} : vector<2x192xf32> to vector<2x64xf32>
    %344 = vector.extract_strided_slice %342 {offsets = [0, 0], sizes = [2, 64], strides = [1, 1]} : vector<2x192xf32> to vector<2x64xf32>
    %345 = arith.addf %343, %344 : vector<2x64xf32>
    %346 = arith.negf %345 : vector<2x64xf32>
    %347 = math.exp %346 : vector<2x64xf32>
    %cst_140 = arith.constant 1.000000e+00 : f32
    %348 = vector.broadcast %cst_140 : f32 to vector<2x64xf32>
    %349 = arith.addf %348, %347 : vector<2x64xf32>
    %350 = arith.divf %348, %349 : vector<2x64xf32>
    %351 = vector.extract_strided_slice %337 {offsets = [0, 64], sizes = [2, 64], strides = [1, 1]} : vector<2x192xf32> to vector<2x64xf32>
    %352 = vector.extract_strided_slice %342 {offsets = [0, 64], sizes = [2, 64], strides = [1, 1]} : vector<2x192xf32> to vector<2x64xf32>
    %353 = arith.addf %351, %352 : vector<2x64xf32>
    %354 = arith.negf %353 : vector<2x64xf32>
    %355 = math.exp %354 : vector<2x64xf32>
    %cst_141 = arith.constant 1.000000e+00 : f32
    %356 = vector.broadcast %cst_141 : f32 to vector<2x64xf32>
    %357 = arith.addf %356, %355 : vector<2x64xf32>
    %358 = arith.divf %356, %357 : vector<2x64xf32>
    %359 = vector.extract_strided_slice %337 {offsets = [0, 128], sizes = [2, 64], strides = [1, 1]} : vector<2x192xf32> to vector<2x64xf32>
    %360 = vector.extract_strided_slice %342 {offsets = [0, 128], sizes = [2, 64], strides = [1, 1]} : vector<2x192xf32> to vector<2x64xf32>
    %361 = arith.mulf %350, %360 : vector<2x64xf32>
    %362 = arith.addf %359, %361 : vector<2x64xf32>
    %363 = math.tanh %362 : vector<2x64xf32>
    %cst_142 = arith.constant 1.000000e+00 : f32
    %364 = vector.broadcast %cst_142 : f32 to vector<2x64xf32>
    %365 = arith.subf %364, %358 : vector<2x64xf32>
    %366 = arith.mulf %365, %363 : vector<2x64xf32>
    %367 = arith.mulf %358, %271 : vector<2x64xf32>
    %368 = arith.addf %366, %367 : vector<2x64xf32>
    %c0_143 = arith.constant 0 : index
    %c0_144 = arith.constant 0 : index
    %369 = vector.load %arg1[%c0_143, %c0_144] : memref<16x64xf32, #tpu.memory_space<vmem>>, vector<16x64xf32>
    %cst_145 = arith.constant dense<0.000000e+00> : vector<2x16xf32>
    %370 = tpu.matmul %368, %369, %cst_145 {dimension_numbers = #tpu.dot_dimension_numbers<[1], [1], [0], [0], [0, 0, 1, 0], [], []>} : vector<2x64xf32>, vector<16x64xf32>, vector<2x16xf32> -> vector<2x16xf32>
    %c0_146 = arith.constant 0 : index
    %c0_147 = arith.constant 0 : index
    %371 = vector.load %arg2[%c0_146, %c0_147] : memref<2x16xf32, #tpu.memory_space<vmem>>, vector<2x16xf32>
    %372 = arith.addf %370, %371 : vector<2x16xf32>
    %cst_148 = arith.constant dense<0xFF800000> : vector<2xf32>
    %373 = vector.multi_reduction <maximumf>, %372, %cst_148 [1] : vector<2x16xf32> to vector<2xf32>
    %374 = vector.shape_cast %373 : vector<2xf32> to vector<2x1xf32>
    %375 = vector.broadcast %374 : vector<2x1xf32> to vector<2x16xf32>
    %376 = arith.subf %372, %375 : vector<2x16xf32>
    %377 = math.exp %376 : vector<2x16xf32>
    %cst_149 = arith.constant dense<0.000000e+00> : vector<2xf32>
    %378 = vector.multi_reduction <add>, %377, %cst_149 [1] : vector<2x16xf32> to vector<2xf32>
    %379 = vector.shape_cast %378 : vector<2xf32> to vector<2x1xf32>
    %380 = tpu.reciprocal %379 {approx = true} : vector<2x1xf32> -> vector<2x1xf32>
    %381 = vector.broadcast %380 : vector<2x1xf32> to vector<2x16xf32>
    %382 = arith.mulf %377, %381 : vector<2x16xf32>
    %cst_150 = arith.constant dense<0.000000e+00> : vector<2x64xf32>
    %383 = tpu.matmul %382, %369, %cst_150 {dimension_numbers = #tpu.dot_dimension_numbers<[1], [0], [0], [1], [0, 0, 1, 1], [], []>} : vector<2x16xf32>, vector<16x64xf32>, vector<2x64xf32> -> vector<2x64xf32>
    %384 = tpu.concatenate %383, %368 in 1 : vector<2x64xf32>, vector<2x64xf32> -> vector<2x128xf32>
    %c0_151 = arith.constant 0 : index
    %c0_152 = arith.constant 0 : index
    %385 = vector.load %arg12[%c0_151, %c0_152] : memref<128x64xf32, #tpu.memory_space<vmem>>, vector<128x64xf32>
    %cst_153 = arith.constant dense<0.000000e+00> : vector<2x64xf32>
    %386 = tpu.matmul %384, %385, %cst_153 {dimension_numbers = #tpu.dot_dimension_numbers<[1], [0], [0], [1], [0, 0, 1, 1], [], []>} : vector<2x128xf32>, vector<128x64xf32>, vector<2x64xf32> -> vector<2x64xf32>
    %c0_154 = arith.constant 0 : index
    %c0_155 = arith.constant 0 : index
    %387 = vector.load %arg13[%c0_154, %c0_155] : memref<1x64xf32, #tpu.memory_space<vmem>>, vector<1x64xf32>
    %388 = vector.broadcast %387 : vector<1x64xf32> to vector<2x64xf32>
    %389 = arith.addf %386, %388 : vector<2x64xf32>
    %390 = math.tanh %389 : vector<2x64xf32>
    %391 = vector.extract_strided_slice %390 {offsets = [0, 0], sizes = [1, 64], strides = [1, 1]} : vector<2x64xf32> to vector<1x64xf32>
    %392 = vector.extract_strided_slice %390 {offsets = [1, 0], sizes = [1, 64], strides = [1, 1]} : vector<2x64xf32> to vector<1x64xf32>
    %393 = tpu.concatenate %391, %392 in 1 : vector<1x64xf32>, vector<1x64xf32> -> vector<1x128xf32>
    %394 = arith.index_cast %c3_i32 : i32 to index
    %c0_156 = arith.constant 0 : index
    %395 = vector.load %arg14[%394, %c0_156] : memref<8x128xf32, #tpu.memory_space<vmem>>, vector<1x128xf32>
    tpu.vector_store %arg14[%394, %c0_156], %393 {strides = array<i32>} : memref<8x128xf32, #tpu.memory_space<vmem>>, vector<1x128xf32>,
    %c4_i32 = arith.constant 4 : i32
    %c2_i32_157 = arith.constant 2 : i32
    %396 = arith.muli %c4_i32, %c2_i32_157 : i32
    %397 = arith.index_cast %396 : i32 to index
    %c0_158 = arith.constant 0 : index
    %398 = vector.load %arg15[%397, %c0_158] : memref<16x192xf32, #tpu.memory_space<vmem>>, vector<2x192xf32>
    %c0_159 = arith.constant 0 : index
    %c0_160 = arith.constant 0 : index
    %399 = vector.load %arg6[%c0_159, %c0_160] : memref<64x192xf32, #tpu.memory_space<vmem>>, vector<64x192xf32>
    %cst_161 = arith.constant dense<0.000000e+00> : vector<2x192xf32>
    %400 = tpu.matmul %332, %399, %cst_161 {dimension_numbers = #tpu.dot_dimension_numbers<[1], [0], [0], [1], [0, 0, 1, 1], [], []>} : vector<2x64xf32>, vector<64x192xf32>, vector<2x192xf32> -> vector<2x192xf32>
    %c0_162 = arith.constant 0 : index
    %c0_163 = arith.constant 0 : index
    %401 = vector.load %arg7[%c0_162, %c0_163] : memref<1x192xf32, #tpu.memory_space<vmem>>, vector<1x192xf32>
    %402 = vector.broadcast %401 : vector<1x192xf32> to vector<2x192xf32>
    %403 = arith.addf %400, %402 : vector<2x192xf32>
    %404 = vector.extract_strided_slice %398 {offsets = [0, 0], sizes = [2, 64], strides = [1, 1]} : vector<2x192xf32> to vector<2x64xf32>
    %405 = vector.extract_strided_slice %403 {offsets = [0, 0], sizes = [2, 64], strides = [1, 1]} : vector<2x192xf32> to vector<2x64xf32>
    %406 = arith.addf %404, %405 : vector<2x64xf32>
    %407 = arith.negf %406 : vector<2x64xf32>
    %408 = math.exp %407 : vector<2x64xf32>
    %cst_164 = arith.constant 1.000000e+00 : f32
    %409 = vector.broadcast %cst_164 : f32 to vector<2x64xf32>
    %410 = arith.addf %409, %408 : vector<2x64xf32>
    %411 = arith.divf %409, %410 : vector<2x64xf32>
    %412 = vector.extract_strided_slice %398 {offsets = [0, 64], sizes = [2, 64], strides = [1, 1]} : vector<2x192xf32> to vector<2x64xf32>
    %413 = vector.extract_strided_slice %403 {offsets = [0, 64], sizes = [2, 64], strides = [1, 1]} : vector<2x192xf32> to vector<2x64xf32>
    %414 = arith.addf %412, %413 : vector<2x64xf32>
    %415 = arith.negf %414 : vector<2x64xf32>
    %416 = math.exp %415 : vector<2x64xf32>
    %cst_165 = arith.constant 1.000000e+00 : f32
    %417 = vector.broadcast %cst_165 : f32 to vector<2x64xf32>
    %418 = arith.addf %417, %416 : vector<2x64xf32>
    %419 = arith.divf %417, %418 : vector<2x64xf32>
    %420 = vector.extract_strided_slice %398 {offsets = [0, 128], sizes = [2, 64], strides = [1, 1]} : vector<2x192xf32> to vector<2x64xf32>
    %421 = vector.extract_strided_slice %403 {offsets = [0, 128], sizes = [2, 64], strides = [1, 1]} : vector<2x192xf32> to vector<2x64xf32>
    %422 = arith.mulf %411, %421 : vector<2x64xf32>
    %423 = arith.addf %420, %422 : vector<2x64xf32>
    %424 = math.tanh %423 : vector<2x64xf32>
    %cst_166 = arith.constant 1.000000e+00 : f32
    %425 = vector.broadcast %cst_166 : f32 to vector<2x64xf32>
    %426 = arith.subf %425, %419 : vector<2x64xf32>
    %427 = arith.mulf %426, %424 : vector<2x64xf32>
    %428 = arith.mulf %419, %332 : vector<2x64xf32>
    %429 = arith.addf %427, %428 : vector<2x64xf32>
    %c0_167 = arith.constant 0 : index
    %c0_168 = arith.constant 0 : index
    %430 = vector.load %arg8[%c0_167, %c0_168] : memref<64x192xf32, #tpu.memory_space<vmem>>, vector<64x192xf32>
    %cst_169 = arith.constant dense<0.000000e+00> : vector<2x192xf32>
    %431 = tpu.matmul %429, %430, %cst_169 {dimension_numbers = #tpu.dot_dimension_numbers<[1], [0], [0], [1], [0, 0, 1, 1], [], []>} : vector<2x64xf32>, vector<64x192xf32>, vector<2x192xf32> -> vector<2x192xf32>
    %c0_170 = arith.constant 0 : index
    %c0_171 = arith.constant 0 : index
    %432 = vector.load %arg9[%c0_170, %c0_171] : memref<1x192xf32, #tpu.memory_space<vmem>>, vector<1x192xf32>
    %433 = vector.broadcast %432 : vector<1x192xf32> to vector<2x192xf32>
    %434 = arith.addf %431, %433 : vector<2x192xf32>
    %c0_172 = arith.constant 0 : index
    %c0_173 = arith.constant 0 : index
    %435 = vector.load %arg10[%c0_172, %c0_173] : memref<64x192xf32, #tpu.memory_space<vmem>>, vector<64x192xf32>
    %cst_174 = arith.constant dense<0.000000e+00> : vector<2x192xf32>
    %436 = tpu.matmul %368, %435, %cst_174 {dimension_numbers = #tpu.dot_dimension_numbers<[1], [0], [0], [1], [0, 0, 1, 1], [], []>} : vector<2x64xf32>, vector<64x192xf32>, vector<2x192xf32> -> vector<2x192xf32>
    %c0_175 = arith.constant 0 : index
    %c0_176 = arith.constant 0 : index
    %437 = vector.load %arg11[%c0_175, %c0_176] : memref<1x192xf32, #tpu.memory_space<vmem>>, vector<1x192xf32>
    %438 = vector.broadcast %437 : vector<1x192xf32> to vector<2x192xf32>
    %439 = arith.addf %436, %438 : vector<2x192xf32>
    %440 = vector.extract_strided_slice %434 {offsets = [0, 0], sizes = [2, 64], strides = [1, 1]} : vector<2x192xf32> to vector<2x64xf32>
    %441 = vector.extract_strided_slice %439 {offsets = [0, 0], sizes = [2, 64], strides = [1, 1]} : vector<2x192xf32> to vector<2x64xf32>
    %442 = arith.addf %440, %441 : vector<2x64xf32>
    %443 = arith.negf %442 : vector<2x64xf32>
    %444 = math.exp %443 : vector<2x64xf32>
    %cst_177 = arith.constant 1.000000e+00 : f32
    %445 = vector.broadcast %cst_177 : f32 to vector<2x64xf32>
    %446 = arith.addf %445, %444 : vector<2x64xf32>
    %447 = arith.divf %445, %446 : vector<2x64xf32>
    %448 = vector.extract_strided_slice %434 {offsets = [0, 64], sizes = [2, 64], strides = [1, 1]} : vector<2x192xf32> to vector<2x64xf32>
    %449 = vector.extract_strided_slice %439 {offsets = [0, 64], sizes = [2, 64], strides = [1, 1]} : vector<2x192xf32> to vector<2x64xf32>
    %450 = arith.addf %448, %449 : vector<2x64xf32>
    %451 = arith.negf %450 : vector<2x64xf32>
    %452 = math.exp %451 : vector<2x64xf32>
    %cst_178 = arith.constant 1.000000e+00 : f32
    %453 = vector.broadcast %cst_178 : f32 to vector<2x64xf32>
    %454 = arith.addf %453, %452 : vector<2x64xf32>
    %455 = arith.divf %453, %454 : vector<2x64xf32>
    %456 = vector.extract_strided_slice %434 {offsets = [0, 128], sizes = [2, 64], strides = [1, 1]} : vector<2x192xf32> to vector<2x64xf32>
    %457 = vector.extract_strided_slice %439 {offsets = [0, 128], sizes = [2, 64], strides = [1, 1]} : vector<2x192xf32> to vector<2x64xf32>
    %458 = arith.mulf %447, %457 : vector<2x64xf32>
    %459 = arith.addf %456, %458 : vector<2x64xf32>
    %460 = math.tanh %459 : vector<2x64xf32>
    %cst_179 = arith.constant 1.000000e+00 : f32
    %461 = vector.broadcast %cst_179 : f32 to vector<2x64xf32>
    %462 = arith.subf %461, %455 : vector<2x64xf32>
    %463 = arith.mulf %462, %460 : vector<2x64xf32>
    %464 = arith.mulf %455, %368 : vector<2x64xf32>
    %465 = arith.addf %463, %464 : vector<2x64xf32>
    %c0_180 = arith.constant 0 : index
    %c0_181 = arith.constant 0 : index
    %466 = vector.load %arg1[%c0_180, %c0_181] : memref<16x64xf32, #tpu.memory_space<vmem>>, vector<16x64xf32>
    %cst_182 = arith.constant dense<0.000000e+00> : vector<2x16xf32>
    %467 = tpu.matmul %465, %466, %cst_182 {dimension_numbers = #tpu.dot_dimension_numbers<[1], [1], [0], [0], [0, 0, 1, 0], [], []>} : vector<2x64xf32>, vector<16x64xf32>, vector<2x16xf32> -> vector<2x16xf32>
    %c0_183 = arith.constant 0 : index
    %c0_184 = arith.constant 0 : index
    %468 = vector.load %arg2[%c0_183, %c0_184] : memref<2x16xf32, #tpu.memory_space<vmem>>, vector<2x16xf32>
    %469 = arith.addf %467, %468 : vector<2x16xf32>
    %cst_185 = arith.constant dense<0xFF800000> : vector<2xf32>
    %470 = vector.multi_reduction <maximumf>, %469, %cst_185 [1] : vector<2x16xf32> to vector<2xf32>
    %471 = vector.shape_cast %470 : vector<2xf32> to vector<2x1xf32>
    %472 = vector.broadcast %471 : vector<2x1xf32> to vector<2x16xf32>
    %473 = arith.subf %469, %472 : vector<2x16xf32>
    %474 = math.exp %473 : vector<2x16xf32>
    %cst_186 = arith.constant dense<0.000000e+00> : vector<2xf32>
    %475 = vector.multi_reduction <add>, %474, %cst_186 [1] : vector<2x16xf32> to vector<2xf32>
    %476 = vector.shape_cast %475 : vector<2xf32> to vector<2x1xf32>
    %477 = tpu.reciprocal %476 {approx = true} : vector<2x1xf32> -> vector<2x1xf32>
    %478 = vector.broadcast %477 : vector<2x1xf32> to vector<2x16xf32>
    %479 = arith.mulf %474, %478 : vector<2x16xf32>
    %cst_187 = arith.constant dense<0.000000e+00> : vector<2x64xf32>
    %480 = tpu.matmul %479, %466, %cst_187 {dimension_numbers = #tpu.dot_dimension_numbers<[1], [0], [0], [1], [0, 0, 1, 1], [], []>} : vector<2x16xf32>, vector<16x64xf32>, vector<2x64xf32> -> vector<2x64xf32>
    %481 = tpu.concatenate %480, %465 in 1 : vector<2x64xf32>, vector<2x64xf32> -> vector<2x128xf32>
    %c0_188 = arith.constant 0 : index
    %c0_189 = arith.constant 0 : index
    %482 = vector.load %arg12[%c0_188, %c0_189] : memref<128x64xf32, #tpu.memory_space<vmem>>, vector<128x64xf32>
    %cst_190 = arith.constant dense<0.000000e+00> : vector<2x64xf32>
    %483 = tpu.matmul %481, %482, %cst_190 {dimension_numbers = #tpu.dot_dimension_numbers<[1], [0], [0], [1], [0, 0, 1, 1], [], []>} : vector<2x128xf32>, vector<128x64xf32>, vector<2x64xf32> -> vector<2x64xf32>
    %c0_191 = arith.constant 0 : index
    %c0_192 = arith.constant 0 : index
    %484 = vector.load %arg13[%c0_191, %c0_192] : memref<1x64xf32, #tpu.memory_space<vmem>>, vector<1x64xf32>
    %485 = vector.broadcast %484 : vector<1x64xf32> to vector<2x64xf32>
    %486 = arith.addf %483, %485 : vector<2x64xf32>
    %487 = math.tanh %486 : vector<2x64xf32>
    %488 = vector.extract_strided_slice %487 {offsets = [0, 0], sizes = [1, 64], strides = [1, 1]} : vector<2x64xf32> to vector<1x64xf32>
    %489 = vector.extract_strided_slice %487 {offsets = [1, 0], sizes = [1, 64], strides = [1, 1]} : vector<2x64xf32> to vector<1x64xf32>
    %490 = tpu.concatenate %488, %489 in 1 : vector<1x64xf32>, vector<1x64xf32> -> vector<1x128xf32>
    %491 = arith.index_cast %c4_i32 : i32 to index
    %c0_193 = arith.constant 0 : index
    %492 = vector.load %arg14[%491, %c0_193] : memref<8x128xf32, #tpu.memory_space<vmem>>, vector<1x128xf32>
    tpu.vector_store %arg14[%491, %c0_193], %490 {strides = array<i32>} : memref<8x128xf32, #tpu.memory_space<vmem>>, vector<1x128xf32>,
    %c5_i32 = arith.constant 5 : i32
    %c2_i32_194 = arith.constant 2 : i32
    %493 = arith.muli %c5_i32, %c2_i32_194 : i32
    %494 = arith.index_cast %493 : i32 to index
    %c0_195 = arith.constant 0 : index
    %495 = vector.load %arg15[%494, %c0_195] : memref<16x192xf32, #tpu.memory_space<vmem>>, vector<2x192xf32>
    %c0_196 = arith.constant 0 : index
    %c0_197 = arith.constant 0 : index
    %496 = vector.load %arg6[%c0_196, %c0_197] : memref<64x192xf32, #tpu.memory_space<vmem>>, vector<64x192xf32>
    %cst_198 = arith.constant dense<0.000000e+00> : vector<2x192xf32>
    %497 = tpu.matmul %429, %496, %cst_198 {dimension_numbers = #tpu.dot_dimension_numbers<[1], [0], [0], [1], [0, 0, 1, 1], [], []>} : vector<2x64xf32>, vector<64x192xf32>, vector<2x192xf32> -> vector<2x192xf32>
    %c0_199 = arith.constant 0 : index
    %c0_200 = arith.constant 0 : index
    %498 = vector.load %arg7[%c0_199, %c0_200] : memref<1x192xf32, #tpu.memory_space<vmem>>, vector<1x192xf32>
    %499 = vector.broadcast %498 : vector<1x192xf32> to vector<2x192xf32>
    %500 = arith.addf %497, %499 : vector<2x192xf32>
    %501 = vector.extract_strided_slice %495 {offsets = [0, 0], sizes = [2, 64], strides = [1, 1]} : vector<2x192xf32> to vector<2x64xf32>
    %502 = vector.extract_strided_slice %500 {offsets = [0, 0], sizes = [2, 64], strides = [1, 1]} : vector<2x192xf32> to vector<2x64xf32>
    %503 = arith.addf %501, %502 : vector<2x64xf32>
    %504 = arith.negf %503 : vector<2x64xf32>
    %505 = math.exp %504 : vector<2x64xf32>
    %cst_201 = arith.constant 1.000000e+00 : f32
    %506 = vector.broadcast %cst_201 : f32 to vector<2x64xf32>
    %507 = arith.addf %506, %505 : vector<2x64xf32>
    %508 = arith.divf %506, %507 : vector<2x64xf32>
    %509 = vector.extract_strided_slice %495 {offsets = [0, 64], sizes = [2, 64], strides = [1, 1]} : vector<2x192xf32> to vector<2x64xf32>
    %510 = vector.extract_strided_slice %500 {offsets = [0, 64], sizes = [2, 64], strides = [1, 1]} : vector<2x192xf32> to vector<2x64xf32>
    %511 = arith.addf %509, %510 : vector<2x64xf32>
    %512 = arith.negf %511 : vector<2x64xf32>
    %513 = math.exp %512 : vector<2x64xf32>
    %cst_202 = arith.constant 1.000000e+00 : f32
    %514 = vector.broadcast %cst_202 : f32 to vector<2x64xf32>
    %515 = arith.addf %514, %513 : vector<2x64xf32>
    %516 = arith.divf %514, %515 : vector<2x64xf32>
    %517 = vector.extract_strided_slice %495 {offsets = [0, 128], sizes = [2, 64], strides = [1, 1]} : vector<2x192xf32> to vector<2x64xf32>
    %518 = vector.extract_strided_slice %500 {offsets = [0, 128], sizes = [2, 64], strides = [1, 1]} : vector<2x192xf32> to vector<2x64xf32>
    %519 = arith.mulf %508, %518 : vector<2x64xf32>
    %520 = arith.addf %517, %519 : vector<2x64xf32>
    %521 = math.tanh %520 : vector<2x64xf32>
    %cst_203 = arith.constant 1.000000e+00 : f32
    %522 = vector.broadcast %cst_203 : f32 to vector<2x64xf32>
    %523 = arith.subf %522, %516 : vector<2x64xf32>
    %524 = arith.mulf %523, %521 : vector<2x64xf32>
    %525 = arith.mulf %516, %429 : vector<2x64xf32>
    %526 = arith.addf %524, %525 : vector<2x64xf32>
    %c0_204 = arith.constant 0 : index
    %c0_205 = arith.constant 0 : index
    %527 = vector.load %arg8[%c0_204, %c0_205] : memref<64x192xf32, #tpu.memory_space<vmem>>, vector<64x192xf32>
    %cst_206 = arith.constant dense<0.000000e+00> : vector<2x192xf32>
    %528 = tpu.matmul %526, %527, %cst_206 {dimension_numbers = #tpu.dot_dimension_numbers<[1], [0], [0], [1], [0, 0, 1, 1], [], []>} : vector<2x64xf32>, vector<64x192xf32>, vector<2x192xf32> -> vector<2x192xf32>
    %c0_207 = arith.constant 0 : index
    %c0_208 = arith.constant 0 : index
    %529 = vector.load %arg9[%c0_207, %c0_208] : memref<1x192xf32, #tpu.memory_space<vmem>>, vector<1x192xf32>
    %530 = vector.broadcast %529 : vector<1x192xf32> to vector<2x192xf32>
    %531 = arith.addf %528, %530 : vector<2x192xf32>
    %c0_209 = arith.constant 0 : index
    %c0_210 = arith.constant 0 : index
    %532 = vector.load %arg10[%c0_209, %c0_210] : memref<64x192xf32, #tpu.memory_space<vmem>>, vector<64x192xf32>
    %cst_211 = arith.constant dense<0.000000e+00> : vector<2x192xf32>
    %533 = tpu.matmul %465, %532, %cst_211 {dimension_numbers = #tpu.dot_dimension_numbers<[1], [0], [0], [1], [0, 0, 1, 1], [], []>} : vector<2x64xf32>, vector<64x192xf32>, vector<2x192xf32> -> vector<2x192xf32>
    %c0_212 = arith.constant 0 : index
    %c0_213 = arith.constant 0 : index
    %534 = vector.load %arg11[%c0_212, %c0_213] : memref<1x192xf32, #tpu.memory_space<vmem>>, vector<1x192xf32>
    %535 = vector.broadcast %534 : vector<1x192xf32> to vector<2x192xf32>
    %536 = arith.addf %533, %535 : vector<2x192xf32>
    %537 = vector.extract_strided_slice %531 {offsets = [0, 0], sizes = [2, 64], strides = [1, 1]} : vector<2x192xf32> to vector<2x64xf32>
    %538 = vector.extract_strided_slice %536 {offsets = [0, 0], sizes = [2, 64], strides = [1, 1]} : vector<2x192xf32> to vector<2x64xf32>
    %539 = arith.addf %537, %538 : vector<2x64xf32>
    %540 = arith.negf %539 : vector<2x64xf32>
    %541 = math.exp %540 : vector<2x64xf32>
    %cst_214 = arith.constant 1.000000e+00 : f32
    %542 = vector.broadcast %cst_214 : f32 to vector<2x64xf32>
    %543 = arith.addf %542, %541 : vector<2x64xf32>
    %544 = arith.divf %542, %543 : vector<2x64xf32>
    %545 = vector.extract_strided_slice %531 {offsets = [0, 64], sizes = [2, 64], strides = [1, 1]} : vector<2x192xf32> to vector<2x64xf32>
    %546 = vector.extract_strided_slice %536 {offsets = [0, 64], sizes = [2, 64], strides = [1, 1]} : vector<2x192xf32> to vector<2x64xf32>
    %547 = arith.addf %545, %546 : vector<2x64xf32>
    %548 = arith.negf %547 : vector<2x64xf32>
    %549 = math.exp %548 : vector<2x64xf32>
    %cst_215 = arith.constant 1.000000e+00 : f32
    %550 = vector.broadcast %cst_215 : f32 to vector<2x64xf32>
    %551 = arith.addf %550, %549 : vector<2x64xf32>
    %552 = arith.divf %550, %551 : vector<2x64xf32>
    %553 = vector.extract_strided_slice %531 {offsets = [0, 128], sizes = [2, 64], strides = [1, 1]} : vector<2x192xf32> to vector<2x64xf32>
    %554 = vector.extract_strided_slice %536 {offsets = [0, 128], sizes = [2, 64], strides = [1, 1]} : vector<2x192xf32> to vector<2x64xf32>
    %555 = arith.mulf %544, %554 : vector<2x64xf32>
    %556 = arith.addf %553, %555 : vector<2x64xf32>
    %557 = math.tanh %556 : vector<2x64xf32>
    %cst_216 = arith.constant 1.000000e+00 : f32
    %558 = vector.broadcast %cst_216 : f32 to vector<2x64xf32>
    %559 = arith.subf %558, %552 : vector<2x64xf32>
    %560 = arith.mulf %559, %557 : vector<2x64xf32>
    %561 = arith.mulf %552, %465 : vector<2x64xf32>
    %562 = arith.addf %560, %561 : vector<2x64xf32>
    %c0_217 = arith.constant 0 : index
    %c0_218 = arith.constant 0 : index
    %563 = vector.load %arg1[%c0_217, %c0_218] : memref<16x64xf32, #tpu.memory_space<vmem>>, vector<16x64xf32>
    %cst_219 = arith.constant dense<0.000000e+00> : vector<2x16xf32>
    %564 = tpu.matmul %562, %563, %cst_219 {dimension_numbers = #tpu.dot_dimension_numbers<[1], [1], [0], [0], [0, 0, 1, 0], [], []>} : vector<2x64xf32>, vector<16x64xf32>, vector<2x16xf32> -> vector<2x16xf32>
    %c0_220 = arith.constant 0 : index
    %c0_221 = arith.constant 0 : index
    %565 = vector.load %arg2[%c0_220, %c0_221] : memref<2x16xf32, #tpu.memory_space<vmem>>, vector<2x16xf32>
    %566 = arith.addf %564, %565 : vector<2x16xf32>
    %cst_222 = arith.constant dense<0xFF800000> : vector<2xf32>
    %567 = vector.multi_reduction <maximumf>, %566, %cst_222 [1] : vector<2x16xf32> to vector<2xf32>
    %568 = vector.shape_cast %567 : vector<2xf32> to vector<2x1xf32>
    %569 = vector.broadcast %568 : vector<2x1xf32> to vector<2x16xf32>
    %570 = arith.subf %566, %569 : vector<2x16xf32>
    %571 = math.exp %570 : vector<2x16xf32>
    %cst_223 = arith.constant dense<0.000000e+00> : vector<2xf32>
    %572 = vector.multi_reduction <add>, %571, %cst_223 [1] : vector<2x16xf32> to vector<2xf32>
    %573 = vector.shape_cast %572 : vector<2xf32> to vector<2x1xf32>
    %574 = tpu.reciprocal %573 {approx = true} : vector<2x1xf32> -> vector<2x1xf32>
    %575 = vector.broadcast %574 : vector<2x1xf32> to vector<2x16xf32>
    %576 = arith.mulf %571, %575 : vector<2x16xf32>
    %cst_224 = arith.constant dense<0.000000e+00> : vector<2x64xf32>
    %577 = tpu.matmul %576, %563, %cst_224 {dimension_numbers = #tpu.dot_dimension_numbers<[1], [0], [0], [1], [0, 0, 1, 1], [], []>} : vector<2x16xf32>, vector<16x64xf32>, vector<2x64xf32> -> vector<2x64xf32>
    %578 = tpu.concatenate %577, %562 in 1 : vector<2x64xf32>, vector<2x64xf32> -> vector<2x128xf32>
    %c0_225 = arith.constant 0 : index
    %c0_226 = arith.constant 0 : index
    %579 = vector.load %arg12[%c0_225, %c0_226] : memref<128x64xf32, #tpu.memory_space<vmem>>, vector<128x64xf32>
    %cst_227 = arith.constant dense<0.000000e+00> : vector<2x64xf32>
    %580 = tpu.matmul %578, %579, %cst_227 {dimension_numbers = #tpu.dot_dimension_numbers<[1], [0], [0], [1], [0, 0, 1, 1], [], []>} : vector<2x128xf32>, vector<128x64xf32>, vector<2x64xf32> -> vector<2x64xf32>
    %c0_228 = arith.constant 0 : index
    %c0_229 = arith.constant 0 : index
    %581 = vector.load %arg13[%c0_228, %c0_229] : memref<1x64xf32, #tpu.memory_space<vmem>>, vector<1x64xf32>
    %582 = vector.broadcast %581 : vector<1x64xf32> to vector<2x64xf32>
    %583 = arith.addf %580, %582 : vector<2x64xf32>
    %584 = math.tanh %583 : vector<2x64xf32>
    %585 = vector.extract_strided_slice %584 {offsets = [0, 0], sizes = [1, 64], strides = [1, 1]} : vector<2x64xf32> to vector<1x64xf32>
    %586 = vector.extract_strided_slice %584 {offsets = [1, 0], sizes = [1, 64], strides = [1, 1]} : vector<2x64xf32> to vector<1x64xf32>
    %587 = tpu.concatenate %585, %586 in 1 : vector<1x64xf32>, vector<1x64xf32> -> vector<1x128xf32>
    %588 = arith.index_cast %c5_i32 : i32 to index
    %c0_230 = arith.constant 0 : index
    %589 = vector.load %arg14[%588, %c0_230] : memref<8x128xf32, #tpu.memory_space<vmem>>, vector<1x128xf32>
    tpu.vector_store %arg14[%588, %c0_230], %587 {strides = array<i32>} : memref<8x128xf32, #tpu.memory_space<vmem>>, vector<1x128xf32>,
    %c6_i32 = arith.constant 6 : i32
    %c2_i32_231 = arith.constant 2 : i32
    %590 = arith.muli %c6_i32, %c2_i32_231 : i32
    %591 = arith.index_cast %590 : i32 to index
    %c0_232 = arith.constant 0 : index
    %592 = vector.load %arg15[%591, %c0_232] : memref<16x192xf32, #tpu.memory_space<vmem>>, vector<2x192xf32>
    %c0_233 = arith.constant 0 : index
    %c0_234 = arith.constant 0 : index
    %593 = vector.load %arg6[%c0_233, %c0_234] : memref<64x192xf32, #tpu.memory_space<vmem>>, vector<64x192xf32>
    %cst_235 = arith.constant dense<0.000000e+00> : vector<2x192xf32>
    %594 = tpu.matmul %526, %593, %cst_235 {dimension_numbers = #tpu.dot_dimension_numbers<[1], [0], [0], [1], [0, 0, 1, 1], [], []>} : vector<2x64xf32>, vector<64x192xf32>, vector<2x192xf32> -> vector<2x192xf32>
    %c0_236 = arith.constant 0 : index
    %c0_237 = arith.constant 0 : index
    %595 = vector.load %arg7[%c0_236, %c0_237] : memref<1x192xf32, #tpu.memory_space<vmem>>, vector<1x192xf32>
    %596 = vector.broadcast %595 : vector<1x192xf32> to vector<2x192xf32>
    %597 = arith.addf %594, %596 : vector<2x192xf32>
    %598 = vector.extract_strided_slice %592 {offsets = [0, 0], sizes = [2, 64], strides = [1, 1]} : vector<2x192xf32> to vector<2x64xf32>
    %599 = vector.extract_strided_slice %597 {offsets = [0, 0], sizes = [2, 64], strides = [1, 1]} : vector<2x192xf32> to vector<2x64xf32>
    %600 = arith.addf %598, %599 : vector<2x64xf32>
    %601 = arith.negf %600 : vector<2x64xf32>
    %602 = math.exp %601 : vector<2x64xf32>
    %cst_238 = arith.constant 1.000000e+00 : f32
    %603 = vector.broadcast %cst_238 : f32 to vector<2x64xf32>
    %604 = arith.addf %603, %602 : vector<2x64xf32>
    %605 = arith.divf %603, %604 : vector<2x64xf32>
    %606 = vector.extract_strided_slice %592 {offsets = [0, 64], sizes = [2, 64], strides = [1, 1]} : vector<2x192xf32> to vector<2x64xf32>
    %607 = vector.extract_strided_slice %597 {offsets = [0, 64], sizes = [2, 64], strides = [1, 1]} : vector<2x192xf32> to vector<2x64xf32>
    %608 = arith.addf %606, %607 : vector<2x64xf32>
    %609 = arith.negf %608 : vector<2x64xf32>
    %610 = math.exp %609 : vector<2x64xf32>
    %cst_239 = arith.constant 1.000000e+00 : f32
    %611 = vector.broadcast %cst_239 : f32 to vector<2x64xf32>
    %612 = arith.addf %611, %610 : vector<2x64xf32>
    %613 = arith.divf %611, %612 : vector<2x64xf32>
    %614 = vector.extract_strided_slice %592 {offsets = [0, 128], sizes = [2, 64], strides = [1, 1]} : vector<2x192xf32> to vector<2x64xf32>
    %615 = vector.extract_strided_slice %597 {offsets = [0, 128], sizes = [2, 64], strides = [1, 1]} : vector<2x192xf32> to vector<2x64xf32>
    %616 = arith.mulf %605, %615 : vector<2x64xf32>
    %617 = arith.addf %614, %616 : vector<2x64xf32>
    %618 = math.tanh %617 : vector<2x64xf32>
    %cst_240 = arith.constant 1.000000e+00 : f32
    %619 = vector.broadcast %cst_240 : f32 to vector<2x64xf32>
    %620 = arith.subf %619, %613 : vector<2x64xf32>
    %621 = arith.mulf %620, %618 : vector<2x64xf32>
    %622 = arith.mulf %613, %526 : vector<2x64xf32>
    %623 = arith.addf %621, %622 : vector<2x64xf32>
    %c0_241 = arith.constant 0 : index
    %c0_242 = arith.constant 0 : index
    %624 = vector.load %arg8[%c0_241, %c0_242] : memref<64x192xf32, #tpu.memory_space<vmem>>, vector<64x192xf32>
    %cst_243 = arith.constant dense<0.000000e+00> : vector<2x192xf32>
    %625 = tpu.matmul %623, %624, %cst_243 {dimension_numbers = #tpu.dot_dimension_numbers<[1], [0], [0], [1], [0, 0, 1, 1], [], []>} : vector<2x64xf32>, vector<64x192xf32>, vector<2x192xf32> -> vector<2x192xf32>
    %c0_244 = arith.constant 0 : index
    %c0_245 = arith.constant 0 : index
    %626 = vector.load %arg9[%c0_244, %c0_245] : memref<1x192xf32, #tpu.memory_space<vmem>>, vector<1x192xf32>
    %627 = vector.broadcast %626 : vector<1x192xf32> to vector<2x192xf32>
    %628 = arith.addf %625, %627 : vector<2x192xf32>
    %c0_246 = arith.constant 0 : index
    %c0_247 = arith.constant 0 : index
    %629 = vector.load %arg10[%c0_246, %c0_247] : memref<64x192xf32, #tpu.memory_space<vmem>>, vector<64x192xf32>
    %cst_248 = arith.constant dense<0.000000e+00> : vector<2x192xf32>
    %630 = tpu.matmul %562, %629, %cst_248 {dimension_numbers = #tpu.dot_dimension_numbers<[1], [0], [0], [1], [0, 0, 1, 1], [], []>} : vector<2x64xf32>, vector<64x192xf32>, vector<2x192xf32> -> vector<2x192xf32>
    %c0_249 = arith.constant 0 : index
    %c0_250 = arith.constant 0 : index
    %631 = vector.load %arg11[%c0_249, %c0_250] : memref<1x192xf32, #tpu.memory_space<vmem>>, vector<1x192xf32>
    %632 = vector.broadcast %631 : vector<1x192xf32> to vector<2x192xf32>
    %633 = arith.addf %630, %632 : vector<2x192xf32>
    %634 = vector.extract_strided_slice %628 {offsets = [0, 0], sizes = [2, 64], strides = [1, 1]} : vector<2x192xf32> to vector<2x64xf32>
    %635 = vector.extract_strided_slice %633 {offsets = [0, 0], sizes = [2, 64], strides = [1, 1]} : vector<2x192xf32> to vector<2x64xf32>
    %636 = arith.addf %634, %635 : vector<2x64xf32>
    %637 = arith.negf %636 : vector<2x64xf32>
    %638 = math.exp %637 : vector<2x64xf32>
    %cst_251 = arith.constant 1.000000e+00 : f32
    %639 = vector.broadcast %cst_251 : f32 to vector<2x64xf32>
    %640 = arith.addf %639, %638 : vector<2x64xf32>
    %641 = arith.divf %639, %640 : vector<2x64xf32>
    %642 = vector.extract_strided_slice %628 {offsets = [0, 64], sizes = [2, 64], strides = [1, 1]} : vector<2x192xf32> to vector<2x64xf32>
    %643 = vector.extract_strided_slice %633 {offsets = [0, 64], sizes = [2, 64], strides = [1, 1]} : vector<2x192xf32> to vector<2x64xf32>
    %644 = arith.addf %642, %643 : vector<2x64xf32>
    %645 = arith.negf %644 : vector<2x64xf32>
    %646 = math.exp %645 : vector<2x64xf32>
    %cst_252 = arith.constant 1.000000e+00 : f32
    %647 = vector.broadcast %cst_252 : f32 to vector<2x64xf32>
    %648 = arith.addf %647, %646 : vector<2x64xf32>
    %649 = arith.divf %647, %648 : vector<2x64xf32>
    %650 = vector.extract_strided_slice %628 {offsets = [0, 128], sizes = [2, 64], strides = [1, 1]} : vector<2x192xf32> to vector<2x64xf32>
    %651 = vector.extract_strided_slice %633 {offsets = [0, 128], sizes = [2, 64], strides = [1, 1]} : vector<2x192xf32> to vector<2x64xf32>
    %652 = arith.mulf %641, %651 : vector<2x64xf32>
    %653 = arith.addf %650, %652 : vector<2x64xf32>
    %654 = math.tanh %653 : vector<2x64xf32>
    %cst_253 = arith.constant 1.000000e+00 : f32
    %655 = vector.broadcast %cst_253 : f32 to vector<2x64xf32>
    %656 = arith.subf %655, %649 : vector<2x64xf32>
    %657 = arith.mulf %656, %654 : vector<2x64xf32>
    %658 = arith.mulf %649, %562 : vector<2x64xf32>
    %659 = arith.addf %657, %658 : vector<2x64xf32>
    %c0_254 = arith.constant 0 : index
    %c0_255 = arith.constant 0 : index
    %660 = vector.load %arg1[%c0_254, %c0_255] : memref<16x64xf32, #tpu.memory_space<vmem>>, vector<16x64xf32>
    %cst_256 = arith.constant dense<0.000000e+00> : vector<2x16xf32>
    %661 = tpu.matmul %659, %660, %cst_256 {dimension_numbers = #tpu.dot_dimension_numbers<[1], [1], [0], [0], [0, 0, 1, 0], [], []>} : vector<2x64xf32>, vector<16x64xf32>, vector<2x16xf32> -> vector<2x16xf32>
    %c0_257 = arith.constant 0 : index
    %c0_258 = arith.constant 0 : index
    %662 = vector.load %arg2[%c0_257, %c0_258] : memref<2x16xf32, #tpu.memory_space<vmem>>, vector<2x16xf32>
    %663 = arith.addf %661, %662 : vector<2x16xf32>
    %cst_259 = arith.constant dense<0xFF800000> : vector<2xf32>
    %664 = vector.multi_reduction <maximumf>, %663, %cst_259 [1] : vector<2x16xf32> to vector<2xf32>
    %665 = vector.shape_cast %664 : vector<2xf32> to vector<2x1xf32>
    %666 = vector.broadcast %665 : vector<2x1xf32> to vector<2x16xf32>
    %667 = arith.subf %663, %666 : vector<2x16xf32>
    %668 = math.exp %667 : vector<2x16xf32>
    %cst_260 = arith.constant dense<0.000000e+00> : vector<2xf32>
    %669 = vector.multi_reduction <add>, %668, %cst_260 [1] : vector<2x16xf32> to vector<2xf32>
    %670 = vector.shape_cast %669 : vector<2xf32> to vector<2x1xf32>
    %671 = tpu.reciprocal %670 {approx = true} : vector<2x1xf32> -> vector<2x1xf32>
    %672 = vector.broadcast %671 : vector<2x1xf32> to vector<2x16xf32>
    %673 = arith.mulf %668, %672 : vector<2x16xf32>
    %cst_261 = arith.constant dense<0.000000e+00> : vector<2x64xf32>
    %674 = tpu.matmul %673, %660, %cst_261 {dimension_numbers = #tpu.dot_dimension_numbers<[1], [0], [0], [1], [0, 0, 1, 1], [], []>} : vector<2x16xf32>, vector<16x64xf32>, vector<2x64xf32> -> vector<2x64xf32>
    %675 = tpu.concatenate %674, %659 in 1 : vector<2x64xf32>, vector<2x64xf32> -> vector<2x128xf32>
    %c0_262 = arith.constant 0 : index
    %c0_263 = arith.constant 0 : index
    %676 = vector.load %arg12[%c0_262, %c0_263] : memref<128x64xf32, #tpu.memory_space<vmem>>, vector<128x64xf32>
    %cst_264 = arith.constant dense<0.000000e+00> : vector<2x64xf32>
    %677 = tpu.matmul %675, %676, %cst_264 {dimension_numbers = #tpu.dot_dimension_numbers<[1], [0], [0], [1], [0, 0, 1, 1], [], []>} : vector<2x128xf32>, vector<128x64xf32>, vector<2x64xf32> -> vector<2x64xf32>
    %c0_265 = arith.constant 0 : index
    %c0_266 = arith.constant 0 : index
    %678 = vector.load %arg13[%c0_265, %c0_266] : memref<1x64xf32, #tpu.memory_space<vmem>>, vector<1x64xf32>
    %679 = vector.broadcast %678 : vector<1x64xf32> to vector<2x64xf32>
    %680 = arith.addf %677, %679 : vector<2x64xf32>
    %681 = math.tanh %680 : vector<2x64xf32>
    %682 = vector.extract_strided_slice %681 {offsets = [0, 0], sizes = [1, 64], strides = [1, 1]} : vector<2x64xf32> to vector<1x64xf32>
    %683 = vector.extract_strided_slice %681 {offsets = [1, 0], sizes = [1, 64], strides = [1, 1]} : vector<2x64xf32> to vector<1x64xf32>
    %684 = tpu.concatenate %682, %683 in 1 : vector<1x64xf32>, vector<1x64xf32> -> vector<1x128xf32>
    %685 = arith.index_cast %c6_i32 : i32 to index
    %c0_267 = arith.constant 0 : index
    %686 = vector.load %arg14[%685, %c0_267] : memref<8x128xf32, #tpu.memory_space<vmem>>, vector<1x128xf32>
    tpu.vector_store %arg14[%685, %c0_267], %684 {strides = array<i32>} : memref<8x128xf32, #tpu.memory_space<vmem>>, vector<1x128xf32>,
    %c7_i32 = arith.constant 7 : i32
    %c2_i32_268 = arith.constant 2 : i32
    %687 = arith.muli %c7_i32, %c2_i32_268 : i32
    %688 = arith.index_cast %687 : i32 to index
    %c0_269 = arith.constant 0 : index
    %689 = vector.load %arg15[%688, %c0_269] : memref<16x192xf32, #tpu.memory_space<vmem>>, vector<2x192xf32>
    %c0_270 = arith.constant 0 : index
    %c0_271 = arith.constant 0 : index
    %690 = vector.load %arg6[%c0_270, %c0_271] : memref<64x192xf32, #tpu.memory_space<vmem>>, vector<64x192xf32>
    %cst_272 = arith.constant dense<0.000000e+00> : vector<2x192xf32>
    %691 = tpu.matmul %623, %690, %cst_272 {dimension_numbers = #tpu.dot_dimension_numbers<[1], [0], [0], [1], [0, 0, 1, 1], [], []>} : vector<2x64xf32>, vector<64x192xf32>, vector<2x192xf32> -> vector<2x192xf32>
    %c0_273 = arith.constant 0 : index
    %c0_274 = arith.constant 0 : index
    %692 = vector.load %arg7[%c0_273, %c0_274] : memref<1x192xf32, #tpu.memory_space<vmem>>, vector<1x192xf32>
    %693 = vector.broadcast %692 : vector<1x192xf32> to vector<2x192xf32>
    %694 = arith.addf %691, %693 : vector<2x192xf32>
    %695 = vector.extract_strided_slice %689 {offsets = [0, 0], sizes = [2, 64], strides = [1, 1]} : vector<2x192xf32> to vector<2x64xf32>
    %696 = vector.extract_strided_slice %694 {offsets = [0, 0], sizes = [2, 64], strides = [1, 1]} : vector<2x192xf32> to vector<2x64xf32>
    %697 = arith.addf %695, %696 : vector<2x64xf32>
    %698 = arith.negf %697 : vector<2x64xf32>
    %699 = math.exp %698 : vector<2x64xf32>
    %cst_275 = arith.constant 1.000000e+00 : f32
    %700 = vector.broadcast %cst_275 : f32 to vector<2x64xf32>
    %701 = arith.addf %700, %699 : vector<2x64xf32>
    %702 = arith.divf %700, %701 : vector<2x64xf32>
    %703 = vector.extract_strided_slice %689 {offsets = [0, 64], sizes = [2, 64], strides = [1, 1]} : vector<2x192xf32> to vector<2x64xf32>
    %704 = vector.extract_strided_slice %694 {offsets = [0, 64], sizes = [2, 64], strides = [1, 1]} : vector<2x192xf32> to vector<2x64xf32>
    %705 = arith.addf %703, %704 : vector<2x64xf32>
    %706 = arith.negf %705 : vector<2x64xf32>
    %707 = math.exp %706 : vector<2x64xf32>
    %cst_276 = arith.constant 1.000000e+00 : f32
    %708 = vector.broadcast %cst_276 : f32 to vector<2x64xf32>
    %709 = arith.addf %708, %707 : vector<2x64xf32>
    %710 = arith.divf %708, %709 : vector<2x64xf32>
    %711 = vector.extract_strided_slice %689 {offsets = [0, 128], sizes = [2, 64], strides = [1, 1]} : vector<2x192xf32> to vector<2x64xf32>
    %712 = vector.extract_strided_slice %694 {offsets = [0, 128], sizes = [2, 64], strides = [1, 1]} : vector<2x192xf32> to vector<2x64xf32>
    %713 = arith.mulf %702, %712 : vector<2x64xf32>
    %714 = arith.addf %711, %713 : vector<2x64xf32>
    %715 = math.tanh %714 : vector<2x64xf32>
    %cst_277 = arith.constant 1.000000e+00 : f32
    %716 = vector.broadcast %cst_277 : f32 to vector<2x64xf32>
    %717 = arith.subf %716, %710 : vector<2x64xf32>
    %718 = arith.mulf %717, %715 : vector<2x64xf32>
    %719 = arith.mulf %710, %623 : vector<2x64xf32>
    %720 = arith.addf %718, %719 : vector<2x64xf32>
    %c0_278 = arith.constant 0 : index
    %c0_279 = arith.constant 0 : index
    %721 = vector.load %arg8[%c0_278, %c0_279] : memref<64x192xf32, #tpu.memory_space<vmem>>, vector<64x192xf32>
    %cst_280 = arith.constant dense<0.000000e+00> : vector<2x192xf32>
    %722 = tpu.matmul %720, %721, %cst_280 {dimension_numbers = #tpu.dot_dimension_numbers<[1], [0], [0], [1], [0, 0, 1, 1], [], []>} : vector<2x64xf32>, vector<64x192xf32>, vector<2x192xf32> -> vector<2x192xf32>
    %c0_281 = arith.constant 0 : index
    %c0_282 = arith.constant 0 : index
    %723 = vector.load %arg9[%c0_281, %c0_282] : memref<1x192xf32, #tpu.memory_space<vmem>>, vector<1x192xf32>
    %724 = vector.broadcast %723 : vector<1x192xf32> to vector<2x192xf32>
    %725 = arith.addf %722, %724 : vector<2x192xf32>
    %c0_283 = arith.constant 0 : index
    %c0_284 = arith.constant 0 : index
    %726 = vector.load %arg10[%c0_283, %c0_284] : memref<64x192xf32, #tpu.memory_space<vmem>>, vector<64x192xf32>
    %cst_285 = arith.constant dense<0.000000e+00> : vector<2x192xf32>
    %727 = tpu.matmul %659, %726, %cst_285 {dimension_numbers = #tpu.dot_dimension_numbers<[1], [0], [0], [1], [0, 0, 1, 1], [], []>} : vector<2x64xf32>, vector<64x192xf32>, vector<2x192xf32> -> vector<2x192xf32>
    %c0_286 = arith.constant 0 : index
    %c0_287 = arith.constant 0 : index
    %728 = vector.load %arg11[%c0_286, %c0_287] : memref<1x192xf32, #tpu.memory_space<vmem>>, vector<1x192xf32>
    %729 = vector.broadcast %728 : vector<1x192xf32> to vector<2x192xf32>
    %730 = arith.addf %727, %729 : vector<2x192xf32>
    %731 = vector.extract_strided_slice %725 {offsets = [0, 0], sizes = [2, 64], strides = [1, 1]} : vector<2x192xf32> to vector<2x64xf32>
    %732 = vector.extract_strided_slice %730 {offsets = [0, 0], sizes = [2, 64], strides = [1, 1]} : vector<2x192xf32> to vector<2x64xf32>
    %733 = arith.addf %731, %732 : vector<2x64xf32>
    %734 = arith.negf %733 : vector<2x64xf32>
    %735 = math.exp %734 : vector<2x64xf32>
    %cst_288 = arith.constant 1.000000e+00 : f32
    %736 = vector.broadcast %cst_288 : f32 to vector<2x64xf32>
    %737 = arith.addf %736, %735 : vector<2x64xf32>
    %738 = arith.divf %736, %737 : vector<2x64xf32>
    %739 = vector.extract_strided_slice %725 {offsets = [0, 64], sizes = [2, 64], strides = [1, 1]} : vector<2x192xf32> to vector<2x64xf32>
    %740 = vector.extract_strided_slice %730 {offsets = [0, 64], sizes = [2, 64], strides = [1, 1]} : vector<2x192xf32> to vector<2x64xf32>
    %741 = arith.addf %739, %740 : vector<2x64xf32>
    %742 = arith.negf %741 : vector<2x64xf32>
    %743 = math.exp %742 : vector<2x64xf32>
    %cst_289 = arith.constant 1.000000e+00 : f32
    %744 = vector.broadcast %cst_289 : f32 to vector<2x64xf32>
    %745 = arith.addf %744, %743 : vector<2x64xf32>
    %746 = arith.divf %744, %745 : vector<2x64xf32>
    %747 = vector.extract_strided_slice %725 {offsets = [0, 128], sizes = [2, 64], strides = [1, 1]} : vector<2x192xf32> to vector<2x64xf32>
    %748 = vector.extract_strided_slice %730 {offsets = [0, 128], sizes = [2, 64], strides = [1, 1]} : vector<2x192xf32> to vector<2x64xf32>
    %749 = arith.mulf %738, %748 : vector<2x64xf32>
    %750 = arith.addf %747, %749 : vector<2x64xf32>
    %751 = math.tanh %750 : vector<2x64xf32>
    %cst_290 = arith.constant 1.000000e+00 : f32
    %752 = vector.broadcast %cst_290 : f32 to vector<2x64xf32>
    %753 = arith.subf %752, %746 : vector<2x64xf32>
    %754 = arith.mulf %753, %751 : vector<2x64xf32>
    %755 = arith.mulf %746, %659 : vector<2x64xf32>
    %756 = arith.addf %754, %755 : vector<2x64xf32>
    %c0_291 = arith.constant 0 : index
    %c0_292 = arith.constant 0 : index
    %757 = vector.load %arg1[%c0_291, %c0_292] : memref<16x64xf32, #tpu.memory_space<vmem>>, vector<16x64xf32>
    %cst_293 = arith.constant dense<0.000000e+00> : vector<2x16xf32>
    %758 = tpu.matmul %756, %757, %cst_293 {dimension_numbers = #tpu.dot_dimension_numbers<[1], [1], [0], [0], [0, 0, 1, 0], [], []>} : vector<2x64xf32>, vector<16x64xf32>, vector<2x16xf32> -> vector<2x16xf32>
    %c0_294 = arith.constant 0 : index
    %c0_295 = arith.constant 0 : index
    %759 = vector.load %arg2[%c0_294, %c0_295] : memref<2x16xf32, #tpu.memory_space<vmem>>, vector<2x16xf32>
    %760 = arith.addf %758, %759 : vector<2x16xf32>
    %cst_296 = arith.constant dense<0xFF800000> : vector<2xf32>
    %761 = vector.multi_reduction <maximumf>, %760, %cst_296 [1] : vector<2x16xf32> to vector<2xf32>
    %762 = vector.shape_cast %761 : vector<2xf32> to vector<2x1xf32>
    %763 = vector.broadcast %762 : vector<2x1xf32> to vector<2x16xf32>
    %764 = arith.subf %760, %763 : vector<2x16xf32>
    %765 = math.exp %764 : vector<2x16xf32>
    %cst_297 = arith.constant dense<0.000000e+00> : vector<2xf32>
    %766 = vector.multi_reduction <add>, %765, %cst_297 [1] : vector<2x16xf32> to vector<2xf32>
    %767 = vector.shape_cast %766 : vector<2xf32> to vector<2x1xf32>
    %768 = tpu.reciprocal %767 {approx = true} : vector<2x1xf32> -> vector<2x1xf32>
    %769 = vector.broadcast %768 : vector<2x1xf32> to vector<2x16xf32>
    %770 = arith.mulf %765, %769 : vector<2x16xf32>
    %cst_298 = arith.constant dense<0.000000e+00> : vector<2x64xf32>
    %771 = tpu.matmul %770, %757, %cst_298 {dimension_numbers = #tpu.dot_dimension_numbers<[1], [0], [0], [1], [0, 0, 1, 1], [], []>} : vector<2x16xf32>, vector<16x64xf32>, vector<2x64xf32> -> vector<2x64xf32>
    %772 = tpu.concatenate %771, %756 in 1 : vector<2x64xf32>, vector<2x64xf32> -> vector<2x128xf32>
    %c0_299 = arith.constant 0 : index
    %c0_300 = arith.constant 0 : index
    %773 = vector.load %arg12[%c0_299, %c0_300] : memref<128x64xf32, #tpu.memory_space<vmem>>, vector<128x64xf32>
    %cst_301 = arith.constant dense<0.000000e+00> : vector<2x64xf32>
    %774 = tpu.matmul %772, %773, %cst_301 {dimension_numbers = #tpu.dot_dimension_numbers<[1], [0], [0], [1], [0, 0, 1, 1], [], []>} : vector<2x128xf32>, vector<128x64xf32>, vector<2x64xf32> -> vector<2x64xf32>
    %c0_302 = arith.constant 0 : index
    %c0_303 = arith.constant 0 : index
    %775 = vector.load %arg13[%c0_302, %c0_303] : memref<1x64xf32, #tpu.memory_space<vmem>>, vector<1x64xf32>
    %776 = vector.broadcast %775 : vector<1x64xf32> to vector<2x64xf32>
    %777 = arith.addf %774, %776 : vector<2x64xf32>
    %778 = math.tanh %777 : vector<2x64xf32>
    %779 = vector.extract_strided_slice %778 {offsets = [0, 0], sizes = [1, 64], strides = [1, 1]} : vector<2x64xf32> to vector<1x64xf32>
    %780 = vector.extract_strided_slice %778 {offsets = [1, 0], sizes = [1, 64], strides = [1, 1]} : vector<2x64xf32> to vector<1x64xf32>
    %781 = tpu.concatenate %779, %780 in 1 : vector<1x64xf32>, vector<1x64xf32> -> vector<1x128xf32>
    %782 = arith.index_cast %c7_i32 : i32 to index
    %c0_304 = arith.constant 0 : index
    %783 = vector.load %arg14[%782, %c0_304] : memref<8x128xf32, #tpu.memory_space<vmem>>, vector<1x128xf32>
    tpu.vector_store %arg14[%782, %c0_304], %781 {strides = array<i32>} : memref<8x128xf32, #tpu.memory_space<vmem>>, vector<1x128xf32>,
    %c8_i32 = arith.constant 8 : i32
    return
  }
}

</mosaic_0001>

<llo_original>
// kernel: reverse
$region0: #{reverse}
  %s0 = inlined_call_operand.vmem [shape: f32[16,32], index: 0, kind: input, shape index: {}]
  %s1 = inlined_call_operand.vmem [shape: f32[16,32], index: 1, kind: output, shape index: {}]
  $region1: #{reverse} parent=0
    #allocation0 [shape = 'u8[8192]{0}', space=vmem, size = 0x2000, scoped, tag = 'operand span for operand 0']
    #allocation1 [shape = 'u8[8192]{0}', space=vmem, size = 0x2000, scoped, tag = 'operand span for operand 1']
    // Predicated region
    $region2: #{reverse} parent=1 // pred_check
      _
    $region3: #{reverse} parent=1 // pred_check_branch
      %3 = sbr.rel (0) target = $region5
    $region4: #{reverse} parent=1 // pred_region
      // Predicated region
      $region6: #{reverse} parent=4 // pred_check
        _
      $region7: #{reverse} parent=4 // pred_check_branch
        %5 = sbr.rel (0) target = $region9
      $region8: #{reverse} parent=4 // pred_region
        // Predicated region
        $region21: #{reverse} parent=8 // pred_check
          _
        $region22: #{reverse} parent=8 // pred_check_branch
          %23 = sbr.rel (0) target = $region24
        $region23: #{reverse} parent=8 // pred_region
          loop: start=0, step=1, limit=1
          $region25: #{reverse} parent=23 // loop_pre_header
            _
          $region26: #{reverse} parent=23 // loop_header
            %s25 = sphi 0, %s29
            %p26 = scmp.ge.s32.totalorder %s25, 1
            %s30 = sphi %s0, %s0
            %s31 = sphi [#allocation0], [#allocation0]
          $region27: #{reverse} parent=23 // loop_header_branch
            %28 = sbr.rel (%p26) target = $region31
          $region28: #{reverse} parent=23 // loop_body
            %v32 = vld [vmem:[%s30] sm:$0xff]
            %33 = vst [vmem:[%s31] sm:$0xff] %v32
            %v34 = vld [vmem:[%s30 + $0x8] sm:$0xff]
            %35 = vst [vmem:[%s31 + $0x8] sm:$0xff] %v34
          $region29: #{reverse} parent=23 // loop_footer
            %s29 = sadd.s32 1, %s25
          $region30: #{reverse} parent=23 // loop_footer_branch
            %24 = sbr.rel target = $region26
          $region31: #{reverse} parent=23 // loop_exit
            _
        $region24: #{reverse} parent=8 // pred_fallthru
          _
        // Predicated region
        $region32: #{reverse} parent=8 // pred_check
          _
        $region33: #{reverse} parent=8 // pred_check_branch
          %37 = sbr.rel target = $region35
        $region34: #{reverse} parent=8 // pred_region
          _
        $region35: #{reverse} parent=8 // pred_fallthru
          _
      $region9: #{reverse} parent=4 // pred_fallthru
        _
      // Predicated region
      $region10: #{reverse} parent=4 // pred_check
        _
      $region11: #{reverse} parent=4 // pred_check_branch
        %7 = sbr.rel target = $region13
      $region12: #{reverse} parent=4 // pred_region
        %s9 = ssub.s32 256, 1
        loop: start=0, step=1, limit=1
        $region14: #{reverse} parent=12 // loop_pre_header
          _
        $region15: #{reverse} parent=12 // loop_header
          %s11 = sphi 0, %s15
          %p12 = scmp.ge.s32.totalorder %s11, 1
          %s16 = sphi %s0, %s0
          %s17 = sphi [#allocation0], [#allocation0]
        $region16: #{reverse} parent=12 // loop_header_branch
          %14 = sbr.rel (%p12) target = $region20
        $region17: #{reverse} parent=12 // loop_body
          %v18 = vld [vmem:[%s16] sm:%s9]
          %19 = vst [vmem:[%s17] sm:%s9] %v18
          %v20 = vld [vmem:[%s16 + $0x8] sm:%s9]
          %21 = vst [vmem:[%s17 + $0x8] sm:%s9] %v20
        $region18: #{reverse} parent=12 // loop_footer
          %s15 = sadd.s32 1, %s11
        $region19: #{reverse} parent=12 // loop_footer_branch
          %10 = sbr.rel target = $region15
        $region20: #{reverse} parent=12 // loop_exit
          _
      $region13: #{reverse} parent=4 // pred_fallthru
        _
    $region5: #{reverse} parent=1 // pred_fallthru
      _
    %38 = vnop
    %s39 = scalar_lea.vmem [#allocation0], 8
    %s40 = scalar_lea.vmem %s39, 7 [#allocation0]
    %v41 = vld [vmem:[%s40] ss:$-1 sm:$0xff]
    %42 = vst [vmem:[#allocation1] sm:$0xff] %v41
    %s43 = scalar_lea.vmem [#allocation1], 8
    %s44 = scalar_lea.vmem [#allocation0], 7
    %v45 = vld [vmem:[%s44] ss:$-1 sm:$0xff]
    %46 = vst [vmem:[%s43] sm:$0xff] %v45
    // Predicated region
    $region36: #{reverse} parent=1 // pred_check
      _
    $region37: #{reverse} parent=1 // pred_check_branch
      %48 = sbr.rel (0) target = $region39
    $region38: #{reverse} parent=1 // pred_region
      // Predicated region
      $region40: #{reverse} parent=38 // pred_check
        _
      $region41: #{reverse} parent=38 // pred_check_branch
        %50 = sbr.rel (0) target = $region43
      $region42: #{reverse} parent=38 // pred_region
        // Predicated region
        $region55: #{reverse} parent=42 // pred_check
          _
        $region56: #{reverse} parent=42 // pred_check_branch
          %68 = sbr.rel (0) target = $region58
        $region57: #{reverse} parent=42 // pred_region
          loop: start=0, step=1, limit=1
          $region59: #{reverse} parent=57 // loop_pre_header
            _
          $region60: #{reverse} parent=57 // loop_header
            %s70 = sphi 0, %s74
            %p71 = scmp.ge.s32.totalorder %s70, 1
            %s75 = sphi [#allocation1], [#allocation1]
            %s76 = sphi %s1, %s1
          $region61: #{reverse} parent=57 // loop_header_branch
            %73 = sbr.rel (%p71) target = $region65
          $region62: #{reverse} parent=57 // loop_body
            %v77 = vld [vmem:[%s75] sm:$0xff]
            %78 = vst [vmem:[%s76] sm:$0xff] %v77
            %v79 = vld [vmem:[%s75 + $0x8] sm:$0xff]
            %80 = vst [vmem:[%s76 + $0x8] sm:$0xff] %v79
          $region63: #{reverse} parent=57 // loop_footer
            %s74 = sadd.s32 1, %s70
          $region64: #{reverse} parent=57 // loop_footer_branch
            %69 = sbr.rel target = $region60
          $region65: #{reverse} parent=57 // loop_exit
            _
        $region58: #{reverse} parent=42 // pred_fallthru
          _
        // Predicated region
        $region66: #{reverse} parent=42 // pred_check
          _
        $region67: #{reverse} parent=42 // pred_check_branch
          %82 = sbr.rel target = $region69
        $region68: #{reverse} parent=42 // pred_region
          _
        $region69: #{reverse} parent=42 // pred_fallthru
          _
      $region43: #{reverse} parent=38 // pred_fallthru
        _
      // Predicated region
      $region44: #{reverse} parent=38 // pred_check
        _
      $region45: #{reverse} parent=38 // pred_check_branch
        %52 = sbr.rel target = $region47
      $region46: #{reverse} parent=38 // pred_region
        %s54 = ssub.s32 256, 1
        loop: start=0, step=1, limit=1
        $region48: #{reverse} parent=46 // loop_pre_header
          _
        $region49: #{reverse} parent=46 // loop_header
          %s56 = sphi 0, %s60
          %p57 = scmp.ge.s32.totalorder %s56, 1
          %s61 = sphi [#allocation1], [#allocation1]
          %s62 = sphi %s1, %s1
        $region50: #{reverse} parent=46 // loop_header_branch
          %59 = sbr.rel (%p57) target = $region54
        $region51: #{reverse} parent=46 // loop_body
          %v63 = vld [vmem:[%s61] sm:%s54]
          %64 = vst [vmem:[%s62] sm:%s54] %v63
          %v65 = vld [vmem:[%s61 + $0x8] sm:%s54]
          %66 = vst [vmem:[%s62 + $0x8] sm:%s54] %v65
        $region52: #{reverse} parent=46 // loop_footer
          %s60 = sadd.s32 1, %s56
        $region53: #{reverse} parent=46 // loop_footer_branch
          %55 = sbr.rel target = $region49
        $region54: #{reverse} parent=46 // loop_exit
          _
      $region47: #{reverse} parent=38 // pred_fallthru
        _
    $region39: #{reverse} parent=1 // pred_fallthru
      _
    %83 = vnop

// kernel: modal_attention_bidir_gru_decoder.1
$region0: #{modal_attention_bidir_gru_decoder.1}
  #allocation0 [shape = 'u32[]', space=smem, size = 0x4, offset = 0x4, fixed_abs, tag = 'smem constant byte address 0x4 - core index']
  #allocation1 [shape = 'u32[144,128]{1,0:T(1,128)}', space=vmem, size = 0x12000, scoped, tag = 'internal scratch']
  #allocation2 [shape = 'f32[16,192]{1,0:T(8,128)}', space=vmem, size = 0x4000, scoped, tag = 'scratch operand']
  %s0 = inlined_call_operand.vmem [shape: f32[16,16], index: 0, kind: input, shape index: {}]
  %s1 = inlined_call_operand.vmem [shape: f32[16,64], index: 1, kind: input, shape index: {}]
  %s2 = inlined_call_operand.vmem [shape: f32[2,16], index: 2, kind: input, shape index: {}]
  %s3 = inlined_call_operand.vmem [shape: f32[2,64], index: 3, kind: input, shape index: {}]
  %s4 = inlined_call_operand.vmem [shape: f32[16,192], index: 4, kind: input, shape index: {}]
  %s5 = inlined_call_operand.vmem [shape: f32[1,192], index: 5, kind: input, shape index: {}]
  %s6 = inlined_call_operand.vmem [shape: f32[64,192], index: 6, kind: input, shape index: {}]
  %s7 = inlined_call_operand.vmem [shape: f32[1,192], index: 7, kind: input, shape index: {}]
  %s8 = inlined_call_operand.vmem [shape: f32[64,192], index: 8, kind: input, shape index: {}]
  %s9 = inlined_call_operand.vmem [shape: f32[1,192], index: 9, kind: input, shape index: {}]
  %s10 = inlined_call_operand.vmem [shape: f32[64,192], index: 10, kind: input, shape index: {}]
  %s11 = inlined_call_operand.vmem [shape: f32[1,192], index: 11, kind: input, shape index: {}]
  %s12 = inlined_call_operand.vmem [shape: f32[128,64], index: 12, kind: input, shape index: {}]
  %s13 = inlined_call_operand.vmem [shape: f32[1,64], index: 13, kind: input, shape index: {}]
  %s14 = inlined_call_operand.vmem [shape: f32[8,128], index: 14, kind: output, shape index: {}]
  %s15 = sld [smem:[#allocation0]]
  $region66: #{modal_attention_bidir_gru_decoder.1} parent=0
    _
  %s17 = ssub.s32 1, %s15
  %s18 = scalar_select 0, %s17, %s15
  // Predicated region
  $region2: #{modal_attention_bidir_gru_decoder.1} parent=0 // pred_check
    _
  $region3: #{modal_attention_bidir_gru_decoder.1} parent=0 // pred_check_branch
    %20 = sbr.rel (0) target = $region5
  $region4: #{modal_attention_bidir_gru_decoder.1} parent=0 // pred_region
    _
  $region5: #{modal_attention_bidir_gru_decoder.1} parent=0 // pred_fallthru
    _
  // Predicated region
  $region6: #{modal_attention_bidir_gru_decoder.1} parent=0 // pred_check
    _
  $region7: #{modal_attention_bidir_gru_decoder.1} parent=0 // pred_check_branch
    %22 = sbr.rel (0) target = $region9
  $region8: #{modal_attention_bidir_gru_decoder.1} parent=0 // pred_region
    _
  $region9: #{modal_attention_bidir_gru_decoder.1} parent=0 // pred_fallthru
    _
  // Predicated region
  $region10: #{modal_attention_bidir_gru_decoder.1} parent=0 // pred_check
    _
  $region11: #{modal_attention_bidir_gru_decoder.1} parent=0 // pred_check_branch
    %24 = sbr.rel (0) target = $region13
  $region12: #{modal_attention_bidir_gru_decoder.1} parent=0 // pred_region
    _
  $region13: #{modal_attention_bidir_gru_decoder.1} parent=0 // pred_fallthru
    _
  // Predicated region
  $region14: #{modal_attention_bidir_gru_decoder.1} parent=0 // pred_check
    _
  $region15: #{modal_attention_bidir_gru_decoder.1} parent=0 // pred_check_branch
    %26 = sbr.rel (0) target = $region17
  $region16: #{modal_attention_bidir_gru_decoder.1} parent=0 // pred_region
    _
  $region17: #{modal_attention_bidir_gru_decoder.1} parent=0 // pred_fallthru
    _
  // Predicated region
  $region18: #{modal_attention_bidir_gru_decoder.1} parent=0 // pred_check
    _
  $region19: #{modal_attention_bidir_gru_decoder.1} parent=0 // pred_check_branch
    %28 = sbr.rel (0) target = $region21
  $region20: #{modal_attention_bidir_gru_decoder.1} parent=0 // pred_region
    _
  $region21: #{modal_attention_bidir_gru_decoder.1} parent=0 // pred_fallthru
    _
  // Predicated region
  $region22: #{modal_attention_bidir_gru_decoder.1} parent=0 // pred_check
    _
  $region23: #{modal_attention_bidir_gru_decoder.1} parent=0 // pred_check_branch
    %30 = sbr.rel (0) target = $region25
  $region24: #{modal_attention_bidir_gru_decoder.1} parent=0 // pred_region
    _
  $region25: #{modal_attention_bidir_gru_decoder.1} parent=0 // pred_fallthru
    _
  // Predicated region
  $region26: #{modal_attention_bidir_gru_decoder.1} parent=0 // pred_check
    _
  $region27: #{modal_attention_bidir_gru_decoder.1} parent=0 // pred_check_branch
    %32 = sbr.rel (0) target = $region29
  $region28: #{modal_attention_bidir_gru_decoder.1} parent=0 // pred_region
    _
  $region29: #{modal_attention_bidir_gru_decoder.1} parent=0 // pred_fallthru
    _
  // Predicated region
  $region30: #{modal_attention_bidir_gru_decoder.1} parent=0 // pred_check
    _
  $region31: #{modal_attention_bidir_gru_decoder.1} parent=0 // pred_check_branch
    %34 = sbr.rel (0) target = $region33
  $region32: #{modal_attention_bidir_gru_decoder.1} parent=0 // pred_region
    _
  $region33: #{modal_attention_bidir_gru_decoder.1} parent=0 // pred_fallthru
    _
  // Predicated region
  $region34: #{modal_attention_bidir_gru_decoder.1} parent=0 // pred_check
    _
  $region35: #{modal_attention_bidir_gru_decoder.1} parent=0 // pred_check_branch
    %36 = sbr.rel (0) target = $region37
  $region36: #{modal_attention_bidir_gru_decoder.1} parent=0 // pred_region
    _
  $region37: #{modal_attention_bidir_gru_decoder.1} parent=0 // pred_fallthru
    _
  // Predicated region
  $region38: #{modal_attention_bidir_gru_decoder.1} parent=0 // pred_check
    _
  $region39: #{modal_attention_bidir_gru_decoder.1} parent=0 // pred_check_branch
    %38 = sbr.rel (0) target = $region41
  $region40: #{modal_attention_bidir_gru_decoder.1} parent=0 // pred_region
    _
  $region41: #{modal_attention_bidir_gru_decoder.1} parent=0 // pred_fallthru
    _
  // Predicated region
  $region42: #{modal_attention_bidir_gru_decoder.1} parent=0 // pred_check
    _
  $region43: #{modal_attention_bidir_gru_decoder.1} parent=0 // pred_check_branch
    %40 = sbr.rel (0) target = $region45
  $region44: #{modal_attention_bidir_gru_decoder.1} parent=0 // pred_region
    _
  $region45: #{modal_attention_bidir_gru_decoder.1} parent=0 // pred_fallthru
    _
  // Predicated region
  $region46: #{modal_attention_bidir_gru_decoder.1} parent=0 // pred_check
    _
  $region47: #{modal_attention_bidir_gru_decoder.1} parent=0 // pred_check_branch
    %42 = sbr.rel (0) target = $region49
  $region48: #{modal_attention_bidir_gru_decoder.1} parent=0 // pred_region
    _
  $region49: #{modal_attention_bidir_gru_decoder.1} parent=0 // pred_fallthru
    _
  // Predicated region
  $region50: #{modal_attention_bidir_gru_decoder.1} parent=0 // pred_check
    _
  $region51: #{modal_attention_bidir_gru_decoder.1} parent=0 // pred_check_branch
    %44 = sbr.rel (0) target = $region53
  $region52: #{modal_attention_bidir_gru_decoder.1} parent=0 // pred_region
    _
  $region53: #{modal_attention_bidir_gru_decoder.1} parent=0 // pred_fallthru
    _
  // Predicated region
  $region54: #{modal_attention_bidir_gru_decoder.1} parent=0 // pred_check
    _
  $region55: #{modal_attention_bidir_gru_decoder.1} parent=0 // pred_check_branch
    %46 = sbr.rel (0) target = $region57
  $region56: #{modal_attention_bidir_gru_decoder.1} parent=0 // pred_region
    _
  $region57: #{modal_attention_bidir_gru_decoder.1} parent=0 // pred_fallthru
    _
  %v47 = vld [vmem:[%s0] sm:$0xff]
  %v48 = vld [vmem:[%s0 + $0x8] sm:$0xff]
  %v49 = vld [vmem:[%s4] sm:$0xff]
  %v50 = vld [vmem:[%s4 + $0x8] sm:$0xff]
  %v51 = vld [vmem:[%s4 + $0x10] sm:$0xff]
  %v52 = vld [vmem:[%s4 + $0x18] sm:$0xff]
  %v53 = vld [vmem:[%s5] sm:$0x3]
  %v55 = vlaneseq
  %v56 = vshrl.u32 %v55, 7
  %v57 = vsub.s32 0, %v56
  %v58 = vrot.slane %v53, %v57
  %v59 = vlaneseq
  %v60 = vshrl.u32 %v59, 7
  %v61 = vsub.s32 1, %v60
  %v62 = vrot.slane %v53, %v61
  %vm65 = vcmask 130048
  %v67 = vsel %vm65, %v47, 0
  %v70 = vsel %vm65, %v48, 0
  %72 = vmatprep.subr.mxu0 0.0
  %73 = vmatpush1.msra.mxu0 0.0
  %74 = vmatprep.subr.mxu0 0.0
  %75 = vmatpush1.msra.mxu0 0.0
  %76 = vmatprep.subr.mxu0 0.0
  %77 = vmatpush1.msra.mxu0 0.0
  %78 = vmatprep.subr.mxu0 0.0
  %79 = vmatpush1.msra.mxu0 0.0
  %80 = vmatprep.subr.mxu0 0.0
  %81 = vmatpush1.msra.mxu0 0.0
  %82 = vmatprep.subr.mxu0 0.0
  %83 = vmatpush1.msra.mxu0 0.0
  %84 = vmatprep.subr.mxu0 0.0
  %85 = vmatpush1.msra.mxu0 0.0
  %86 = vmatprep.subr.mxu0 0.0
  %87 = vmatpush1.msra.mxu0 0.0
  %88 = vmatprep.subr.mxu0 0.0
  %89 = vmatpush1.msra.mxu0 0.0
  %90 = vmatprep.subr.mxu0 0.0
  %91 = vmatpush1.msra.mxu0 0.0
  %92 = vmatprep.subr.mxu0 0.0
  %93 = vmatpush1.msra.mxu0 0.0
  %94 = vmatprep.subr.mxu0 0.0
  %95 = vmatpush1.msra.mxu0 0.0
  %96 = vmatprep.subr.mxu0 0.0
  %97 = vmatpush1.msra.mxu0 0.0
  %98 = vmatprep.subr.mxu0 0.0
  %99 = vmatpush1.msra.mxu0 0.0
  %100 = vmatprep.subr.mxu0 %v52
  %101 = vmatpush1.msra.mxu0 %v51
  %102 = vmatprep.subr.mxu0 %v50
  %103 = vmatpush1.msra.mxu0 %v49
  %104 = vmatprep.subr.mxu0 0.0
  %105 = vmatpush2.msra.mxu0 0.0
  %106 = vmatprep.subr.mxu0 0.0
  %107 = vmatpush2.msra.mxu0 0.0
  %108 = vmatprep.subr.mxu0 0.0
  %109 = vmatpush2.msra.mxu0 0.0
  %110 = vmatprep.subr.mxu0 0.0
  %111 = vmatpush2.msra.mxu0 0.0
  %112 = vmatprep.subr.mxu0 0.0
  %113 = vmatpush2.msra.mxu0 0.0
  %114 = vmatprep.subr.mxu0 0.0
  %115 = vmatpush2.msra.mxu0 0.0
  %116 = vmatprep.subr.mxu0 0.0
  %117 = vmatpush2.msra.mxu0 0.0
  %118 = vmatprep.subr.mxu0 0.0
  %119 = vmatpush2.msra.mxu0 0.0
  %120 = vmatprep.subr.mxu0 0.0
  %121 = vmatpush2.msra.mxu0 0.0
  %122 = vmatprep.subr.mxu0 0.0
  %123 = vmatpush2.msra.mxu0 0.0
  %124 = vmatprep.subr.mxu0 0.0
  %125 = vmatpush2.msra.mxu0 0.0
  %126 = vmatprep.subr.mxu0 0.0
  %127 = vmatpush2.msra.mxu0 0.0
  %128 = vmatprep.subr.mxu0 0.0
  %129 = vmatpush2.msra.mxu0 0.0
  %130 = vmatprep.subr.mxu0 0.0
  %131 = vmatpush2.msra.mxu0 0.0
  %132 = vmatprep.subr.mxu0 0.0
  %133 = vmatpush2.msra.mxu0 0.0
  %134 = vmatprep.subr.mxu0 0.0
  %135 = vmatpush2.msra.mxu0 0.0
  %136 = vmatprep.mubr.f32.mxu0 0.0
  %137 = vmatmul.mubr.f32.gmra.mxu0 %v67
  %v138 = vpop.f32.mrf.mxu0
  %v139 = vadd.f32 %v58, %v138
  %v140 = vpop.f32.mrf.mxu0
  %v141 = vadd.f32 %v62, %v140
  %142 = vmatprep.mubr.f32.mxu0 0.0
  %143 = vmatmul.mubr.f32.gmra.mxu0 %v70
  %v144 = vpop.f32.mrf.mxu0
  %v145 = vadd.f32 %v58, %v144
  %v146 = vpop.f32.mrf.mxu0
  %v147 = vadd.f32 %v62, %v146
  %148 = vdwg.mxu0
  %149 = vst [vmem:[#allocation2] sm:$0xff] %v139
  %vm150 = vcmask 523264
  %151 = vst.msk [vmem:[#allocation2 + $0x8] sm:$0xff] %vm150, %v141
  %152 = vst [vmem:[#allocation2 + $0x10] sm:$0xff] %v145
  %153 = vst.msk [vmem:[#allocation2 + $0x18] sm:$0xff] %vm150, %v147
  %v154 = vld [vmem:[%s3] sm:$0x3]
  %v155 = vld [vmem:[#allocation2] sm:$0x3]
  %v156 = vld [vmem:[#allocation2 + $0x8] sm:$0x3]
  %v157 = vld [vmem:[%s6] sm:$0xff]
  %v158 = vld [vmem:[%s6 + $0x8] sm:$0xff]
  %v159 = vld [vmem:[%s6 + $0x10] sm:$0xff]
  %v160 = vld [vmem:[%s6 + $0x18] sm:$0xff]
  %v161 = vld [vmem:[%s6 + $0x20] sm:$0xff]
  %v162 = vld [vmem:[%s6 + $0x28] sm:$0xff]
  %v163 = vld [vmem:[%s6 + $0x30] sm:$0xff]
  %v164 = vld [vmem:[%s6 + $0x38] sm:$0xff]
  %v165 = vld [vmem:[%s6 + $0x40] sm:$0xff]
  %v166 = vld [vmem:[%s6 + $0x48] sm:$0xff]
  %v167 = vld [vmem:[%s6 + $0x50] sm:$0xff]
  %v168 = vld [vmem:[%s6 + $0x58] sm:$0xff]
  %v169 = vld [vmem:[%s6 + $0x60] sm:$0xff]
  %v170 = vld [vmem:[%s6 + $0x68] sm:$0xff]
  %v171 = vld [vmem:[%s6 + $0x70] sm:$0xff]
  %v172 = vld [vmem:[%s6 + $0x78] sm:$0xff]
  %v173 = vld [vmem:[%s7] sm:$0x3]
  %v175 = vlaneseq
  %v176 = vshrl.u32 %v175, 7
  %v177 = vsub.s32 0, %v176
  %v178 = vrot.slane %v173, %v177
  %v179 = vlaneseq
  %v180 = vshrl.u32 %v179, 7
  %v181 = vsub.s32 1, %v180
  %v182 = vrot.slane %v173, %v181
  %v186 = vsel %vm150, %v154, 0
  %188 = vmatprep.subr.mxu0 0.0
  %189 = vmatpush1.msra.mxu0 0.0
  %190 = vmatprep.subr.mxu0 0.0
  %191 = vmatpush1.msra.mxu0 0.0
  %192 = vmatprep.subr.mxu0 0.0
  %193 = vmatpush1.msra.mxu0 0.0
  %194 = vmatprep.subr.mxu0 0.0
  %195 = vmatpush1.msra.mxu0 0.0
  %196 = vmatprep.subr.mxu0 0.0
  %197 = vmatpush1.msra.mxu0 0.0
  %198 = vmatprep.subr.mxu0 0.0
  %199 = vmatpush1.msra.mxu0 0.0
  %200 = vmatprep.subr.mxu0 0.0
  %201 = vmatpush1.msra.mxu0 0.0
  %202 = vmatprep.subr.mxu0 0.0
  %203 = vmatpush1.msra.mxu0 0.0
  %204 = vmatprep.subr.mxu0 %v172
  %205 = vmatpush1.msra.mxu0 %v171
  %206 = vmatprep.subr.mxu0 %v170
  %207 = vmatpush1.msra.mxu0 %v169
  %208 = vmatprep.subr.mxu0 %v168
  %209 = vmatpush1.msra.mxu0 %v167
  %210 = vmatprep.subr.mxu0 %v166
  %211 = vmatpush1.msra.mxu0 %v165
  %212 = vmatprep.subr.mxu0 %v164
  %213 = vmatpush1.msra.mxu0 %v163
  %214 = vmatprep.subr.mxu0 %v162
  %215 = vmatpush1.msra.mxu0 %v161
  %216 = vmatprep.subr.mxu0 %v160
  %217 = vmatpush1.msra.mxu0 %v159
  %218 = vmatprep.subr.mxu0 %v158
  %219 = vmatpush1.msra.mxu0 %v157
  %220 = vmatprep.subr.mxu0 0.0
  %221 = vmatpush2.msra.mxu0 0.0
  %222 = vmatprep.subr.mxu0 0.0
  %223 = vmatpush2.msra.mxu0 0.0
  %224 = vmatprep.subr.mxu0 0.0
  %225 = vmatpush2.msra.mxu0 0.0
  %226 = vmatprep.subr.mxu0 0.0
  %227 = vmatpush2.msra.mxu0 0.0
  %228 = vmatprep.subr.mxu0 0.0
  %229 = vmatpush2.msra.mxu0 0.0
  %230 = vmatprep.subr.mxu0 0.0
  %231 = vmatpush2.msra.mxu0 0.0
  %232 = vmatprep.subr.mxu0 0.0
  %233 = vmatpush2.msra.mxu0 0.0
  %234 = vmatprep.subr.mxu0 0.0
  %235 = vmatpush2.msra.mxu0 0.0
  %236 = vmatprep.subr.mxu0 0.0
  %237 = vmatpush2.msra.mxu0 0.0
  %238 = vmatprep.subr.mxu0 0.0
  %239 = vmatpush2.msra.mxu0 0.0
  %240 = vmatprep.subr.mxu0 0.0
  %241 = vmatpush2.msra.mxu0 0.0
  %242 = vmatprep.subr.mxu0 0.0
  %243 = vmatpush2.msra.mxu0 0.0
  %244 = vmatprep.subr.mxu0 0.0
  %245 = vmatpush2.msra.mxu0 0.0
  %246 = vmatprep.subr.mxu0 0.0
  %247 = vmatpush2.msra.mxu0 0.0
  %248 = vmatprep.subr.mxu0 0.0
  %249 = vmatpush2.msra.mxu0 0.0
  %250 = vmatprep.subr.mxu0 0.0
  %251 = vmatpush2.msra.mxu0 0.0
  %252 = vmatprep.mubr.f32.mxu0 0.0
  %253 = vmatmul.mubr.f32.gmra.mxu0 %v186
  %v254 = vpop.f32.mrf.mxu0
  %v255 = vadd.f32 %v178, %v254
  %v256 = vpop.f32.mrf.mxu0
  %v257 = vadd.f32 %v182, %v256
  %258 = vdwg.mxu0
  %v259 = vadd.f32 %v155, %v255
  %v260 = vxor.u32 %v259, 2147483648
  %v261 = vmul.f32 %v260, 1.442695
  %v262 = vpow.pop %v261
  %v263 = vadd.f32 %v262, 1.0
  %v264 = vrcp.pop %v263
  %v265 = vmul.f32 1.0, %v264
  %v266 = vmul.f32 %v265, %v257
  %v267 = vadd.f32 %v156, %v266
  %v268 = vtanh.pop %v267
  %v269 = vsub.f32 1.0, %v265
  %271 = vrot.lane.b32.xlu0 %v268, 64
  %v272 = vpop.permute.xlu0 %271
  %v274 = vmul.f32 %v269, %v272
  %275 = vrot.lane.b32.xlu0 %v154, 64
  %v276 = vpop.permute.xlu0 %275
  %v278 = vmul.f32 %v265, %v276
  %v279 = vadd.f32 %v274, %v278
  %v280 = vld [vmem:[%s8] sm:$0xff]
  %v281 = vld [vmem:[%s8 + $0x8] sm:$0xff]
  %v282 = vld [vmem:[%s8 + $0x10] sm:$0xff]
  %v283 = vld [vmem:[%s8 + $0x18] sm:$0xff]
  %v284 = vld [vmem:[%s8 + $0x20] sm:$0xff]
  %v285 = vld [vmem:[%s8 + $0x28] sm:$0xff]
  %v286 = vld [vmem:[%s8 + $0x30] sm:$0xff]
  %v287 = vld [vmem:[%s8 + $0x38] sm:$0xff]
  %v288 = vld [vmem:[%s8 + $0x40] sm:$0xff]
  %v289 = vld [vmem:[%s8 + $0x48] sm:$0xff]
  %v290 = vld [vmem:[%s8 + $0x50] sm:$0xff]
  %v291 = vld [vmem:[%s8 + $0x58] sm:$0xff]
  %v292 = vld [vmem:[%s8 + $0x60] sm:$0xff]
  %v293 = vld [vmem:[%s8 + $0x68] sm:$0xff]
  %v294 = vld [vmem:[%s8 + $0x70] sm:$0xff]
  %v295 = vld [vmem:[%s8 + $0x78] sm:$0xff]
  %v296 = vld [vmem:[%s9] sm:$0x3]
  %v298 = vlaneseq
  %v299 = vshrl.u32 %v298, 7
  %v300 = vsub.s32 0, %v299
  %v301 = vrot.slane %v296, %v300
  %v302 = vlaneseq
  %v303 = vshrl.u32 %v302, 7
  %v304 = vsub.s32 1, %v303
  %v305 = vrot.slane %v296, %v304
  %309 = vrot.lane.b32.xlu0 %v279, 64
  %v310 = vpop.permute.xlu0 %309
  %v311 = vsel %vm150, %v310, 0
  %313 = vmatprep.subr.mxu0 0.0
  %314 = vmatpush1.msra.mxu0 0.0
  %315 = vmatprep.subr.mxu0 0.0
  %316 = vmatpush1.msra.mxu0 0.0
  %317 = vmatprep.subr.mxu0 0.0
  %318 = vmatpush1.msra.mxu0 0.0
  %319 = vmatprep.subr.mxu0 0.0
  %320 = vmatpush1.msra.mxu0 0.0
  %321 = vmatprep.subr.mxu0 0.0
  %322 = vmatpush1.msra.mxu0 0.0
  %323 = vmatprep.subr.mxu0 0.0
  %324 = vmatpush1.msra.mxu0 0.0
  %325 = vmatprep.subr.mxu0 0.0
  %326 = vmatpush1.msra.mxu0 0.0
  %327 = vmatprep.subr.mxu0 0.0
  %328 = vmatpush1.msra.mxu0 0.0
  %329 = vmatprep.subr.mxu0 %v295
  %330 = vmatpush1.msra.mxu0 %v294
  %331 = vmatprep.subr.mxu0 %v293
  %332 = vmatpush1.msra.mxu0 %v292
  %333 = vmatprep.subr.mxu0 %v291
  %334 = vmatpush1.msra.mxu0 %v290
  %335 = vmatprep.subr.mxu0 %v289
  %336 = vmatpush1.msra.mxu0 %v288
  %337 = vmatprep.subr.mxu0 %v287
  %338 = vmatpush1.msra.mxu0 %v286
  %339 = vmatprep.subr.mxu0 %v285
  %340 = vmatpush1.msra.mxu0 %v284
  %341 = vmatprep.subr.mxu0 %v283
  %342 = vmatpush1.msra.mxu0 %v282
  %343 = vmatprep.subr.mxu0 %v281
  %344 = vmatpush1.msra.mxu0 %v280
  %345 = vmatprep.subr.mxu0 0.0
  %346 = vmatpush2.msra.mxu0 0.0
  %347 = vmatprep.subr.mxu0 0.0
  %348 = vmatpush2.msra.mxu0 0.0
  %349 = vmatprep.subr.mxu0 0.0
  %350 = vmatpush2.msra.mxu0 0.0
  %351 = vmatprep.subr.mxu0 0.0
  %352 = vmatpush2.msra.mxu0 0.0
  %353 = vmatprep.subr.mxu0 0.0
  %354 = vmatpush2.msra.mxu0 0.0
  %355 = vmatprep.subr.mxu0 0.0
  %356 = vmatpush2.msra.mxu0 0.0
  %357 = vmatprep.subr.mxu0 0.0
  %358 = vmatpush2.msra.mxu0 0.0
  %359 = vmatprep.subr.mxu0 0.0
  %360 = vmatpush2.msra.mxu0 0.0
  %361 = vmatprep.subr.mxu0 0.0
  %362 = vmatpush2.msra.mxu0 0.0
  %363 = vmatprep.subr.mxu0 0.0
  %364 = vmatpush2.msra.mxu0 0.0
  %365 = vmatprep.subr.mxu0 0.0
  %366 = vmatpush2.msra.mxu0 0.0
  %367 = vmatprep.subr.mxu0 0.0
  %368 = vmatpush2.msra.mxu0 0.0
  %369 = vmatprep.subr.mxu0 0.0
  %370 = vmatpush2.msra.mxu0 0.0
  %371 = vmatprep.subr.mxu0 0.0
  %372 = vmatpush2.msra.mxu0 0.0
  %373 = vmatprep.subr.mxu0 0.0
  %374 = vmatpush2.msra.mxu0 0.0
  %375 = vmatprep.subr.mxu0 0.0
  %376 = vmatpush2.msra.mxu0 0.0
  %377 = vmatprep.mubr.f32.mxu0 0.0
  %378 = vmatmul.mubr.f32.gmra.mxu0 %v311
  %v379 = vpop.f32.mrf.mxu0
  %v380 = vadd.f32 %v301, %v379
  %v381 = vpop.f32.mrf.mxu0
  %v382 = vadd.f32 %v305, %v381
  %383 = vdwg.mxu0
  %v384 = vld [vmem:[%s10] sm:$0xff]
  %v385 = vld [vmem:[%s10 + $0x8] sm:$0xff]
  %v386 = vld [vmem:[%s10 + $0x10] sm:$0xff]
  %v387 = vld [vmem:[%s10 + $0x18] sm:$0xff]
  %v388 = vld [vmem:[%s10 + $0x20] sm:$0xff]
  %v389 = vld [vmem:[%s10 + $0x28] sm:$0xff]
  %v390 = vld [vmem:[%s10 + $0x30] sm:$0xff]
  %v391 = vld [vmem:[%s10 + $0x38] sm:$0xff]
  %v392 = vld [vmem:[%s10 + $0x40] sm:$0xff]
  %v393 = vld [vmem:[%s10 + $0x48] sm:$0xff]
  %v394 = vld [vmem:[%s10 + $0x50] sm:$0xff]
  %v395 = vld [vmem:[%s10 + $0x58] sm:$0xff]
  %v396 = vld [vmem:[%s10 + $0x60] sm:$0xff]
  %v397 = vld [vmem:[%s10 + $0x68] sm:$0xff]
  %v398 = vld [vmem:[%s10 + $0x70] sm:$0xff]
  %v399 = vld [vmem:[%s10 + $0x78] sm:$0xff]
  %v400 = vld [vmem:[%s11] sm:$0x3]
  %v402 = vlaneseq
  %v403 = vshrl.u32 %v402, 7
  %v404 = vsub.s32 0, %v403
  %v405 = vrot.slane %v400, %v404
  %v406 = vlaneseq
  %v407 = vshrl.u32 %v406, 7
  %v408 = vsub.s32 1, %v407
  %v409 = vrot.slane %v400, %v408
  %412 = vmatprep.subr.mxu0 0.0
  %413 = vmatpush1.msra.mxu0 0.0
  %414 = vmatprep.subr.mxu0 0.0
  %415 = vmatpush1.msra.mxu0 0.0
  %416 = vmatprep.subr.mxu0 0.0
  %417 = vmatpush1.msra.mxu0 0.0
  %418 = vmatprep.subr.mxu0 0.0
  %419 = vmatpush1.msra.mxu0 0.0
  %420 = vmatprep.subr.mxu0 0.0
  %421 = vmatpush1.msra.mxu0 0.0
  %422 = vmatprep.subr.mxu0 0.0
  %423 = vmatpush1.msra.mxu0 0.0
  %424 = vmatprep.subr.mxu0 0.0
  %425 = vmatpush1.msra.mxu0 0.0
  %426 = vmatprep.subr.mxu0 0.0
  %427 = vmatpush1.msra.mxu0 0.0
  %428 = vmatprep.subr.mxu0 %v399
  %429 = vmatpush1.msra.mxu0 %v398
  %430 = vmatprep.subr.mxu0 %v397
  %431 = vmatpush1.msra.mxu0 %v396
  %432 = vmatprep.subr.mxu0 %v395
  %433 = vmatpush1.msra.mxu0 %v394
  %434 = vmatprep.subr.mxu0 %v393
  %435 = vmatpush1.msra.mxu0 %v392
  %436 = vmatprep.subr.mxu0 %v391
  %437 = vmatpush1.msra.mxu0 %v390
  %438 = vmatprep.subr.mxu0 %v389
  %439 = vmatpush1.msra.mxu0 %v388
  %440 = vmatprep.subr.mxu0 %v387
  %441 = vmatpush1.msra.mxu0 %v386
  %442 = vmatprep.subr.mxu0 %v385
  %443 = vmatpush1.msra.mxu0 %v384
  %444 = vmatprep.subr.mxu0 0.0
  %445 = vmatpush2.msra.mxu0 0.0
  %446 = vmatprep.subr.mxu0 0.0
  %447 = vmatpush2.msra.mxu0 0.0
  %448 = vmatprep.subr.mxu0 0.0
  %449 = vmatpush2.msra.mxu0 0.0
  %450 = vmatprep.subr.mxu0 0.0
  %451 = vmatpush2.msra.mxu0 0.0
  %452 = vmatprep.subr.mxu0 0.0
  %453 = vmatpush2.msra.mxu0 0.0
  %454 = vmatprep.subr.mxu0 0.0
  %455 = vmatpush2.msra.mxu0 0.0
  %456 = vmatprep.subr.mxu0 0.0
  %457 = vmatpush2.msra.mxu0 0.0
  %458 = vmatprep.subr.mxu0 0.0
  %459 = vmatpush2.msra.mxu0 0.0
  %460 = vmatprep.subr.mxu0 0.0
  %461 = vmatpush2.msra.mxu0 0.0
  %462 = vmatprep.subr.mxu0 0.0
  %463 = vmatpush2.msra.mxu0 0.0
  %464 = vmatprep.subr.mxu0 0.0
  %465 = vmatpush2.msra.mxu0 0.0
  %466 = vmatprep.subr.mxu0 0.0
  %467 = vmatpush2.msra.mxu0 0.0
  %468 = vmatprep.subr.mxu0 0.0
  %469 = vmatpush2.msra.mxu0 0.0
  %470 = vmatprep.subr.mxu0 0.0
  %471 = vmatpush2.msra.mxu0 0.0
  %472 = vmatprep.subr.mxu0 0.0
  %473 = vmatpush2.msra.mxu0 0.0
  %474 = vmatprep.subr.mxu0 0.0
  %475 = vmatpush2.msra.mxu0 0.0
  %476 = vmatprep.mubr.f32.mxu0 0.0
  %477 = vmatmul.mubr.f32.gmra.mxu0 %v186
  %v478 = vpop.f32.mrf.mxu0
  %v479 = vadd.f32 %v405, %v478
  %v480 = vpop.f32.mrf.mxu0
  %v481 = vadd.f32 %v409, %v480
  %482 = vdwg.mxu0
  %v483 = vadd.f32 %v380, %v479
  %v484 = vxor.u32 %v483, 2147483648
  %v485 = vmul.f32 %v484, 1.442695
  %v486 = vpow.pop %v485
  %v487 = vadd.f32 %v486, 1.0
  %v488 = vrcp.pop %v487
  %v489 = vmul.f32 1.0, %v488
  %v490 = vmul.f32 %v489, %v481
  %v491 = vadd.f32 %v382, %v490
  %v492 = vtanh.pop %v491
  %v493 = vsub.f32 1.0, %v489
  %495 = vrot.lane.b32.xlu0 %v492, 64
  %v496 = vpop.permute.xlu0 %495
  %v498 = vmul.f32 %v493, %v496
  %v499 = vmul.f32 %v489, %v276
  %v500 = vadd.f32 %v498, %v499
  %v501 = vld [vmem:[%s1] sm:$0xff]
  %v502 = vld [vmem:[%s1 + $0x8] sm:$0xff]
  %v503 = vld [vmem:[%s2] sm:$0x3]
  %505 = vrot.lane.b32.xlu0 %v500, 64
  %v506 = vpop.permute.xlu0 %505
  %v507 = vsel %vm150, %v506, 0
  %v510 = vsel %vm150, %v501, 0
  %v513 = vsel %vm150, %v502, 0
  %515 = vmatprep.subr.mxu0 0.0
  %516 = vmatpush1.xpose.msra.mxu0 0.0
  %517 = vmatprep.subr.mxu0 0.0
  %518 = vmatpush1.xpose.msra.mxu0 0.0
  %519 = vmatprep.subr.mxu0 0.0
  %520 = vmatpush1.xpose.msra.mxu0 0.0
  %521 = vmatprep.subr.mxu0 0.0
  %522 = vmatpush1.xpose.msra.mxu0 0.0
  %523 = vmatprep.subr.mxu0 0.0
  %524 = vmatpush1.xpose.msra.mxu0 0.0
  %525 = vmatprep.subr.mxu0 0.0
  %526 = vmatpush1.xpose.msra.mxu0 0.0
  %527 = vmatprep.subr.mxu0 0.0
  %528 = vmatpush1.xpose.msra.mxu0 0.0
  %529 = vmatprep.subr.mxu0 0.0
  %530 = vmatpush1.xpose.msra.mxu0 0.0
  %531 = vmatprep.subr.mxu0 0.0
  %532 = vmatpush1.xpose.msra.mxu0 0.0
  %533 = vmatprep.subr.mxu0 0.0
  %534 = vmatpush1.xpose.msra.mxu0 0.0
  %535 = vmatprep.subr.mxu0 0.0
  %536 = vmatpush1.xpose.msra.mxu0 0.0
  %537 = vmatprep.subr.mxu0 0.0
  %538 = vmatpush1.xpose.msra.mxu0 0.0
  %539 = vmatprep.subr.mxu0 0.0
  %540 = vmatpush1.xpose.msra.mxu0 0.0
  %541 = vmatprep.subr.mxu0 0.0
  %542 = vmatpush1.xpose.msra.mxu0 0.0
  %543 = vmatprep.subr.mxu0 0.0
  %544 = vmatpush1.xpose.msra.mxu0 %v513
  %545 = vmatprep.subr.mxu0 0.0
  %546 = vmatpush1.xpose.msra.mxu0 %v510
  %547 = vmatprep.subr.mxu0 0.0
  %548 = vmatpush2.xpose.msra.mxu0 0.0
  %549 = vmatprep.subr.mxu0 0.0
  %550 = vmatpush2.xpose.msra.mxu0 0.0
  %551 = vmatprep.subr.mxu0 0.0
  %552 = vmatpush2.xpose.msra.mxu0 0.0
  %553 = vmatprep.subr.mxu0 0.0
  %554 = vmatpush2.xpose.msra.mxu0 0.0
  %555 = vmatprep.subr.mxu0 0.0
  %556 = vmatpush2.xpose.msra.mxu0 0.0
  %557 = vmatprep.subr.mxu0 0.0
  %558 = vmatpush2.xpose.msra.mxu0 0.0
  %559 = vmatprep.subr.mxu0 0.0
  %560 = vmatpush2.xpose.msra.mxu0 0.0
  %561 = vmatprep.subr.mxu0 0.0
  %562 = vmatpush2.xpose.msra.mxu0 0.0
  %563 = vmatprep.subr.mxu0 0.0
  %564 = vmatpush2.xpose.msra.mxu0 0.0
  %565 = vmatprep.subr.mxu0 0.0
  %566 = vmatpush2.xpose.msra.mxu0 0.0
  %567 = vmatprep.subr.mxu0 0.0
  %568 = vmatpush2.xpose.msra.mxu0 0.0
  %569 = vmatprep.subr.mxu0 0.0
  %570 = vmatpush2.xpose.msra.mxu0 0.0
  %571 = vmatprep.subr.mxu0 0.0
  %572 = vmatpush2.xpose.msra.mxu0 0.0
  %573 = vmatprep.subr.mxu0 0.0
  %574 = vmatpush2.xpose.msra.mxu0 0.0
  %575 = vmatprep.subr.mxu0 0.0
  %576 = vmatpush2.xpose.msra.mxu0 0.0
  %577 = vmatprep.subr.mxu0 0.0
  %578 = vmatpush2.xpose.msra.mxu0 0.0
  %579 = vmatprep.mubr.f32.mxu0 0.0
  %580 = vmatmul.mubr.f32.gmra.mxu0 %v507
  %v581 = vpop.f32.mrf.mxu0
  %v582 = vadd.f32 %v503, %v581
  %v583 = vpop.f32.mrf.mxu0
  %584 = vdwg.mxu0
  %vm585 = vcmask 123904
  %v586 = vsel %vm585, %v582, -inf
  %587 = vmax.xlane.f32.xlu0 %v586
  %v588 = vpop.xlane.xlu0 %587
  %v589 = vsub.f32 %v582, %v588
  %v590 = vmul.f32 %v589, 1.442695
  %v591 = vpow.pop %v590
  %v592 = vsel %vm585, %v591, 0.0
  %593 = vadd.xlane.f32.xlu0 %v592
  %v594 = vpop.xlane.xlu0 %593
  %v595 = vrcp.pop %v594
  %v596 = vmul.f32 %v591, %v595
  %v598 = vsel %vm65, %v596, 0
  %600 = vmatprep.subr.mxu0 0.0
  %601 = vmatpush1.msra.mxu0 0.0
  %602 = vmatprep.subr.mxu0 0.0
  %603 = vmatpush1.msra.mxu0 0.0
  %604 = vmatprep.subr.mxu0 0.0
  %605 = vmatpush1.msra.mxu0 0.0
  %606 = vmatprep.subr.mxu0 0.0
  %607 = vmatpush1.msra.mxu0 0.0
  %608 = vmatprep.subr.mxu0 0.0
  %609 = vmatpush1.msra.mxu0 0.0
  %610 = vmatprep.subr.mxu0 0.0
  %611 = vmatpush1.msra.mxu0 0.0
  %612 = vmatprep.subr.mxu0 0.0
  %613 = vmatpush1.msra.mxu0 0.0
  %614 = vmatprep.subr.mxu0 0.0
  %615 = vmatpush1.msra.mxu0 0.0
  %616 = vmatprep.subr.mxu0 0.0
  %617 = vmatpush1.msra.mxu0 0.0
  %618 = vmatprep.subr.mxu0 0.0
  %619 = vmatpush1.msra.mxu0 0.0
  %620 = vmatprep.subr.mxu0 0.0
  %621 = vmatpush1.msra.mxu0 0.0
  %622 = vmatprep.subr.mxu0 0.0
  %623 = vmatpush1.msra.mxu0 0.0
  %624 = vmatprep.subr.mxu0 0.0
  %625 = vmatpush1.msra.mxu0 0.0
  %626 = vmatprep.subr.mxu0 0.0
  %627 = vmatpush1.msra.mxu0 0.0
  %628 = vmatprep.subr.mxu0 0.0
  %629 = vmatpush1.msra.mxu0 %v502
  %630 = vmatprep.subr.mxu0 0.0
  %631 = vmatpush1.msra.mxu0 %v501
  %632 = vmatprep.subr.mxu0 0.0
  %633 = vmatpush2.msra.mxu0 0.0
  %634 = vmatprep.subr.mxu0 0.0
  %635 = vmatpush2.msra.mxu0 0.0
  %636 = vmatprep.subr.mxu0 0.0
  %637 = vmatpush2.msra.mxu0 0.0
  %638 = vmatprep.subr.mxu0 0.0
  %639 = vmatpush2.msra.mxu0 0.0
  %640 = vmatprep.subr.mxu0 0.0
  %641 = vmatpush2.msra.mxu0 0.0
  %642 = vmatprep.subr.mxu0 0.0
  %643 = vmatpush2.msra.mxu0 0.0
  %644 = vmatprep.subr.mxu0 0.0
  %645 = vmatpush2.msra.mxu0 0.0
  %646 = vmatprep.subr.mxu0 0.0
  %647 = vmatpush2.msra.mxu0 0.0
  %648 = vmatprep.subr.mxu0 0.0
  %649 = vmatpush2.msra.mxu0 0.0
  %650 = vmatprep.subr.mxu0 0.0
  %651 = vmatpush2.msra.mxu0 0.0
  %652 = vmatprep.subr.mxu0 0.0
  %653 = vmatpush2.msra.mxu0 0.0
  %654 = vmatprep.subr.mxu0 0.0
  %655 = vmatpush2.msra.mxu0 0.0
  %656 = vmatprep.subr.mxu0 0.0
  %657 = vmatpush2.msra.mxu0 0.0
  %658 = vmatprep.subr.mxu0 0.0
  %659 = vmatpush2.msra.mxu0 0.0
  %660 = vmatprep.subr.mxu0 0.0
  %661 = vmatpush2.msra.mxu0 0.0
  %662 = vmatprep.subr.mxu0 0.0
  %663 = vmatpush2.msra.mxu0 0.0
  %664 = vmatprep.mubr.f32.mxu0 0.0
  %665 = vmatmul.mubr.f32.gmra.mxu0 %v598
  %v666 = vpop.f32.mrf.mxu0
  %v667 = vadd.f32 0.0, %v666
  %v668 = vpop.f32.mrf.mxu0
  %669 = vdwg.mxu0
  %v670 = vsel %vm150, %v667, %v500
  %v671 = vld [vmem:[%s12] sm:$0xff]
  %v672 = vld [vmem:[%s12 + $0x8] sm:$0xff]
  %v673 = vld [vmem:[%s12 + $0x10] sm:$0xff]
  %v674 = vld [vmem:[%s12 + $0x18] sm:$0xff]
  %v675 = vld [vmem:[%s12 + $0x20] sm:$0xff]
  %v676 = vld [vmem:[%s12 + $0x28] sm:$0xff]
  %v677 = vld [vmem:[%s12 + $0x30] sm:$0xff]
  %v678 = vld [vmem:[%s12 + $0x38] sm:$0xff]
  %v679 = vld [vmem:[%s12 + $0x40] sm:$0xff]
  %v680 = vld [vmem:[%s12 + $0x48] sm:$0xff]
  %v681 = vld [vmem:[%s12 + $0x50] sm:$0xff]
  %v682 = vld [vmem:[%s12 + $0x58] sm:$0xff]
  %v683 = vld [vmem:[%s12 + $0x60] sm:$0xff]
  %v684 = vld [vmem:[%s12 + $0x68] sm:$0xff]
  %v685 = vld [vmem:[%s12 + $0x70] sm:$0xff]
  %v686 = vld [vmem:[%s12 + $0x78] sm:$0xff]
  %v687 = vld [vmem:[%s13] sm:$0x1]
  %v689 = vlaneseq
  %v690 = vshrl.u32 %v689, 7
  %v691 = vsub.s32 0, %v690
  %v692 = vrot.slane %v687, %v691
  %694 = vmatprep.subr.mxu0 0.0
  %695 = vmatpush1.msra.mxu0 %v686
  %696 = vmatprep.subr.mxu0 0.0
  %697 = vmatpush1.msra.mxu0 %v685
  %698 = vmatprep.subr.mxu0 0.0
  %699 = vmatpush1.msra.mxu0 %v684
  %700 = vmatprep.subr.mxu0 0.0
  %701 = vmatpush1.msra.mxu0 %v683
  %702 = vmatprep.subr.mxu0 0.0
  %703 = vmatpush1.msra.mxu0 %v682
  %704 = vmatprep.subr.mxu0 0.0
  %705 = vmatpush1.msra.mxu0 %v681
  %706 = vmatprep.subr.mxu0 0.0
  %707 = vmatpush1.msra.mxu0 %v680
  %708 = vmatprep.subr.mxu0 0.0
  %709 = vmatpush1.msra.mxu0 %v679
  %710 = vmatprep.subr.mxu0 0.0
  %711 = vmatpush1.msra.mxu0 %v678
  %712 = vmatprep.subr.mxu0 0.0
  %713 = vmatpush1.msra.mxu0 %v677
  %714 = vmatprep.subr.mxu0 0.0
  %715 = vmatpush1.msra.mxu0 %v676
  %716 = vmatprep.subr.mxu0 0.0
  %717 = vmatpush1.msra.mxu0 %v675
  %718 = vmatprep.subr.mxu0 0.0
  %719 = vmatpush1.msra.mxu0 %v674
  %720 = vmatprep.subr.mxu0 0.0
  %721 = vmatpush1.msra.mxu0 %v673
  %722 = vmatprep.subr.mxu0 0.0
  %723 = vmatpush1.msra.mxu0 %v672
  %724 = vmatprep.subr.mxu0 0.0
  %725 = vmatpush1.msra.mxu0 %v671
  %726 = vmatprep.subr.mxu0 0.0
  %727 = vmatpush2.msra.mxu0 0.0
  %728 = vmatprep.subr.mxu0 0.0
  %729 = vmatpush2.msra.mxu0 0.0
  %730 = vmatprep.subr.mxu0 0.0
  %731 = vmatpush2.msra.mxu0 0.0
  %732 = vmatprep.subr.mxu0 0.0
  %733 = vmatpush2.msra.mxu0 0.0
  %734 = vmatprep.subr.mxu0 0.0
  %735 = vmatpush2.msra.mxu0 0.0
  %736 = vmatprep.subr.mxu0 0.0
  %737 = vmatpush2.msra.mxu0 0.0
  %738 = vmatprep.subr.mxu0 0.0
  %739 = vmatpush2.msra.mxu0 0.0
  %740 = vmatprep.subr.mxu0 0.0
  %741 = vmatpush2.msra.mxu0 0.0
  %742 = vmatprep.subr.mxu0 0.0
  %743 = vmatpush2.msra.mxu0 0.0
  %744 = vmatprep.subr.mxu0 0.0
  %745 = vmatpush2.msra.mxu0 0.0
  %746 = vmatprep.subr.mxu0 0.0
  %747 = vmatpush2.msra.mxu0 0.0
  %748 = vmatprep.subr.mxu0 0.0
  %749 = vmatpush2.msra.mxu0 0.0
  %750 = vmatprep.subr.mxu0 0.0
  %751 = vmatpush2.msra.mxu0 0.0
  %752 = vmatprep.subr.mxu0 0.0
  %753 = vmatpush2.msra.mxu0 0.0
  %754 = vmatprep.subr.mxu0 0.0
  %755 = vmatpush2.msra.mxu0 0.0
  %756 = vmatprep.subr.mxu0 0.0
  %757 = vmatpush2.msra.mxu0 0.0
  %758 = vmatprep.mubr.f32.mxu0 0.0
  %759 = vmatmul.mubr.f32.gmra.mxu0 %v670
  %v760 = vpop.f32.mrf.mxu0
  %v761 = vadd.f32 %v692, %v760
  %v762 = vpop.f32.mrf.mxu0
  %763 = vdwg.mxu0
  %v764 = vtanh.pop %v761
  %v766 = vrot.slane %v764, 1
  %767 = vrot.lane.b32.xlu0 %v766, 64
  %v768 = vpop.permute.xlu0 %767
  %v770 = vsel %vm150, %v764, %v768
  %771 = vst [vmem:[%s14] sm:$0x1] %v770
  %v772 = vld [vmem:[#allocation2] sm:$0xc]
  %v773 = vld [vmem:[#allocation2 + $0x8] sm:$0xc]
  %v774 = vld [vmem:[%s6] sm:$0xff]
  %v775 = vld [vmem:[%s6 + $0x8] sm:$0xff]
  %v776 = vld [vmem:[%s6 + $0x10] sm:$0xff]
  %v777 = vld [vmem:[%s6 + $0x18] sm:$0xff]
  %v778 = vld [vmem:[%s6 + $0x20] sm:$0xff]
  %v779 = vld [vmem:[%s6 + $0x28] sm:$0xff]
  %v780 = vld [vmem:[%s6 + $0x30] sm:$0xff]
  %v781 = vld [vmem:[%s6 + $0x38] sm:$0xff]
  %v782 = vld [vmem:[%s6 + $0x40] sm:$0xff]
  %v783 = vld [vmem:[%s6 + $0x48] sm:$0xff]
  %v784 = vld [vmem:[%s6 + $0x50] sm:$0xff]
  %v785 = vld [vmem:[%s6 + $0x58] sm:$0xff]
  %v786 = vld [vmem:[%s6 + $0x60] sm:$0xff]
  %v787 = vld [vmem:[%s6 + $0x68] sm:$0xff]
  %v788 = vld [vmem:[%s6 + $0x70] sm:$0xff]
  %v789 = vld [vmem:[%s6 + $0x78] sm:$0xff]
  %v790 = vld [vmem:[%s7] sm:$0x3]
  %v792 = vlaneseq
  %v793 = vshrl.u32 %v792, 7
  %v794 = vsub.s32 0, %v793
  %v795 = vrot.slane %v790, %v794
  %v796 = vlaneseq
  %v797 = vshrl.u32 %v796, 7
  %v798 = vsub.s32 1, %v797
  %v799 = vrot.slane %v790, %v798
  %802 = vmatprep.subr.mxu0 0.0
  %803 = vmatpush1.msra.mxu0 0.0
  %804 = vmatprep.subr.mxu0 0.0
  %805 = vmatpush1.msra.mxu0 0.0
  %806 = vmatprep.subr.mxu0 0.0
  %807 = vmatpush1.msra.mxu0 0.0
  %808 = vmatprep.subr.mxu0 0.0
  %809 = vmatpush1.msra.mxu0 0.0
  %810 = vmatprep.subr.mxu0 0.0
  %811 = vmatpush1.msra.mxu0 0.0
  %812 = vmatprep.subr.mxu0 0.0
  %813 = vmatpush1.msra.mxu0 0.0
  %814 = vmatprep.subr.mxu0 0.0
  %815 = vmatpush1.msra.mxu0 0.0
  %816 = vmatprep.subr.mxu0 0.0
  %817 = vmatpush1.msra.mxu0 0.0
  %818 = vmatprep.subr.mxu0 %v789
  %819 = vmatpush1.msra.mxu0 %v788
  %820 = vmatprep.subr.mxu0 %v787
  %821 = vmatpush1.msra.mxu0 %v786
  %822 = vmatprep.subr.mxu0 %v785
  %823 = vmatpush1.msra.mxu0 %v784
  %824 = vmatprep.subr.mxu0 %v783
  %825 = vmatpush1.msra.mxu0 %v782
  %826 = vmatprep.subr.mxu0 %v781
  %827 = vmatpush1.msra.mxu0 %v780
  %828 = vmatprep.subr.mxu0 %v779
  %829 = vmatpush1.msra.mxu0 %v778
  %830 = vmatprep.subr.mxu0 %v777
  %831 = vmatpush1.msra.mxu0 %v776
  %832 = vmatprep.subr.mxu0 %v775
  %833 = vmatpush1.msra.mxu0 %v774
  %834 = vmatprep.subr.mxu0 0.0
  %835 = vmatpush2.msra.mxu0 0.0
  %836 = vmatprep.subr.mxu0 0.0
  %837 = vmatpush2.msra.mxu0 0.0
  %838 = vmatprep.subr.mxu0 0.0
  %839 = vmatpush2.msra.mxu0 0.0
  %840 = vmatprep.subr.mxu0 0.0
  %841 = vmatpush2.msra.mxu0 0.0
  %842 = vmatprep.subr.mxu0 0.0
  %843 = vmatpush2.msra.mxu0 0.0
  %844 = vmatprep.subr.mxu0 0.0
  %845 = vmatpush2.msra.mxu0 0.0
  %846 = vmatprep.subr.mxu0 0.0
  %847 = vmatpush2.msra.mxu0 0.0
  %848 = vmatprep.subr.mxu0 0.0
  %849 = vmatpush2.msra.mxu0 0.0
  %850 = vmatprep.subr.mxu0 0.0
  %851 = vmatpush2.msra.mxu0 0.0
  %852 = vmatprep.subr.mxu0 0.0
  %853 = vmatpush2.msra.mxu0 0.0
  %854 = vmatprep.subr.mxu0 0.0
  %855 = vmatpush2.msra.mxu0 0.0
  %856 = vmatprep.subr.mxu0 0.0
  %857 = vmatpush2.msra.mxu0 0.0
  %858 = vmatprep.subr.mxu0 0.0
  %859 = vmatpush2.msra.mxu0 0.0
  %860 = vmatprep.subr.mxu0 0.0
  %861 = vmatpush2.msra.mxu0 0.0
  %862 = vmatprep.subr.mxu0 0.0
  %863 = vmatpush2.msra.mxu0 0.0
  %864 = vmatprep.subr.mxu0 0.0
  %865 = vmatpush2.msra.mxu0 0.0
  %866 = vmatprep.mubr.f32.mxu0 0.0
  %867 = vmatmul.mubr.f32.gmra.mxu0 %v311
  %v868 = vpop.f32.mrf.mxu0
  %v869 = vadd.f32 %v795, %v868
  %v870 = vpop.f32.mrf.mxu0
  %v871 = vadd.f32 %v799, %v870
  %872 = vdwg.mxu0
  %v874 = vrot.slane %v869, 6
  %v876 = vadd.f32 %v772, %v874
  %v877 = vxor.u32 %v876, 2147483648
  %v878 = vmul.f32 %v877, 1.442695
  %v879 = vpow.pop %v878
  %v880 = vadd.f32 %v879, 1.0
  %v881 = vrcp.pop %v880
  %v882 = vmul.f32 1.0, %v881
  %v884 = vrot.slane %v871, 6
  %v886 = vmul.f32 %v882, %v884
  %v887 = vadd.f32 %v773, %v886
  %v888 = vtanh.pop %v887
  %v889 = vsub.f32 1.0, %v882
  %891 = vrot.lane.b32.xlu0 %v888, 64
  %v892 = vpop.permute.xlu0 %891
  %v894 = vmul.f32 %v889, %v892
  %v895 = vrot.slane %v279, 6
  %v897 = vmul.f32 %v882, %v895
  %v898 = vadd.f32 %v894, %v897
  %v899 = vld [vmem:[%s8] sm:$0xff]
  %v900 = vld [vmem:[%s8 + $0x8] sm:$0xff]
  %v901 = vld [vmem:[%s8 + $0x10] sm:$0xff]
  %v902 = vld [vmem:[%s8 + $0x18] sm:$0xff]
  %v903 = vld [vmem:[%s8 + $0x20] sm:$0xff]
  %v904 = vld [vmem:[%s8 + $0x28] sm:$0xff]
  %v905 = vld [vmem:[%s8 + $0x30] sm:$0xff]
  %v906 = vld [vmem:[%s8 + $0x38] sm:$0xff]
  %v907 = vld [vmem:[%s8 + $0x40] sm:$0xff]
  %v908 = vld [vmem:[%s8 + $0x48] sm:$0xff]
  %v909 = vld [vmem:[%s8 + $0x50] sm:$0xff]
  %v910 = vld [vmem:[%s8 + $0x58] sm:$0xff]
  %v911 = vld [vmem:[%s8 + $0x60] sm:$0xff]
  %v912 = vld [vmem:[%s8 + $0x68] sm:$0xff]
  %v913 = vld [vmem:[%s8 + $0x70] sm:$0xff]
  %v914 = vld [vmem:[%s8 + $0x78] sm:$0xff]
  %v915 = vld [vmem:[%s9] sm:$0x3]
  %v917 = vlaneseq
  %v918 = vshrl.u32 %v917, 7
  %v919 = vsub.s32 0, %v918
  %v920 = vrot.slane %v915, %v919
  %v921 = vlaneseq
  %v922 = vshrl.u32 %v921, 7
  %v923 = vsub.s32 1, %v922
  %v924 = vrot.slane %v915, %v923
  %v928 = vrot.slane %v898, 2
  %929 = vrot.lane.b32.xlu0 %v928, 64
  %v930 = vpop.permute.xlu0 %929
  %v931 = vsel %vm150, %v930, 0
  %933 = vmatprep.subr.mxu0 0.0
  %934 = vmatpush1.msra.mxu0 0.0
  %935 = vmatprep.subr.mxu0 0.0
  %936 = vmatpush1.msra.mxu0 0.0
  %937 = vmatprep.subr.mxu0 0.0
  %938 = vmatpush1.msra.mxu0 0.0
  %939 = vmatprep.subr.mxu0 0.0
  %940 = vmatpush1.msra.mxu0 0.0
  %941 = vmatprep.subr.mxu0 0.0
  %942 = vmatpush1.msra.mxu0 0.0
  %943 = vmatprep.subr.mxu0 0.0
  %944 = vmatpush1.msra.mxu0 0.0
  %945 = vmatprep.subr.mxu0 0.0
  %946 = vmatpush1.msra.mxu0 0.0
  %947 = vmatprep.subr.mxu0 0.0
  %948 = vmatpush1.msra.mxu0 0.0
  %949 = vmatprep.subr.mxu0 %v914
  %950 = vmatpush1.msra.mxu0 %v913
  %951 = vmatprep.subr.mxu0 %v912
  %952 = vmatpush1.msra.mxu0 %v911
  %953 = vmatprep.subr.mxu0 %v910
  %954 = vmatpush1.msra.mxu0 %v909
  %955 = vmatprep.subr.mxu0 %v908
  %956 = vmatpush1.msra.mxu0 %v907
  %957 = vmatprep.subr.mxu0 %v906
  %958 = vmatpush1.msra.mxu0 %v905
  %959 = vmatprep.subr.mxu0 %v904
  %960 = vmatpush1.msra.mxu0 %v903
  %961 = vmatprep.subr.mxu0 %v902
  %962 = vmatpush1.msra.mxu0 %v901
  %963 = vmatprep.subr.mxu0 %v900
  %964 = vmatpush1.msra.mxu0 %v899
  %965 = vmatprep.subr.mxu0 0.0
  %966 = vmatpush2.msra.mxu0 0.0
  %967 = vmatprep.subr.mxu0 0.0
  %968 = vmatpush2.msra.mxu0 0.0
  %969 = vmatprep.subr.mxu0 0.0
  %970 = vmatpush2.msra.mxu0 0.0
  %971 = vmatprep.subr.mxu0 0.0
  %972 = vmatpush2.msra.mxu0 0.0
  %973 = vmatprep.subr.mxu0 0.0
  %974 = vmatpush2.msra.mxu0 0.0
  %975 = vmatprep.subr.mxu0 0.0
  %976 = vmatpush2.msra.mxu0 0.0
  %977 = vmatprep.subr.mxu0 0.0
  %978 = vmatpush2.msra.mxu0 0.0
  %979 = vmatprep.subr.mxu0 0.0
  %980 = vmatpush2.msra.mxu0 0.0
  %981 = vmatprep.subr.mxu0 0.0
  %982 = vmatpush2.msra.mxu0 0.0
  %983 = vmatprep.subr.mxu0 0.0
  %984 = vmatpush2.msra.mxu0 0.0
  %985 = vmatprep.subr.mxu0 0.0
  %986 = vmatpush2.msra.mxu0 0.0
  %987 = vmatprep.subr.mxu0 0.0
  %988 = vmatpush2.msra.mxu0 0.0
  %989 = vmatprep.subr.mxu0 0.0
  %990 = vmatpush2.msra.mxu0 0.0
  %991 = vmatprep.subr.mxu0 0.0
  %992 = vmatpush2.msra.mxu0 0.0
  %993 = vmatprep.subr.mxu0 0.0
  %994 = vmatpush2.msra.mxu0 0.0
  %995 = vmatprep.subr.mxu0 0.0
  %996 = vmatpush2.msra.mxu0 0.0
  %997 = vmatprep.mubr.f32.mxu0 0.0
  %998 = vmatmul.mubr.f32.gmra.mxu0 %v931
  %v999 = vpop.f32.mrf.mxu0
  %v1000 = vadd.f32 %v920, %v999
  %v1001 = vpop.f32.mrf.mxu0
  %v1002 = vadd.f32 %v924, %v1001
  %1003 = vdwg.mxu0
  %v1004 = vld [vmem:[%s10] sm:$0xff]
  %v1005 = vld [vmem:[%s10 + $0x8] sm:$0xff]
  %v1006 = vld [vmem:[%s10 + $0x10] sm:$0xff]
  %v1007 = vld [vmem:[%s10 + $0x18] sm:$0xff]
  %v1008 = vld [vmem:[%s10 + $0x20] sm:$0xff]
  %v1009 = vld [vmem:[%s10 + $0x28] sm:$0xff]
  %v1010 = vld [vmem:[%s10 + $0x30] sm:$0xff]
  %v1011 = vld [vmem:[%s10 + $0x38] sm:$0xff]
  %v1012 = vld [vmem:[%s10 + $0x40] sm:$0xff]
  %v1013 = vld [vmem:[%s10 + $0x48] sm:$0xff]
  %v1014 = vld [vmem:[%s10 + $0x50] sm:$0xff]
  %v1015 = vld [vmem:[%s10 + $0x58] sm:$0xff]
  %v1016 = vld [vmem:[%s10 + $0x60] sm:$0xff]
  %v1017 = vld [vmem:[%s10 + $0x68] sm:$0xff]
  %v1018 = vld [vmem:[%s10 + $0x70] sm:$0xff]
  %v1019 = vld [vmem:[%s10 + $0x78] sm:$0xff]
  %v1020 = vld [vmem:[%s11] sm:$0x3]
  %v1022 = vlaneseq
  %v1023 = vshrl.u32 %v1022, 7
  %v1024 = vsub.s32 0, %v1023
  %v1025 = vrot.slane %v1020, %v1024
  %v1026 = vlaneseq
  %v1027 = vshrl.u32 %v1026, 7
  %v1028 = vsub.s32 1, %v1027
  %v1029 = vrot.slane %v1020, %v1028
  %1032 = vmatprep.subr.mxu0 0.0
  %1033 = vmatpush1.msra.mxu0 0.0
  %1034 = vmatprep.subr.mxu0 0.0
  %1035 = vmatpush1.msra.mxu0 0.0
  %1036 = vmatprep.subr.mxu0 0.0
  %1037 = vmatpush1.msra.mxu0 0.0
  %1038 = vmatprep.subr.mxu0 0.0
  %1039 = vmatpush1.msra.mxu0 0.0
  %1040 = vmatprep.subr.mxu0 0.0
  %1041 = vmatpush1.msra.mxu0 0.0
  %1042 = vmatprep.subr.mxu0 0.0
  %1043 = vmatpush1.msra.mxu0 0.0
  %1044 = vmatprep.subr.mxu0 0.0
  %1045 = vmatpush1.msra.mxu0 0.0
  %1046 = vmatprep.subr.mxu0 0.0
  %1047 = vmatpush1.msra.mxu0 0.0
  %1048 = vmatprep.subr.mxu0 %v1019
  %1049 = vmatpush1.msra.mxu0 %v1018
  %1050 = vmatprep.subr.mxu0 %v1017
  %1051 = vmatpush1.msra.mxu0 %v1016
  %1052 = vmatprep.subr.mxu0 %v1015
  %1053 = vmatpush1.msra.mxu0 %v1014
  %1054 = vmatprep.subr.mxu0 %v1013
  %1055 = vmatpush1.msra.mxu0 %v1012
  %1056 = vmatprep.subr.mxu0 %v1011
  %1057 = vmatpush1.msra.mxu0 %v1010
  %1058 = vmatprep.subr.mxu0 %v1009
  %1059 = vmatpush1.msra.mxu0 %v1008
  %1060 = vmatprep.subr.mxu0 %v1007
  %1061 = vmatpush1.msra.mxu0 %v1006
  %1062 = vmatprep.subr.mxu0 %v1005
  %1063 = vmatpush1.msra.mxu0 %v1004
  %1064 = vmatprep.subr.mxu0 0.0
  %1065 = vmatpush2.msra.mxu0 0.0
  %1066 = vmatprep.subr.mxu0 0.0
  %1067 = vmatpush2.msra.mxu0 0.0
  %1068 = vmatprep.subr.mxu0 0.0
  %1069 = vmatpush2.msra.mxu0 0.0
  %1070 = vmatprep.subr.mxu0 0.0
  %1071 = vmatpush2.msra.mxu0 0.0
  %1072 = vmatprep.subr.mxu0 0.0
  %1073 = vmatpush2.msra.mxu0 0.0
  %1074 = vmatprep.subr.mxu0 0.0
  %1075 = vmatpush2.msra.mxu0 0.0
  %1076 = vmatprep.subr.mxu0 0.0
  %1077 = vmatpush2.msra.mxu0 0.0
  %1078 = vmatprep.subr.mxu0 0.0
  %1079 = vmatpush2.msra.mxu0 0.0
  %1080 = vmatprep.subr.mxu0 0.0
  %1081 = vmatpush2.msra.mxu0 0.0
  %1082 = vmatprep.subr.mxu0 0.0
  %1083 = vmatpush2.msra.mxu0 0.0
  %1084 = vmatprep.subr.mxu0 0.0
  %1085 = vmatpush2.msra.mxu0 0.0
  %1086 = vmatprep.subr.mxu0 0.0
  %1087 = vmatpush2.msra.mxu0 0.0
  %1088 = vmatprep.subr.mxu0 0.0
  %1089 = vmatpush2.msra.mxu0 0.0
  %1090 = vmatprep.subr.mxu0 0.0
  %1091 = vmatpush2.msra.mxu0 0.0
  %1092 = vmatprep.subr.mxu0 0.0
  %1093 = vmatpush2.msra.mxu0 0.0
  %1094 = vmatprep.subr.mxu0 0.0
  %1095 = vmatpush2.msra.mxu0 0.0
  %1096 = vmatprep.mubr.f32.mxu0 0.0
  %1097 = vmatmul.mubr.f32.gmra.mxu0 %v507
  %v1098 = vpop.f32.mrf.mxu0
  %v1099 = vadd.f32 %v1025, %v1098
  %v1100 = vpop.f32.mrf.mxu0
  %v1101 = vadd.f32 %v1029, %v1100
  %1102 = vdwg.mxu0
  %v1103 = vadd.f32 %v1000, %v1099
  %v1104 = vxor.u32 %v1103, 2147483648
  %v1105 = vmul.f32 %v1104, 1.442695
  %v1106 = vpow.pop %v1105
  %v1107 = vadd.f32 %v1106, 1.0
  %v1108 = vrcp.pop %v1107
  %v1109 = vmul.f32 1.0, %v1108
  %v1110 = vmul.f32 %v1109, %v1101
  %v1111 = vadd.f32 %v1002, %v1110
  %v1112 = vtanh.pop %v1111
  %v1113 = vsub.f32 1.0, %v1109
  %1115 = vrot.lane.b32.xlu0 %v1112, 64
  %v1116 = vpop.permute.xlu0 %1115
  %v1118 = vmul.f32 %v1113, %v1116
  %v1119 = vmul.f32 %v1109, %v500
  %v1120 = vadd.f32 %v1118, %v1119
  %v1121 = vld [vmem:[%s1] sm:$0xff]
  %v1122 = vld [vmem:[%s1 + $0x8] sm:$0xff]
  %v1123 = vld [vmem:[%s2] sm:$0x3]
  %1125 = vrot.lane.b32.xlu0 %v1120, 64
  %v1126 = vpop.permute.xlu0 %1125
  %v1127 = vsel %vm150, %v1126, 0
  %v1130 = vsel %vm150, %v1121, 0
  %v1133 = vsel %vm150, %v1122, 0
  %1135 = vmatprep.subr.mxu0 0.0
  %1136 = vmatpush1.xpose.msra.mxu0 0.0
  %1137 = vmatprep.subr.mxu0 0.0
  %1138 = vmatpush1.xpose.msra.mxu0 0.0
  %1139 = vmatprep.subr.mxu0 0.0
  %1140 = vmatpush1.xpose.msra.mxu0 0.0
  %1141 = vmatprep.subr.mxu0 0.0
  %1142 = vmatpush1.xpose.msra.mxu0 0.0
  %1143 = vmatprep.subr.mxu0 0.0
  %1144 = vmatpush1.xpose.msra.mxu0 0.0
  %1145 = vmatprep.subr.mxu0 0.0
  %1146 = vmatpush1.xpose.msra.mxu0 0.0
  %1147 = vmatprep.subr.mxu0 0.0
  %1148 = vmatpush1.xpose.msra.mxu0 0.0
  %1149 = vmatprep.subr.mxu0 0.0
  %1150 = vmatpush1.xpose.msra.mxu0 0.0
  %1151 = vmatprep.subr.mxu0 0.0
  %1152 = vmatpush1.xpose.msra.mxu0 0.0
  %1153 = vmatprep.subr.mxu0 0.0
  %1154 = vmatpush1.xpose.msra.mxu0 0.0
  %1155 = vmatprep.subr.mxu0 0.0
  %1156 = vmatpush1.xpose.msra.mxu0 0.0
  %1157 = vmatprep.subr.mxu0 0.0
  %1158 = vmatpush1.xpose.msra.mxu0 0.0
  %1159 = vmatprep.subr.mxu0 0.0
  %1160 = vmatpush1.xpose.msra.mxu0 0.0
  %1161 = vmatprep.subr.mxu0 0.0
  %1162 = vmatpush1.xpose.msra.mxu0 0.0
  %1163 = vmatprep.subr.mxu0 0.0
  %1164 = vmatpush1.xpose.msra.mxu0 %v1133
  %1165 = vmatprep.subr.mxu0 0.0
  %1166 = vmatpush1.xpose.msra.mxu0 %v1130
  %1167 = vmatprep.subr.mxu0 0.0
  %1168 = vmatpush2.xpose.msra.mxu0 0.0
  %1169 = vmatprep.subr.mxu0 0.0
  %1170 = vmatpush2.xpose.msra.mxu0 0.0
  %1171 = vmatprep.subr.mxu0 0.0
  %1172 = vmatpush2.xpose.msra.mxu0 0.0
  %1173 = vmatprep.subr.mxu0 0.0
  %1174 = vmatpush2.xpose.msra.mxu0 0.0
  %1175 = vmatprep.subr.mxu0 0.0
  %1176 = vmatpush2.xpose.msra.mxu0 0.0
  %1177 = vmatprep.subr.mxu0 0.0
  %1178 = vmatpush2.xpose.msra.mxu0 0.0
  %1179 = vmatprep.subr.mxu0 0.0
  %1180 = vmatpush2.xpose.msra.mxu0 0.0
  %1181 = vmatprep.subr.mxu0 0.0
  %1182 = vmatpush2.xpose.msra.mxu0 0.0
  %1183 = vmatprep.subr.mxu0 0.0
  %1184 = vmatpush2.xpose.msra.mxu0 0.0
  %1185 = vmatprep.subr.mxu0 0.0
  %1186 = vmatpush2.xpose.msra.mxu0 0.0
  %1187 = vmatprep.subr.mxu0 0.0
  %1188 = vmatpush2.xpose.msra.mxu0 0.0
  %1189 = vmatprep.subr.mxu0 0.0
  %1190 = vmatpush2.xpose.msra.mxu0 0.0
  %1191 = vmatprep.subr.mxu0 0.0
  %1192 = vmatpush2.xpose.msra.mxu0 0.0
  %1193 = vmatprep.subr.mxu0 0.0
  %1194 = vmatpush2.xpose.msra.mxu0 0.0
  %1195 = vmatprep.subr.mxu0 0.0
  %1196 = vmatpush2.xpose.msra.mxu0 0.0
  %1197 = vmatprep.subr.mxu0 0.0
  %1198 = vmatpush2.xpose.msra.mxu0 0.0
  %1199 = vmatprep.mubr.f32.mxu0 0.0
  %1200 = vmatmul.mubr.f32.gmra.mxu0 %v1127
  %v1201 = vpop.f32.mrf.mxu0
  %v1202 = vadd.f32 %v1123, %v1201
  %v1203 = vpop.f32.mrf.mxu0
  %1204 = vdwg.mxu0
  %v1205 = vsel %vm585, %v1202, -inf
  %1206 = vmax.xlane.f32.xlu0 %v1205
  %v1207 = vpop.xlane.xlu0 %1206
  %v1208 = vsub.f32 %v1202, %v1207
  %v1209 = vmul.f32 %v1208, 1.442695
  %v1210 = vpow.pop %v1209
  %v1211 = vsel %vm585, %v1210, 0.0
  %1212 = vadd.xlane.f32.xlu0 %v1211
  %v1213 = vpop.xlane.xlu0 %1212
  %v1214 = vrcp.pop %v1213
  %v1215 = vmul.f32 %v1210, %v1214
  %v1217 = vsel %vm65, %v1215, 0
  %1219 = vmatprep.subr.mxu0 0.0
  %1220 = vmatpush1.msra.mxu0 0.0
  %1221 = vmatprep.subr.mxu0 0.0
  %1222 = vmatpush1.msra.mxu0 0.0
  %1223 = vmatprep.subr.mxu0 0.0
  %1224 = vmatpush1.msra.mxu0 0.0
  %1225 = vmatprep.subr.mxu0 0.0
  %1226 = vmatpush1.msra.mxu0 0.0
  %1227 = vmatprep.subr.mxu0 0.0
  %1228 = vmatpush1.msra.mxu0 0.0
  %1229 = vmatprep.subr.mxu0 0.0
  %1230 = vmatpush1.msra.mxu0 0.0
  %1231 = vmatprep.subr.mxu0 0.0
  %1232 = vmatpush1.msra.mxu0 0.0
  %1233 = vmatprep.subr.mxu0 0.0
  %1234 = vmatpush1.msra.mxu0 0.0
  %1235 = vmatprep.subr.mxu0 0.0
  %1236 = vmatpush1.msra.mxu0 0.0
  %1237 = vmatprep.subr.mxu0 0.0
  %1238 = vmatpush1.msra.mxu0 0.0
  %1239 = vmatprep.subr.mxu0 0.0
  %1240 = vmatpush1.msra.mxu0 0.0
  %1241 = vmatprep.subr.mxu0 0.0
  %1242 = vmatpush1.msra.mxu0 0.0
  %1243 = vmatprep.subr.mxu0 0.0
  %1244 = vmatpush1.msra.mxu0 0.0
  %1245 = vmatprep.subr.mxu0 0.0
  %1246 = vmatpush1.msra.mxu0 0.0
  %1247 = vmatprep.subr.mxu0 0.0
  %1248 = vmatpush1.msra.mxu0 %v1122
  %1249 = vmatprep.subr.mxu0 0.0
  %1250 = vmatpush1.msra.mxu0 %v1121
  %1251 = vmatprep.subr.mxu0 0.0
  %1252 = vmatpush2.msra.mxu0 0.0
  %1253 = vmatprep.subr.mxu0 0.0
  %1254 = vmatpush2.msra.mxu0 0.0
  %1255 = vmatprep.subr.mxu0 0.0
  %1256 = vmatpush2.msra.mxu0 0.0
  %1257 = vmatprep.subr.mxu0 0.0
  %1258 = vmatpush2.msra.mxu0 0.0
  %1259 = vmatprep.subr.mxu0 0.0
  %1260 = vmatpush2.msra.mxu0 0.0
  %1261 = vmatprep.subr.mxu0 0.0
  %1262 = vmatpush2.msra.mxu0 0.0
  %1263 = vmatprep.subr.mxu0 0.0
  %1264 = vmatpush2.msra.mxu0 0.0
  %1265 = vmatprep.subr.mxu0 0.0
  %1266 = vmatpush2.msra.mxu0 0.0
  %1267 = vmatprep.subr.mxu0 0.0
  %1268 = vmatpush2.msra.mxu0 0.0
  %1269 = vmatprep.subr.mxu0 0.0
  %1270 = vmatpush2.msra.mxu0 0.0
  %1271 = vmatprep.subr.mxu0 0.0
  %1272 = vmatpush2.msra.mxu0 0.0
  %1273 = vmatprep.subr.mxu0 0.0
  %1274 = vmatpush2.msra.mxu0 0.0
  %1275 = vmatprep.subr.mxu0 0.0
  %1276 = vmatpush2.msra.mxu0 0.0
  %1277 = vmatprep.subr.mxu0 0.0
  %1278 = vmatpush2.msra.mxu0 0.0
  %1279 = vmatprep.subr.mxu0 0.0
  %1280 = vmatpush2.msra.mxu0 0.0
  %1281 = vmatprep.subr.mxu0 0.0
  %1282 = vmatpush2.msra.mxu0 0.0
  %1283 = vmatprep.mubr.f32.mxu0 0.0
  %1284 = vmatmul.mubr.f32.gmra.mxu0 %v1217
  %v1285 = vpop.f32.mrf.mxu0
  %v1286 = vadd.f32 0.0, %v1285
  %v1287 = vpop.f32.mrf.mxu0
  %1288 = vdwg.mxu0
  %v1289 = vsel %vm150, %v1286, %v1120
  %v1290 = vld [vmem:[%s12] sm:$0xff]
  %v1291 = vld [vmem:[%s12 + $0x8] sm:$0xff]
  %v1292 = vld [vmem:[%s12 + $0x10] sm:$0xff]
  %v1293 = vld [vmem:[%s12 + $0x18] sm:$0xff]
  %v1294 = vld [vmem:[%s12 + $0x20] sm:$0xff]
  %v1295 = vld [vmem:[%s12 + $0x28] sm:$0xff]
  %v1296 = vld [vmem:[%s12 + $0x30] sm:$0xff]
  %v1297 = vld [vmem:[%s12 + $0x38] sm:$0xff]
  %v1298 = vld [vmem:[%s12 + $0x40] sm:$0xff]
  %v1299 = vld [vmem:[%s12 + $0x48] sm:$0xff]
  %v1300 = vld [vmem:[%s12 + $0x50] sm:$0xff]
  %v1301 = vld [vmem:[%s12 + $0x58] sm:$0xff]
  %v1302 = vld [vmem:[%s12 + $0x60] sm:$0xff]
  %v1303 = vld [vmem:[%s12 + $0x68] sm:$0xff]
  %v1304 = vld [vmem:[%s12 + $0x70] sm:$0xff]
  %v1305 = vld [vmem:[%s12 + $0x78] sm:$0xff]
  %v1306 = vld [vmem:[%s13] sm:$0x1]
  %v1308 = vlaneseq
  %v1309 = vshrl.u32 %v1308, 7
  %v1310 = vsub.s32 0, %v1309
  %v1311 = vrot.slane %v1306, %v1310
  %1313 = vmatprep.subr.mxu0 0.0
  %1314 = vmatpush1.msra.mxu0 %v1305
  %1315 = vmatprep.subr.mxu0 0.0
  %1316 = vmatpush1.msra.mxu0 %v1304
  %1317 = vmatprep.subr.mxu0 0.0
  %1318 = vmatpush1.msra.mxu0 %v1303
  %1319 = vmatprep.subr.mxu0 0.0
  %1320 = vmatpush1.msra.mxu0 %v1302
  %1321 = vmatprep.subr.mxu0 0.0
  %1322 = vmatpush1.msra.mxu0 %v1301
  %1323 = vmatprep.subr.mxu0 0.0
  %1324 = vmatpush1.msra.mxu0 %v1300
  %1325 = vmatprep.subr.mxu0 0.0
  %1326 = vmatpush1.msra.mxu0 %v1299
  %1327 = vmatprep.subr.mxu0 0.0
  %1328 = vmatpush1.msra.mxu0 %v1298
  %1329 = vmatprep.subr.mxu0 0.0
  %1330 = vmatpush1.msra.mxu0 %v1297
  %1331 = vmatprep.subr.mxu0 0.0
  %1332 = vmatpush1.msra.mxu0 %v1296
  %1333 = vmatprep.subr.mxu0 0.0
  %1334 = vmatpush1.msra.mxu0 %v1295
  %1335 = vmatprep.subr.mxu0 0.0
  %1336 = vmatpush1.msra.mxu0 %v1294
  %1337 = vmatprep.subr.mxu0 0.0
  %1338 = vmatpush1.msra.mxu0 %v1293
  %1339 = vmatprep.subr.mxu0 0.0
  %1340 = vmatpush1.msra.mxu0 %v1292
  %1341 = vmatprep.subr.mxu0 0.0
  %1342 = vmatpush1.msra.mxu0 %v1291
  %1343 = vmatprep.subr.mxu0 0.0
  %1344 = vmatpush1.msra.mxu0 %v1290
  %1345 = vmatprep.subr.mxu0 0.0
  %1346 = vmatpush2.msra.mxu0 0.0
  %1347 = vmatprep.subr.mxu0 0.0
  %1348 = vmatpush2.msra.mxu0 0.0
  %1349 = vmatprep.subr.mxu0 0.0
  %1350 = vmatpush2.msra.mxu0 0.0
  %1351 = vmatprep.subr.mxu0 0.0
  %1352 = vmatpush2.msra.mxu0 0.0
  %1353 = vmatprep.subr.mxu0 0.0
  %1354 = vmatpush2.msra.mxu0 0.0
  %1355 = vmatprep.subr.mxu0 0.0
  %1356 = vmatpush2.msra.mxu0 0.0
  %1357 = vmatprep.subr.mxu0 0.0
  %1358 = vmatpush2.msra.mxu0 0.0
  %1359 = vmatprep.subr.mxu0 0.0
  %1360 = vmatpush2.msra.mxu0 0.0
  %1361 = vmatprep.subr.mxu0 0.0
  %1362 = vmatpush2.msra.mxu0 0.0
  %1363 = vmatprep.subr.mxu0 0.0
  %1364 = vmatpush2.msra.mxu0 0.0
  %1365 = vmatprep.subr.mxu0 0.0
  %1366 = vmatpush2.msra.mxu0 0.0
  %1367 = vmatprep.subr.mxu0 0.0
  %1368 = vmatpush2.msra.mxu0 0.0
  %1369 = vmatprep.subr.mxu0 0.0
  %1370 = vmatpush2.msra.mxu0 0.0
  %1371 = vmatprep.subr.mxu0 0.0
  %1372 = vmatpush2.msra.mxu0 0.0
  %1373 = vmatprep.subr.mxu0 0.0
  %1374 = vmatpush2.msra.mxu0 0.0
  %1375 = vmatprep.subr.mxu0 0.0
  %1376 = vmatpush2.msra.mxu0 0.0
  %1377 = vmatprep.mubr.f32.mxu0 0.0
  %1378 = vmatmul.mubr.f32.gmra.mxu0 %v1289
  %v1379 = vpop.f32.mrf.mxu0
  %v1380 = vadd.f32 %v1311, %v1379
  %v1381 = vpop.f32.mrf.mxu0
  %1382 = vdwg.mxu0
  %v1383 = vtanh.pop %v1380
  %v1385 = vrot.slane %v1383, 1
  %1386 = vrot.lane.b32.xlu0 %v1385, 64
  %v1387 = vpop.permute.xlu0 %1386
  %v1389 = vsel %vm150, %v1383, %v1387
  %1390 = vst [vmem:[%s14 + $0x1] sm:$0x1] %v1389
  %v1391 = vld [vmem:[#allocation2] sm:$0x30]
  %v1392 = vld [vmem:[#allocation2 + $0x8] sm:$0x30]
  %v1393 = vld [vmem:[%s6] sm:$0xff]
  %v1394 = vld [vmem:[%s6 + $0x8] sm:$0xff]
  %v1395 = vld [vmem:[%s6 + $0x10] sm:$0xff]
  %v1396 = vld [vmem:[%s6 + $0x18] sm:$0xff]
  %v1397 = vld [vmem:[%s6 + $0x20] sm:$0xff]
  %v1398 = vld [vmem:[%s6 + $0x28] sm:$0xff]
  %v1399 = vld [vmem:[%s6 + $0x30] sm:$0xff]
  %v1400 = vld [vmem:[%s6 + $0x38] sm:$0xff]
  %v1401 = vld [vmem:[%s6 + $0x40] sm:$0xff]
  %v1402 = vld [vmem:[%s6 + $0x48] sm:$0xff]
  %v1403 = vld [vmem:[%s6 + $0x50] sm:$0xff]
  %v1404 = vld [vmem:[%s6 + $0x58] sm:$0xff]
  %v1405 = vld [vmem:[%s6 + $0x60] sm:$0xff]
  %v1406 = vld [vmem:[%s6 + $0x68] sm:$0xff]
  %v1407 = vld [vmem:[%s6 + $0x70] sm:$0xff]
  %v1408 = vld [vmem:[%s6 + $0x78] sm:$0xff]
  %v1409 = vld [vmem:[%s7] sm:$0x3]
  %v1411 = vlaneseq
  %v1412 = vshrl.u32 %v1411, 7
  %v1413 = vsub.s32 0, %v1412
  %v1414 = vrot.slane %v1409, %v1413
  %v1415 = vlaneseq
  %v1416 = vshrl.u32 %v1415, 7
  %v1417 = vsub.s32 1, %v1416
  %v1418 = vrot.slane %v1409, %v1417
  %1421 = vmatprep.subr.mxu0 0.0
  %1422 = vmatpush1.msra.mxu0 0.0
  %1423 = vmatprep.subr.mxu0 0.0
  %1424 = vmatpush1.msra.mxu0 0.0
  %1425 = vmatprep.subr.mxu0 0.0
  %1426 = vmatpush1.msra.mxu0 0.0
  %1427 = vmatprep.subr.mxu0 0.0
  %1428 = vmatpush1.msra.mxu0 0.0
  %1429 = vmatprep.subr.mxu0 0.0
  %1430 = vmatpush1.msra.mxu0 0.0
  %1431 = vmatprep.subr.mxu0 0.0
  %1432 = vmatpush1.msra.mxu0 0.0
  %1433 = vmatprep.subr.mxu0 0.0
  %1434 = vmatpush1.msra.mxu0 0.0
  %1435 = vmatprep.subr.mxu0 0.0
  %1436 = vmatpush1.msra.mxu0 0.0
  %1437 = vmatprep.subr.mxu0 %v1408
  %1438 = vmatpush1.msra.mxu0 %v1407
  %1439 = vmatprep.subr.mxu0 %v1406
  %1440 = vmatpush1.msra.mxu0 %v1405
  %1441 = vmatprep.subr.mxu0 %v1404
  %1442 = vmatpush1.msra.mxu0 %v1403
  %1443 = vmatprep.subr.mxu0 %v1402
  %1444 = vmatpush1.msra.mxu0 %v1401
  %1445 = vmatprep.subr.mxu0 %v1400
  %1446 = vmatpush1.msra.mxu0 %v1399
  %1447 = vmatprep.subr.mxu0 %v1398
  %1448 = vmatpush1.msra.mxu0 %v1397
  %1449 = vmatprep.subr.mxu0 %v1396
  %1450 = vmatpush1.msra.mxu0 %v1395
  %1451 = vmatprep.subr.mxu0 %v1394
  %1452 = vmatpush1.msra.mxu0 %v1393
  %1453 = vmatprep.subr.mxu0 0.0
  %1454 = vmatpush2.msra.mxu0 0.0
  %1455 = vmatprep.subr.mxu0 0.0
  %1456 = vmatpush2.msra.mxu0 0.0
  %1457 = vmatprep.subr.mxu0 0.0
  %1458 = vmatpush2.msra.mxu0 0.0
  %1459 = vmatprep.subr.mxu0 0.0
  %1460 = vmatpush2.msra.mxu0 0.0
  %1461 = vmatprep.subr.mxu0 0.0
  %1462 = vmatpush2.msra.mxu0 0.0
  %1463 = vmatprep.subr.mxu0 0.0
  %1464 = vmatpush2.msra.mxu0 0.0
  %1465 = vmatprep.subr.mxu0 0.0
  %1466 = vmatpush2.msra.mxu0 0.0
  %1467 = vmatprep.subr.mxu0 0.0
  %1468 = vmatpush2.msra.mxu0 0.0
  %1469 = vmatprep.subr.mxu0 0.0
  %1470 = vmatpush2.msra.mxu0 0.0
  %1471 = vmatprep.subr.mxu0 0.0
  %1472 = vmatpush2.msra.mxu0 0.0
  %1473 = vmatprep.subr.mxu0 0.0
  %1474 = vmatpush2.msra.mxu0 0.0
  %1475 = vmatprep.subr.mxu0 0.0
  %1476 = vmatpush2.msra.mxu0 0.0
  %1477 = vmatprep.subr.mxu0 0.0
  %1478 = vmatpush2.msra.mxu0 0.0
  %1479 = vmatprep.subr.mxu0 0.0
  %1480 = vmatpush2.msra.mxu0 0.0
  %1481 = vmatprep.subr.mxu0 0.0
  %1482 = vmatpush2.msra.mxu0 0.0
  %1483 = vmatprep.subr.mxu0 0.0
  %1484 = vmatpush2.msra.mxu0 0.0
  %1485 = vmatprep.mubr.f32.mxu0 0.0
  %1486 = vmatmul.mubr.f32.gmra.mxu0 %v931
  %v1487 = vpop.f32.mrf.mxu0
  %v1488 = vadd.f32 %v1414, %v1487
  %v1489 = vpop.f32.mrf.mxu0
  %v1490 = vadd.f32 %v1418, %v1489
  %1491 = vdwg.mxu0
  %v1493 = vrot.slane %v1488, 4
  %v1495 = vadd.f32 %v1391, %v1493
  %v1496 = vxor.u32 %v1495, 2147483648
  %v1497 = vmul.f32 %v1496, 1.442695
  %v1498 = vpow.pop %v1497
  %v1499 = vadd.f32 %v1498, 1.0
  %v1500 = vrcp.pop %v1499
  %v1501 = vmul.f32 1.0, %v1500
  %v1503 = vrot.slane %v1490, 4
  %v1505 = vmul.f32 %v1501, %v1503
  %v1506 = vadd.f32 %v1392, %v1505
  %v1507 = vtanh.pop %v1506
  %v1508 = vsub.f32 1.0, %v1501
  %1510 = vrot.lane.b32.xlu0 %v1507, 64
  %v1511 = vpop.permute.xlu0 %1510
  %v1513 = vmul.f32 %v1508, %v1511
  %v1514 = vrot.slane %v898, 6
  %v1516 = vmul.f32 %v1501, %v1514
  %v1517 = vadd.f32 %v1513, %v1516
  %v1518 = vld [vmem:[%s8] sm:$0xff]
  %v1519 = vld [vmem:[%s8 + $0x8] sm:$0xff]
  %v1520 = vld [vmem:[%s8 + $0x10] sm:$0xff]
  %v1521 = vld [vmem:[%s8 + $0x18] sm:$0xff]
  %v1522 = vld [vmem:[%s8 + $0x20] sm:$0xff]
  %v1523 = vld [vmem:[%s8 + $0x28] sm:$0xff]
  %v1524 = vld [vmem:[%s8 + $0x30] sm:$0xff]
  %v1525 = vld [vmem:[%s8 + $0x38] sm:$0xff]
  %v1526 = vld [vmem:[%s8 + $0x40] sm:$0xff]
  %v1527 = vld [vmem:[%s8 + $0x48] sm:$0xff]
  %v1528 = vld [vmem:[%s8 + $0x50] sm:$0xff]
  %v1529 = vld [vmem:[%s8 + $0x58] sm:$0xff]
  %v1530 = vld [vmem:[%s8 + $0x60] sm:$0xff]
  %v1531 = vld [vmem:[%s8 + $0x68] sm:$0xff]
  %v1532 = vld [vmem:[%s8 + $0x70] sm:$0xff]
  %v1533 = vld [vmem:[%s8 + $0x78] sm:$0xff]
  %v1534 = vld [vmem:[%s9] sm:$0x3]
  %v1536 = vlaneseq
  %v1537 = vshrl.u32 %v1536, 7
  %v1538 = vsub.s32 0, %v1537
  %v1539 = vrot.slane %v1534, %v1538
  %v1540 = vlaneseq
  %v1541 = vshrl.u32 %v1540, 7
  %v1542 = vsub.s32 1, %v1541
  %v1543 = vrot.slane %v1534, %v1542
  %v1547 = vrot.slane %v1517, 4
  %1548 = vrot.lane.b32.xlu0 %v1547, 64
  %v1549 = vpop.permute.xlu0 %1548
  %v1550 = vsel %vm150, %v1549, 0
  %1552 = vmatprep.subr.mxu0 0.0
  %1553 = vmatpush1.msra.mxu0 0.0
  %1554 = vmatprep.subr.mxu0 0.0
  %1555 = vmatpush1.msra.mxu0 0.0
  %1556 = vmatprep.subr.mxu0 0.0
  %1557 = vmatpush1.msra.mxu0 0.0
  %1558 = vmatprep.subr.mxu0 0.0
  %1559 = vmatpush1.msra.mxu0 0.0
  %1560 = vmatprep.subr.mxu0 0.0
  %1561 = vmatpush1.msra.mxu0 0.0
  %1562 = vmatprep.subr.mxu0 0.0
  %1563 = vmatpush1.msra.mxu0 0.0
  %1564 = vmatprep.subr.mxu0 0.0
  %1565 = vmatpush1.msra.mxu0 0.0
  %1566 = vmatprep.subr.mxu0 0.0
  %1567 = vmatpush1.msra.mxu0 0.0
  %1568 = vmatprep.subr.mxu0 %v1533
  %1569 = vmatpush1.msra.mxu0 %v1532
  %1570 = vmatprep.subr.mxu0 %v1531
  %1571 = vmatpush1.msra.mxu0 %v1530
  %1572 = vmatprep.subr.mxu0 %v1529
  %1573 = vmatpush1.msra.mxu0 %v1528
  %1574 = vmatprep.subr.mxu0 %v1527
  %1575 = vmatpush1.msra.mxu0 %v1526
  %1576 = vmatprep.subr.mxu0 %v1525
  %1577 = vmatpush1.msra.mxu0 %v1524
  %1578 = vmatprep.subr.mxu0 %v1523
  %1579 = vmatpush1.msra.mxu0 %v1522
  %1580 = vmatprep.subr.mxu0 %v1521
  %1581 = vmatpush1.msra.mxu0 %v1520
  %1582 = vmatprep.subr.mxu0 %v1519
  %1583 = vmatpush1.msra.mxu0 %v1518
  %1584 = vmatprep.subr.mxu0 0.0
  %1585 = vmatpush2.msra.mxu0 0.0
  %1586 = vmatprep.subr.mxu0 0.0
  %1587 = vmatpush2.msra.mxu0 0.0
  %1588 = vmatprep.subr.mxu0 0.0
  %1589 = vmatpush2.msra.mxu0 0.0
  %1590 = vmatprep.subr.mxu0 0.0
  %1591 = vmatpush2.msra.mxu0 0.0
  %1592 = vmatprep.subr.mxu0 0.0
  %1593 = vmatpush2.msra.mxu0 0.0
  %1594 = vmatprep.subr.mxu0 0.0
  %1595 = vmatpush2.msra.mxu0 0.0
  %1596 = vmatprep.subr.mxu0 0.0
  %1597 = vmatpush2.msra.mxu0 0.0
  %1598 = vmatprep.subr.mxu0 0.0
  %1599 = vmatpush2.msra.mxu0 0.0
  %1600 = vmatprep.subr.mxu0 0.0
  %1601 = vmatpush2.msra.mxu0 0.0
  %1602 = vmatprep.subr.mxu0 0.0
  %1603 = vmatpush2.msra.mxu0 0.0
  %1604 = vmatprep.subr.mxu0 0.0
  %1605 = vmatpush2.msra.mxu0 0.0
  %1606 = vmatprep.subr.mxu0 0.0
  %1607 = vmatpush2.msra.mxu0 0.0
  %1608 = vmatprep.subr.mxu0 0.0
  %1609 = vmatpush2.msra.mxu0 0.0
  %1610 = vmatprep.subr.mxu0 0.0
  %1611 = vmatpush2.msra.mxu0 0.0
  %1612 = vmatprep.subr.mxu0 0.0
  %1613 = vmatpush2.msra.mxu0 0.0
  %1614 = vmatprep.subr.mxu0 0.0
  %1615 = vmatpush2.msra.mxu0 0.0
  %1616 = vmatprep.mubr.f32.mxu0 0.0
  %1617 = vmatmul.mubr.f32.gmra.mxu0 %v1550
  %v1618 = vpop.f32.mrf.mxu0
  %v1619 = vadd.f32 %v1539, %v1618
  %v1620 = vpop.f32.mrf.mxu0
  %v1621 = vadd.f32 %v1543, %v1620
  %1622 = vdwg.mxu0
  %v1623 = vld [vmem:[%s10] sm:$0xff]
  %v1624 = vld [vmem:[%s10 + $0x8] sm:$0xff]
  %v1625 = vld [vmem:[%s10 + $0x10] sm:$0xff]
  %v1626 = vld [vmem:[%s10 + $0x18] sm:$0xff]
  %v1627 = vld [vmem:[%s10 + $0x20] sm:$0xff]
  %v1628 = vld [vmem:[%s10 + $0x28] sm:$0xff]
  %v1629 = vld [vmem:[%s10 + $0x30] sm:$0xff]
  %v1630 = vld [vmem:[%s10 + $0x38] sm:$0xff]
  %v1631 = vld [vmem:[%s10 + $0x40] sm:$0xff]
  %v1632 = vld [vmem:[%s10 + $0x48] sm:$0xff]
  %v1633 = vld [vmem:[%s10 + $0x50] sm:$0xff]
  %v1634 = vld [vmem:[%s10 + $0x58] sm:$0xff]
  %v1635 = vld [vmem:[%s10 + $0x60] sm:$0xff]
  %v1636 = vld [vmem:[%s10 + $0x68] sm:$0xff]
  %v1637 = vld [vmem:[%s10 + $0x70] sm:$0xff]
  %v1638 = vld [vmem:[%s10 + $0x78] sm:$0xff]
  %v1639 = vld [vmem:[%s11] sm:$0x3]
  %v1641 = vlaneseq
  %v1642 = vshrl.u32 %v1641, 7
  %v1643 = vsub.s32 0, %v1642
  %v1644 = vrot.slane %v1639, %v1643
  %v1645 = vlaneseq
  %v1646 = vshrl.u32 %v1645, 7
  %v1647 = vsub.s32 1, %v1646
  %v1648 = vrot.slane %v1639, %v1647
  %1651 = vmatprep.subr.mxu0 0.0
  %1652 = vmatpush1.msra.mxu0 0.0
  %1653 = vmatprep.subr.mxu0 0.0
  %1654 = vmatpush1.msra.mxu0 0.0
  %1655 = vmatprep.subr.mxu0 0.0
  %1656 = vmatpush1.msra.mxu0 0.0
  %1657 = vmatprep.subr.mxu0 0.0
  %1658 = vmatpush1.msra.mxu0 0.0
  %1659 = vmatprep.subr.mxu0 0.0
  %1660 = vmatpush1.msra.mxu0 0.0
  %1661 = vmatprep.subr.mxu0 0.0
  %1662 = vmatpush1.msra.mxu0 0.0
  %1663 = vmatprep.subr.mxu0 0.0
  %1664 = vmatpush1.msra.mxu0 0.0
  %1665 = vmatprep.subr.mxu0 0.0
  %1666 = vmatpush1.msra.mxu0 0.0
  %1667 = vmatprep.subr.mxu0 %v1638
  %1668 = vmatpush1.msra.mxu0 %v1637
  %1669 = vmatprep.subr.mxu0 %v1636
  %1670 = vmatpush1.msra.mxu0 %v1635
  %1671 = vmatprep.subr.mxu0 %v1634
  %1672 = vmatpush1.msra.mxu0 %v1633
  %1673 = vmatprep.subr.mxu0 %v1632
  %1674 = vmatpush1.msra.mxu0 %v1631
  %1675 = vmatprep.subr.mxu0 %v1630
  %1676 = vmatpush1.msra.mxu0 %v1629
  %1677 = vmatprep.subr.mxu0 %v1628
  %1678 = vmatpush1.msra.mxu0 %v1627
  %1679 = vmatprep.subr.mxu0 %v1626
  %1680 = vmatpush1.msra.mxu0 %v1625
  %1681 = vmatprep.subr.mxu0 %v1624
  %1682 = vmatpush1.msra.mxu0 %v1623
  %1683 = vmatprep.subr.mxu0 0.0
  %1684 = vmatpush2.msra.mxu0 0.0
  %1685 = vmatprep.subr.mxu0 0.0
  %1686 = vmatpush2.msra.mxu0 0.0
  %1687 = vmatprep.subr.mxu0 0.0
  %1688 = vmatpush2.msra.mxu0 0.0
  %1689 = vmatprep.subr.mxu0 0.0
  %1690 = vmatpush2.msra.mxu0 0.0
  %1691 = vmatprep.subr.mxu0 0.0
  %1692 = vmatpush2.msra.mxu0 0.0
  %1693 = vmatprep.subr.mxu0 0.0
  %1694 = vmatpush2.msra.mxu0 0.0
  %1695 = vmatprep.subr.mxu0 0.0
  %1696 = vmatpush2.msra.mxu0 0.0
  %1697 = vmatprep.subr.mxu0 0.0
  %1698 = vmatpush2.msra.mxu0 0.0
  %1699 = vmatprep.subr.mxu0 0.0
  %1700 = vmatpush2.msra.mxu0 0.0
  %1701 = vmatprep.subr.mxu0 0.0
  %1702 = vmatpush2.msra.mxu0 0.0
  %1703 = vmatprep.subr.mxu0 0.0
  %1704 = vmatpush2.msra.mxu0 0.0
  %1705 = vmatprep.subr.mxu0 0.0
  %1706 = vmatpush2.msra.mxu0 0.0
  %1707 = vmatprep.subr.mxu0 0.0
  %1708 = vmatpush2.msra.mxu0 0.0
  %1709 = vmatprep.subr.mxu0 0.0
  %1710 = vmatpush2.msra.mxu0 0.0
  %1711 = vmatprep.subr.mxu0 0.0
  %1712 = vmatpush2.msra.mxu0 0.0
  %1713 = vmatprep.subr.mxu0 0.0
  %1714 = vmatpush2.msra.mxu0 0.0
  %1715 = vmatprep.mubr.f32.mxu0 0.0
  %1716 = vmatmul.mubr.f32.gmra.mxu0 %v1127
  %v1717 = vpop.f32.mrf.mxu0
  %v1718 = vadd.f32 %v1644, %v1717
  %v1719 = vpop.f32.mrf.mxu0
  %v1720 = vadd.f32 %v1648, %v1719
  %1721 = vdwg.mxu0
  %v1722 = vadd.f32 %v1619, %v1718
  %v1723 = vxor.u32 %v1722, 2147483648
  %v1724 = vmul.f32 %v1723, 1.442695
  %v1725 = vpow.pop %v1724
  %v1726 = vadd.f32 %v1725, 1.0
  %v1727 = vrcp.pop %v1726
  %v1728 = vmul.f32 1.0, %v1727
  %v1729 = vmul.f32 %v1728, %v1720
  %v1730 = vadd.f32 %v1621, %v1729
  %v1731 = vtanh.pop %v1730
  %v1732 = vsub.f32 1.0, %v1728
  %1734 = vrot.lane.b32.xlu0 %v1731, 64
  %v1735 = vpop.permute.xlu0 %1734
  %v1737 = vmul.f32 %v1732, %v1735
  %v1738 = vmul.f32 %v1728, %v1120
  %v1739 = vadd.f32 %v1737, %v1738
  %v1740 = vld [vmem:[%s1] sm:$0xff]
  %v1741 = vld [vmem:[%s1 + $0x8] sm:$0xff]
  %v1742 = vld [vmem:[%s2] sm:$0x3]
  %1744 = vrot.lane.b32.xlu0 %v1739, 64
  %v1745 = vpop.permute.xlu0 %1744
  %v1746 = vsel %vm150, %v1745, 0
  %v1749 = vsel %vm150, %v1740, 0
  %v1752 = vsel %vm150, %v1741, 0
  %1754 = vmatprep.subr.mxu0 0.0
  %1755 = vmatpush1.xpose.msra.mxu0 0.0
  %1756 = vmatprep.subr.mxu0 0.0
  %1757 = vmatpush1.xpose.msra.mxu0 0.0
  %1758 = vmatprep.subr.mxu0 0.0
  %1759 = vmatpush1.xpose.msra.mxu0 0.0
  %1760 = vmatprep.subr.mxu0 0.0
  %1761 = vmatpush1.xpose.msra.mxu0 0.0
  %1762 = vmatprep.subr.mxu0 0.0
  %1763 = vmatpush1.xpose.msra.mxu0 0.0
  %1764 = vmatprep.subr.mxu0 0.0
  %1765 = vmatpush1.xpose.msra.mxu0 0.0
  %1766 = vmatprep.subr.mxu0 0.0
  %1767 = vmatpush1.xpose.msra.mxu0 0.0
  %1768 = vmatprep.subr.mxu0 0.0
  %1769 = vmatpush1.xpose.msra.mxu0 0.0
  %1770 = vmatprep.subr.mxu0 0.0
  %1771 = vmatpush1.xpose.msra.mxu0 0.0
  %1772 = vmatprep.subr.mxu0 0.0
  %1773 = vmatpush1.xpose.msra.mxu0 0.0
  %1774 = vmatprep.subr.mxu0 0.0
  %1775 = vmatpush1.xpose.msra.mxu0 0.0
  %1776 = vmatprep.subr.mxu0 0.0
  %1777 = vmatpush1.xpose.msra.mxu0 0.0
  %1778 = vmatprep.subr.mxu0 0.0
  %1779 = vmatpush1.xpose.msra.mxu0 0.0
  %1780 = vmatprep.subr.mxu0 0.0
  %1781 = vmatpush1.xpose.msra.mxu0 0.0
  %1782 = vmatprep.subr.mxu0 0.0
  %1783 = vmatpush1.xpose.msra.mxu0 %v1752
  %1784 = vmatprep.subr.mxu0 0.0
  %1785 = vmatpush1.xpose.msra.mxu0 %v1749
  %1786 = vmatprep.subr.mxu0 0.0
  %1787 = vmatpush2.xpose.msra.mxu0 0.0
  %1788 = vmatprep.subr.mxu0 0.0
  %1789 = vmatpush2.xpose.msra.mxu0 0.0
  %1790 = vmatprep.subr.mxu0 0.0
  %1791 = vmatpush2.xpose.msra.mxu0 0.0
  %1792 = vmatprep.subr.mxu0 0.0
  %1793 = vmatpush2.xpose.msra.mxu0 0.0
  %1794 = vmatprep.subr.mxu0 0.0
  %1795 = vmatpush2.xpose.msra.mxu0 0.0
  %1796 = vmatprep.subr.mxu0 0.0
  %1797 = vmatpush2.xpose.msra.mxu0 0.0
  %1798 = vmatprep.subr.mxu0 0.0
  %1799 = vmatpush2.xpose.msra.mxu0 0.0
  %1800 = vmatprep.subr.mxu0 0.0
  %1801 = vmatpush2.xpose.msra.mxu0 0.0
  %1802 = vmatprep.subr.mxu0 0.0
  %1803 = vmatpush2.xpose.msra.mxu0 0.0
  %1804 = vmatprep.subr.mxu0 0.0
  %1805 = vmatpush2.xpose.msra.mxu0 0.0
  %1806 = vmatprep.subr.mxu0 0.0
  %1807 = vmatpush2.xpose.msra.mxu0 0.0
  %1808 = vmatprep.subr.mxu0 0.0
  %1809 = vmatpush2.xpose.msra.mxu0 0.0
  %1810 = vmatprep.subr.mxu0 0.0
  %1811 = vmatpush2.xpose.msra.mxu0 0.0
  %1812 = vmatprep.subr.mxu0 0.0
  %1813 = vmatpush2.xpose.msra.mxu0 0.0
  %1814 = vmatprep.subr.mxu0 0.0
  %1815 = vmatpush2.xpose.msra.mxu0 0.0
  %1816 = vmatprep.subr.mxu0 0.0
  %1817 = vmatpush2.xpose.msra.mxu0 0.0
  %1818 = vmatprep.mubr.f32.mxu0 0.0
  %1819 = vmatmul.mubr.f32.gmra.mxu0 %v1746
  %v1820 = vpop.f32.mrf.mxu0
  %v1821 = vadd.f32 %v1742, %v1820
  %v1822 = vpop.f32.mrf.mxu0
  %1823 = vdwg.mxu0
  %v1824 = vsel %vm585, %v1821, -inf
  %1825 = vmax.xlane.f32.xlu0 %v1824
  %v1826 = vpop.xlane.xlu0 %1825
  %v1827 = vsub.f32 %v1821, %v1826
  %v1828 = vmul.f32 %v1827, 1.442695
  %v1829 = vpow.pop %v1828
  %v1830 = vsel %vm585, %v1829, 0.0
  %1831 = vadd.xlane.f32.xlu0 %v1830
  %v1832 = vpop.xlane.xlu0 %1831
  %v1833 = vrcp.pop %v1832
  %v1834 = vmul.f32 %v1829, %v1833
  %v1836 = vsel %vm65, %v1834, 0
  %1838 = vmatprep.subr.mxu0 0.0
  %1839 = vmatpush1.msra.mxu0 0.0
  %1840 = vmatprep.subr.mxu0 0.0
  %1841 = vmatpush1.msra.mxu0 0.0
  %1842 = vmatprep.subr.mxu0 0.0
  %1843 = vmatpush1.msra.mxu0 0.0
  %1844 = vmatprep.subr.mxu0 0.0
  %1845 = vmatpush1.msra.mxu0 0.0
  %1846 = vmatprep.subr.mxu0 0.0
  %1847 = vmatpush1.msra.mxu0 0.0
  %1848 = vmatprep.subr.mxu0 0.0
  %1849 = vmatpush1.msra.mxu0 0.0
  %1850 = vmatprep.subr.mxu0 0.0
  %1851 = vmatpush1.msra.mxu0 0.0
  %1852 = vmatprep.subr.mxu0 0.0
  %1853 = vmatpush1.msra.mxu0 0.0
  %1854 = vmatprep.subr.mxu0 0.0
  %1855 = vmatpush1.msra.mxu0 0.0
  %1856 = vmatprep.subr.mxu0 0.0
  %1857 = vmatpush1.msra.mxu0 0.0
  %1858 = vmatprep.subr.mxu0 0.0
  %1859 = vmatpush1.msra.mxu0 0.0
  %1860 = vmatprep.subr.mxu0 0.0
  %1861 = vmatpush1.msra.mxu0 0.0
  %1862 = vmatprep.subr.mxu0 0.0
  %1863 = vmatpush1.msra.mxu0 0.0
  %1864 = vmatprep.subr.mxu0 0.0
  %1865 = vmatpush1.msra.mxu0 0.0
  %1866 = vmatprep.subr.mxu0 0.0
  %1867 = vmatpush1.msra.mxu0 %v1741
  %1868 = vmatprep.subr.mxu0 0.0
  %1869 = vmatpush1.msra.mxu0 %v1740
  %1870 = vmatprep.subr.mxu0 0.0
  %1871 = vmatpush2.msra.mxu0 0.0
  %1872 = vmatprep.subr.mxu0 0.0
  %1873 = vmatpush2.msra.mxu0 0.0
  %1874 = vmatprep.subr.mxu0 0.0
  %1875 = vmatpush2.msra.mxu0 0.0
  %1876 = vmatprep.subr.mxu0 0.0
  %1877 = vmatpush2.msra.mxu0 0.0
  %1878 = vmatprep.subr.mxu0 0.0
  %1879 = vmatpush2.msra.mxu0 0.0
  %1880 = vmatprep.subr.mxu0 0.0
  %1881 = vmatpush2.msra.mxu0 0.0
  %1882 = vmatprep.subr.mxu0 0.0
  %1883 = vmatpush2.msra.mxu0 0.0
  %1884 = vmatprep.subr.mxu0 0.0
  %1885 = vmatpush2.msra.mxu0 0.0
  %1886 = vmatprep.subr.mxu0 0.0
  %1887 = vmatpush2.msra.mxu0 0.0
  %1888 = vmatprep.subr.mxu0 0.0
  %1889 = vmatpush2.msra.mxu0 0.0
  %1890 = vmatprep.subr.mxu0 0.0
  %1891 = vmatpush2.msra.mxu0 0.0
  %1892 = vmatprep.subr.mxu0 0.0
  %1893 = vmatpush2.msra.mxu0 0.0
  %1894 = vmatprep.subr.mxu0 0.0
  %1895 = vmatpush2.msra.mxu0 0.0
  %1896 = vmatprep.subr.mxu0 0.0
  %1897 = vmatpush2.msra.mxu0 0.0
  %1898 = vmatprep.subr.mxu0 0.0
  %1899 = vmatpush2.msra.mxu0 0.0
  %1900 = vmatprep.subr.mxu0 0.0
  %1901 = vmatpush2.msra.mxu0 0.0
  %1902 = vmatprep.mubr.f32.mxu0 0.0
  %1903 = vmatmul.mubr.f32.gmra.mxu0 %v1836
  %v1904 = vpop.f32.mrf.mxu0
  %v1905 = vadd.f32 0.0, %v1904
  %v1906 = vpop.f32.mrf.mxu0
  %1907 = vdwg.mxu0
  %v1908 = vsel %vm150, %v1905, %v1739
  %v1909 = vld [vmem:[%s12] sm:$0xff]
  %v1910 = vld [vmem:[%s12 + $0x8] sm:$0xff]
  %v1911 = vld [vmem:[%s12 + $0x10] sm:$0xff]
  %v1912 = vld [vmem:[%s12 + $0x18] sm:$0xff]
  %v1913 = vld [vmem:[%s12 + $0x20] sm:$0xff]
  %v1914 = vld [vmem:[%s12 + $0x28] sm:$0xff]
  %v1915 = vld [vmem:[%s12 + $0x30] sm:$0xff]
  %v1916 = vld [vmem:[%s12 + $0x38] sm:$0xff]
  %v1917 = vld [vmem:[%s12 + $0x40] sm:$0xff]
  %v1918 = vld [vmem:[%s12 + $0x48] sm:$0xff]
  %v1919 = vld [vmem:[%s12 + $0x50] sm:$0xff]
  %v1920 = vld [vmem:[%s12 + $0x58] sm:$0xff]
  %v1921 = vld [vmem:[%s12 + $0x60] sm:$0xff]
  %v1922 = vld [vmem:[%s12 + $0x68] sm:$0xff]
  %v1923 = vld [vmem:[%s12 + $0x70] sm:$0xff]
  %v1924 = vld [vmem:[%s12 + $0x78] sm:$0xff]
  %v1925 = vld [vmem:[%s13] sm:$0x1]
  %v1927 = vlaneseq
  %v1928 = vshrl.u32 %v1927, 7
  %v1929 = vsub.s32 0, %v1928
  %v1930 = vrot.slane %v1925, %v1929
  %1932 = vmatprep.subr.mxu0 0.0
  %1933 = vmatpush1.msra.mxu0 %v1924
  %1934 = vmatprep.subr.mxu0 0.0
  %1935 = vmatpush1.msra.mxu0 %v1923
  %1936 = vmatprep.subr.mxu0 0.0
  %1937 = vmatpush1.msra.mxu0 %v1922
  %1938 = vmatprep.subr.mxu0 0.0
  %1939 = vmatpush1.msra.mxu0 %v1921
  %1940 = vmatprep.subr.mxu0 0.0
  %1941 = vmatpush1.msra.mxu0 %v1920
  %1942 = vmatprep.subr.mxu0 0.0
  %1943 = vmatpush1.msra.mxu0 %v1919
  %1944 = vmatprep.subr.mxu0 0.0
  %1945 = vmatpush1.msra.mxu0 %v1918
  %1946 = vmatprep.subr.mxu0 0.0
  %1947 = vmatpush1.msra.mxu0 %v1917
  %1948 = vmatprep.subr.mxu0 0.0
  %1949 = vmatpush1.msra.mxu0 %v1916
  %1950 = vmatprep.subr.mxu0 0.0
  %1951 = vmatpush1.msra.mxu0 %v1915
  %1952 = vmatprep.subr.mxu0 0.0
  %1953 = vmatpush1.msra.mxu0 %v1914
  %1954 = vmatprep.subr.mxu0 0.0
  %1955 = vmatpush1.msra.mxu0 %v1913
  %1956 = vmatprep.subr.mxu0 0.0
  %1957 = vmatpush1.msra.mxu0 %v1912
  %1958 = vmatprep.subr.mxu0 0.0
  %1959 = vmatpush1.msra.mxu0 %v1911
  %1960 = vmatprep.subr.mxu0 0.0
  %1961 = vmatpush1.msra.mxu0 %v1910
  %1962 = vmatprep.subr.mxu0 0.0
  %1963 = vmatpush1.msra.mxu0 %v1909
  %1964 = vmatprep.subr.mxu0 0.0
  %1965 = vmatpush2.msra.mxu0 0.0
  %1966 = vmatprep.subr.mxu0 0.0
  %1967 = vmatpush2.msra.mxu0 0.0
  %1968 = vmatprep.subr.mxu0 0.0
  %1969 = vmatpush2.msra.mxu0 0.0
  %1970 = vmatprep.subr.mxu0 0.0
  %1971 = vmatpush2.msra.mxu0 0.0
  %1972 = vmatprep.subr.mxu0 0.0
  %1973 = vmatpush2.msra.mxu0 0.0
  %1974 = vmatprep.subr.mxu0 0.0
  %1975 = vmatpush2.msra.mxu0 0.0
  %1976 = vmatprep.subr.mxu0 0.0
  %1977 = vmatpush2.msra.mxu0 0.0
  %1978 = vmatprep.subr.mxu0 0.0
  %1979 = vmatpush2.msra.mxu0 0.0
  %1980 = vmatprep.subr.mxu0 0.0
  %1981 = vmatpush2.msra.mxu0 0.0
  %1982 = vmatprep.subr.mxu0 0.0
  %1983 = vmatpush2.msra.mxu0 0.0
  %1984 = vmatprep.subr.mxu0 0.0
  %1985 = vmatpush2.msra.mxu0 0.0
  %1986 = vmatprep.subr.mxu0 0.0
  %1987 = vmatpush2.msra.mxu0 0.0
  %1988 = vmatprep.subr.mxu0 0.0
  %1989 = vmatpush2.msra.mxu0 0.0
  %1990 = vmatprep.subr.mxu0 0.0
  %1991 = vmatpush2.msra.mxu0 0.0
  %1992 = vmatprep.subr.mxu0 0.0
  %1993 = vmatpush2.msra.mxu0 0.0
  %1994 = vmatprep.subr.mxu0 0.0
  %1995 = vmatpush2.msra.mxu0 0.0
  %1996 = vmatprep.mubr.f32.mxu0 0.0
  %1997 = vmatmul.mubr.f32.gmra.mxu0 %v1908
  %v1998 = vpop.f32.mrf.mxu0
  %v1999 = vadd.f32 %v1930, %v1998
  %v2000 = vpop.f32.mrf.mxu0
  %2001 = vdwg.mxu0
  %v2002 = vtanh.pop %v1999
  %v2004 = vrot.slane %v2002, 1
  %2005 = vrot.lane.b32.xlu0 %v2004, 64
  %v2006 = vpop.permute.xlu0 %2005
  %v2008 = vsel %vm150, %v2002, %v2006
  %2009 = vst [vmem:[%s14 + $0x2] sm:$0x1] %v2008
  %v2010 = vld [vmem:[#allocation2] sm:$0xc0]
  %v2011 = vld [vmem:[#allocation2 + $0x8] sm:$0xc0]
  %v2012 = vld [vmem:[%s6] sm:$0xff]
  %v2013 = vld [vmem:[%s6 + $0x8] sm:$0xff]
  %v2014 = vld [vmem:[%s6 + $0x10] sm:$0xff]
  %v2015 = vld [vmem:[%s6 + $0x18] sm:$0xff]
  %v2016 = vld [vmem:[%s6 + $0x20] sm:$0xff]
  %v2017 = vld [vmem:[%s6 + $0x28] sm:$0xff]
  %v2018 = vld [vmem:[%s6 + $0x30] sm:$0xff]
  %v2019 = vld [vmem:[%s6 + $0x38] sm:$0xff]
  %v2020 = vld [vmem:[%s6 + $0x40] sm:$0xff]
  %v2021 = vld [vmem:[%s6 + $0x48] sm:$0xff]
  %v2022 = vld [vmem:[%s6 + $0x50] sm:$0xff]
  %v2023 = vld [vmem:[%s6 + $0x58] sm:$0xff]
  %v2024 = vld [vmem:[%s6 + $0x60] sm:$0xff]
  %v2025 = vld [vmem:[%s6 + $0x68] sm:$0xff]
  %v2026 = vld [vmem:[%s6 + $0x70] sm:$0xff]
  %v2027 = vld [vmem:[%s6 + $0x78] sm:$0xff]
  %v2028 = vld [vmem:[%s7] sm:$0x3]
  %v2030 = vlaneseq
  %v2031 = vshrl.u32 %v2030, 7
  %v2032 = vsub.s32 0, %v2031
  %v2033 = vrot.slane %v2028, %v2032
  %v2034 = vlaneseq
  %v2035 = vshrl.u32 %v2034, 7
  %v2036 = vsub.s32 1, %v2035
  %v2037 = vrot.slane %v2028, %v2036
  %2040 = vmatprep.subr.mxu0 0.0
  %2041 = vmatpush1.msra.mxu0 0.0
  %2042 = vmatprep.subr.mxu0 0.0
  %2043 = vmatpush1.msra.mxu0 0.0
  %2044 = vmatprep.subr.mxu0 0.0
  %2045 = vmatpush1.msra.mxu0 0.0
  %2046 = vmatprep.subr.mxu0 0.0
  %2047 = vmatpush1.msra.mxu0 0.0
  %2048 = vmatprep.subr.mxu0 0.0
  %2049 = vmatpush1.msra.mxu0 0.0
  %2050 = vmatprep.subr.mxu0 0.0
  %2051 = vmatpush1.msra.mxu0 0.0
  %2052 = vmatprep.subr.mxu0 0.0
  %2053 = vmatpush1.msra.mxu0 0.0
  %2054 = vmatprep.subr.mxu0 0.0
  %2055 = vmatpush1.msra.mxu0 0.0
  %2056 = vmatprep.subr.mxu0 %v2027
  %2057 = vmatpush1.msra.mxu0 %v2026
  %2058 = vmatprep.subr.mxu0 %v2025
  %2059 = vmatpush1.msra.mxu0 %v2024
  %2060 = vmatprep.subr.mxu0 %v2023
  %2061 = vmatpush1.msra.mxu0 %v2022
  %2062 = vmatprep.subr.mxu0 %v2021
  %2063 = vmatpush1.msra.mxu0 %v2020
  %2064 = vmatprep.subr.mxu0 %v2019
  %2065 = vmatpush1.msra.mxu0 %v2018
  %2066 = vmatprep.subr.mxu0 %v2017
  %2067 = vmatpush1.msra.mxu0 %v2016
  %2068 = vmatprep.subr.mxu0 %v2015
  %2069 = vmatpush1.msra.mxu0 %v2014
  %2070 = vmatprep.subr.mxu0 %v2013
  %2071 = vmatpush1.msra.mxu0 %v2012
  %2072 = vmatprep.subr.mxu0 0.0
  %2073 = vmatpush2.msra.mxu0 0.0
  %2074 = vmatprep.subr.mxu0 0.0
  %2075 = vmatpush2.msra.mxu0 0.0
  %2076 = vmatprep.subr.mxu0 0.0
  %2077 = vmatpush2.msra.mxu0 0.0
  %2078 = vmatprep.subr.mxu0 0.0
  %2079 = vmatpush2.msra.mxu0 0.0
  %2080 = vmatprep.subr.mxu0 0.0
  %2081 = vmatpush2.msra.mxu0 0.0
  %2082 = vmatprep.subr.mxu0 0.0
  %2083 = vmatpush2.msra.mxu0 0.0
  %2084 = vmatprep.subr.mxu0 0.0
  %2085 = vmatpush2.msra.mxu0 0.0
  %2086 = vmatprep.subr.mxu0 0.0
  %2087 = vmatpush2.msra.mxu0 0.0
  %2088 = vmatprep.subr.mxu0 0.0
  %2089 = vmatpush2.msra.mxu0 0.0
  %2090 = vmatprep.subr.mxu0 0.0
  %2091 = vmatpush2.msra.mxu0 0.0
  %2092 = vmatprep.subr.mxu0 0.0
  %2093 = vmatpush2.msra.mxu0 0.0
  %2094 = vmatprep.subr.mxu0 0.0
  %2095 = vmatpush2.msra.mxu0 0.0
  %2096 = vmatprep.subr.mxu0 0.0
  %2097 = vmatpush2.msra.mxu0 0.0
  %2098 = vmatprep.subr.mxu0 0.0
  %2099 = vmatpush2.msra.mxu0 0.0
  %2100 = vmatprep.subr.mxu0 0.0
  %2101 = vmatpush2.msra.mxu0 0.0
  %2102 = vmatprep.subr.mxu0 0.0
  %2103 = vmatpush2.msra.mxu0 0.0
  %2104 = vmatprep.mubr.f32.mxu0 0.0
  %2105 = vmatmul.mubr.f32.gmra.mxu0 %v1550
  %v2106 = vpop.f32.mrf.mxu0
  %v2107 = vadd.f32 %v2033, %v2106
  %v2108 = vpop.f32.mrf.mxu0
  %v2109 = vadd.f32 %v2037, %v2108
  %2110 = vdwg.mxu0
  %v2112 = vrot.slane %v2107, 2
  %v2114 = vadd.f32 %v2010, %v2112
  %v2115 = vxor.u32 %v2114, 2147483648
  %v2116 = vmul.f32 %v2115, 1.442695
  %v2117 = vpow.pop %v2116
  %v2118 = vadd.f32 %v2117, 1.0
  %v2119 = vrcp.pop %v2118
  %v2120 = vmul.f32 1.0, %v2119
  %v2122 = vrot.slane %v2109, 2
  %v2124 = vmul.f32 %v2120, %v2122
  %v2125 = vadd.f32 %v2011, %v2124
  %v2126 = vtanh.pop %v2125
  %v2127 = vsub.f32 1.0, %v2120
  %2129 = vrot.lane.b32.xlu0 %v2126, 64
  %v2130 = vpop.permute.xlu0 %2129
  %v2132 = vmul.f32 %v2127, %v2130
  %v2133 = vrot.slane %v1517, 6
  %v2135 = vmul.f32 %v2120, %v2133
  %v2136 = vadd.f32 %v2132, %v2135
  %v2137 = vld [vmem:[%s8] sm:$0xff]
  %v2138 = vld [vmem:[%s8 + $0x8] sm:$0xff]
  %v2139 = vld [vmem:[%s8 + $0x10] sm:$0xff]
  %v2140 = vld [vmem:[%s8 + $0x18] sm:$0xff]
  %v2141 = vld [vmem:[%s8 + $0x20] sm:$0xff]
  %v2142 = vld [vmem:[%s8 + $0x28] sm:$0xff]
  %v2143 = vld [vmem:[%s8 + $0x30] sm:$0xff]
  %v2144 = vld [vmem:[%s8 + $0x38] sm:$0xff]
  %v2145 = vld [vmem:[%s8 + $0x40] sm:$0xff]
  %v2146 = vld [vmem:[%s8 + $0x48] sm:$0xff]
  %v2147 = vld [vmem:[%s8 + $0x50] sm:$0xff]
  %v2148 = vld [vmem:[%s8 + $0x58] sm:$0xff]
  %v2149 = vld [vmem:[%s8 + $0x60] sm:$0xff]
  %v2150 = vld [vmem:[%s8 + $0x68] sm:$0xff]
  %v2151 = vld [vmem:[%s8 + $0x70] sm:$0xff]
  %v2152 = vld [vmem:[%s8 + $0x78] sm:$0xff]
  %v2153 = vld [vmem:[%s9] sm:$0x3]
  %v2155 = vlaneseq
  %v2156 = vshrl.u32 %v2155, 7
  %v2157 = vsub.s32 0, %v2156
  %v2158 = vrot.slane %v2153, %v2157
  %v2159 = vlaneseq
  %v2160 = vshrl.u32 %v2159, 7
  %v2161 = vsub.s32 1, %v2160
  %v2162 = vrot.slane %v2153, %v2161
  %v2166 = vrot.slane %v2136, 6
  %2167 = vrot.lane.b32.xlu0 %v2166, 64
  %v2168 = vpop.permute.xlu0 %2167
  %v2169 = vsel %vm150, %v2168, 0
  %2171 = vmatprep.subr.mxu0 0.0
  %2172 = vmatpush1.msra.mxu0 0.0
  %2173 = vmatprep.subr.mxu0 0.0
  %2174 = vmatpush1.msra.mxu0 0.0
  %2175 = vmatprep.subr.mxu0 0.0
  %2176 = vmatpush1.msra.mxu0 0.0
  %2177 = vmatprep.subr.mxu0 0.0
  %2178 = vmatpush1.msra.mxu0 0.0
  %2179 = vmatprep.subr.mxu0 0.0
  %2180 = vmatpush1.msra.mxu0 0.0
  %2181 = vmatprep.subr.mxu0 0.0
  %2182 = vmatpush1.msra.mxu0 0.0
  %2183 = vmatprep.subr.mxu0 0.0
  %2184 = vmatpush1.msra.mxu0 0.0
  %2185 = vmatprep.subr.mxu0 0.0
  %2186 = vmatpush1.msra.mxu0 0.0
  %2187 = vmatprep.subr.mxu0 %v2152
  %2188 = vmatpush1.msra.mxu0 %v2151
  %2189 = vmatprep.subr.mxu0 %v2150
  %2190 = vmatpush1.msra.mxu0 %v2149
  %2191 = vmatprep.subr.mxu0 %v2148
  %2192 = vmatpush1.msra.mxu0 %v2147
  %2193 = vmatprep.subr.mxu0 %v2146
  %2194 = vmatpush1.msra.mxu0 %v2145
  %2195 = vmatprep.subr.mxu0 %v2144
  %2196 = vmatpush1.msra.mxu0 %v2143
  %2197 = vmatprep.subr.mxu0 %v2142
  %2198 = vmatpush1.msra.mxu0 %v2141
  %2199 = vmatprep.subr.mxu0 %v2140
  %2200 = vmatpush1.msra.mxu0 %v2139
  %2201 = vmatprep.subr.mxu0 %v2138
  %2202 = vmatpush1.msra.mxu0 %v2137
  %2203 = vmatprep.subr.mxu0 0.0
  %2204 = vmatpush2.msra.mxu0 0.0
  %2205 = vmatprep.subr.mxu0 0.0
  %2206 = vmatpush2.msra.mxu0 0.0
  %2207 = vmatprep.subr.mxu0 0.0
  %2208 = vmatpush2.msra.mxu0 0.0
  %2209 = vmatprep.subr.mxu0 0.0
  %2210 = vmatpush2.msra.mxu0 0.0
  %2211 = vmatprep.subr.mxu0 0.0
  %2212 = vmatpush2.msra.mxu0 0.0
  %2213 = vmatprep.subr.mxu0 0.0
  %2214 = vmatpush2.msra.mxu0 0.0
  %2215 = vmatprep.subr.mxu0 0.0
  %2216 = vmatpush2.msra.mxu0 0.0
  %2217 = vmatprep.subr.mxu0 0.0
  %2218 = vmatpush2.msra.mxu0 0.0
  %2219 = vmatprep.subr.mxu0 0.0
  %2220 = vmatpush2.msra.mxu0 0.0
  %2221 = vmatprep.subr.mxu0 0.0
  %2222 = vmatpush2.msra.mxu0 0.0
  %2223 = vmatprep.subr.mxu0 0.0
  %2224 = vmatpush2.msra.mxu0 0.0
  %2225 = vmatprep.subr.mxu0 0.0
  %2226 = vmatpush2.msra.mxu0 0.0
  %2227 = vmatprep.subr.mxu0 0.0
  %2228 = vmatpush2.msra.mxu0 0.0
  %2229 = vmatprep.subr.mxu0 0.0
  %2230 = vmatpush2.msra.mxu0 0.0
  %2231 = vmatprep.subr.mxu0 0.0
  %2232 = vmatpush2.msra.mxu0 0.0
  %2233 = vmatprep.subr.mxu0 0.0
  %2234 = vmatpush2.msra.mxu0 0.0
  %2235 = vmatprep.mubr.f32.mxu0 0.0
  %2236 = vmatmul.mubr.f32.gmra.mxu0 %v2169
  %v2237 = vpop.f32.mrf.mxu0
  %v2238 = vadd.f32 %v2158, %v2237
  %v2239 = vpop.f32.mrf.mxu0
  %v2240 = vadd.f32 %v2162, %v2239
  %2241 = vdwg.mxu0
  %v2242 = vld [vmem:[%s10] sm:$0xff]
  %v2243 = vld [vmem:[%s10 + $0x8] sm:$0xff]
  %v2244 = vld [vmem:[%s10 + $0x10] sm:$0xff]
  %v2245 = vld [vmem:[%s10 + $0x18] sm:$0xff]
  %v2246 = vld [vmem:[%s10 + $0x20] sm:$0xff]
  %v2247 = vld [vmem:[%s10 + $0x28] sm:$0xff]
  %v2248 = vld [vmem:[%s10 + $0x30] sm:$0xff]
  %v2249 = vld [vmem:[%s10 + $0x38] sm:$0xff]
  %v2250 = vld [vmem:[%s10 + $0x40] sm:$0xff]
  %v2251 = vld [vmem:[%s10 + $0x48] sm:$0xff]
  %v2252 = vld [vmem:[%s10 + $0x50] sm:$0xff]
  %v2253 = vld [vmem:[%s10 + $0x58] sm:$0xff]
  %v2254 = vld [vmem:[%s10 + $0x60] sm:$0xff]
  %v2255 = vld [vmem:[%s10 + $0x68] sm:$0xff]
  %v2256 = vld [vmem:[%s10 + $0x70] sm:$0xff]
  %v2257 = vld [vmem:[%s10 + $0x78] sm:$0xff]
  %v2258 = vld [vmem:[%s11] sm:$0x3]
  %v2260 = vlaneseq
  %v2261 = vshrl.u32 %v2260, 7
  %v2262 = vsub.s32 0, %v2261
  %v2263 = vrot.slane %v2258, %v2262
  %v2264 = vlaneseq
  %v2265 = vshrl.u32 %v2264, 7
  %v2266 = vsub.s32 1, %v2265
  %v2267 = vrot.slane %v2258, %v2266
  %2270 = vmatprep.subr.mxu0 0.0
  %2271 = vmatpush1.msra.mxu0 0.0
  %2272 = vmatprep.subr.mxu0 0.0
  %2273 = vmatpush1.msra.mxu0 0.0
  %2274 = vmatprep.subr.mxu0 0.0
  %2275 = vmatpush1.msra.mxu0 0.0
  %2276 = vmatprep.subr.mxu0 0.0
  %2277 = vmatpush1.msra.mxu0 0.0
  %2278 = vmatprep.subr.mxu0 0.0
  %2279 = vmatpush1.msra.mxu0 0.0
  %2280 = vmatprep.subr.mxu0 0.0
  %2281 = vmatpush1.msra.mxu0 0.0
  %2282 = vmatprep.subr.mxu0 0.0
  %2283 = vmatpush1.msra.mxu0 0.0
  %2284 = vmatprep.subr.mxu0 0.0
  %2285 = vmatpush1.msra.mxu0 0.0
  %2286 = vmatprep.subr.mxu0 %v2257
  %2287 = vmatpush1.msra.mxu0 %v2256
  %2288 = vmatprep.subr.mxu0 %v2255
  %2289 = vmatpush1.msra.mxu0 %v2254
  %2290 = vmatprep.subr.mxu0 %v2253
  %2291 = vmatpush1.msra.mxu0 %v2252
  %2292 = vmatprep.subr.mxu0 %v2251
  %2293 = vmatpush1.msra.mxu0 %v2250
  %2294 = vmatprep.subr.mxu0 %v2249
  %2295 = vmatpush1.msra.mxu0 %v2248
  %2296 = vmatprep.subr.mxu0 %v2247
  %2297 = vmatpush1.msra.mxu0 %v2246
  %2298 = vmatprep.subr.mxu0 %v2245
  %2299 = vmatpush1.msra.mxu0 %v2244
  %2300 = vmatprep.subr.mxu0 %v2243
  %2301 = vmatpush1.msra.mxu0 %v2242
  %2302 = vmatprep.subr.mxu0 0.0
  %2303 = vmatpush2.msra.mxu0 0.0
  %2304 = vmatprep.subr.mxu0 0.0
  %2305 = vmatpush2.msra.mxu0 0.0
  %2306 = vmatprep.subr.mxu0 0.0
  %2307 = vmatpush2.msra.mxu0 0.0
  %2308 = vmatprep.subr.mxu0 0.0
  %2309 = vmatpush2.msra.mxu0 0.0
  %2310 = vmatprep.subr.mxu0 0.0
  %2311 = vmatpush2.msra.mxu0 0.0
  %2312 = vmatprep.subr.mxu0 0.0
  %2313 = vmatpush2.msra.mxu0 0.0
  %2314 = vmatprep.subr.mxu0 0.0
  %2315 = vmatpush2.msra.mxu0 0.0
  %2316 = vmatprep.subr.mxu0 0.0
  %2317 = vmatpush2.msra.mxu0 0.0
  %2318 = vmatprep.subr.mxu0 0.0
  %2319 = vmatpush2.msra.mxu0 0.0
  %2320 = vmatprep.subr.mxu0 0.0
  %2321 = vmatpush2.msra.mxu0 0.0
  %2322 = vmatprep.subr.mxu0 0.0
  %2323 = vmatpush2.msra.mxu0 0.0
  %2324 = vmatprep.subr.mxu0 0.0
  %2325 = vmatpush2.msra.mxu0 0.0
  %2326 = vmatprep.subr.mxu0 0.0
  %2327 = vmatpush2.msra.mxu0 0.0
  %2328 = vmatprep.subr.mxu0 0.0
  %2329 = vmatpush2.msra.mxu0 0.0
  %2330 = vmatprep.subr.mxu0 0.0
  %2331 = vmatpush2.msra.mxu0 0.0
  %2332 = vmatprep.subr.mxu0 0.0
  %2333 = vmatpush2.msra.mxu0 0.0
  %2334 = vmatprep.mubr.f32.mxu0 0.0
  %2335 = vmatmul.mubr.f32.gmra.mxu0 %v1746
  %v2336 = vpop.f32.mrf.mxu0
  %v2337 = vadd.f32 %v2263, %v2336
  %v2338 = vpop.f32.mrf.mxu0
  %v2339 = vadd.f32 %v2267, %v2338
  %2340 = vdwg.mxu0
  %v2341 = vadd.f32 %v2238, %v2337
  %v2342 = vxor.u32 %v2341, 2147483648
  %v2343 = vmul.f32 %v2342, 1.442695
  %v2344 = vpow.pop %v2343
  %v2345 = vadd.f32 %v2344, 1.0
  %v2346 = vrcp.pop %v2345
  %v2347 = vmul.f32 1.0, %v2346
  %v2348 = vmul.f32 %v2347, %v2339
  %v2349 = vadd.f32 %v2240, %v2348
  %v2350 = vtanh.pop %v2349
  %v2351 = vsub.f32 1.0, %v2347
  %2353 = vrot.lane.b32.xlu0 %v2350, 64
  %v2354 = vpop.permute.xlu0 %2353
  %v2356 = vmul.f32 %v2351, %v2354
  %v2357 = vmul.f32 %v2347, %v1739
  %v2358 = vadd.f32 %v2356, %v2357
  %v2359 = vld [vmem:[%s1] sm:$0xff]
  %v2360 = vld [vmem:[%s1 + $0x8] sm:$0xff]
  %v2361 = vld [vmem:[%s2] sm:$0x3]
  %2363 = vrot.lane.b32.xlu0 %v2358, 64
  %v2364 = vpop.permute.xlu0 %2363
  %v2365 = vsel %vm150, %v2364, 0
  %v2368 = vsel %vm150, %v2359, 0
  %v2371 = vsel %vm150, %v2360, 0
  %2373 = vmatprep.subr.mxu0 0.0
  %2374 = vmatpush1.xpose.msra.mxu0 0.0
  %2375 = vmatprep.subr.mxu0 0.0
  %2376 = vmatpush1.xpose.msra.mxu0 0.0
  %2377 = vmatprep.subr.mxu0 0.0
  %2378 = vmatpush1.xpose.msra.mxu0 0.0
  %2379 = vmatprep.subr.mxu0 0.0
  %2380 = vmatpush1.xpose.msra.mxu0 0.0
  %2381 = vmatprep.subr.mxu0 0.0
  %2382 = vmatpush1.xpose.msra.mxu0 0.0
  %2383 = vmatprep.subr.mxu0 0.0
  %2384 = vmatpush1.xpose.msra.mxu0 0.0
  %2385 = vmatprep.subr.mxu0 0.0
  %2386 = vmatpush1.xpose.msra.mxu0 0.0
  %2387 = vmatprep.subr.mxu0 0.0
  %2388 = vmatpush1.xpose.msra.mxu0 0.0
  %2389 = vmatprep.subr.mxu0 0.0
  %2390 = vmatpush1.xpose.msra.mxu0 0.0
  %2391 = vmatprep.subr.mxu0 0.0
  %2392 = vmatpush1.xpose.msra.mxu0 0.0
  %2393 = vmatprep.subr.mxu0 0.0
  %2394 = vmatpush1.xpose.msra.mxu0 0.0
  %2395 = vmatprep.subr.mxu0 0.0
  %2396 = vmatpush1.xpose.msra.mxu0 0.0
  %2397 = vmatprep.subr.mxu0 0.0
  %2398 = vmatpush1.xpose.msra.mxu0 0.0
  %2399 = vmatprep.subr.mxu0 0.0
  %2400 = vmatpush1.xpose.msra.mxu0 0.0
  %2401 = vmatprep.subr.mxu0 0.0
  %2402 = vmatpush1.xpose.msra.mxu0 %v2371
  %2403 = vmatprep.subr.mxu0 0.0
  %2404 = vmatpush1.xpose.msra.mxu0 %v2368
  %2405 = vmatprep.subr.mxu0 0.0
  %2406 = vmatpush2.xpose.msra.mxu0 0.0
  %2407 = vmatprep.subr.mxu0 0.0
  %2408 = vmatpush2.xpose.msra.mxu0 0.0
  %2409 = vmatprep.subr.mxu0 0.0
  %2410 = vmatpush2.xpose.msra.mxu0 0.0
  %2411 = vmatprep.subr.mxu0 0.0
  %2412 = vmatpush2.xpose.msra.mxu0 0.0
  %2413 = vmatprep.subr.mxu0 0.0
  %2414 = vmatpush2.xpose.msra.mxu0 0.0
  %2415 = vmatprep.subr.mxu0 0.0
  %2416 = vmatpush2.xpose.msra.mxu0 0.0
  %2417 = vmatprep.subr.mxu0 0.0
  %2418 = vmatpush2.xpose.msra.mxu0 0.0
  %2419 = vmatprep.subr.mxu0 0.0
  %2420 = vmatpush2.xpose.msra.mxu0 0.0
  %2421 = vmatprep.subr.mxu0 0.0
  %2422 = vmatpush2.xpose.msra.mxu0 0.0
  %2423 = vmatprep.subr.mxu0 0.0
  %2424 = vmatpush2.xpose.msra.mxu0 0.0
  %2425 = vmatprep.subr.mxu0 0.0
  %2426 = vmatpush2.xpose.msra.mxu0 0.0
  %2427 = vmatprep.subr.mxu0 0.0
  %2428 = vmatpush2.xpose.msra.mxu0 0.0
  %2429 = vmatprep.subr.mxu0 0.0
  %2430 = vmatpush2.xpose.msra.mxu0 0.0
  %2431 = vmatprep.subr.mxu0 0.0
  %2432 = vmatpush2.xpose.msra.mxu0 0.0
  %2433 = vmatprep.subr.mxu0 0.0
  %2434 = vmatpush2.xpose.msra.mxu0 0.0
  %2435 = vmatprep.subr.mxu0 0.0
  %2436 = vmatpush2.xpose.msra.mxu0 0.0
  %2437 = vmatprep.mubr.f32.mxu0 0.0
  %2438 = vmatmul.mubr.f32.gmra.mxu0 %v2365
  %v2439 = vpop.f32.mrf.mxu0
  %v2440 = vadd.f32 %v2361, %v2439
  %v2441 = vpop.f32.mrf.mxu0
  %2442 = vdwg.mxu0
  %v2443 = vsel %vm585, %v2440, -inf
  %2444 = vmax.xlane.f32.xlu0 %v2443
  %v2445 = vpop.xlane.xlu0 %2444
  %v2446 = vsub.f32 %v2440, %v2445
  %v2447 = vmul.f32 %v2446, 1.442695
  %v2448 = vpow.pop %v2447
  %v2449 = vsel %vm585, %v2448, 0.0
  %2450 = vadd.xlane.f32.xlu0 %v2449
  %v2451 = vpop.xlane.xlu0 %2450
  %v2452 = vrcp.pop %v2451
  %v2453 = vmul.f32 %v2448, %v2452
  %v2455 = vsel %vm65, %v2453, 0
  %2457 = vmatprep.subr.mxu0 0.0
  %2458 = vmatpush1.msra.mxu0 0.0
  %2459 = vmatprep.subr.mxu0 0.0
  %2460 = vmatpush1.msra.mxu0 0.0
  %2461 = vmatprep.subr.mxu0 0.0
  %2462 = vmatpush1.msra.mxu0 0.0
  %2463 = vmatprep.subr.mxu0 0.0
  %2464 = vmatpush1.msra.mxu0 0.0
  %2465 = vmatprep.subr.mxu0 0.0
  %2466 = vmatpush1.msra.mxu0 0.0
  %2467 = vmatprep.subr.mxu0 0.0
  %2468 = vmatpush1.msra.mxu0 0.0
  %2469 = vmatprep.subr.mxu0 0.0
  %2470 = vmatpush1.msra.mxu0 0.0
  %2471 = vmatprep.subr.mxu0 0.0
  %2472 = vmatpush1.msra.mxu0 0.0
  %2473 = vmatprep.subr.mxu0 0.0
  %2474 = vmatpush1.msra.mxu0 0.0
  %2475 = vmatprep.subr.mxu0 0.0
  %2476 = vmatpush1.msra.mxu0 0.0
  %2477 = vmatprep.subr.mxu0 0.0
  %2478 = vmatpush1.msra.mxu0 0.0
  %2479 = vmatprep.subr.mxu0 0.0
  %2480 = vmatpush1.msra.mxu0 0.0
  %2481 = vmatprep.subr.mxu0 0.0
  %2482 = vmatpush1.msra.mxu0 0.0
  %2483 = vmatprep.subr.mxu0 0.0
  %2484 = vmatpush1.msra.mxu0 0.0
  %2485 = vmatprep.subr.mxu0 0.0
  %2486 = vmatpush1.msra.mxu0 %v2360
  %2487 = vmatprep.subr.mxu0 0.0
  %2488 = vmatpush1.msra.mxu0 %v2359
  %2489 = vmatprep.subr.mxu0 0.0
  %2490 = vmatpush2.msra.mxu0 0.0
  %2491 = vmatprep.subr.mxu0 0.0
  %2492 = vmatpush2.msra.mxu0 0.0
  %2493 = vmatprep.subr.mxu0 0.0
  %2494 = vmatpush2.msra.mxu0 0.0
  %2495 = vmatprep.subr.mxu0 0.0
  %2496 = vmatpush2.msra.mxu0 0.0
  %2497 = vmatprep.subr.mxu0 0.0
  %2498 = vmatpush2.msra.mxu0 0.0
  %2499 = vmatprep.subr.mxu0 0.0
  %2500 = vmatpush2.msra.mxu0 0.0
  %2501 = vmatprep.subr.mxu0 0.0
  %2502 = vmatpush2.msra.mxu0 0.0
  %2503 = vmatprep.subr.mxu0 0.0
  %2504 = vmatpush2.msra.mxu0 0.0
  %2505 = vmatprep.subr.mxu0 0.0
  %2506 = vmatpush2.msra.mxu0 0.0
  %2507 = vmatprep.subr.mxu0 0.0
  %2508 = vmatpush2.msra.mxu0 0.0
  %2509 = vmatprep.subr.mxu0 0.0
  %2510 = vmatpush2.msra.mxu0 0.0
  %2511 = vmatprep.subr.mxu0 0.0
  %2512 = vmatpush2.msra.mxu0 0.0
  %2513 = vmatprep.subr.mxu0 0.0
  %2514 = vmatpush2.msra.mxu0 0.0
  %2515 = vmatprep.subr.mxu0 0.0
  %2516 = vmatpush2.msra.mxu0 0.0
  %2517 = vmatprep.subr.mxu0 0.0
  %2518 = vmatpush2.msra.mxu0 0.0
  %2519 = vmatprep.subr.mxu0 0.0
  %2520 = vmatpush2.msra.mxu0 0.0
  %2521 = vmatprep.mubr.f32.mxu0 0.0
  %2522 = vmatmul.mubr.f32.gmra.mxu0 %v2455
  %v2523 = vpop.f32.mrf.mxu0
  %v2524 = vadd.f32 0.0, %v2523
  %v2525 = vpop.f32.mrf.mxu0
  %2526 = vdwg.mxu0
  %v2527 = vsel %vm150, %v2524, %v2358
  %v2528 = vld [vmem:[%s12] sm:$0xff]
  %v2529 = vld [vmem:[%s12 + $0x8] sm:$0xff]
  %v2530 = vld [vmem:[%s12 + $0x10] sm:$0xff]
  %v2531 = vld [vmem:[%s12 + $0x18] sm:$0xff]
  %v2532 = vld [vmem:[%s12 + $0x20] sm:$0xff]
  %v2533 = vld [vmem:[%s12 + $0x28] sm:$0xff]
  %v2534 = vld [vmem:[%s12 + $0x30] sm:$0xff]
  %v2535 = vld [vmem:[%s12 + $0x38] sm:$0xff]
  %v2536 = vld [vmem:[%s12 + $0x40] sm:$0xff]
  %v2537 = vld [vmem:[%s12 + $0x48] sm:$0xff]
  %v2538 = vld [vmem:[%s12 + $0x50] sm:$0xff]
  %v2539 = vld [vmem:[%s12 + $0x58] sm:$0xff]
  %v2540 = vld [vmem:[%s12 + $0x60] sm:$0xff]
  %v2541 = vld [vmem:[%s12 + $0x68] sm:$0xff]
  %v2542 = vld [vmem:[%s12 + $0x70] sm:$0xff]
  %v2543 = vld [vmem:[%s12 + $0x78] sm:$0xff]
  %v2544 = vld [vmem:[%s13] sm:$0x1]
  %v2546 = vlaneseq
  %v2547 = vshrl.u32 %v2546, 7
  %v2548 = vsub.s32 0, %v2547
  %v2549 = vrot.slane %v2544, %v2548
  %2551 = vmatprep.subr.mxu0 0.0
  %2552 = vmatpush1.msra.mxu0 %v2543
  %2553 = vmatprep.subr.mxu0 0.0
  %2554 = vmatpush1.msra.mxu0 %v2542
  %2555 = vmatprep.subr.mxu0 0.0
  %2556 = vmatpush1.msra.mxu0 %v2541
  %2557 = vmatprep.subr.mxu0 0.0
  %2558 = vmatpush1.msra.mxu0 %v2540
  %2559 = vmatprep.subr.mxu0 0.0
  %2560 = vmatpush1.msra.mxu0 %v2539
  %2561 = vmatprep.subr.mxu0 0.0
  %2562 = vmatpush1.msra.mxu0 %v2538
  %2563 = vmatprep.subr.mxu0 0.0
  %2564 = vmatpush1.msra.mxu0 %v2537
  %2565 = vmatprep.subr.mxu0 0.0
  %2566 = vmatpush1.msra.mxu0 %v2536
  %2567 = vmatprep.subr.mxu0 0.0
  %2568 = vmatpush1.msra.mxu0 %v2535
  %2569 = vmatprep.subr.mxu0 0.0
  %2570 = vmatpush1.msra.mxu0 %v2534
  %2571 = vmatprep.subr.mxu0 0.0
  %2572 = vmatpush1.msra.mxu0 %v2533
  %2573 = vmatprep.subr.mxu0 0.0
  %2574 = vmatpush1.msra.mxu0 %v2532
  %2575 = vmatprep.subr.mxu0 0.0
  %2576 = vmatpush1.msra.mxu0 %v2531
  %2577 = vmatprep.subr.mxu0 0.0
  %2578 = vmatpush1.msra.mxu0 %v2530
  %2579 = vmatprep.subr.mxu0 0.0
  %2580 = vmatpush1.msra.mxu0 %v2529
  %2581 = vmatprep.subr.mxu0 0.0
  %2582 = vmatpush1.msra.mxu0 %v2528
  %2583 = vmatprep.subr.mxu0 0.0
  %2584 = vmatpush2.msra.mxu0 0.0
  %2585 = vmatprep.subr.mxu0 0.0
  %2586 = vmatpush2.msra.mxu0 0.0
  %2587 = vmatprep.subr.mxu0 0.0
  %2588 = vmatpush2.msra.mxu0 0.0
  %2589 = vmatprep.subr.mxu0 0.0
  %2590 = vmatpush2.msra.mxu0 0.0
  %2591 = vmatprep.subr.mxu0 0.0
  %2592 = vmatpush2.msra.mxu0 0.0
  %2593 = vmatprep.subr.mxu0 0.0
  %2594 = vmatpush2.msra.mxu0 0.0
  %2595 = vmatprep.subr.mxu0 0.0
  %2596 = vmatpush2.msra.mxu0 0.0
  %2597 = vmatprep.subr.mxu0 0.0
  %2598 = vmatpush2.msra.mxu0 0.0
  %2599 = vmatprep.subr.mxu0 0.0
  %2600 = vmatpush2.msra.mxu0 0.0
  %2601 = vmatprep.subr.mxu0 0.0
  %2602 = vmatpush2.msra.mxu0 0.0
  %2603 = vmatprep.subr.mxu0 0.0
  %2604 = vmatpush2.msra.mxu0 0.0
  %2605 = vmatprep.subr.mxu0 0.0
  %2606 = vmatpush2.msra.mxu0 0.0
  %2607 = vmatprep.subr.mxu0 0.0
  %2608 = vmatpush2.msra.mxu0 0.0
  %2609 = vmatprep.subr.mxu0 0.0
  %2610 = vmatpush2.msra.mxu0 0.0
  %2611 = vmatprep.subr.mxu0 0.0
  %2612 = vmatpush2.msra.mxu0 0.0
  %2613 = vmatprep.subr.mxu0 0.0
  %2614 = vmatpush2.msra.mxu0 0.0
  %2615 = vmatprep.mubr.f32.mxu0 0.0
  %2616 = vmatmul.mubr.f32.gmra.mxu0 %v2527
  %v2617 = vpop.f32.mrf.mxu0
  %v2618 = vadd.f32 %v2549, %v2617
  %v2619 = vpop.f32.mrf.mxu0
  %2620 = vdwg.mxu0
  %v2621 = vtanh.pop %v2618
  %v2623 = vrot.slane %v2621, 1
  %2624 = vrot.lane.b32.xlu0 %v2623, 64
  %v2625 = vpop.permute.xlu0 %2624
  %v2627 = vsel %vm150, %v2621, %v2625
  %2628 = vst [vmem:[%s14 + $0x3] sm:$0x1] %v2627
  %v2629 = vld [vmem:[#allocation2 + $0x10] sm:$0x3]
  %v2630 = vld [vmem:[#allocation2 + $0x18] sm:$0x3]
  %v2631 = vld [vmem:[%s6] sm:$0xff]
  %v2632 = vld [vmem:[%s6 + $0x8] sm:$0xff]
  %v2633 = vld [vmem:[%s6 + $0x10] sm:$0xff]
  %v2634 = vld [vmem:[%s6 + $0x18] sm:$0xff]
  %v2635 = vld [vmem:[%s6 + $0x20] sm:$0xff]
  %v2636 = vld [vmem:[%s6 + $0x28] sm:$0xff]
  %v2637 = vld [vmem:[%s6 + $0x30] sm:$0xff]
  %v2638 = vld [vmem:[%s6 + $0x38] sm:$0xff]
  %v2639 = vld [vmem:[%s6 + $0x40] sm:$0xff]
  %v2640 = vld [vmem:[%s6 + $0x48] sm:$0xff]
  %v2641 = vld [vmem:[%s6 + $0x50] sm:$0xff]
  %v2642 = vld [vmem:[%s6 + $0x58] sm:$0xff]
  %v2643 = vld [vmem:[%s6 + $0x60] sm:$0xff]
  %v2644 = vld [vmem:[%s6 + $0x68] sm:$0xff]
  %v2645 = vld [vmem:[%s6 + $0x70] sm:$0xff]
  %v2646 = vld [vmem:[%s6 + $0x78] sm:$0xff]
  %v2647 = vld [vmem:[%s7] sm:$0x3]
  %v2649 = vlaneseq
  %v2650 = vshrl.u32 %v2649, 7
  %v2651 = vsub.s32 0, %v2650
  %v2652 = vrot.slane %v2647, %v2651
  %v2653 = vlaneseq
  %v2654 = vshrl.u32 %v2653, 7
  %v2655 = vsub.s32 1, %v2654
  %v2656 = vrot.slane %v2647, %v2655
  %2659 = vmatprep.subr.mxu0 0.0
  %2660 = vmatpush1.msra.mxu0 0.0
  %2661 = vmatprep.subr.mxu0 0.0
  %2662 = vmatpush1.msra.mxu0 0.0
  %2663 = vmatprep.subr.mxu0 0.0
  %2664 = vmatpush1.msra.mxu0 0.0
  %2665 = vmatprep.subr.mxu0 0.0
  %2666 = vmatpush1.msra.mxu0 0.0
  %2667 = vmatprep.subr.mxu0 0.0
  %2668 = vmatpush1.msra.mxu0 0.0
  %2669 = vmatprep.subr.mxu0 0.0
  %2670 = vmatpush1.msra.mxu0 0.0
  %2671 = vmatprep.subr.mxu0 0.0
  %2672 = vmatpush1.msra.mxu0 0.0
  %2673 = vmatprep.subr.mxu0 0.0
  %2674 = vmatpush1.msra.mxu0 0.0
  %2675 = vmatprep.subr.mxu0 %v2646
  %2676 = vmatpush1.msra.mxu0 %v2645
  %2677 = vmatprep.subr.mxu0 %v2644
  %2678 = vmatpush1.msra.mxu0 %v2643
  %2679 = vmatprep.subr.mxu0 %v2642
  %2680 = vmatpush1.msra.mxu0 %v2641
  %2681 = vmatprep.subr.mxu0 %v2640
  %2682 = vmatpush1.msra.mxu0 %v2639
  %2683 = vmatprep.subr.mxu0 %v2638
  %2684 = vmatpush1.msra.mxu0 %v2637
  %2685 = vmatprep.subr.mxu0 %v2636
  %2686 = vmatpush1.msra.mxu0 %v2635
  %2687 = vmatprep.subr.mxu0 %v2634
  %2688 = vmatpush1.msra.mxu0 %v2633
  %2689 = vmatprep.subr.mxu0 %v2632
  %2690 = vmatpush1.msra.mxu0 %v2631
  %2691 = vmatprep.subr.mxu0 0.0
  %2692 = vmatpush2.msra.mxu0 0.0
  %2693 = vmatprep.subr.mxu0 0.0
  %2694 = vmatpush2.msra.mxu0 0.0
  %2695 = vmatprep.subr.mxu0 0.0
  %2696 = vmatpush2.msra.mxu0 0.0
  %2697 = vmatprep.subr.mxu0 0.0
  %2698 = vmatpush2.msra.mxu0 0.0
  %2699 = vmatprep.subr.mxu0 0.0
  %2700 = vmatpush2.msra.mxu0 0.0
  %2701 = vmatprep.subr.mxu0 0.0
  %2702 = vmatpush2.msra.mxu0 0.0
  %2703 = vmatprep.subr.mxu0 0.0
  %2704 = vmatpush2.msra.mxu0 0.0
  %2705 = vmatprep.subr.mxu0 0.0
  %2706 = vmatpush2.msra.mxu0 0.0
  %2707 = vmatprep.subr.mxu0 0.0
  %2708 = vmatpush2.msra.mxu0 0.0
  %2709 = vmatprep.subr.mxu0 0.0
  %2710 = vmatpush2.msra.mxu0 0.0
  %2711 = vmatprep.subr.mxu0 0.0
  %2712 = vmatpush2.msra.mxu0 0.0
  %2713 = vmatprep.subr.mxu0 0.0
  %2714 = vmatpush2.msra.mxu0 0.0
  %2715 = vmatprep.subr.mxu0 0.0
  %2716 = vmatpush2.msra.mxu0 0.0
  %2717 = vmatprep.subr.mxu0 0.0
  %2718 = vmatpush2.msra.mxu0 0.0
  %2719 = vmatprep.subr.mxu0 0.0
  %2720 = vmatpush2.msra.mxu0 0.0
  %2721 = vmatprep.subr.mxu0 0.0
  %2722 = vmatpush2.msra.mxu0 0.0
  %2723 = vmatprep.mubr.f32.mxu0 0.0
  %2724 = vmatmul.mubr.f32.gmra.mxu0 %v2169
  %v2725 = vpop.f32.mrf.mxu0
  %v2726 = vadd.f32 %v2652, %v2725
  %v2727 = vpop.f32.mrf.mxu0
  %v2728 = vadd.f32 %v2656, %v2727
  %2729 = vdwg.mxu0
  %v2730 = vadd.f32 %v2629, %v2726
  %v2731 = vxor.u32 %v2730, 2147483648
  %v2732 = vmul.f32 %v2731, 1.442695
  %v2733 = vpow.pop %v2732
  %v2734 = vadd.f32 %v2733, 1.0
  %v2735 = vrcp.pop %v2734
  %v2736 = vmul.f32 1.0, %v2735
  %v2737 = vmul.f32 %v2736, %v2728
  %v2738 = vadd.f32 %v2630, %v2737
  %v2739 = vtanh.pop %v2738
  %v2740 = vsub.f32 1.0, %v2736
  %2742 = vrot.lane.b32.xlu0 %v2739, 64
  %v2743 = vpop.permute.xlu0 %2742
  %v2745 = vmul.f32 %v2740, %v2743
  %v2747 = vmul.f32 %v2736, %v2166
  %v2748 = vadd.f32 %v2745, %v2747
  %v2749 = vld [vmem:[%s8] sm:$0xff]
  %v2750 = vld [vmem:[%s8 + $0x8] sm:$0xff]
  %v2751 = vld [vmem:[%s8 + $0x10] sm:$0xff]
  %v2752 = vld [vmem:[%s8 + $0x18] sm:$0xff]
  %v2753 = vld [vmem:[%s8 + $0x20] sm:$0xff]
  %v2754 = vld [vmem:[%s8 + $0x28] sm:$0xff]
  %v2755 = vld [vmem:[%s8 + $0x30] sm:$0xff]
  %v2756 = vld [vmem:[%s8 + $0x38] sm:$0xff]
  %v2757 = vld [vmem:[%s8 + $0x40] sm:$0xff]
  %v2758 = vld [vmem:[%s8 + $0x48] sm:$0xff]
  %v2759 = vld [vmem:[%s8 + $0x50] sm:$0xff]
  %v2760 = vld [vmem:[%s8 + $0x58] sm:$0xff]
  %v2761 = vld [vmem:[%s8 + $0x60] sm:$0xff]
  %v2762 = vld [vmem:[%s8 + $0x68] sm:$0xff]
  %v2763 = vld [vmem:[%s8 + $0x70] sm:$0xff]
  %v2764 = vld [vmem:[%s8 + $0x78] sm:$0xff]
  %v2765 = vld [vmem:[%s9] sm:$0x3]
  %v2767 = vlaneseq
  %v2768 = vshrl.u32 %v2767, 7
  %v2769 = vsub.s32 0, %v2768
  %v2770 = vrot.slane %v2765, %v2769
  %v2771 = vlaneseq
  %v2772 = vshrl.u32 %v2771, 7
  %v2773 = vsub.s32 1, %v2772
  %v2774 = vrot.slane %v2765, %v2773
  %2778 = vrot.lane.b32.xlu0 %v2748, 64
  %v2779 = vpop.permute.xlu0 %2778
  %v2780 = vsel %vm150, %v2779, 0
  %2782 = vmatprep.subr.mxu0 0.0
  %2783 = vmatpush1.msra.mxu0 0.0
  %2784 = vmatprep.subr.mxu0 0.0
  %2785 = vmatpush1.msra.mxu0 0.0
  %2786 = vmatprep.subr.mxu0 0.0
  %2787 = vmatpush1.msra.mxu0 0.0
  %2788 = vmatprep.subr.mxu0 0.0
  %2789 = vmatpush1.msra.mxu0 0.0
  %2790 = vmatprep.subr.mxu0 0.0
  %2791 = vmatpush1.msra.mxu0 0.0
  %2792 = vmatprep.subr.mxu0 0.0
  %2793 = vmatpush1.msra.mxu0 0.0
  %2794 = vmatprep.subr.mxu0 0.0
  %2795 = vmatpush1.msra.mxu0 0.0
  %2796 = vmatprep.subr.mxu0 0.0
  %2797 = vmatpush1.msra.mxu0 0.0
  %2798 = vmatprep.subr.mxu0 %v2764
  %2799 = vmatpush1.msra.mxu0 %v2763
  %2800 = vmatprep.subr.mxu0 %v2762
  %2801 = vmatpush1.msra.mxu0 %v2761
  %2802 = vmatprep.subr.mxu0 %v2760
  %2803 = vmatpush1.msra.mxu0 %v2759
  %2804 = vmatprep.subr.mxu0 %v2758
  %2805 = vmatpush1.msra.mxu0 %v2757
  %2806 = vmatprep.subr.mxu0 %v2756
  %2807 = vmatpush1.msra.mxu0 %v2755
  %2808 = vmatprep.subr.mxu0 %v2754
  %2809 = vmatpush1.msra.mxu0 %v2753
  %2810 = vmatprep.subr.mxu0 %v2752
  %2811 = vmatpush1.msra.mxu0 %v2751
  %2812 = vmatprep.subr.mxu0 %v2750
  %2813 = vmatpush1.msra.mxu0 %v2749
  %2814 = vmatprep.subr.mxu0 0.0
  %2815 = vmatpush2.msra.mxu0 0.0
  %2816 = vmatprep.subr.mxu0 0.0
  %2817 = vmatpush2.msra.mxu0 0.0
  %2818 = vmatprep.subr.mxu0 0.0
  %2819 = vmatpush2.msra.mxu0 0.0
  %2820 = vmatprep.subr.mxu0 0.0
  %2821 = vmatpush2.msra.mxu0 0.0
  %2822 = vmatprep.subr.mxu0 0.0
  %2823 = vmatpush2.msra.mxu0 0.0
  %2824 = vmatprep.subr.mxu0 0.0
  %2825 = vmatpush2.msra.mxu0 0.0
  %2826 = vmatprep.subr.mxu0 0.0
  %2827 = vmatpush2.msra.mxu0 0.0
  %2828 = vmatprep.subr.mxu0 0.0
  %2829 = vmatpush2.msra.mxu0 0.0
  %2830 = vmatprep.subr.mxu0 0.0
  %2831 = vmatpush2.msra.mxu0 0.0
  %2832 = vmatprep.subr.mxu0 0.0
  %2833 = vmatpush2.msra.mxu0 0.0
  %2834 = vmatprep.subr.mxu0 0.0
  %2835 = vmatpush2.msra.mxu0 0.0
  %2836 = vmatprep.subr.mxu0 0.0
  %2837 = vmatpush2.msra.mxu0 0.0
  %2838 = vmatprep.subr.mxu0 0.0
  %2839 = vmatpush2.msra.mxu0 0.0
  %2840 = vmatprep.subr.mxu0 0.0
  %2841 = vmatpush2.msra.mxu0 0.0
  %2842 = vmatprep.subr.mxu0 0.0
  %2843 = vmatpush2.msra.mxu0 0.0
  %2844 = vmatprep.subr.mxu0 0.0
  %2845 = vmatpush2.msra.mxu0 0.0
  %2846 = vmatprep.mubr.f32.mxu0 0.0
  %2847 = vmatmul.mubr.f32.gmra.mxu0 %v2780
  %v2848 = vpop.f32.mrf.mxu0
  %v2849 = vadd.f32 %v2770, %v2848
  %v2850 = vpop.f32.mrf.mxu0
  %v2851 = vadd.f32 %v2774, %v2850
  %2852 = vdwg.mxu0
  %v2853 = vld [vmem:[%s10] sm:$0xff]
  %v2854 = vld [vmem:[%s10 + $0x8] sm:$0xff]
  %v2855 = vld [vmem:[%s10 + $0x10] sm:$0xff]
  %v2856 = vld [vmem:[%s10 + $0x18] sm:$0xff]
  %v2857 = vld [vmem:[%s10 + $0x20] sm:$0xff]
  %v2858 = vld [vmem:[%s10 + $0x28] sm:$0xff]
  %v2859 = vld [vmem:[%s10 + $0x30] sm:$0xff]
  %v2860 = vld [vmem:[%s10 + $0x38] sm:$0xff]
  %v2861 = vld [vmem:[%s10 + $0x40] sm:$0xff]
  %v2862 = vld [vmem:[%s10 + $0x48] sm:$0xff]
  %v2863 = vld [vmem:[%s10 + $0x50] sm:$0xff]
  %v2864 = vld [vmem:[%s10 + $0x58] sm:$0xff]
  %v2865 = vld [vmem:[%s10 + $0x60] sm:$0xff]
  %v2866 = vld [vmem:[%s10 + $0x68] sm:$0xff]
  %v2867 = vld [vmem:[%s10 + $0x70] sm:$0xff]
  %v2868 = vld [vmem:[%s10 + $0x78] sm:$0xff]
  %v2869 = vld [vmem:[%s11] sm:$0x3]
  %v2871 = vlaneseq
  %v2872 = vshrl.u32 %v2871, 7
  %v2873 = vsub.s32 0, %v2872
  %v2874 = vrot.slane %v2869, %v2873
  %v2875 = vlaneseq
  %v2876 = vshrl.u32 %v2875, 7
  %v2877 = vsub.s32 1, %v2876
  %v2878 = vrot.slane %v2869, %v2877
  %2881 = vmatprep.subr.mxu0 0.0
  %2882 = vmatpush1.msra.mxu0 0.0
  %2883 = vmatprep.subr.mxu0 0.0
  %2884 = vmatpush1.msra.mxu0 0.0
  %2885 = vmatprep.subr.mxu0 0.0
  %2886 = vmatpush1.msra.mxu0 0.0
  %2887 = vmatprep.subr.mxu0 0.0
  %2888 = vmatpush1.msra.mxu0 0.0
  %2889 = vmatprep.subr.mxu0 0.0
  %2890 = vmatpush1.msra.mxu0 0.0
  %2891 = vmatprep.subr.mxu0 0.0
  %2892 = vmatpush1.msra.mxu0 0.0
  %2893 = vmatprep.subr.mxu0 0.0
  %2894 = vmatpush1.msra.mxu0 0.0
  %2895 = vmatprep.subr.mxu0 0.0
  %2896 = vmatpush1.msra.mxu0 0.0
  %2897 = vmatprep.subr.mxu0 %v2868
  %2898 = vmatpush1.msra.mxu0 %v2867
  %2899 = vmatprep.subr.mxu0 %v2866
  %2900 = vmatpush1.msra.mxu0 %v2865
  %2901 = vmatprep.subr.mxu0 %v2864
  %2902 = vmatpush1.msra.mxu0 %v2863
  %2903 = vmatprep.subr.mxu0 %v2862
  %2904 = vmatpush1.msra.mxu0 %v2861
  %2905 = vmatprep.subr.mxu0 %v2860
  %2906 = vmatpush1.msra.mxu0 %v2859
  %2907 = vmatprep.subr.mxu0 %v2858
  %2908 = vmatpush1.msra.mxu0 %v2857
  %2909 = vmatprep.subr.mxu0 %v2856
  %2910 = vmatpush1.msra.mxu0 %v2855
  %2911 = vmatprep.subr.mxu0 %v2854
  %2912 = vmatpush1.msra.mxu0 %v2853
  %2913 = vmatprep.subr.mxu0 0.0
  %2914 = vmatpush2.msra.mxu0 0.0
  %2915 = vmatprep.subr.mxu0 0.0
  %2916 = vmatpush2.msra.mxu0 0.0
  %2917 = vmatprep.subr.mxu0 0.0
  %2918 = vmatpush2.msra.mxu0 0.0
  %2919 = vmatprep.subr.mxu0 0.0
  %2920 = vmatpush2.msra.mxu0 0.0
  %2921 = vmatprep.subr.mxu0 0.0
  %2922 = vmatpush2.msra.mxu0 0.0
  %2923 = vmatprep.subr.mxu0 0.0
  %2924 = vmatpush2.msra.mxu0 0.0
  %2925 = vmatprep.subr.mxu0 0.0
  %2926 = vmatpush2.msra.mxu0 0.0
  %2927 = vmatprep.subr.mxu0 0.0
  %2928 = vmatpush2.msra.mxu0 0.0
  %2929 = vmatprep.subr.mxu0 0.0
  %2930 = vmatpush2.msra.mxu0 0.0
  %2931 = vmatprep.subr.mxu0 0.0
  %2932 = vmatpush2.msra.mxu0 0.0
  %2933 = vmatprep.subr.mxu0 0.0
  %2934 = vmatpush2.msra.mxu0 0.0
  %2935 = vmatprep.subr.mxu0 0.0
  %2936 = vmatpush2.msra.mxu0 0.0
  %2937 = vmatprep.subr.mxu0 0.0
  %2938 = vmatpush2.msra.mxu0 0.0
  %2939 = vmatprep.subr.mxu0 0.0
  %2940 = vmatpush2.msra.mxu0 0.0
  %2941 = vmatprep.subr.mxu0 0.0
  %2942 = vmatpush2.msra.mxu0 0.0
  %2943 = vmatprep.subr.mxu0 0.0
  %2944 = vmatpush2.msra.mxu0 0.0
  %2945 = vmatprep.mubr.f32.mxu0 0.0
  %2946 = vmatmul.mubr.f32.gmra.mxu0 %v2365
  %v2947 = vpop.f32.mrf.mxu0
  %v2948 = vadd.f32 %v2874, %v2947
  %v2949 = vpop.f32.mrf.mxu0
  %v2950 = vadd.f32 %v2878, %v2949
  %2951 = vdwg.mxu0
  %v2952 = vadd.f32 %v2849, %v2948
  %v2953 = vxor.u32 %v2952, 2147483648
  %v2954 = vmul.f32 %v2953, 1.442695
  %v2955 = vpow.pop %v2954
  %v2956 = vadd.f32 %v2955, 1.0
  %v2957 = vrcp.pop %v2956
  %v2958 = vmul.f32 1.0, %v2957
  %v2959 = vmul.f32 %v2958, %v2950
  %v2960 = vadd.f32 %v2851, %v2959
  %v2961 = vtanh.pop %v2960
  %v2962 = vsub.f32 1.0, %v2958
  %2964 = vrot.lane.b32.xlu0 %v2961, 64
  %v2965 = vpop.permute.xlu0 %2964
  %v2967 = vmul.f32 %v2962, %v2965
  %v2968 = vmul.f32 %v2958, %v2358
  %v2969 = vadd.f32 %v2967, %v2968
  %v2970 = vld [vmem:[%s1] sm:$0xff]
  %v2971 = vld [vmem:[%s1 + $0x8] sm:$0xff]
  %v2972 = vld [vmem:[%s2] sm:$0x3]
  %2974 = vrot.lane.b32.xlu0 %v2969, 64
  %v2975 = vpop.permute.xlu0 %2974
  %v2976 = vsel %vm150, %v2975, 0
  %v2979 = vsel %vm150, %v2970, 0
  %v2982 = vsel %vm150, %v2971, 0
  %2984 = vmatprep.subr.mxu0 0.0
  %2985 = vmatpush1.xpose.msra.mxu0 0.0
  %2986 = vmatprep.subr.mxu0 0.0
  %2987 = vmatpush1.xpose.msra.mxu0 0.0
  %2988 = vmatprep.subr.mxu0 0.0
  %2989 = vmatpush1.xpose.msra.mxu0 0.0
  %2990 = vmatprep.subr.mxu0 0.0
  %2991 = vmatpush1.xpose.msra.mxu0 0.0
  %2992 = vmatprep.subr.mxu0 0.0
  %2993 = vmatpush1.xpose.msra.mxu0 0.0
  %2994 = vmatprep.subr.mxu0 0.0
  %2995 = vmatpush1.xpose.msra.mxu0 0.0
  %2996 = vmatprep.subr.mxu0 0.0
  %2997 = vmatpush1.xpose.msra.mxu0 0.0
  %2998 = vmatprep.subr.mxu0 0.0
  %2999 = vmatpush1.xpose.msra.mxu0 0.0
  %3000 = vmatprep.subr.mxu0 0.0
  %3001 = vmatpush1.xpose.msra.mxu0 0.0
  %3002 = vmatprep.subr.mxu0 0.0
  %3003 = vmatpush1.xpose.msra.mxu0 0.0
  %3004 = vmatprep.subr.mxu0 0.0
  %3005 = vmatpush1.xpose.msra.mxu0 0.0
  %3006 = vmatprep.subr.mxu0 0.0
  %3007 = vmatpush1.xpose.msra.mxu0 0.0
  %3008 = vmatprep.subr.mxu0 0.0
  %3009 = vmatpush1.xpose.msra.mxu0 0.0
  %3010 = vmatprep.subr.mxu0 0.0
  %3011 = vmatpush1.xpose.msra.mxu0 0.0
  %3012 = vmatprep.subr.mxu0 0.0
  %3013 = vmatpush1.xpose.msra.mxu0 %v2982
  %3014 = vmatprep.subr.mxu0 0.0
  %3015 = vmatpush1.xpose.msra.mxu0 %v2979
  %3016 = vmatprep.subr.mxu0 0.0
  %3017 = vmatpush2.xpose.msra.mxu0 0.0
  %3018 = vmatprep.subr.mxu0 0.0
  %3019 = vmatpush2.xpose.msra.mxu0 0.0
  %3020 = vmatprep.subr.mxu0 0.0
  %3021 = vmatpush2.xpose.msra.mxu0 0.0
  %3022 = vmatprep.subr.mxu0 0.0
  %3023 = vmatpush2.xpose.msra.mxu0 0.0
  %3024 = vmatprep.subr.mxu0 0.0
  %3025 = vmatpush2.xpose.msra.mxu0 0.0
  %3026 = vmatprep.subr.mxu0 0.0
  %3027 = vmatpush2.xpose.msra.mxu0 0.0
  %3028 = vmatprep.subr.mxu0 0.0
  %3029 = vmatpush2.xpose.msra.mxu0 0.0
  %3030 = vmatprep.subr.mxu0 0.0
  %3031 = vmatpush2.xpose.msra.mxu0 0.0
  %3032 = vmatprep.subr.mxu0 0.0
  %3033 = vmatpush2.xpose.msra.mxu0 0.0
  %3034 = vmatprep.subr.mxu0 0.0
  %3035 = vmatpush2.xpose.msra.mxu0 0.0
  %3036 = vmatprep.subr.mxu0 0.0
  %3037 = vmatpush2.xpose.msra.mxu0 0.0
  %3038 = vmatprep.subr.mxu0 0.0
  %3039 = vmatpush2.xpose.msra.mxu0 0.0
  %3040 = vmatprep.subr.mxu0 0.0
  %3041 = vmatpush2.xpose.msra.mxu0 0.0
  %3042 = vmatprep.subr.mxu0 0.0
  %3043 = vmatpush2.xpose.msra.mxu0 0.0
  %3044 = vmatprep.subr.mxu0 0.0
  %3045 = vmatpush2.xpose.msra.mxu0 0.0
  %3046 = vmatprep.subr.mxu0 0.0
  %3047 = vmatpush2.xpose.msra.mxu0 0.0
  %3048 = vmatprep.mubr.f32.mxu0 0.0
  %3049 = vmatmul.mubr.f32.gmra.mxu0 %v2976
  %v3050 = vpop.f32.mrf.mxu0
  %v3051 = vadd.f32 %v2972, %v3050
  %v3052 = vpop.f32.mrf.mxu0
  %3053 = vdwg.mxu0
  %v3054 = vsel %vm585, %v3051, -inf
  %3055 = vmax.xlane.f32.xlu0 %v3054
  %v3056 = vpop.xlane.xlu0 %3055
  %v3057 = vsub.f32 %v3051, %v3056
  %v3058 = vmul.f32 %v3057, 1.442695
  %v3059 = vpow.pop %v3058
  %v3060 = vsel %vm585, %v3059, 0.0
  %3061 = vadd.xlane.f32.xlu0 %v3060
  %v3062 = vpop.xlane.xlu0 %3061
  %v3063 = vrcp.pop %v3062
  %v3064 = vmul.f32 %v3059, %v3063
  %v3066 = vsel %vm65, %v3064, 0
  %3068 = vmatprep.subr.mxu0 0.0
  %3069 = vmatpush1.msra.mxu0 0.0
  %3070 = vmatprep.subr.mxu0 0.0
  %3071 = vmatpush1.msra.mxu0 0.0
  %3072 = vmatprep.subr.mxu0 0.0
  %3073 = vmatpush1.msra.mxu0 0.0
  %3074 = vmatprep.subr.mxu0 0.0
  %3075 = vmatpush1.msra.mxu0 0.0
  %3076 = vmatprep.subr.mxu0 0.0
  %3077 = vmatpush1.msra.mxu0 0.0
  %3078 = vmatprep.subr.mxu0 0.0
  %3079 = vmatpush1.msra.mxu0 0.0
  %3080 = vmatprep.subr.mxu0 0.0
  %3081 = vmatpush1.msra.mxu0 0.0
  %3082 = vmatprep.subr.mxu0 0.0
  %3083 = vmatpush1.msra.mxu0 0.0
  %3084 = vmatprep.subr.mxu0 0.0
  %3085 = vmatpush1.msra.mxu0 0.0
  %3086 = vmatprep.subr.mxu0 0.0
  %3087 = vmatpush1.msra.mxu0 0.0
  %3088 = vmatprep.subr.mxu0 0.0
  %3089 = vmatpush1.msra.mxu0 0.0
  %3090 = vmatprep.subr.mxu0 0.0
  %3091 = vmatpush1.msra.mxu0 0.0
  %3092 = vmatprep.subr.mxu0 0.0
  %3093 = vmatpush1.msra.mxu0 0.0
  %3094 = vmatprep.subr.mxu0 0.0
  %3095 = vmatpush1.msra.mxu0 0.0
  %3096 = vmatprep.subr.mxu0 0.0
  %3097 = vmatpush1.msra.mxu0 %v2971
  %3098 = vmatprep.subr.mxu0 0.0
  %3099 = vmatpush1.msra.mxu0 %v2970
  %3100 = vmatprep.subr.mxu0 0.0
  %3101 = vmatpush2.msra.mxu0 0.0
  %3102 = vmatprep.subr.mxu0 0.0
  %3103 = vmatpush2.msra.mxu0 0.0
  %3104 = vmatprep.subr.mxu0 0.0
  %3105 = vmatpush2.msra.mxu0 0.0
  %3106 = vmatprep.subr.mxu0 0.0
  %3107 = vmatpush2.msra.mxu0 0.0
  %3108 = vmatprep.subr.mxu0 0.0
  %3109 = vmatpush2.msra.mxu0 0.0
  %3110 = vmatprep.subr.mxu0 0.0
  %3111 = vmatpush2.msra.mxu0 0.0
  %3112 = vmatprep.subr.mxu0 0.0
  %3113 = vmatpush2.msra.mxu0 0.0
  %3114 = vmatprep.subr.mxu0 0.0
  %3115 = vmatpush2.msra.mxu0 0.0
  %3116 = vmatprep.subr.mxu0 0.0
  %3117 = vmatpush2.msra.mxu0 0.0
  %3118 = vmatprep.subr.mxu0 0.0
  %3119 = vmatpush2.msra.mxu0 0.0
  %3120 = vmatprep.subr.mxu0 0.0
  %3121 = vmatpush2.msra.mxu0 0.0
  %3122 = vmatprep.subr.mxu0 0.0
  %3123 = vmatpush2.msra.mxu0 0.0
  %3124 = vmatprep.subr.mxu0 0.0
  %3125 = vmatpush2.msra.mxu0 0.0
  %3126 = vmatprep.subr.mxu0 0.0
  %3127 = vmatpush2.msra.mxu0 0.0
  %3128 = vmatprep.subr.mxu0 0.0
  %3129 = vmatpush2.msra.mxu0 0.0
  %3130 = vmatprep.subr.mxu0 0.0
  %3131 = vmatpush2.msra.mxu0 0.0
  %3132 = vmatprep.mubr.f32.mxu0 0.0
  %3133 = vmatmul.mubr.f32.gmra.mxu0 %v3066
  %v3134 = vpop.f32.mrf.mxu0
  %v3135 = vadd.f32 0.0, %v3134
  %v3136 = vpop.f32.mrf.mxu0
  %3137 = vdwg.mxu0
  %v3138 = vsel %vm150, %v3135, %v2969
  %v3139 = vld [vmem:[%s12] sm:$0xff]
  %v3140 = vld [vmem:[%s12 + $0x8] sm:$0xff]
  %v3141 = vld [vmem:[%s12 + $0x10] sm:$0xff]
  %v3142 = vld [vmem:[%s12 + $0x18] sm:$0xff]
  %v3143 = vld [vmem:[%s12 + $0x20] sm:$0xff]
  %v3144 = vld [vmem:[%s12 + $0x28] sm:$0xff]
  %v3145 = vld [vmem:[%s12 + $0x30] sm:$0xff]
  %v3146 = vld [vmem:[%s12 + $0x38] sm:$0xff]
  %v3147 = vld [vmem:[%s12 + $0x40] sm:$0xff]
  %v3148 = vld [vmem:[%s12 + $0x48] sm:$0xff]
  %v3149 = vld [vmem:[%s12 + $0x50] sm:$0xff]
  %v3150 = vld [vmem:[%s12 + $0x58] sm:$0xff]
  %v3151 = vld [vmem:[%s12 + $0x60] sm:$0xff]
  %v3152 = vld [vmem:[%s12 + $0x68] sm:$0xff]
  %v3153 = vld [vmem:[%s12 + $0x70] sm:$0xff]
  %v3154 = vld [vmem:[%s12 + $0x78] sm:$0xff]
  %v3155 = vld [vmem:[%s13] sm:$0x1]
  %v3157 = vlaneseq
  %v3158 = vshrl.u32 %v3157, 7
  %v3159 = vsub.s32 0, %v3158
  %v3160 = vrot.slane %v3155, %v3159
  %3162 = vmatprep.subr.mxu0 0.0
  %3163 = vmatpush1.msra.mxu0 %v3154
  %3164 = vmatprep.subr.mxu0 0.0
  %3165 = vmatpush1.msra.mxu0 %v3153
  %3166 = vmatprep.subr.mxu0 0.0
  %3167 = vmatpush1.msra.mxu0 %v3152
  %3168 = vmatprep.subr.mxu0 0.0
  %3169 = vmatpush1.msra.mxu0 %v3151
  %3170 = vmatprep.subr.mxu0 0.0
  %3171 = vmatpush1.msra.mxu0 %v3150
  %3172 = vmatprep.subr.mxu0 0.0
  %3173 = vmatpush1.msra.mxu0 %v3149
  %3174 = vmatprep.subr.mxu0 0.0
  %3175 = vmatpush1.msra.mxu0 %v3148
  %3176 = vmatprep.subr.mxu0 0.0
  %3177 = vmatpush1.msra.mxu0 %v3147
  %3178 = vmatprep.subr.mxu0 0.0
  %3179 = vmatpush1.msra.mxu0 %v3146
  %3180 = vmatprep.subr.mxu0 0.0
  %3181 = vmatpush1.msra.mxu0 %v3145
  %3182 = vmatprep.subr.mxu0 0.0
  %3183 = vmatpush1.msra.mxu0 %v3144
  %3184 = vmatprep.subr.mxu0 0.0
  %3185 = vmatpush1.msra.mxu0 %v3143
  %3186 = vmatprep.subr.mxu0 0.0
  %3187 = vmatpush1.msra.mxu0 %v3142
  %3188 = vmatprep.subr.mxu0 0.0
  %3189 = vmatpush1.msra.mxu0 %v3141
  %3190 = vmatprep.subr.mxu0 0.0
  %3191 = vmatpush1.msra.mxu0 %v3140
  %3192 = vmatprep.subr.mxu0 0.0
  %3193 = vmatpush1.msra.mxu0 %v3139
  %3194 = vmatprep.subr.mxu0 0.0
  %3195 = vmatpush2.msra.mxu0 0.0
  %3196 = vmatprep.subr.mxu0 0.0
  %3197 = vmatpush2.msra.mxu0 0.0
  %3198 = vmatprep.subr.mxu0 0.0
  %3199 = vmatpush2.msra.mxu0 0.0
  %3200 = vmatprep.subr.mxu0 0.0
  %3201 = vmatpush2.msra.mxu0 0.0
  %3202 = vmatprep.subr.mxu0 0.0
  %3203 = vmatpush2.msra.mxu0 0.0
  %3204 = vmatprep.subr.mxu0 0.0
  %3205 = vmatpush2.msra.mxu0 0.0
  %3206 = vmatprep.subr.mxu0 0.0
  %3207 = vmatpush2.msra.mxu0 0.0
  %3208 = vmatprep.subr.mxu0 0.0
  %3209 = vmatpush2.msra.mxu0 0.0
  %3210 = vmatprep.subr.mxu0 0.0
  %3211 = vmatpush2.msra.mxu0 0.0
  %3212 = vmatprep.subr.mxu0 0.0
  %3213 = vmatpush2.msra.mxu0 0.0
  %3214 = vmatprep.subr.mxu0 0.0
  %3215 = vmatpush2.msra.mxu0 0.0
  %3216 = vmatprep.subr.mxu0 0.0
  %3217 = vmatpush2.msra.mxu0 0.0
  %3218 = vmatprep.subr.mxu0 0.0
  %3219 = vmatpush2.msra.mxu0 0.0
  %3220 = vmatprep.subr.mxu0 0.0
  %3221 = vmatpush2.msra.mxu0 0.0
  %3222 = vmatprep.subr.mxu0 0.0
  %3223 = vmatpush2.msra.mxu0 0.0
  %3224 = vmatprep.subr.mxu0 0.0
  %3225 = vmatpush2.msra.mxu0 0.0
  %3226 = vmatprep.mubr.f32.mxu0 0.0
  %3227 = vmatmul.mubr.f32.gmra.mxu0 %v3138
  %v3228 = vpop.f32.mrf.mxu0
  %v3229 = vadd.f32 %v3160, %v3228
  %v3230 = vpop.f32.mrf.mxu0
  %3231 = vdwg.mxu0
  %v3232 = vtanh.pop %v3229
  %v3234 = vrot.slane %v3232, 1
  %3235 = vrot.lane.b32.xlu0 %v3234, 64
  %v3236 = vpop.permute.xlu0 %3235
  %v3238 = vsel %vm150, %v3232, %v3236
  %3239 = vst [vmem:[%s14 + $0x4] sm:$0x1] %v3238
  %v3240 = vld [vmem:[#allocation2 + $0x10] sm:$0xc]
  %v3241 = vld [vmem:[#allocation2 + $0x18] sm:$0xc]
  %v3242 = vld [vmem:[%s6] sm:$0xff]
  %v3243 = vld [vmem:[%s6 + $0x8] sm:$0xff]
  %v3244 = vld [vmem:[%s6 + $0x10] sm:$0xff]
  %v3245 = vld [vmem:[%s6 + $0x18] sm:$0xff]
  %v3246 = vld [vmem:[%s6 + $0x20] sm:$0xff]
  %v3247 = vld [vmem:[%s6 + $0x28] sm:$0xff]
  %v3248 = vld [vmem:[%s6 + $0x30] sm:$0xff]
  %v3249 = vld [vmem:[%s6 + $0x38] sm:$0xff]
  %v3250 = vld [vmem:[%s6 + $0x40] sm:$0xff]
  %v3251 = vld [vmem:[%s6 + $0x48] sm:$0xff]
  %v3252 = vld [vmem:[%s6 + $0x50] sm:$0xff]
  %v3253 = vld [vmem:[%s6 + $0x58] sm:$0xff]
  %v3254 = vld [vmem:[%s6 + $0x60] sm:$0xff]
  %v3255 = vld [vmem:[%s6 + $0x68] sm:$0xff]
  %v3256 = vld [vmem:[%s6 + $0x70] sm:$0xff]
  %v3257 = vld [vmem:[%s6 + $0x78] sm:$0xff]
  %v3258 = vld [vmem:[%s7] sm:$0x3]
  %v3260 = vlaneseq
  %v3261 = vshrl.u32 %v3260, 7
  %v3262 = vsub.s32 0, %v3261
  %v3263 = vrot.slane %v3258, %v3262
  %v3264 = vlaneseq
  %v3265 = vshrl.u32 %v3264, 7
  %v3266 = vsub.s32 1, %v3265
  %v3267 = vrot.slane %v3258, %v3266
  %3270 = vmatprep.subr.mxu0 0.0
  %3271 = vmatpush1.msra.mxu0 0.0
  %3272 = vmatprep.subr.mxu0 0.0
  %3273 = vmatpush1.msra.mxu0 0.0
  %3274 = vmatprep.subr.mxu0 0.0
  %3275 = vmatpush1.msra.mxu0 0.0
  %3276 = vmatprep.subr.mxu0 0.0
  %3277 = vmatpush1.msra.mxu0 0.0
  %3278 = vmatprep.subr.mxu0 0.0
  %3279 = vmatpush1.msra.mxu0 0.0
  %3280 = vmatprep.subr.mxu0 0.0
  %3281 = vmatpush1.msra.mxu0 0.0
  %3282 = vmatprep.subr.mxu0 0.0
  %3283 = vmatpush1.msra.mxu0 0.0
  %3284 = vmatprep.subr.mxu0 0.0
  %3285 = vmatpush1.msra.mxu0 0.0
  %3286 = vmatprep.subr.mxu0 %v3257
  %3287 = vmatpush1.msra.mxu0 %v3256
  %3288 = vmatprep.subr.mxu0 %v3255
  %3289 = vmatpush1.msra.mxu0 %v3254
  %3290 = vmatprep.subr.mxu0 %v3253
  %3291 = vmatpush1.msra.mxu0 %v3252
  %3292 = vmatprep.subr.mxu0 %v3251
  %3293 = vmatpush1.msra.mxu0 %v3250
  %3294 = vmatprep.subr.mxu0 %v3249
  %3295 = vmatpush1.msra.mxu0 %v3248
  %3296 = vmatprep.subr.mxu0 %v3247
  %3297 = vmatpush1.msra.mxu0 %v3246
  %3298 = vmatprep.subr.mxu0 %v3245
  %3299 = vmatpush1.msra.mxu0 %v3244
  %3300 = vmatprep.subr.mxu0 %v3243
  %3301 = vmatpush1.msra.mxu0 %v3242
  %3302 = vmatprep.subr.mxu0 0.0
  %3303 = vmatpush2.msra.mxu0 0.0
  %3304 = vmatprep.subr.mxu0 0.0
  %3305 = vmatpush2.msra.mxu0 0.0
  %3306 = vmatprep.subr.mxu0 0.0
  %3307 = vmatpush2.msra.mxu0 0.0
  %3308 = vmatprep.subr.mxu0 0.0
  %3309 = vmatpush2.msra.mxu0 0.0
  %3310 = vmatprep.subr.mxu0 0.0
  %3311 = vmatpush2.msra.mxu0 0.0
  %3312 = vmatprep.subr.mxu0 0.0
  %3313 = vmatpush2.msra.mxu0 0.0
  %3314 = vmatprep.subr.mxu0 0.0
  %3315 = vmatpush2.msra.mxu0 0.0
  %3316 = vmatprep.subr.mxu0 0.0
  %3317 = vmatpush2.msra.mxu0 0.0
  %3318 = vmatprep.subr.mxu0 0.0
  %3319 = vmatpush2.msra.mxu0 0.0
  %3320 = vmatprep.subr.mxu0 0.0
  %3321 = vmatpush2.msra.mxu0 0.0
  %3322 = vmatprep.subr.mxu0 0.0
  %3323 = vmatpush2.msra.mxu0 0.0
  %3324 = vmatprep.subr.mxu0 0.0
  %3325 = vmatpush2.msra.mxu0 0.0
  %3326 = vmatprep.subr.mxu0 0.0
  %3327 = vmatpush2.msra.mxu0 0.0
  %3328 = vmatprep.subr.mxu0 0.0
  %3329 = vmatpush2.msra.mxu0 0.0
  %3330 = vmatprep.subr.mxu0 0.0
  %3331 = vmatpush2.msra.mxu0 0.0
  %3332 = vmatprep.subr.mxu0 0.0
  %3333 = vmatpush2.msra.mxu0 0.0
  %3334 = vmatprep.mubr.f32.mxu0 0.0
  %3335 = vmatmul.mubr.f32.gmra.mxu0 %v2780
  %v3336 = vpop.f32.mrf.mxu0
  %v3337 = vadd.f32 %v3263, %v3336
  %v3338 = vpop.f32.mrf.mxu0
  %v3339 = vadd.f32 %v3267, %v3338
  %3340 = vdwg.mxu0
  %v3342 = vrot.slane %v3337, 6
  %v3344 = vadd.f32 %v3240, %v3342
  %v3345 = vxor.u32 %v3344, 2147483648
  %v3346 = vmul.f32 %v3345, 1.442695
  %v3347 = vpow.pop %v3346
  %v3348 = vadd.f32 %v3347, 1.0
  %v3349 = vrcp.pop %v3348
  %v3350 = vmul.f32 1.0, %v3349
  %v3352 = vrot.slane %v3339, 6
  %v3354 = vmul.f32 %v3350, %v3352
  %v3355 = vadd.f32 %v3241, %v3354
  %v3356 = vtanh.pop %v3355
  %v3357 = vsub.f32 1.0, %v3350
  %3359 = vrot.lane.b32.xlu0 %v3356, 64
  %v3360 = vpop.permute.xlu0 %3359
  %v3362 = vmul.f32 %v3357, %v3360
  %v3363 = vrot.slane %v2748, 6
  %v3365 = vmul.f32 %v3350, %v3363
  %v3366 = vadd.f32 %v3362, %v3365
  %v3367 = vld [vmem:[%s8] sm:$0xff]
  %v3368 = vld [vmem:[%s8 + $0x8] sm:$0xff]
  %v3369 = vld [vmem:[%s8 + $0x10] sm:$0xff]
  %v3370 = vld [vmem:[%s8 + $0x18] sm:$0xff]
  %v3371 = vld [vmem:[%s8 + $0x20] sm:$0xff]
  %v3372 = vld [vmem:[%s8 + $0x28] sm:$0xff]
  %v3373 = vld [vmem:[%s8 + $0x30] sm:$0xff]
  %v3374 = vld [vmem:[%s8 + $0x38] sm:$0xff]
  %v3375 = vld [vmem:[%s8 + $0x40] sm:$0xff]
  %v3376 = vld [vmem:[%s8 + $0x48] sm:$0xff]
  %v3377 = vld [vmem:[%s8 + $0x50] sm:$0xff]
  %v3378 = vld [vmem:[%s8 + $0x58] sm:$0xff]
  %v3379 = vld [vmem:[%s8 + $0x60] sm:$0xff]
  %v3380 = vld [vmem:[%s8 + $0x68] sm:$0xff]
  %v3381 = vld [vmem:[%s8 + $0x70] sm:$0xff]
  %v3382 = vld [vmem:[%s8 + $0x78] sm:$0xff]
  %v3383 = vld [vmem:[%s9] sm:$0x3]
  %v3385 = vlaneseq
  %v3386 = vshrl.u32 %v3385, 7
  %v3387 = vsub.s32 0, %v3386
  %v3388 = vrot.slane %v3383, %v3387
  %v3389 = vlaneseq
  %v3390 = vshrl.u32 %v3389, 7
  %v3391 = vsub.s32 1, %v3390
  %v3392 = vrot.slane %v3383, %v3391
  %v3396 = vrot.slane %v3366, 2
  %3397 = vrot.lane.b32.xlu0 %v3396, 64
  %v3398 = vpop.permute.xlu0 %3397
  %v3399 = vsel %vm150, %v3398, 0
  %3401 = vmatprep.subr.mxu0 0.0
  %3402 = vmatpush1.msra.mxu0 0.0
  %3403 = vmatprep.subr.mxu0 0.0
  %3404 = vmatpush1.msra.mxu0 0.0
  %3405 = vmatprep.subr.mxu0 0.0
  %3406 = vmatpush1.msra.mxu0 0.0
  %3407 = vmatprep.subr.mxu0 0.0
  %3408 = vmatpush1.msra.mxu0 0.0
  %3409 = vmatprep.subr.mxu0 0.0
  %3410 = vmatpush1.msra.mxu0 0.0
  %3411 = vmatprep.subr.mxu0 0.0
  %3412 = vmatpush1.msra.mxu0 0.0
  %3413 = vmatprep.subr.mxu0 0.0
  %3414 = vmatpush1.msra.mxu0 0.0
  %3415 = vmatprep.subr.mxu0 0.0
  %3416 = vmatpush1.msra.mxu0 0.0
  %3417 = vmatprep.subr.mxu0 %v3382
  %3418 = vmatpush1.msra.mxu0 %v3381
  %3419 = vmatprep.subr.mxu0 %v3380
  %3420 = vmatpush1.msra.mxu0 %v3379
  %3421 = vmatprep.subr.mxu0 %v3378
  %3422 = vmatpush1.msra.mxu0 %v3377
  %3423 = vmatprep.subr.mxu0 %v3376
  %3424 = vmatpush1.msra.mxu0 %v3375
  %3425 = vmatprep.subr.mxu0 %v3374
  %3426 = vmatpush1.msra.mxu0 %v3373
  %3427 = vmatprep.subr.mxu0 %v3372
  %3428 = vmatpush1.msra.mxu0 %v3371
  %3429 = vmatprep.subr.mxu0 %v3370
  %3430 = vmatpush1.msra.mxu0 %v3369
  %3431 = vmatprep.subr.mxu0 %v3368
  %3432 = vmatpush1.msra.mxu0 %v3367
  %3433 = vmatprep.subr.mxu0 0.0
  %3434 = vmatpush2.msra.mxu0 0.0
  %3435 = vmatprep.subr.mxu0 0.0
  %3436 = vmatpush2.msra.mxu0 0.0
  %3437 = vmatprep.subr.mxu0 0.0
  %3438 = vmatpush2.msra.mxu0 0.0
  %3439 = vmatprep.subr.mxu0 0.0
  %3440 = vmatpush2.msra.mxu0 0.0
  %3441 = vmatprep.subr.mxu0 0.0
  %3442 = vmatpush2.msra.mxu0 0.0
  %3443 = vmatprep.subr.mxu0 0.0
  %3444 = vmatpush2.msra.mxu0 0.0
  %3445 = vmatprep.subr.mxu0 0.0
  %3446 = vmatpush2.msra.mxu0 0.0
  %3447 = vmatprep.subr.mxu0 0.0
  %3448 = vmatpush2.msra.mxu0 0.0
  %3449 = vmatprep.subr.mxu0 0.0
  %3450 = vmatpush2.msra.mxu0 0.0
  %3451 = vmatprep.subr.mxu0 0.0
  %3452 = vmatpush2.msra.mxu0 0.0
  %3453 = vmatprep.subr.mxu0 0.0
  %3454 = vmatpush2.msra.mxu0 0.0
  %3455 = vmatprep.subr.mxu0 0.0
  %3456 = vmatpush2.msra.mxu0 0.0
  %3457 = vmatprep.subr.mxu0 0.0
  %3458 = vmatpush2.msra.mxu0 0.0
  %3459 = vmatprep.subr.mxu0 0.0
  %3460 = vmatpush2.msra.mxu0 0.0
  %3461 = vmatprep.subr.mxu0 0.0
  %3462 = vmatpush2.msra.mxu0 0.0
  %3463 = vmatprep.subr.mxu0 0.0
  %3464 = vmatpush2.msra.mxu0 0.0
  %3465 = vmatprep.mubr.f32.mxu0 0.0
  %3466 = vmatmul.mubr.f32.gmra.mxu0 %v3399
  %v3467 = vpop.f32.mrf.mxu0
  %v3468 = vadd.f32 %v3388, %v3467
  %v3469 = vpop.f32.mrf.mxu0
  %v3470 = vadd.f32 %v3392, %v3469
  %3471 = vdwg.mxu0
  %v3472 = vld [vmem:[%s10] sm:$0xff]
  %v3473 = vld [vmem:[%s10 + $0x8] sm:$0xff]
  %v3474 = vld [vmem:[%s10 + $0x10] sm:$0xff]
  %v3475 = vld [vmem:[%s10 + $0x18] sm:$0xff]
  %v3476 = vld [vmem:[%s10 + $0x20] sm:$0xff]
  %v3477 = vld [vmem:[%s10 + $0x28] sm:$0xff]
  %v3478 = vld [vmem:[%s10 + $0x30] sm:$0xff]
  %v3479 = vld [vmem:[%s10 + $0x38] sm:$0xff]
  %v3480 = vld [vmem:[%s10 + $0x40] sm:$0xff]
  %v3481 = vld [vmem:[%s10 + $0x48] sm:$0xff]
  %v3482 = vld [vmem:[%s10 + $0x50] sm:$0xff]
  %v3483 = vld [vmem:[%s10 + $0x58] sm:$0xff]
  %v3484 = vld [vmem:[%s10 + $0x60] sm:$0xff]
  %v3485 = vld [vmem:[%s10 + $0x68] sm:$0xff]
  %v3486 = vld [vmem:[%s10 + $0x70] sm:$0xff]
  %v3487 = vld [vmem:[%s10 + $0x78] sm:$0xff]
  %v3488 = vld [vmem:[%s11] sm:$0x3]
  %v3490 = vlaneseq
  %v3491 = vshrl.u32 %v3490, 7
  %v3492 = vsub.s32 0, %v3491
  %v3493 = vrot.slane %v3488, %v3492
  %v3494 = vlaneseq
  %v3495 = vshrl.u32 %v3494, 7
  %v3496 = vsub.s32 1, %v3495
  %v3497 = vrot.slane %v3488, %v3496
  %3500 = vmatprep.subr.mxu0 0.0
  %3501 = vmatpush1.msra.mxu0 0.0
  %3502 = vmatprep.subr.mxu0 0.0
  %3503 = vmatpush1.msra.mxu0 0.0
  %3504 = vmatprep.subr.mxu0 0.0
  %3505 = vmatpush1.msra.mxu0 0.0
  %3506 = vmatprep.subr.mxu0 0.0
  %3507 = vmatpush1.msra.mxu0 0.0
  %3508 = vmatprep.subr.mxu0 0.0
  %3509 = vmatpush1.msra.mxu0 0.0
  %3510 = vmatprep.subr.mxu0 0.0
  %3511 = vmatpush1.msra.mxu0 0.0
  %3512 = vmatprep.subr.mxu0 0.0
  %3513 = vmatpush1.msra.mxu0 0.0
  %3514 = vmatprep.subr.mxu0 0.0
  %3515 = vmatpush1.msra.mxu0 0.0
  %3516 = vmatprep.subr.mxu0 %v3487
  %3517 = vmatpush1.msra.mxu0 %v3486
  %3518 = vmatprep.subr.mxu0 %v3485
  %3519 = vmatpush1.msra.mxu0 %v3484
  %3520 = vmatprep.subr.mxu0 %v3483
  %3521 = vmatpush1.msra.mxu0 %v3482
  %3522 = vmatprep.subr.mxu0 %v3481
  %3523 = vmatpush1.msra.mxu0 %v3480
  %3524 = vmatprep.subr.mxu0 %v3479
  %3525 = vmatpush1.msra.mxu0 %v3478
  %3526 = vmatprep.subr.mxu0 %v3477
  %3527 = vmatpush1.msra.mxu0 %v3476
  %3528 = vmatprep.subr.mxu0 %v3475
  %3529 = vmatpush1.msra.mxu0 %v3474
  %3530 = vmatprep.subr.mxu0 %v3473
  %3531 = vmatpush1.msra.mxu0 %v3472
  %3532 = vmatprep.subr.mxu0 0.0
  %3533 = vmatpush2.msra.mxu0 0.0
  %3534 = vmatprep.subr.mxu0 0.0
  %3535 = vmatpush2.msra.mxu0 0.0
  %3536 = vmatprep.subr.mxu0 0.0
  %3537 = vmatpush2.msra.mxu0 0.0
  %3538 = vmatprep.subr.mxu0 0.0
  %3539 = vmatpush2.msra.mxu0 0.0
  %3540 = vmatprep.subr.mxu0 0.0
  %3541 = vmatpush2.msra.mxu0 0.0
  %3542 = vmatprep.subr.mxu0 0.0
  %3543 = vmatpush2.msra.mxu0 0.0
  %3544 = vmatprep.subr.mxu0 0.0
  %3545 = vmatpush2.msra.mxu0 0.0
  %3546 = vmatprep.subr.mxu0 0.0
  %3547 = vmatpush2.msra.mxu0 0.0
  %3548 = vmatprep.subr.mxu0 0.0
  %3549 = vmatpush2.msra.mxu0 0.0
  %3550 = vmatprep.subr.mxu0 0.0
  %3551 = vmatpush2.msra.mxu0 0.0
  %3552 = vmatprep.subr.mxu0 0.0
  %3553 = vmatpush2.msra.mxu0 0.0
  %3554 = vmatprep.subr.mxu0 0.0
  %3555 = vmatpush2.msra.mxu0 0.0
  %3556 = vmatprep.subr.mxu0 0.0
  %3557 = vmatpush2.msra.mxu0 0.0
  %3558 = vmatprep.subr.mxu0 0.0
  %3559 = vmatpush2.msra.mxu0 0.0
  %3560 = vmatprep.subr.mxu0 0.0
  %3561 = vmatpush2.msra.mxu0 0.0
  %3562 = vmatprep.subr.mxu0 0.0
  %3563 = vmatpush2.msra.mxu0 0.0
  %3564 = vmatprep.mubr.f32.mxu0 0.0
  %3565 = vmatmul.mubr.f32.gmra.mxu0 %v2976
  %v3566 = vpop.f32.mrf.mxu0
  %v3567 = vadd.f32 %v3493, %v3566
  %v3568 = vpop.f32.mrf.mxu0
  %v3569 = vadd.f32 %v3497, %v3568
  %3570 = vdwg.mxu0
  %v3571 = vadd.f32 %v3468, %v3567
  %v3572 = vxor.u32 %v3571, 2147483648
  %v3573 = vmul.f32 %v3572, 1.442695
  %v3574 = vpow.pop %v3573
  %v3575 = vadd.f32 %v3574, 1.0
  %v3576 = vrcp.pop %v3575
  %v3577 = vmul.f32 1.0, %v3576
  %v3578 = vmul.f32 %v3577, %v3569
  %v3579 = vadd.f32 %v3470, %v3578
  %v3580 = vtanh.pop %v3579
  %v3581 = vsub.f32 1.0, %v3577
  %3583 = vrot.lane.b32.xlu0 %v3580, 64
  %v3584 = vpop.permute.xlu0 %3583
  %v3586 = vmul.f32 %v3581, %v3584
  %v3587 = vmul.f32 %v3577, %v2969
  %v3588 = vadd.f32 %v3586, %v3587
  %v3589 = vld [vmem:[%s1] sm:$0xff]
  %v3590 = vld [vmem:[%s1 + $0x8] sm:$0xff]
  %v3591 = vld [vmem:[%s2] sm:$0x3]
  %3593 = vrot.lane.b32.xlu0 %v3588, 64
  %v3594 = vpop.permute.xlu0 %3593
  %v3595 = vsel %vm150, %v3594, 0
  %v3598 = vsel %vm150, %v3589, 0
  %v3601 = vsel %vm150, %v3590, 0
  %3603 = vmatprep.subr.mxu0 0.0
  %3604 = vmatpush1.xpose.msra.mxu0 0.0
  %3605 = vmatprep.subr.mxu0 0.0
  %3606 = vmatpush1.xpose.msra.mxu0 0.0
  %3607 = vmatprep.subr.mxu0 0.0
  %3608 = vmatpush1.xpose.msra.mxu0 0.0
  %3609 = vmatprep.subr.mxu0 0.0
  %3610 = vmatpush1.xpose.msra.mxu0 0.0
  %3611 = vmatprep.subr.mxu0 0.0
  %3612 = vmatpush1.xpose.msra.mxu0 0.0
  %3613 = vmatprep.subr.mxu0 0.0
  %3614 = vmatpush1.xpose.msra.mxu0 0.0
  %3615 = vmatprep.subr.mxu0 0.0
  %3616 = vmatpush1.xpose.msra.mxu0 0.0
  %3617 = vmatprep.subr.mxu0 0.0
  %3618 = vmatpush1.xpose.msra.mxu0 0.0
  %3619 = vmatprep.subr.mxu0 0.0
  %3620 = vmatpush1.xpose.msra.mxu0 0.0
  %3621 = vmatprep.subr.mxu0 0.0
  %3622 = vmatpush1.xpose.msra.mxu0 0.0
  %3623 = vmatprep.subr.mxu0 0.0
  %3624 = vmatpush1.xpose.msra.mxu0 0.0
  %3625 = vmatprep.subr.mxu0 0.0
  %3626 = vmatpush1.xpose.msra.mxu0 0.0
  %3627 = vmatprep.subr.mxu0 0.0
  %3628 = vmatpush1.xpose.msra.mxu0 0.0
  %3629 = vmatprep.subr.mxu0 0.0
  %3630 = vmatpush1.xpose.msra.mxu0 0.0
  %3631 = vmatprep.subr.mxu0 0.0
  %3632 = vmatpush1.xpose.msra.mxu0 %v3601
  %3633 = vmatprep.subr.mxu0 0.0
  %3634 = vmatpush1.xpose.msra.mxu0 %v3598
  %3635 = vmatprep.subr.mxu0 0.0
  %3636 = vmatpush2.xpose.msra.mxu0 0.0
  %3637 = vmatprep.subr.mxu0 0.0
  %3638 = vmatpush2.xpose.msra.mxu0 0.0
  %3639 = vmatprep.subr.mxu0 0.0
  %3640 = vmatpush2.xpose.msra.mxu0 0.0
  %3641 = vmatprep.subr.mxu0 0.0
  %3642 = vmatpush2.xpose.msra.mxu0 0.0
  %3643 = vmatprep.subr.mxu0 0.0
  %3644 = vmatpush2.xpose.msra.mxu0 0.0
  %3645 = vmatprep.subr.mxu0 0.0
  %3646 = vmatpush2.xpose.msra.mxu0 0.0
  %3647 = vmatprep.subr.mxu0 0.0
  %3648 = vmatpush2.xpose.msra.mxu0 0.0
  %3649 = vmatprep.subr.mxu0 0.0
  %3650 = vmatpush2.xpose.msra.mxu0 0.0
  %3651 = vmatprep.subr.mxu0 0.0
  %3652 = vmatpush2.xpose.msra.mxu0 0.0
  %3653 = vmatprep.subr.mxu0 0.0
  %3654 = vmatpush2.xpose.msra.mxu0 0.0
  %3655 = vmatprep.subr.mxu0 0.0
  %3656 = vmatpush2.xpose.msra.mxu0 0.0
  %3657 = vmatprep.subr.mxu0 0.0
  %3658 = vmatpush2.xpose.msra.mxu0 0.0
  %3659 = vmatprep.subr.mxu0 0.0
  %3660 = vmatpush2.xpose.msra.mxu0 0.0
  %3661 = vmatprep.subr.mxu0 0.0
  %3662 = vmatpush2.xpose.msra.mxu0 0.0
  %3663 = vmatprep.subr.mxu0 0.0
  %3664 = vmatpush2.xpose.msra.mxu0 0.0
  %3665 = vmatprep.subr.mxu0 0.0
  %3666 = vmatpush2.xpose.msra.mxu0 0.0
  %3667 = vmatprep.mubr.f32.mxu0 0.0
  %3668 = vmatmul.mubr.f32.gmra.mxu0 %v3595
  %v3669 = vpop.f32.mrf.mxu0
  %v3670 = vadd.f32 %v3591, %v3669
  %v3671 = vpop.f32.mrf.mxu0
  %3672 = vdwg.mxu0
  %v3673 = vsel %vm585, %v3670, -inf
  %3674 = vmax.xlane.f32.xlu0 %v3673
  %v3675 = vpop.xlane.xlu0 %3674
  %v3676 = vsub.f32 %v3670, %v3675
  %v3677 = vmul.f32 %v3676, 1.442695
  %v3678 = vpow.pop %v3677
  %v3679 = vsel %vm585, %v3678, 0.0
  %3680 = vadd.xlane.f32.xlu0 %v3679
  %v3681 = vpop.xlane.xlu0 %3680
  %v3682 = vrcp.pop %v3681
  %v3683 = vmul.f32 %v3678, %v3682
  %v3685 = vsel %vm65, %v3683, 0
  %3687 = vmatprep.subr.mxu0 0.0
  %3688 = vmatpush1.msra.mxu0 0.0
  %3689 = vmatprep.subr.mxu0 0.0
  %3690 = vmatpush1.msra.mxu0 0.0
  %3691 = vmatprep.subr.mxu0 0.0
  %3692 = vmatpush1.msra.mxu0 0.0
  %3693 = vmatprep.subr.mxu0 0.0
  %3694 = vmatpush1.msra.mxu0 0.0
  %3695 = vmatprep.subr.mxu0 0.0
  %3696 = vmatpush1.msra.mxu0 0.0
  %3697 = vmatprep.subr.mxu0 0.0
  %3698 = vmatpush1.msra.mxu0 0.0
  %3699 = vmatprep.subr.mxu0 0.0
  %3700 = vmatpush1.msra.mxu0 0.0
  %3701 = vmatprep.subr.mxu0 0.0
  %3702 = vmatpush1.msra.mxu0 0.0
  %3703 = vmatprep.subr.mxu0 0.0
  %3704 = vmatpush1.msra.mxu0 0.0
  %3705 = vmatprep.subr.mxu0 0.0
  %3706 = vmatpush1.msra.mxu0 0.0
  %3707 = vmatprep.subr.mxu0 0.0
  %3708 = vmatpush1.msra.mxu0 0.0
  %3709 = vmatprep.subr.mxu0 0.0
  %3710 = vmatpush1.msra.mxu0 0.0
  %3711 = vmatprep.subr.mxu0 0.0
  %3712 = vmatpush1.msra.mxu0 0.0
  %3713 = vmatprep.subr.mxu0 0.0
  %3714 = vmatpush1.msra.mxu0 0.0
  %3715 = vmatprep.subr.mxu0 0.0
  %3716 = vmatpush1.msra.mxu0 %v3590
  %3717 = vmatprep.subr.mxu0 0.0
  %3718 = vmatpush1.msra.mxu0 %v3589
  %3719 = vmatprep.subr.mxu0 0.0
  %3720 = vmatpush2.msra.mxu0 0.0
  %3721 = vmatprep.subr.mxu0 0.0
  %3722 = vmatpush2.msra.mxu0 0.0
  %3723 = vmatprep.subr.mxu0 0.0
  %3724 = vmatpush2.msra.mxu0 0.0
  %3725 = vmatprep.subr.mxu0 0.0
  %3726 = vmatpush2.msra.mxu0 0.0
  %3727 = vmatprep.subr.mxu0 0.0
  %3728 = vmatpush2.msra.mxu0 0.0
  %3729 = vmatprep.subr.mxu0 0.0
  %3730 = vmatpush2.msra.mxu0 0.0
  %3731 = vmatprep.subr.mxu0 0.0
  %3732 = vmatpush2.msra.mxu0 0.0
  %3733 = vmatprep.subr.mxu0 0.0
  %3734 = vmatpush2.msra.mxu0 0.0
  %3735 = vmatprep.subr.mxu0 0.0
  %3736 = vmatpush2.msra.mxu0 0.0
  %3737 = vmatprep.subr.mxu0 0.0
  %3738 = vmatpush2.msra.mxu0 0.0
  %3739 = vmatprep.subr.mxu0 0.0
  %3740 = vmatpush2.msra.mxu0 0.0
  %3741 = vmatprep.subr.mxu0 0.0
  %3742 = vmatpush2.msra.mxu0 0.0
  %3743 = vmatprep.subr.mxu0 0.0
  %3744 = vmatpush2.msra.mxu0 0.0
  %3745 = vmatprep.subr.mxu0 0.0
  %3746 = vmatpush2.msra.mxu0 0.0
  %3747 = vmatprep.subr.mxu0 0.0
  %3748 = vmatpush2.msra.mxu0 0.0
  %3749 = vmatprep.subr.mxu0 0.0
  %3750 = vmatpush2.msra.mxu0 0.0
  %3751 = vmatprep.mubr.f32.mxu0 0.0
  %3752 = vmatmul.mubr.f32.gmra.mxu0 %v3685
  %v3753 = vpop.f32.mrf.mxu0
  %v3754 = vadd.f32 0.0, %v3753
  %v3755 = vpop.f32.mrf.mxu0
  %3756 = vdwg.mxu0
  %v3757 = vsel %vm150, %v3754, %v3588
  %v3758 = vld [vmem:[%s12] sm:$0xff]
  %v3759 = vld [vmem:[%s12 + $0x8] sm:$0xff]
  %v3760 = vld [vmem:[%s12 + $0x10] sm:$0xff]
  %v3761 = vld [vmem:[%s12 + $0x18] sm:$0xff]
  %v3762 = vld [vmem:[%s12 + $0x20] sm:$0xff]
  %v3763 = vld [vmem:[%s12 + $0x28] sm:$0xff]
  %v3764 = vld [vmem:[%s12 + $0x30] sm:$0xff]
  %v3765 = vld [vmem:[%s12 + $0x38] sm:$0xff]
  %v3766 = vld [vmem:[%s12 + $0x40] sm:$0xff]
  %v3767 = vld [vmem:[%s12 + $0x48] sm:$0xff]
  %v3768 = vld [vmem:[%s12 + $0x50] sm:$0xff]
  %v3769 = vld [vmem:[%s12 + $0x58] sm:$0xff]
  %v3770 = vld [vmem:[%s12 + $0x60] sm:$0xff]
  %v3771 = vld [vmem:[%s12 + $0x68] sm:$0xff]
  %v3772 = vld [vmem:[%s12 + $0x70] sm:$0xff]
  %v3773 = vld [vmem:[%s12 + $0x78] sm:$0xff]
  %v3774 = vld [vmem:[%s13] sm:$0x1]
  %v3776 = vlaneseq
  %v3777 = vshrl.u32 %v3776, 7
  %v3778 = vsub.s32 0, %v3777
  %v3779 = vrot.slane %v3774, %v3778
  %3781 = vmatprep.subr.mxu0 0.0
  %3782 = vmatpush1.msra.mxu0 %v3773
  %3783 = vmatprep.subr.mxu0 0.0
  %3784 = vmatpush1.msra.mxu0 %v3772
  %3785 = vmatprep.subr.mxu0 0.0
  %3786 = vmatpush1.msra.mxu0 %v3771
  %3787 = vmatprep.subr.mxu0 0.0
  %3788 = vmatpush1.msra.mxu0 %v3770
  %3789 = vmatprep.subr.mxu0 0.0
  %3790 = vmatpush1.msra.mxu0 %v3769
  %3791 = vmatprep.subr.mxu0 0.0
  %3792 = vmatpush1.msra.mxu0 %v3768
  %3793 = vmatprep.subr.mxu0 0.0
  %3794 = vmatpush1.msra.mxu0 %v3767
  %3795 = vmatprep.subr.mxu0 0.0
  %3796 = vmatpush1.msra.mxu0 %v3766
  %3797 = vmatprep.subr.mxu0 0.0
  %3798 = vmatpush1.msra.mxu0 %v3765
  %3799 = vmatprep.subr.mxu0 0.0
  %3800 = vmatpush1.msra.mxu0 %v3764
  %3801 = vmatprep.subr.mxu0 0.0
  %3802 = vmatpush1.msra.mxu0 %v3763
  %3803 = vmatprep.subr.mxu0 0.0
  %3804 = vmatpush1.msra.mxu0 %v3762
  %3805 = vmatprep.subr.mxu0 0.0
  %3806 = vmatpush1.msra.mxu0 %v3761
  %3807 = vmatprep.subr.mxu0 0.0
  %3808 = vmatpush1.msra.mxu0 %v3760
  %3809 = vmatprep.subr.mxu0 0.0
  %3810 = vmatpush1.msra.mxu0 %v3759
  %3811 = vmatprep.subr.mxu0 0.0
  %3812 = vmatpush1.msra.mxu0 %v3758
  %3813 = vmatprep.subr.mxu0 0.0
  %3814 = vmatpush2.msra.mxu0 0.0
  %3815 = vmatprep.subr.mxu0 0.0
  %3816 = vmatpush2.msra.mxu0 0.0
  %3817 = vmatprep.subr.mxu0 0.0
  %3818 = vmatpush2.msra.mxu0 0.0
  %3819 = vmatprep.subr.mxu0 0.0
  %3820 = vmatpush2.msra.mxu0 0.0
  %3821 = vmatprep.subr.mxu0 0.0
  %3822 = vmatpush2.msra.mxu0 0.0
  %3823 = vmatprep.subr.mxu0 0.0
  %3824 = vmatpush2.msra.mxu0 0.0
  %3825 = vmatprep.subr.mxu0 0.0
  %3826 = vmatpush2.msra.mxu0 0.0
  %3827 = vmatprep.subr.mxu0 0.0
  %3828 = vmatpush2.msra.mxu0 0.0
  %3829 = vmatprep.subr.mxu0 0.0
  %3830 = vmatpush2.msra.mxu0 0.0
  %3831 = vmatprep.subr.mxu0 0.0
  %3832 = vmatpush2.msra.mxu0 0.0
  %3833 = vmatprep.subr.mxu0 0.0
  %3834 = vmatpush2.msra.mxu0 0.0
  %3835 = vmatprep.subr.mxu0 0.0
  %3836 = vmatpush2.msra.mxu0 0.0
  %3837 = vmatprep.subr.mxu0 0.0
  %3838 = vmatpush2.msra.mxu0 0.0
  %3839 = vmatprep.subr.mxu0 0.0
  %3840 = vmatpush2.msra.mxu0 0.0
  %3841 = vmatprep.subr.mxu0 0.0
  %3842 = vmatpush2.msra.mxu0 0.0
  %3843 = vmatprep.subr.mxu0 0.0
  %3844 = vmatpush2.msra.mxu0 0.0
  %3845 = vmatprep.mubr.f32.mxu0 0.0
  %3846 = vmatmul.mubr.f32.gmra.mxu0 %v3757
  %v3847 = vpop.f32.mrf.mxu0
  %v3848 = vadd.f32 %v3779, %v3847
  %v3849 = vpop.f32.mrf.mxu0
  %3850 = vdwg.mxu0
  %v3851 = vtanh.pop %v3848
  %v3853 = vrot.slane %v3851, 1
  %3854 = vrot.lane.b32.xlu0 %v3853, 64
  %v3855 = vpop.permute.xlu0 %3854
  %v3857 = vsel %vm150, %v3851, %v3855
  %3858 = vst [vmem:[%s14 + $0x5] sm:$0x1] %v3857
  %v3859 = vld [vmem:[#allocation2 + $0x10] sm:$0x30]
  %v3860 = vld [vmem:[#allocation2 + $0x18] sm:$0x30]
  %v3861 = vld [vmem:[%s6] sm:$0xff]
  %v3862 = vld [vmem:[%s6 + $0x8] sm:$0xff]
  %v3863 = vld [vmem:[%s6 + $0x10] sm:$0xff]
  %v3864 = vld [vmem:[%s6 + $0x18] sm:$0xff]
  %v3865 = vld [vmem:[%s6 + $0x20] sm:$0xff]
  %v3866 = vld [vmem:[%s6 + $0x28] sm:$0xff]
  %v3867 = vld [vmem:[%s6 + $0x30] sm:$0xff]
  %v3868 = vld [vmem:[%s6 + $0x38] sm:$0xff]
  %v3869 = vld [vmem:[%s6 + $0x40] sm:$0xff]
  %v3870 = vld [vmem:[%s6 + $0x48] sm:$0xff]
  %v3871 = vld [vmem:[%s6 + $0x50] sm:$0xff]
  %v3872 = vld [vmem:[%s6 + $0x58] sm:$0xff]
  %v3873 = vld [vmem:[%s6 + $0x60] sm:$0xff]
  %v3874 = vld [vmem:[%s6 + $0x68] sm:$0xff]
  %v3875 = vld [vmem:[%s6 + $0x70] sm:$0xff]
  %v3876 = vld [vmem:[%s6 + $0x78] sm:$0xff]
  %v3877 = vld [vmem:[%s7] sm:$0x3]
  %v3879 = vlaneseq
  %v3880 = vshrl.u32 %v3879, 7
  %v3881 = vsub.s32 0, %v3880
  %v3882 = vrot.slane %v3877, %v3881
  %v3883 = vlaneseq
  %v3884 = vshrl.u32 %v3883, 7
  %v3885 = vsub.s32 1, %v3884
  %v3886 = vrot.slane %v3877, %v3885
  %3889 = vmatprep.subr.mxu0 0.0
  %3890 = vmatpush1.msra.mxu0 0.0
  %3891 = vmatprep.subr.mxu0 0.0
  %3892 = vmatpush1.msra.mxu0 0.0
  %3893 = vmatprep.subr.mxu0 0.0
  %3894 = vmatpush1.msra.mxu0 0.0
  %3895 = vmatprep.subr.mxu0 0.0
  %3896 = vmatpush1.msra.mxu0 0.0
  %3897 = vmatprep.subr.mxu0 0.0
  %3898 = vmatpush1.msra.mxu0 0.0
  %3899 = vmatprep.subr.mxu0 0.0
  %3900 = vmatpush1.msra.mxu0 0.0
  %3901 = vmatprep.subr.mxu0 0.0
  %3902 = vmatpush1.msra.mxu0 0.0
  %3903 = vmatprep.subr.mxu0 0.0
  %3904 = vmatpush1.msra.mxu0 0.0
  %3905 = vmatprep.subr.mxu0 %v3876
  %3906 = vmatpush1.msra.mxu0 %v3875
  %3907 = vmatprep.subr.mxu0 %v3874
  %3908 = vmatpush1.msra.mxu0 %v3873
  %3909 = vmatprep.subr.mxu0 %v3872
  %3910 = vmatpush1.msra.mxu0 %v3871
  %3911 = vmatprep.subr.mxu0 %v3870
  %3912 = vmatpush1.msra.mxu0 %v3869
  %3913 = vmatprep.subr.mxu0 %v3868
  %3914 = vmatpush1.msra.mxu0 %v3867
  %3915 = vmatprep.subr.mxu0 %v3866
  %3916 = vmatpush1.msra.mxu0 %v3865
  %3917 = vmatprep.subr.mxu0 %v3864
  %3918 = vmatpush1.msra.mxu0 %v3863
  %3919 = vmatprep.subr.mxu0 %v3862
  %3920 = vmatpush1.msra.mxu0 %v3861
  %3921 = vmatprep.subr.mxu0 0.0
  %3922 = vmatpush2.msra.mxu0 0.0
  %3923 = vmatprep.subr.mxu0 0.0
  %3924 = vmatpush2.msra.mxu0 0.0
  %3925 = vmatprep.subr.mxu0 0.0
  %3926 = vmatpush2.msra.mxu0 0.0
  %3927 = vmatprep.subr.mxu0 0.0
  %3928 = vmatpush2.msra.mxu0 0.0
  %3929 = vmatprep.subr.mxu0 0.0
  %3930 = vmatpush2.msra.mxu0 0.0
  %3931 = vmatprep.subr.mxu0 0.0
  %3932 = vmatpush2.msra.mxu0 0.0
  %3933 = vmatprep.subr.mxu0 0.0
  %3934 = vmatpush2.msra.mxu0 0.0
  %3935 = vmatprep.subr.mxu0 0.0
  %3936 = vmatpush2.msra.mxu0 0.0
  %3937 = vmatprep.subr.mxu0 0.0
  %3938 = vmatpush2.msra.mxu0 0.0
  %3939 = vmatprep.subr.mxu0 0.0
  %3940 = vmatpush2.msra.mxu0 0.0
  %3941 = vmatprep.subr.mxu0 0.0
  %3942 = vmatpush2.msra.mxu0 0.0
  %3943 = vmatprep.subr.mxu0 0.0
  %3944 = vmatpush2.msra.mxu0 0.0
  %3945 = vmatprep.subr.mxu0 0.0
  %3946 = vmatpush2.msra.mxu0 0.0
  %3947 = vmatprep.subr.mxu0 0.0
  %3948 = vmatpush2.msra.mxu0 0.0
  %3949 = vmatprep.subr.mxu0 0.0
  %3950 = vmatpush2.msra.mxu0 0.0
  %3951 = vmatprep.subr.mxu0 0.0
  %3952 = vmatpush2.msra.mxu0 0.0
  %3953 = vmatprep.mubr.f32.mxu0 0.0
  %3954 = vmatmul.mubr.f32.gmra.mxu0 %v3399
  %v3955 = vpop.f32.mrf.mxu0
  %v3956 = vadd.f32 %v3882, %v3955
  %v3957 = vpop.f32.mrf.mxu0
  %v3958 = vadd.f32 %v3886, %v3957
  %3959 = vdwg.mxu0
  %v3961 = vrot.slane %v3956, 4
  %v3963 = vadd.f32 %v3859, %v3961
  %v3964 = vxor.u32 %v3963, 2147483648
  %v3965 = vmul.f32 %v3964, 1.442695
  %v3966 = vpow.pop %v3965
  %v3967 = vadd.f32 %v3966, 1.0
  %v3968 = vrcp.pop %v3967
  %v3969 = vmul.f32 1.0, %v3968
  %v3971 = vrot.slane %v3958, 4
  %v3973 = vmul.f32 %v3969, %v3971
  %v3974 = vadd.f32 %v3860, %v3973
  %v3975 = vtanh.pop %v3974
  %v3976 = vsub.f32 1.0, %v3969
  %3978 = vrot.lane.b32.xlu0 %v3975, 64
  %v3979 = vpop.permute.xlu0 %3978
  %v3981 = vmul.f32 %v3976, %v3979
  %v3982 = vrot.slane %v3366, 6
  %v3984 = vmul.f32 %v3969, %v3982
  %v3985 = vadd.f32 %v3981, %v3984
  %v3986 = vld [vmem:[%s8] sm:$0xff]
  %v3987 = vld [vmem:[%s8 + $0x8] sm:$0xff]
  %v3988 = vld [vmem:[%s8 + $0x10] sm:$0xff]
  %v3989 = vld [vmem:[%s8 + $0x18] sm:$0xff]
  %v3990 = vld [vmem:[%s8 + $0x20] sm:$0xff]
  %v3991 = vld [vmem:[%s8 + $0x28] sm:$0xff]
  %v3992 = vld [vmem:[%s8 + $0x30] sm:$0xff]
  %v3993 = vld [vmem:[%s8 + $0x38] sm:$0xff]
  %v3994 = vld [vmem:[%s8 + $0x40] sm:$0xff]
  %v3995 = vld [vmem:[%s8 + $0x48] sm:$0xff]
  %v3996 = vld [vmem:[%s8 + $0x50] sm:$0xff]
  %v3997 = vld [vmem:[%s8 + $0x58] sm:$0xff]
  %v3998 = vld [vmem:[%s8 + $0x60] sm:$0xff]
  %v3999 = vld [vmem:[%s8 + $0x68] sm:$0xff]
  %v4000 = vld [vmem:[%s8 + $0x70] sm:$0xff]
  %v4001 = vld [vmem:[%s8 + $0x78] sm:$0xff]
  %v4002 = vld [vmem:[%s9] sm:$0x3]
  %v4004 = vlaneseq
  %v4005 = vshrl.u32 %v4004, 7
  %v4006 = vsub.s32 0, %v4005
  %v4007 = vrot.slane %v4002, %v4006
  %v4008 = vlaneseq
  %v4009 = vshrl.u32 %v4008, 7
  %v4010 = vsub.s32 1, %v4009
  %v4011 = vrot.slane %v4002, %v4010
  %v4015 = vrot.slane %v3985, 4
  %4016 = vrot.lane.b32.xlu0 %v4015, 64
  %v4017 = vpop.permute.xlu0 %4016
  %v4018 = vsel %vm150, %v4017, 0
  %4020 = vmatprep.subr.mxu0 0.0
  %4021 = vmatpush1.msra.mxu0 0.0
  %4022 = vmatprep.subr.mxu0 0.0
  %4023 = vmatpush1.msra.mxu0 0.0
  %4024 = vmatprep.subr.mxu0 0.0
  %4025 = vmatpush1.msra.mxu0 0.0
  %4026 = vmatprep.subr.mxu0 0.0
  %4027 = vmatpush1.msra.mxu0 0.0
  %4028 = vmatprep.subr.mxu0 0.0
  %4029 = vmatpush1.msra.mxu0 0.0
  %4030 = vmatprep.subr.mxu0 0.0
  %4031 = vmatpush1.msra.mxu0 0.0
  %4032 = vmatprep.subr.mxu0 0.0
  %4033 = vmatpush1.msra.mxu0 0.0
  %4034 = vmatprep.subr.mxu0 0.0
  %4035 = vmatpush1.msra.mxu0 0.0
  %4036 = vmatprep.subr.mxu0 %v4001
  %4037 = vmatpush1.msra.mxu0 %v4000
  %4038 = vmatprep.subr.mxu0 %v3999
  %4039 = vmatpush1.msra.mxu0 %v3998
  %4040 = vmatprep.subr.mxu0 %v3997
  %4041 = vmatpush1.msra.mxu0 %v3996
  %4042 = vmatprep.subr.mxu0 %v3995
  %4043 = vmatpush1.msra.mxu0 %v3994
  %4044 = vmatprep.subr.mxu0 %v3993
  %4045 = vmatpush1.msra.mxu0 %v3992
  %4046 = vmatprep.subr.mxu0 %v3991
  %4047 = vmatpush1.msra.mxu0 %v3990
  %4048 = vmatprep.subr.mxu0 %v3989
  %4049 = vmatpush1.msra.mxu0 %v3988
  %4050 = vmatprep.subr.mxu0 %v3987
  %4051 = vmatpush1.msra.mxu0 %v3986
  %4052 = vmatprep.subr.mxu0 0.0
  %4053 = vmatpush2.msra.mxu0 0.0
  %4054 = vmatprep.subr.mxu0 0.0
  %4055 = vmatpush2.msra.mxu0 0.0
  %4056 = vmatprep.subr.mxu0 0.0
  %4057 = vmatpush2.msra.mxu0 0.0
  %4058 = vmatprep.subr.mxu0 0.0
  %4059 = vmatpush2.msra.mxu0 0.0
  %4060 = vmatprep.subr.mxu0 0.0
  %4061 = vmatpush2.msra.mxu0 0.0
  %4062 = vmatprep.subr.mxu0 0.0
  %4063 = vmatpush2.msra.mxu0 0.0
  %4064 = vmatprep.subr.mxu0 0.0
  %4065 = vmatpush2.msra.mxu0 0.0
  %4066 = vmatprep.subr.mxu0 0.0
  %4067 = vmatpush2.msra.mxu0 0.0
  %4068 = vmatprep.subr.mxu0 0.0
  %4069 = vmatpush2.msra.mxu0 0.0
  %4070 = vmatprep.subr.mxu0 0.0
  %4071 = vmatpush2.msra.mxu0 0.0
  %4072 = vmatprep.subr.mxu0 0.0
  %4073 = vmatpush2.msra.mxu0 0.0
  %4074 = vmatprep.subr.mxu0 0.0
  %4075 = vmatpush2.msra.mxu0 0.0
  %4076 = vmatprep.subr.mxu0 0.0
  %4077 = vmatpush2.msra.mxu0 0.0
  %4078 = vmatprep.subr.mxu0 0.0
  %4079 = vmatpush2.msra.mxu0 0.0
  %4080 = vmatprep.subr.mxu0 0.0
  %4081 = vmatpush2.msra.mxu0 0.0
  %4082 = vmatprep.subr.mxu0 0.0
  %4083 = vmatpush2.msra.mxu0 0.0
  %4084 = vmatprep.mubr.f32.mxu0 0.0
  %4085 = vmatmul.mubr.f32.gmra.mxu0 %v4018
  %v4086 = vpop.f32.mrf.mxu0
  %v4087 = vadd.f32 %v4007, %v4086
  %v4088 = vpop.f32.mrf.mxu0
  %v4089 = vadd.f32 %v4011, %v4088
  %4090 = vdwg.mxu0
  %v4091 = vld [vmem:[%s10] sm:$0xff]
  %v4092 = vld [vmem:[%s10 + $0x8] sm:$0xff]
  %v4093 = vld [vmem:[%s10 + $0x10] sm:$0xff]
  %v4094 = vld [vmem:[%s10 + $0x18] sm:$0xff]
  %v4095 = vld [vmem:[%s10 + $0x20] sm:$0xff]
  %v4096 = vld [vmem:[%s10 + $0x28] sm:$0xff]
  %v4097 = vld [vmem:[%s10 + $0x30] sm:$0xff]
  %v4098 = vld [vmem:[%s10 + $0x38] sm:$0xff]
  %v4099 = vld [vmem:[%s10 + $0x40] sm:$0xff]
  %v4100 = vld [vmem:[%s10 + $0x48] sm:$0xff]
  %v4101 = vld [vmem:[%s10 + $0x50] sm:$0xff]
  %v4102 = vld [vmem:[%s10 + $0x58] sm:$0xff]
  %v4103 = vld [vmem:[%s10 + $0x60] sm:$0xff]
  %v4104 = vld [vmem:[%s10 + $0x68] sm:$0xff]
  %v4105 = vld [vmem:[%s10 + $0x70] sm:$0xff]
  %v4106 = vld [vmem:[%s10 + $0x78] sm:$0xff]
  %v4107 = vld [vmem:[%s11] sm:$0x3]
  %v4109 = vlaneseq
  %v4110 = vshrl.u32 %v4109, 7
  %v4111 = vsub.s32 0, %v4110
  %v4112 = vrot.slane %v4107, %v4111
  %v4113 = vlaneseq
  %v4114 = vshrl.u32 %v4113, 7
  %v4115 = vsub.s32 1, %v4114
  %v4116 = vrot.slane %v4107, %v4115
  %4119 = vmatprep.subr.mxu0 0.0
  %4120 = vmatpush1.msra.mxu0 0.0
  %4121 = vmatprep.subr.mxu0 0.0
  %4122 = vmatpush1.msra.mxu0 0.0
  %4123 = vmatprep.subr.mxu0 0.0
  %4124 = vmatpush1.msra.mxu0 0.0
  %4125 = vmatprep.subr.mxu0 0.0
  %4126 = vmatpush1.msra.mxu0 0.0
  %4127 = vmatprep.subr.mxu0 0.0
  %4128 = vmatpush1.msra.mxu0 0.0
  %4129 = vmatprep.subr.mxu0 0.0
  %4130 = vmatpush1.msra.mxu0 0.0
  %4131 = vmatprep.subr.mxu0 0.0
  %4132 = vmatpush1.msra.mxu0 0.0
  %4133 = vmatprep.subr.mxu0 0.0
  %4134 = vmatpush1.msra.mxu0 0.0
  %4135 = vmatprep.subr.mxu0 %v4106
  %4136 = vmatpush1.msra.mxu0 %v4105
  %4137 = vmatprep.subr.mxu0 %v4104
  %4138 = vmatpush1.msra.mxu0 %v4103
  %4139 = vmatprep.subr.mxu0 %v4102
  %4140 = vmatpush1.msra.mxu0 %v4101
  %4141 = vmatprep.subr.mxu0 %v4100
  %4142 = vmatpush1.msra.mxu0 %v4099
  %4143 = vmatprep.subr.mxu0 %v4098
  %4144 = vmatpush1.msra.mxu0 %v4097
  %4145 = vmatprep.subr.mxu0 %v4096
  %4146 = vmatpush1.msra.mxu0 %v4095
  %4147 = vmatprep.subr.mxu0 %v4094
  %4148 = vmatpush1.msra.mxu0 %v4093
  %4149 = vmatprep.subr.mxu0 %v4092
  %4150 = vmatpush1.msra.mxu0 %v4091
  %4151 = vmatprep.subr.mxu0 0.0
  %4152 = vmatpush2.msra.mxu0 0.0
  %4153 = vmatprep.subr.mxu0 0.0
  %4154 = vmatpush2.msra.mxu0 0.0
  %4155 = vmatprep.subr.mxu0 0.0
  %4156 = vmatpush2.msra.mxu0 0.0
  %4157 = vmatprep.subr.mxu0 0.0
  %4158 = vmatpush2.msra.mxu0 0.0
  %4159 = vmatprep.subr.mxu0 0.0
  %4160 = vmatpush2.msra.mxu0 0.0
  %4161 = vmatprep.subr.mxu0 0.0
  %4162 = vmatpush2.msra.mxu0 0.0
  %4163 = vmatprep.subr.mxu0 0.0
  %4164 = vmatpush2.msra.mxu0 0.0
  %4165 = vmatprep.subr.mxu0 0.0
  %4166 = vmatpush2.msra.mxu0 0.0
  %4167 = vmatprep.subr.mxu0 0.0
  %4168 = vmatpush2.msra.mxu0 0.0
  %4169 = vmatprep.subr.mxu0 0.0
  %4170 = vmatpush2.msra.mxu0 0.0
  %4171 = vmatprep.subr.mxu0 0.0
  %4172 = vmatpush2.msra.mxu0 0.0
  %4173 = vmatprep.subr.mxu0 0.0
  %4174 = vmatpush2.msra.mxu0 0.0
  %4175 = vmatprep.subr.mxu0 0.0
  %4176 = vmatpush2.msra.mxu0 0.0
  %4177 = vmatprep.subr.mxu0 0.0
  %4178 = vmatpush2.msra.mxu0 0.0
  %4179 = vmatprep.subr.mxu0 0.0
  %4180 = vmatpush2.msra.mxu0 0.0
  %4181 = vmatprep.subr.mxu0 0.0
  %4182 = vmatpush2.msra.mxu0 0.0
  %4183 = vmatprep.mubr.f32.mxu0 0.0
  %4184 = vmatmul.mubr.f32.gmra.mxu0 %v3595
  %v4185 = vpop.f32.mrf.mxu0
  %v4186 = vadd.f32 %v4112, %v4185
  %v4187 = vpop.f32.mrf.mxu0
  %v4188 = vadd.f32 %v4116, %v4187
  %4189 = vdwg.mxu0
  %v4190 = vadd.f32 %v4087, %v4186
  %v4191 = vxor.u32 %v4190, 2147483648
  %v4192 = vmul.f32 %v4191, 1.442695
  %v4193 = vpow.pop %v4192
  %v4194 = vadd.f32 %v4193, 1.0
  %v4195 = vrcp.pop %v4194
  %v4196 = vmul.f32 1.0, %v4195
  %v4197 = vmul.f32 %v4196, %v4188
  %v4198 = vadd.f32 %v4089, %v4197
  %v4199 = vtanh.pop %v4198
  %v4200 = vsub.f32 1.0, %v4196
  %4202 = vrot.lane.b32.xlu0 %v4199, 64
  %v4203 = vpop.permute.xlu0 %4202
  %v4205 = vmul.f32 %v4200, %v4203
  %v4206 = vmul.f32 %v4196, %v3588
  %v4207 = vadd.f32 %v4205, %v4206
  %v4208 = vld [vmem:[%s1] sm:$0xff]
  %v4209 = vld [vmem:[%s1 + $0x8] sm:$0xff]
  %v4210 = vld [vmem:[%s2] sm:$0x3]
  %4212 = vrot.lane.b32.xlu0 %v4207, 64
  %v4213 = vpop.permute.xlu0 %4212
  %v4214 = vsel %vm150, %v4213, 0
  %v4217 = vsel %vm150, %v4208, 0
  %v4220 = vsel %vm150, %v4209, 0
  %4222 = vmatprep.subr.mxu0 0.0
  %4223 = vmatpush1.xpose.msra.mxu0 0.0
  %4224 = vmatprep.subr.mxu0 0.0
  %4225 = vmatpush1.xpose.msra.mxu0 0.0
  %4226 = vmatprep.subr.mxu0 0.0
  %4227 = vmatpush1.xpose.msra.mxu0 0.0
  %4228 = vmatprep.subr.mxu0 0.0
  %4229 = vmatpush1.xpose.msra.mxu0 0.0
  %4230 = vmatprep.subr.mxu0 0.0
  %4231 = vmatpush1.xpose.msra.mxu0 0.0
  %4232 = vmatprep.subr.mxu0 0.0
  %4233 = vmatpush1.xpose.msra.mxu0 0.0
  %4234 = vmatprep.subr.mxu0 0.0
  %4235 = vmatpush1.xpose.msra.mxu0 0.0
  %4236 = vmatprep.subr.mxu0 0.0
  %4237 = vmatpush1.xpose.msra.mxu0 0.0
  %4238 = vmatprep.subr.mxu0 0.0
  %4239 = vmatpush1.xpose.msra.mxu0 0.0
  %4240 = vmatprep.subr.mxu0 0.0
  %4241 = vmatpush1.xpose.msra.mxu0 0.0
  %4242 = vmatprep.subr.mxu0 0.0
  %4243 = vmatpush1.xpose.msra.mxu0 0.0
  %4244 = vmatprep.subr.mxu0 0.0
  %4245 = vmatpush1.xpose.msra.mxu0 0.0
  %4246 = vmatprep.subr.mxu0 0.0
  %4247 = vmatpush1.xpose.msra.mxu0 0.0
  %4248 = vmatprep.subr.mxu0 0.0
  %4249 = vmatpush1.xpose.msra.mxu0 0.0
  %4250 = vmatprep.subr.mxu0 0.0
  %4251 = vmatpush1.xpose.msra.mxu0 %v4220
  %4252 = vmatprep.subr.mxu0 0.0
  %4253 = vmatpush1.xpose.msra.mxu0 %v4217
  %4254 = vmatprep.subr.mxu0 0.0
  %4255 = vmatpush2.xpose.msra.mxu0 0.0
  %4256 = vmatprep.subr.mxu0 0.0
  %4257 = vmatpush2.xpose.msra.mxu0 0.0
  %4258 = vmatprep.subr.mxu0 0.0
  %4259 = vmatpush2.xpose.msra.mxu0 0.0
  %4260 = vmatprep.subr.mxu0 0.0
  %4261 = vmatpush2.xpose.msra.mxu0 0.0
  %4262 = vmatprep.subr.mxu0 0.0
  %4263 = vmatpush2.xpose.msra.mxu0 0.0
  %4264 = vmatprep.subr.mxu0 0.0
  %4265 = vmatpush2.xpose.msra.mxu0 0.0
  %4266 = vmatprep.subr.mxu0 0.0
  %4267 = vmatpush2.xpose.msra.mxu0 0.0
  %4268 = vmatprep.subr.mxu0 0.0
  %4269 = vmatpush2.xpose.msra.mxu0 0.0
  %4270 = vmatprep.subr.mxu0 0.0
  %4271 = vmatpush2.xpose.msra.mxu0 0.0
  %4272 = vmatprep.subr.mxu0 0.0
  %4273 = vmatpush2.xpose.msra.mxu0 0.0
  %4274 = vmatprep.subr.mxu0 0.0
  %4275 = vmatpush2.xpose.msra.mxu0 0.0
  %4276 = vmatprep.subr.mxu0 0.0
  %4277 = vmatpush2.xpose.msra.mxu0 0.0
  %4278 = vmatprep.subr.mxu0 0.0
  %4279 = vmatpush2.xpose.msra.mxu0 0.0
  %4280 = vmatprep.subr.mxu0 0.0
  %4281 = vmatpush2.xpose.msra.mxu0 0.0
  %4282 = vmatprep.subr.mxu0 0.0
  %4283 = vmatpush2.xpose.msra.mxu0 0.0
  %4284 = vmatprep.subr.mxu0 0.0
  %4285 = vmatpush2.xpose.msra.mxu0 0.0
  %4286 = vmatprep.mubr.f32.mxu0 0.0
  %4287 = vmatmul.mubr.f32.gmra.mxu0 %v4214
  %v4288 = vpop.f32.mrf.mxu0
  %v4289 = vadd.f32 %v4210, %v4288
  %v4290 = vpop.f32.mrf.mxu0
  %4291 = vdwg.mxu0
  %v4292 = vsel %vm585, %v4289, -inf
  %4293 = vmax.xlane.f32.xlu0 %v4292
  %v4294 = vpop.xlane.xlu0 %4293
  %v4295 = vsub.f32 %v4289, %v4294
  %v4296 = vmul.f32 %v4295, 1.442695
  %v4297 = vpow.pop %v4296
  %v4298 = vsel %vm585, %v4297, 0.0
  %4299 = vadd.xlane.f32.xlu0 %v4298
  %v4300 = vpop.xlane.xlu0 %4299
  %v4301 = vrcp.pop %v4300
  %v4302 = vmul.f32 %v4297, %v4301
  %v4304 = vsel %vm65, %v4302, 0
  %4306 = vmatprep.subr.mxu0 0.0
  %4307 = vmatpush1.msra.mxu0 0.0
  %4308 = vmatprep.subr.mxu0 0.0
  %4309 = vmatpush1.msra.mxu0 0.0
  %4310 = vmatprep.subr.mxu0 0.0
  %4311 = vmatpush1.msra.mxu0 0.0
  %4312 = vmatprep.subr.mxu0 0.0
  %4313 = vmatpush1.msra.mxu0 0.0
  %4314 = vmatprep.subr.mxu0 0.0
  %4315 = vmatpush1.msra.mxu0 0.0
  %4316 = vmatprep.subr.mxu0 0.0
  %4317 = vmatpush1.msra.mxu0 0.0
  %4318 = vmatprep.subr.mxu0 0.0
  %4319 = vmatpush1.msra.mxu0 0.0
  %4320 = vmatprep.subr.mxu0 0.0
  %4321 = vmatpush1.msra.mxu0 0.0
  %4322 = vmatprep.subr.mxu0 0.0
  %4323 = vmatpush1.msra.mxu0 0.0
  %4324 = vmatprep.subr.mxu0 0.0
  %4325 = vmatpush1.msra.mxu0 0.0
  %4326 = vmatprep.subr.mxu0 0.0
  %4327 = vmatpush1.msra.mxu0 0.0
  %4328 = vmatprep.subr.mxu0 0.0
  %4329 = vmatpush1.msra.mxu0 0.0
  %4330 = vmatprep.subr.mxu0 0.0
  %4331 = vmatpush1.msra.mxu0 0.0
  %4332 = vmatprep.subr.mxu0 0.0
  %4333 = vmatpush1.msra.mxu0 0.0
  %4334 = vmatprep.subr.mxu0 0.0
  %4335 = vmatpush1.msra.mxu0 %v4209
  %4336 = vmatprep.subr.mxu0 0.0
  %4337 = vmatpush1.msra.mxu0 %v4208
  %4338 = vmatprep.subr.mxu0 0.0
  %4339 = vmatpush2.msra.mxu0 0.0
  %4340 = vmatprep.subr.mxu0 0.0
  %4341 = vmatpush2.msra.mxu0 0.0
  %4342 = vmatprep.subr.mxu0 0.0
  %4343 = vmatpush2.msra.mxu0 0.0
  %4344 = vmatprep.subr.mxu0 0.0
  %4345 = vmatpush2.msra.mxu0 0.0
  %4346 = vmatprep.subr.mxu0 0.0
  %4347 = vmatpush2.msra.mxu0 0.0
  %4348 = vmatprep.subr.mxu0 0.0
  %4349 = vmatpush2.msra.mxu0 0.0
  %4350 = vmatprep.subr.mxu0 0.0
  %4351 = vmatpush2.msra.mxu0 0.0
  %4352 = vmatprep.subr.mxu0 0.0
  %4353 = vmatpush2.msra.mxu0 0.0
  %4354 = vmatprep.subr.mxu0 0.0
  %4355 = vmatpush2.msra.mxu0 0.0
  %4356 = vmatprep.subr.mxu0 0.0
  %4357 = vmatpush2.msra.mxu0 0.0
  %4358 = vmatprep.subr.mxu0 0.0
  %4359 = vmatpush2.msra.mxu0 0.0
  %4360 = vmatprep.subr.mxu0 0.0
  %4361 = vmatpush2.msra.mxu0 0.0
  %4362 = vmatprep.subr.mxu0 0.0
  %4363 = vmatpush2.msra.mxu0 0.0
  %4364 = vmatprep.subr.mxu0 0.0
  %4365 = vmatpush2.msra.mxu0 0.0
  %4366 = vmatprep.subr.mxu0 0.0
  %4367 = vmatpush2.msra.mxu0 0.0
  %4368 = vmatprep.subr.mxu0 0.0
  %4369 = vmatpush2.msra.mxu0 0.0
  %4370 = vmatprep.mubr.f32.mxu0 0.0
  %4371 = vmatmul.mubr.f32.gmra.mxu0 %v4304
  %v4372 = vpop.f32.mrf.mxu0
  %v4373 = vadd.f32 0.0, %v4372
  %v4374 = vpop.f32.mrf.mxu0
  %4375 = vdwg.mxu0
  %v4376 = vsel %vm150, %v4373, %v4207
  %v4377 = vld [vmem:[%s12] sm:$0xff]
  %v4378 = vld [vmem:[%s12 + $0x8] sm:$0xff]
  %v4379 = vld [vmem:[%s12 + $0x10] sm:$0xff]
  %v4380 = vld [vmem:[%s12 + $0x18] sm:$0xff]
  %v4381 = vld [vmem:[%s12 + $0x20] sm:$0xff]
  %v4382 = vld [vmem:[%s12 + $0x28] sm:$0xff]
  %v4383 = vld [vmem:[%s12 + $0x30] sm:$0xff]
  %v4384 = vld [vmem:[%s12 + $0x38] sm:$0xff]
  %v4385 = vld [vmem:[%s12 + $0x40] sm:$0xff]
  %v4386 = vld [vmem:[%s12 + $0x48] sm:$0xff]
  %v4387 = vld [vmem:[%s12 + $0x50] sm:$0xff]
  %v4388 = vld [vmem:[%s12 + $0x58] sm:$0xff]
  %v4389 = vld [vmem:[%s12 + $0x60] sm:$0xff]
  %v4390 = vld [vmem:[%s12 + $0x68] sm:$0xff]
  %v4391 = vld [vmem:[%s12 + $0x70] sm:$0xff]
  %v4392 = vld [vmem:[%s12 + $0x78] sm:$0xff]
  %v4393 = vld [vmem:[%s13] sm:$0x1]
  %v4395 = vlaneseq
  %v4396 = vshrl.u32 %v4395, 7
  %v4397 = vsub.s32 0, %v4396
  %v4398 = vrot.slane %v4393, %v4397
  %4400 = vmatprep.subr.mxu0 0.0
  %4401 = vmatpush1.msra.mxu0 %v4392
  %4402 = vmatprep.subr.mxu0 0.0
  %4403 = vmatpush1.msra.mxu0 %v4391
  %4404 = vmatprep.subr.mxu0 0.0
  %4405 = vmatpush1.msra.mxu0 %v4390
  %4406 = vmatprep.subr.mxu0 0.0
  %4407 = vmatpush1.msra.mxu0 %v4389
  %4408 = vmatprep.subr.mxu0 0.0
  %4409 = vmatpush1.msra.mxu0 %v4388
  %4410 = vmatprep.subr.mxu0 0.0
  %4411 = vmatpush1.msra.mxu0 %v4387
  %4412 = vmatprep.subr.mxu0 0.0
  %4413 = vmatpush1.msra.mxu0 %v4386
  %4414 = vmatprep.subr.mxu0 0.0
  %4415 = vmatpush1.msra.mxu0 %v4385
  %4416 = vmatprep.subr.mxu0 0.0
  %4417 = vmatpush1.msra.mxu0 %v4384
  %4418 = vmatprep.subr.mxu0 0.0
  %4419 = vmatpush1.msra.mxu0 %v4383
  %4420 = vmatprep.subr.mxu0 0.0
  %4421 = vmatpush1.msra.mxu0 %v4382
  %4422 = vmatprep.subr.mxu0 0.0
  %4423 = vmatpush1.msra.mxu0 %v4381
  %4424 = vmatprep.subr.mxu0 0.0
  %4425 = vmatpush1.msra.mxu0 %v4380
  %4426 = vmatprep.subr.mxu0 0.0
  %4427 = vmatpush1.msra.mxu0 %v4379
  %4428 = vmatprep.subr.mxu0 0.0
  %4429 = vmatpush1.msra.mxu0 %v4378
  %4430 = vmatprep.subr.mxu0 0.0
  %4431 = vmatpush1.msra.mxu0 %v4377
  %4432 = vmatprep.subr.mxu0 0.0
  %4433 = vmatpush2.msra.mxu0 0.0
  %4434 = vmatprep.subr.mxu0 0.0
  %4435 = vmatpush2.msra.mxu0 0.0
  %4436 = vmatprep.subr.mxu0 0.0
  %4437 = vmatpush2.msra.mxu0 0.0
  %4438 = vmatprep.subr.mxu0 0.0
  %4439 = vmatpush2.msra.mxu0 0.0
  %4440 = vmatprep.subr.mxu0 0.0
  %4441 = vmatpush2.msra.mxu0 0.0
  %4442 = vmatprep.subr.mxu0 0.0
  %4443 = vmatpush2.msra.mxu0 0.0
  %4444 = vmatprep.subr.mxu0 0.0
  %4445 = vmatpush2.msra.mxu0 0.0
  %4446 = vmatprep.subr.mxu0 0.0
  %4447 = vmatpush2.msra.mxu0 0.0
  %4448 = vmatprep.subr.mxu0 0.0
  %4449 = vmatpush2.msra.mxu0 0.0
  %4450 = vmatprep.subr.mxu0 0.0
  %4451 = vmatpush2.msra.mxu0 0.0
  %4452 = vmatprep.subr.mxu0 0.0
  %4453 = vmatpush2.msra.mxu0 0.0
  %4454 = vmatprep.subr.mxu0 0.0
  %4455 = vmatpush2.msra.mxu0 0.0
  %4456 = vmatprep.subr.mxu0 0.0
  %4457 = vmatpush2.msra.mxu0 0.0
  %4458 = vmatprep.subr.mxu0 0.0
  %4459 = vmatpush2.msra.mxu0 0.0
  %4460 = vmatprep.subr.mxu0 0.0
  %4461 = vmatpush2.msra.mxu0 0.0
  %4462 = vmatprep.subr.mxu0 0.0
  %4463 = vmatpush2.msra.mxu0 0.0
  %4464 = vmatprep.mubr.f32.mxu0 0.0
  %4465 = vmatmul.mubr.f32.gmra.mxu0 %v4376
  %v4466 = vpop.f32.mrf.mxu0
  %v4467 = vadd.f32 %v4398, %v4466
  %v4468 = vpop.f32.mrf.mxu0
  %4469 = vdwg.mxu0
  %v4470 = vtanh.pop %v4467
  %v4472 = vrot.slane %v4470, 1
  %4473 = vrot.lane.b32.xlu0 %v4472, 64
  %v4474 = vpop.permute.xlu0 %4473
  %v4476 = vsel %vm150, %v4470, %v4474
  %4477 = vst [vmem:[%s14 + $0x6] sm:$0x1] %v4476
  %v4478 = vld [vmem:[#allocation2 + $0x10] sm:$0xc0]
  %v4479 = vld [vmem:[#allocation2 + $0x18] sm:$0xc0]
  %v4480 = vld [vmem:[%s6] sm:$0xff]
  %v4481 = vld [vmem:[%s6 + $0x8] sm:$0xff]
  %v4482 = vld [vmem:[%s6 + $0x10] sm:$0xff]
  %v4483 = vld [vmem:[%s6 + $0x18] sm:$0xff]
  %v4484 = vld [vmem:[%s6 + $0x20] sm:$0xff]
  %v4485 = vld [vmem:[%s6 + $0x28] sm:$0xff]
  %v4486 = vld [vmem:[%s6 + $0x30] sm:$0xff]
  %v4487 = vld [vmem:[%s6 + $0x38] sm:$0xff]
  %v4488 = vld [vmem:[%s6 + $0x40] sm:$0xff]
  %v4489 = vld [vmem:[%s6 + $0x48] sm:$0xff]
  %v4490 = vld [vmem:[%s6 + $0x50] sm:$0xff]
  %v4491 = vld [vmem:[%s6 + $0x58] sm:$0xff]
  %v4492 = vld [vmem:[%s6 + $0x60] sm:$0xff]
  %v4493 = vld [vmem:[%s6 + $0x68] sm:$0xff]
  %v4494 = vld [vmem:[%s6 + $0x70] sm:$0xff]
  %v4495 = vld [vmem:[%s6 + $0x78] sm:$0xff]
  %v4496 = vld [vmem:[%s7] sm:$0x3]
  %v4498 = vlaneseq
  %v4499 = vshrl.u32 %v4498, 7
  %v4500 = vsub.s32 0, %v4499
  %v4501 = vrot.slane %v4496, %v4500
  %v4502 = vlaneseq
  %v4503 = vshrl.u32 %v4502, 7
  %v4504 = vsub.s32 1, %v4503
  %v4505 = vrot.slane %v4496, %v4504
  %4508 = vmatprep.subr.mxu0 0.0
  %4509 = vmatpush1.msra.mxu0 0.0
  %4510 = vmatprep.subr.mxu0 0.0
  %4511 = vmatpush1.msra.mxu0 0.0
  %4512 = vmatprep.subr.mxu0 0.0
  %4513 = vmatpush1.msra.mxu0 0.0
  %4514 = vmatprep.subr.mxu0 0.0
  %4515 = vmatpush1.msra.mxu0 0.0
  %4516 = vmatprep.subr.mxu0 0.0
  %4517 = vmatpush1.msra.mxu0 0.0
  %4518 = vmatprep.subr.mxu0 0.0
  %4519 = vmatpush1.msra.mxu0 0.0
  %4520 = vmatprep.subr.mxu0 0.0
  %4521 = vmatpush1.msra.mxu0 0.0
  %4522 = vmatprep.subr.mxu0 0.0
  %4523 = vmatpush1.msra.mxu0 0.0
  %4524 = vmatprep.subr.mxu0 %v4495
  %4525 = vmatpush1.msra.mxu0 %v4494
  %4526 = vmatprep.subr.mxu0 %v4493
  %4527 = vmatpush1.msra.mxu0 %v4492
  %4528 = vmatprep.subr.mxu0 %v4491
  %4529 = vmatpush1.msra.mxu0 %v4490
  %4530 = vmatprep.subr.mxu0 %v4489
  %4531 = vmatpush1.msra.mxu0 %v4488
  %4532 = vmatprep.subr.mxu0 %v4487
  %4533 = vmatpush1.msra.mxu0 %v4486
  %4534 = vmatprep.subr.mxu0 %v4485
  %4535 = vmatpush1.msra.mxu0 %v4484
  %4536 = vmatprep.subr.mxu0 %v4483
  %4537 = vmatpush1.msra.mxu0 %v4482
  %4538 = vmatprep.subr.mxu0 %v4481
  %4539 = vmatpush1.msra.mxu0 %v4480
  %4540 = vmatprep.subr.mxu0 0.0
  %4541 = vmatpush2.msra.mxu0 0.0
  %4542 = vmatprep.subr.mxu0 0.0
  %4543 = vmatpush2.msra.mxu0 0.0
  %4544 = vmatprep.subr.mxu0 0.0
  %4545 = vmatpush2.msra.mxu0 0.0
  %4546 = vmatprep.subr.mxu0 0.0
  %4547 = vmatpush2.msra.mxu0 0.0
  %4548 = vmatprep.subr.mxu0 0.0
  %4549 = vmatpush2.msra.mxu0 0.0
  %4550 = vmatprep.subr.mxu0 0.0
  %4551 = vmatpush2.msra.mxu0 0.0
  %4552 = vmatprep.subr.mxu0 0.0
  %4553 = vmatpush2.msra.mxu0 0.0
  %4554 = vmatprep.subr.mxu0 0.0
  %4555 = vmatpush2.msra.mxu0 0.0
  %4556 = vmatprep.subr.mxu0 0.0
  %4557 = vmatpush2.msra.mxu0 0.0
  %4558 = vmatprep.subr.mxu0 0.0
  %4559 = vmatpush2.msra.mxu0 0.0
  %4560 = vmatprep.subr.mxu0 0.0
  %4561 = vmatpush2.msra.mxu0 0.0
  %4562 = vmatprep.subr.mxu0 0.0
  %4563 = vmatpush2.msra.mxu0 0.0
  %4564 = vmatprep.subr.mxu0 0.0
  %4565 = vmatpush2.msra.mxu0 0.0
  %4566 = vmatprep.subr.mxu0 0.0
  %4567 = vmatpush2.msra.mxu0 0.0
  %4568 = vmatprep.subr.mxu0 0.0
  %4569 = vmatpush2.msra.mxu0 0.0
  %4570 = vmatprep.subr.mxu0 0.0
  %4571 = vmatpush2.msra.mxu0 0.0
  %4572 = vmatprep.mubr.f32.mxu0 0.0
  %4573 = vmatmul.mubr.f32.gmra.mxu0 %v4018
  %v4574 = vpop.f32.mrf.mxu0
  %v4575 = vadd.f32 %v4501, %v4574
  %v4576 = vpop.f32.mrf.mxu0
  %v4577 = vadd.f32 %v4505, %v4576
  %4578 = vdwg.mxu0
  %v4580 = vrot.slane %v4575, 2
  %v4582 = vadd.f32 %v4478, %v4580
  %v4583 = vxor.u32 %v4582, 2147483648
  %v4584 = vmul.f32 %v4583, 1.442695
  %v4585 = vpow.pop %v4584
  %v4586 = vadd.f32 %v4585, 1.0
  %v4587 = vrcp.pop %v4586
  %v4588 = vmul.f32 1.0, %v4587
  %v4590 = vrot.slane %v4577, 2
  %v4592 = vmul.f32 %v4588, %v4590
  %v4593 = vadd.f32 %v4479, %v4592
  %v4594 = vtanh.pop %v4593
  %v4595 = vsub.f32 1.0, %v4588
  %4597 = vrot.lane.b32.xlu0 %v4594, 64
  %v4598 = vpop.permute.xlu0 %4597
  %v4600 = vmul.f32 %v4595, %v4598
  %v4601 = vrot.slane %v3985, 6
  %v4603 = vmul.f32 %v4588, %v4601
  %v4604 = vadd.f32 %v4600, %v4603
  %v4605 = vld [vmem:[%s8] sm:$0xff]
  %v4606 = vld [vmem:[%s8 + $0x8] sm:$0xff]
  %v4607 = vld [vmem:[%s8 + $0x10] sm:$0xff]
  %v4608 = vld [vmem:[%s8 + $0x18] sm:$0xff]
  %v4609 = vld [vmem:[%s8 + $0x20] sm:$0xff]
  %v4610 = vld [vmem:[%s8 + $0x28] sm:$0xff]
  %v4611 = vld [vmem:[%s8 + $0x30] sm:$0xff]
  %v4612 = vld [vmem:[%s8 + $0x38] sm:$0xff]
  %v4613 = vld [vmem:[%s8 + $0x40] sm:$0xff]
  %v4614 = vld [vmem:[%s8 + $0x48] sm:$0xff]
  %v4615 = vld [vmem:[%s8 + $0x50] sm:$0xff]
  %v4616 = vld [vmem:[%s8 + $0x58] sm:$0xff]
  %v4617 = vld [vmem:[%s8 + $0x60] sm:$0xff]
  %v4618 = vld [vmem:[%s8 + $0x68] sm:$0xff]
  %v4619 = vld [vmem:[%s8 + $0x70] sm:$0xff]
  %v4620 = vld [vmem:[%s8 + $0x78] sm:$0xff]
  %v4621 = vld [vmem:[%s9] sm:$0x3]
  %v4623 = vlaneseq
  %v4624 = vshrl.u32 %v4623, 7
  %v4625 = vsub.s32 0, %v4624
  %v4626 = vrot.slane %v4621, %v4625
  %v4627 = vlaneseq
  %v4628 = vshrl.u32 %v4627, 7
  %v4629 = vsub.s32 1, %v4628
  %v4630 = vrot.slane %v4621, %v4629
  %v4634 = vrot.slane %v4604, 6
  %4635 = vrot.lane.b32.xlu0 %v4634, 64
  %v4636 = vpop.permute.xlu0 %4635
  %v4637 = vsel %vm150, %v4636, 0
  %4639 = vmatprep.subr.mxu0 0.0
  %4640 = vmatpush1.msra.mxu0 0.0
  %4641 = vmatprep.subr.mxu0 0.0
  %4642 = vmatpush1.msra.mxu0 0.0
  %4643 = vmatprep.subr.mxu0 0.0
  %4644 = vmatpush1.msra.mxu0 0.0
  %4645 = vmatprep.subr.mxu0 0.0
  %4646 = vmatpush1.msra.mxu0 0.0
  %4647 = vmatprep.subr.mxu0 0.0
  %4648 = vmatpush1.msra.mxu0 0.0
  %4649 = vmatprep.subr.mxu0 0.0
  %4650 = vmatpush1.msra.mxu0 0.0
  %4651 = vmatprep.subr.mxu0 0.0
  %4652 = vmatpush1.msra.mxu0 0.0
  %4653 = vmatprep.subr.mxu0 0.0
  %4654 = vmatpush1.msra.mxu0 0.0
  %4655 = vmatprep.subr.mxu0 %v4620
  %4656 = vmatpush1.msra.mxu0 %v4619
  %4657 = vmatprep.subr.mxu0 %v4618
  %4658 = vmatpush1.msra.mxu0 %v4617
  %4659 = vmatprep.subr.mxu0 %v4616
  %4660 = vmatpush1.msra.mxu0 %v4615
  %4661 = vmatprep.subr.mxu0 %v4614
  %4662 = vmatpush1.msra.mxu0 %v4613
  %4663 = vmatprep.subr.mxu0 %v4612
  %4664 = vmatpush1.msra.mxu0 %v4611
  %4665 = vmatprep.subr.mxu0 %v4610
  %4666 = vmatpush1.msra.mxu0 %v4609
  %4667 = vmatprep.subr.mxu0 %v4608
  %4668 = vmatpush1.msra.mxu0 %v4607
  %4669 = vmatprep.subr.mxu0 %v4606
  %4670 = vmatpush1.msra.mxu0 %v4605
  %4671 = vmatprep.subr.mxu0 0.0
  %4672 = vmatpush2.msra.mxu0 0.0
  %4673 = vmatprep.subr.mxu0 0.0
  %4674 = vmatpush2.msra.mxu0 0.0
  %4675 = vmatprep.subr.mxu0 0.0
  %4676 = vmatpush2.msra.mxu0 0.0
  %4677 = vmatprep.subr.mxu0 0.0
  %4678 = vmatpush2.msra.mxu0 0.0
  %4679 = vmatprep.subr.mxu0 0.0
  %4680 = vmatpush2.msra.mxu0 0.0
  %4681 = vmatprep.subr.mxu0 0.0
  %4682 = vmatpush2.msra.mxu0 0.0
  %4683 = vmatprep.subr.mxu0 0.0
  %4684 = vmatpush2.msra.mxu0 0.0
  %4685 = vmatprep.subr.mxu0 0.0
  %4686 = vmatpush2.msra.mxu0 0.0
  %4687 = vmatprep.subr.mxu0 0.0
  %4688 = vmatpush2.msra.mxu0 0.0
  %4689 = vmatprep.subr.mxu0 0.0
  %4690 = vmatpush2.msra.mxu0 0.0
  %4691 = vmatprep.subr.mxu0 0.0
  %4692 = vmatpush2.msra.mxu0 0.0
  %4693 = vmatprep.subr.mxu0 0.0
  %4694 = vmatpush2.msra.mxu0 0.0
  %4695 = vmatprep.subr.mxu0 0.0
  %4696 = vmatpush2.msra.mxu0 0.0
  %4697 = vmatprep.subr.mxu0 0.0
  %4698 = vmatpush2.msra.mxu0 0.0
  %4699 = vmatprep.subr.mxu0 0.0
  %4700 = vmatpush2.msra.mxu0 0.0
  %4701 = vmatprep.subr.mxu0 0.0
  %4702 = vmatpush2.msra.mxu0 0.0
  %4703 = vmatprep.mubr.f32.mxu0 0.0
  %4704 = vmatmul.mubr.f32.gmra.mxu0 %v4637
  %v4705 = vpop.f32.mrf.mxu0
  %v4706 = vadd.f32 %v4626, %v4705
  %v4707 = vpop.f32.mrf.mxu0
  %v4708 = vadd.f32 %v4630, %v4707
  %4709 = vdwg.mxu0
  %v4710 = vld [vmem:[%s10] sm:$0xff]
  %v4711 = vld [vmem:[%s10 + $0x8] sm:$0xff]
  %v4712 = vld [vmem:[%s10 + $0x10] sm:$0xff]
  %v4713 = vld [vmem:[%s10 + $0x18] sm:$0xff]
  %v4714 = vld [vmem:[%s10 + $0x20] sm:$0xff]
  %v4715 = vld [vmem:[%s10 + $0x28] sm:$0xff]
  %v4716 = vld [vmem:[%s10 + $0x30] sm:$0xff]
  %v4717 = vld [vmem:[%s10 + $0x38] sm:$0xff]
  %v4718 = vld [vmem:[%s10 + $0x40] sm:$0xff]
  %v4719 = vld [vmem:[%s10 + $0x48] sm:$0xff]
  %v4720 = vld [vmem:[%s10 + $0x50] sm:$0xff]
  %v4721 = vld [vmem:[%s10 + $0x58] sm:$0xff]
  %v4722 = vld [vmem:[%s10 + $0x60] sm:$0xff]
  %v4723 = vld [vmem:[%s10 + $0x68] sm:$0xff]
  %v4724 = vld [vmem:[%s10 + $0x70] sm:$0xff]
  %v4725 = vld [vmem:[%s10 + $0x78] sm:$0xff]
  %v4726 = vld [vmem:[%s11] sm:$0x3]
  %v4728 = vlaneseq
  %v4729 = vshrl.u32 %v4728, 7
  %v4730 = vsub.s32 0, %v4729
  %v4731 = vrot.slane %v4726, %v4730
  %v4732 = vlaneseq
  %v4733 = vshrl.u32 %v4732, 7
  %v4734 = vsub.s32 1, %v4733
  %v4735 = vrot.slane %v4726, %v4734
  %4738 = vmatprep.subr.mxu0 0.0
  %4739 = vmatpush1.msra.mxu0 0.0
  %4740 = vmatprep.subr.mxu0 0.0
  %4741 = vmatpush1.msra.mxu0 0.0
  %4742 = vmatprep.subr.mxu0 0.0
  %4743 = vmatpush1.msra.mxu0 0.0
  %4744 = vmatprep.subr.mxu0 0.0
  %4745 = vmatpush1.msra.mxu0 0.0
  %4746 = vmatprep.subr.mxu0 0.0
  %4747 = vmatpush1.msra.mxu0 0.0
  %4748 = vmatprep.subr.mxu0 0.0
  %4749 = vmatpush1.msra.mxu0 0.0
  %4750 = vmatprep.subr.mxu0 0.0
  %4751 = vmatpush1.msra.mxu0 0.0
  %4752 = vmatprep.subr.mxu0 0.0
  %4753 = vmatpush1.msra.mxu0 0.0
  %4754 = vmatprep.subr.mxu0 %v4725
  %4755 = vmatpush1.msra.mxu0 %v4724
  %4756 = vmatprep.subr.mxu0 %v4723
  %4757 = vmatpush1.msra.mxu0 %v4722
  %4758 = vmatprep.subr.mxu0 %v4721
  %4759 = vmatpush1.msra.mxu0 %v4720
  %4760 = vmatprep.subr.mxu0 %v4719
  %4761 = vmatpush1.msra.mxu0 %v4718
  %4762 = vmatprep.subr.mxu0 %v4717
  %4763 = vmatpush1.msra.mxu0 %v4716
  %4764 = vmatprep.subr.mxu0 %v4715
  %4765 = vmatpush1.msra.mxu0 %v4714
  %4766 = vmatprep.subr.mxu0 %v4713
  %4767 = vmatpush1.msra.mxu0 %v4712
  %4768 = vmatprep.subr.mxu0 %v4711
  %4769 = vmatpush1.msra.mxu0 %v4710
  %4770 = vmatprep.subr.mxu0 0.0
  %4771 = vmatpush2.msra.mxu0 0.0
  %4772 = vmatprep.subr.mxu0 0.0
  %4773 = vmatpush2.msra.mxu0 0.0
  %4774 = vmatprep.subr.mxu0 0.0
  %4775 = vmatpush2.msra.mxu0 0.0
  %4776 = vmatprep.subr.mxu0 0.0
  %4777 = vmatpush2.msra.mxu0 0.0
  %4778 = vmatprep.subr.mxu0 0.0
  %4779 = vmatpush2.msra.mxu0 0.0
  %4780 = vmatprep.subr.mxu0 0.0
  %4781 = vmatpush2.msra.mxu0 0.0
  %4782 = vmatprep.subr.mxu0 0.0
  %4783 = vmatpush2.msra.mxu0 0.0
  %4784 = vmatprep.subr.mxu0 0.0
  %4785 = vmatpush2.msra.mxu0 0.0
  %4786 = vmatprep.subr.mxu0 0.0
  %4787 = vmatpush2.msra.mxu0 0.0
  %4788 = vmatprep.subr.mxu0 0.0
  %4789 = vmatpush2.msra.mxu0 0.0
  %4790 = vmatprep.subr.mxu0 0.0
  %4791 = vmatpush2.msra.mxu0 0.0
  %4792 = vmatprep.subr.mxu0 0.0
  %4793 = vmatpush2.msra.mxu0 0.0
  %4794 = vmatprep.subr.mxu0 0.0
  %4795 = vmatpush2.msra.mxu0 0.0
  %4796 = vmatprep.subr.mxu0 0.0
  %4797 = vmatpush2.msra.mxu0 0.0
  %4798 = vmatprep.subr.mxu0 0.0
  %4799 = vmatpush2.msra.mxu0 0.0
  %4800 = vmatprep.subr.mxu0 0.0
  %4801 = vmatpush2.msra.mxu0 0.0
  %4802 = vmatprep.mubr.f32.mxu0 0.0
  %4803 = vmatmul.mubr.f32.gmra.mxu0 %v4214
  %v4804 = vpop.f32.mrf.mxu0
  %v4805 = vadd.f32 %v4731, %v4804
  %v4806 = vpop.f32.mrf.mxu0
  %v4807 = vadd.f32 %v4735, %v4806
  %4808 = vdwg.mxu0
  %v4809 = vadd.f32 %v4706, %v4805
  %v4810 = vxor.u32 %v4809, 2147483648
  %v4811 = vmul.f32 %v4810, 1.442695
  %v4812 = vpow.pop %v4811
  %v4813 = vadd.f32 %v4812, 1.0
  %v4814 = vrcp.pop %v4813
  %v4815 = vmul.f32 1.0, %v4814
  %v4816 = vmul.f32 %v4815, %v4807
  %v4817 = vadd.f32 %v4708, %v4816
  %v4818 = vtanh.pop %v4817
  %v4819 = vsub.f32 1.0, %v4815
  %4821 = vrot.lane.b32.xlu0 %v4818, 64
  %v4822 = vpop.permute.xlu0 %4821
  %v4824 = vmul.f32 %v4819, %v4822
  %v4825 = vmul.f32 %v4815, %v4207
  %v4826 = vadd.f32 %v4824, %v4825
  %v4827 = vld [vmem:[%s1] sm:$0xff]
  %v4828 = vld [vmem:[%s1 + $0x8] sm:$0xff]
  %v4829 = vld [vmem:[%s2] sm:$0x3]
  %4831 = vrot.lane.b32.xlu0 %v4826, 64
  %v4832 = vpop.permute.xlu0 %4831
  %v4833 = vsel %vm150, %v4832, 0
  %v4836 = vsel %vm150, %v4827, 0
  %v4839 = vsel %vm150, %v4828, 0
  %4841 = vmatprep.subr.mxu0 0.0
  %4842 = vmatpush1.xpose.msra.mxu0 0.0
  %4843 = vmatprep.subr.mxu0 0.0
  %4844 = vmatpush1.xpose.msra.mxu0 0.0
  %4845 = vmatprep.subr.mxu0 0.0
  %4846 = vmatpush1.xpose.msra.mxu0 0.0
  %4847 = vmatprep.subr.mxu0 0.0
  %4848 = vmatpush1.xpose.msra.mxu0 0.0
  %4849 = vmatprep.subr.mxu0 0.0
  %4850 = vmatpush1.xpose.msra.mxu0 0.0
  %4851 = vmatprep.subr.mxu0 0.0
  %4852 = vmatpush1.xpose.msra.mxu0 0.0
  %4853 = vmatprep.subr.mxu0 0.0
  %4854 = vmatpush1.xpose.msra.mxu0 0.0
  %4855 = vmatprep.subr.mxu0 0.0
  %4856 = vmatpush1.xpose.msra.mxu0 0.0
  %4857 = vmatprep.subr.mxu0 0.0
  %4858 = vmatpush1.xpose.msra.mxu0 0.0
  %4859 = vmatprep.subr.mxu0 0.0
  %4860 = vmatpush1.xpose.msra.mxu0 0.0
  %4861 = vmatprep.subr.mxu0 0.0
  %4862 = vmatpush1.xpose.msra.mxu0 0.0
  %4863 = vmatprep.subr.mxu0 0.0
  %4864 = vmatpush1.xpose.msra.mxu0 0.0
  %4865 = vmatprep.subr.mxu0 0.0
  %4866 = vmatpush1.xpose.msra.mxu0 0.0
  %4867 = vmatprep.subr.mxu0 0.0
  %4868 = vmatpush1.xpose.msra.mxu0 0.0
  %4869 = vmatprep.subr.mxu0 0.0
  %4870 = vmatpush1.xpose.msra.mxu0 %v4839
  %4871 = vmatprep.subr.mxu0 0.0
  %4872 = vmatpush1.xpose.msra.mxu0 %v4836
  %4873 = vmatprep.subr.mxu0 0.0
  %4874 = vmatpush2.xpose.msra.mxu0 0.0
  %4875 = vmatprep.subr.mxu0 0.0
  %4876 = vmatpush2.xpose.msra.mxu0 0.0
  %4877 = vmatprep.subr.mxu0 0.0
  %4878 = vmatpush2.xpose.msra.mxu0 0.0
  %4879 = vmatprep.subr.mxu0 0.0
  %4880 = vmatpush2.xpose.msra.mxu0 0.0
  %4881 = vmatprep.subr.mxu0 0.0
  %4882 = vmatpush2.xpose.msra.mxu0 0.0
  %4883 = vmatprep.subr.mxu0 0.0
  %4884 = vmatpush2.xpose.msra.mxu0 0.0
  %4885 = vmatprep.subr.mxu0 0.0
  %4886 = vmatpush2.xpose.msra.mxu0 0.0
  %4887 = vmatprep.subr.mxu0 0.0
  %4888 = vmatpush2.xpose.msra.mxu0 0.0
  %4889 = vmatprep.subr.mxu0 0.0
  %4890 = vmatpush2.xpose.msra.mxu0 0.0
  %4891 = vmatprep.subr.mxu0 0.0
  %4892 = vmatpush2.xpose.msra.mxu0 0.0
  %4893 = vmatprep.subr.mxu0 0.0
  %4894 = vmatpush2.xpose.msra.mxu0 0.0
  %4895 = vmatprep.subr.mxu0 0.0
  %4896 = vmatpush2.xpose.msra.mxu0 0.0
  %4897 = vmatprep.subr.mxu0 0.0
  %4898 = vmatpush2.xpose.msra.mxu0 0.0
  %4899 = vmatprep.subr.mxu0 0.0
  %4900 = vmatpush2.xpose.msra.mxu0 0.0
  %4901 = vmatprep.subr.mxu0 0.0
  %4902 = vmatpush2.xpose.msra.mxu0 0.0
  %4903 = vmatprep.subr.mxu0 0.0
  %4904 = vmatpush2.xpose.msra.mxu0 0.0
  %4905 = vmatprep.mubr.f32.mxu0 0.0
  %4906 = vmatmul.mubr.f32.gmra.mxu0 %v4833
  %v4907 = vpop.f32.mrf.mxu0
  %v4908 = vadd.f32 %v4829, %v4907
  %v4909 = vpop.f32.mrf.mxu0
  %4910 = vdwg.mxu0
  %v4911 = vsel %vm585, %v4908, -inf
  %4912 = vmax.xlane.f32.xlu0 %v4911
  %v4913 = vpop.xlane.xlu0 %4912
  %v4914 = vsub.f32 %v4908, %v4913
  %v4915 = vmul.f32 %v4914, 1.442695
  %v4916 = vpow.pop %v4915
  %v4917 = vsel %vm585, %v4916, 0.0
  %4918 = vadd.xlane.f32.xlu0 %v4917
  %v4919 = vpop.xlane.xlu0 %4918
  %v4920 = vrcp.pop %v4919
  %v4921 = vmul.f32 %v4916, %v4920
  %v4923 = vsel %vm65, %v4921, 0
  %4925 = vmatprep.subr.mxu0 0.0
  %4926 = vmatpush1.msra.mxu0 0.0
  %4927 = vmatprep.subr.mxu0 0.0
  %4928 = vmatpush1.msra.mxu0 0.0
  %4929 = vmatprep.subr.mxu0 0.0
  %4930 = vmatpush1.msra.mxu0 0.0
  %4931 = vmatprep.subr.mxu0 0.0
  %4932 = vmatpush1.msra.mxu0 0.0
  %4933 = vmatprep.subr.mxu0 0.0
  %4934 = vmatpush1.msra.mxu0 0.0
  %4935 = vmatprep.subr.mxu0 0.0
  %4936 = vmatpush1.msra.mxu0 0.0
  %4937 = vmatprep.subr.mxu0 0.0
  %4938 = vmatpush1.msra.mxu0 0.0
  %4939 = vmatprep.subr.mxu0 0.0
  %4940 = vmatpush1.msra.mxu0 0.0
  %4941 = vmatprep.subr.mxu0 0.0
  %4942 = vmatpush1.msra.mxu0 0.0
  %4943 = vmatprep.subr.mxu0 0.0
  %4944 = vmatpush1.msra.mxu0 0.0
  %4945 = vmatprep.subr.mxu0 0.0
  %4946 = vmatpush1.msra.mxu0 0.0
  %4947 = vmatprep.subr.mxu0 0.0
  %4948 = vmatpush1.msra.mxu0 0.0
  %4949 = vmatprep.subr.mxu0 0.0
  %4950 = vmatpush1.msra.mxu0 0.0
  %4951 = vmatprep.subr.mxu0 0.0
  %4952 = vmatpush1.msra.mxu0 0.0
  %4953 = vmatprep.subr.mxu0 0.0
  %4954 = vmatpush1.msra.mxu0 %v4828
  %4955 = vmatprep.subr.mxu0 0.0
  %4956 = vmatpush1.msra.mxu0 %v4827
  %4957 = vmatprep.subr.mxu0 0.0
  %4958 = vmatpush2.msra.mxu0 0.0
  %4959 = vmatprep.subr.mxu0 0.0
  %4960 = vmatpush2.msra.mxu0 0.0
  %4961 = vmatprep.subr.mxu0 0.0
  %4962 = vmatpush2.msra.mxu0 0.0
  %4963 = vmatprep.subr.mxu0 0.0
  %4964 = vmatpush2.msra.mxu0 0.0
  %4965 = vmatprep.subr.mxu0 0.0
  %4966 = vmatpush2.msra.mxu0 0.0
  %4967 = vmatprep.subr.mxu0 0.0
  %4968 = vmatpush2.msra.mxu0 0.0
  %4969 = vmatprep.subr.mxu0 0.0
  %4970 = vmatpush2.msra.mxu0 0.0
  %4971 = vmatprep.subr.mxu0 0.0
  %4972 = vmatpush2.msra.mxu0 0.0
  %4973 = vmatprep.subr.mxu0 0.0
  %4974 = vmatpush2.msra.mxu0 0.0
  %4975 = vmatprep.subr.mxu0 0.0
  %4976 = vmatpush2.msra.mxu0 0.0
  %4977 = vmatprep.subr.mxu0 0.0
  %4978 = vmatpush2.msra.mxu0 0.0
  %4979 = vmatprep.subr.mxu0 0.0
  %4980 = vmatpush2.msra.mxu0 0.0
  %4981 = vmatprep.subr.mxu0 0.0
  %4982 = vmatpush2.msra.mxu0 0.0
  %4983 = vmatprep.subr.mxu0 0.0
  %4984 = vmatpush2.msra.mxu0 0.0
  %4985 = vmatprep.subr.mxu0 0.0
  %4986 = vmatpush2.msra.mxu0 0.0
  %4987 = vmatprep.subr.mxu0 0.0
  %4988 = vmatpush2.msra.mxu0 0.0
  %4989 = vmatprep.mubr.f32.mxu0 0.0
  %4990 = vmatmul.mubr.f32.gmra.mxu0 %v4923
  %v4991 = vpop.f32.mrf.mxu0
  %v4992 = vadd.f32 0.0, %v4991
  %v4993 = vpop.f32.mrf.mxu0
  %4994 = vdwg.mxu0
  %v4995 = vsel %vm150, %v4992, %v4826
  %v4996 = vld [vmem:[%s12] sm:$0xff]
  %v4997 = vld [vmem:[%s12 + $0x8] sm:$0xff]
  %v4998 = vld [vmem:[%s12 + $0x10] sm:$0xff]
  %v4999 = vld [vmem:[%s12 + $0x18] sm:$0xff]
  %v5000 = vld [vmem:[%s12 + $0x20] sm:$0xff]
  %v5001 = vld [vmem:[%s12 + $0x28] sm:$0xff]
  %v5002 = vld [vmem:[%s12 + $0x30] sm:$0xff]
  %v5003 = vld [vmem:[%s12 + $0x38] sm:$0xff]
  %v5004 = vld [vmem:[%s12 + $0x40] sm:$0xff]
  %v5005 = vld [vmem:[%s12 + $0x48] sm:$0xff]
  %v5006 = vld [vmem:[%s12 + $0x50] sm:$0xff]
  %v5007 = vld [vmem:[%s12 + $0x58] sm:$0xff]
  %v5008 = vld [vmem:[%s12 + $0x60] sm:$0xff]
  %v5009 = vld [vmem:[%s12 + $0x68] sm:$0xff]
  %v5010 = vld [vmem:[%s12 + $0x70] sm:$0xff]
  %v5011 = vld [vmem:[%s12 + $0x78] sm:$0xff]
  %v5012 = vld [vmem:[%s13] sm:$0x1]
  %v5014 = vlaneseq
  %v5015 = vshrl.u32 %v5014, 7
  %v5016 = vsub.s32 0, %v5015
  %v5017 = vrot.slane %v5012, %v5016
  %5019 = vmatprep.subr.mxu0 0.0
  %5020 = vmatpush1.msra.mxu0 %v5011
  %5021 = vmatprep.subr.mxu0 0.0
  %5022 = vmatpush1.msra.mxu0 %v5010
  %5023 = vmatprep.subr.mxu0 0.0
  %5024 = vmatpush1.msra.mxu0 %v5009
  %5025 = vmatprep.subr.mxu0 0.0
  %5026 = vmatpush1.msra.mxu0 %v5008
  %5027 = vmatprep.subr.mxu0 0.0
  %5028 = vmatpush1.msra.mxu0 %v5007
  %5029 = vmatprep.subr.mxu0 0.0
  %5030 = vmatpush1.msra.mxu0 %v5006
  %5031 = vmatprep.subr.mxu0 0.0
  %5032 = vmatpush1.msra.mxu0 %v5005
  %5033 = vmatprep.subr.mxu0 0.0
  %5034 = vmatpush1.msra.mxu0 %v5004
  %5035 = vmatprep.subr.mxu0 0.0
  %5036 = vmatpush1.msra.mxu0 %v5003
  %5037 = vmatprep.subr.mxu0 0.0
  %5038 = vmatpush1.msra.mxu0 %v5002
  %5039 = vmatprep.subr.mxu0 0.0
  %5040 = vmatpush1.msra.mxu0 %v5001
  %5041 = vmatprep.subr.mxu0 0.0
  %5042 = vmatpush1.msra.mxu0 %v5000
  %5043 = vmatprep.subr.mxu0 0.0
  %5044 = vmatpush1.msra.mxu0 %v4999
  %5045 = vmatprep.subr.mxu0 0.0
  %5046 = vmatpush1.msra.mxu0 %v4998
  %5047 = vmatprep.subr.mxu0 0.0
  %5048 = vmatpush1.msra.mxu0 %v4997
  %5049 = vmatprep.subr.mxu0 0.0
  %5050 = vmatpush1.msra.mxu0 %v4996
  %5051 = vmatprep.subr.mxu0 0.0
  %5052 = vmatpush2.msra.mxu0 0.0
  %5053 = vmatprep.subr.mxu0 0.0
  %5054 = vmatpush2.msra.mxu0 0.0
  %5055 = vmatprep.subr.mxu0 0.0
  %5056 = vmatpush2.msra.mxu0 0.0
  %5057 = vmatprep.subr.mxu0 0.0
  %5058 = vmatpush2.msra.mxu0 0.0
  %5059 = vmatprep.subr.mxu0 0.0
  %5060 = vmatpush2.msra.mxu0 0.0
  %5061 = vmatprep.subr.mxu0 0.0
  %5062 = vmatpush2.msra.mxu0 0.0
  %5063 = vmatprep.subr.mxu0 0.0
  %5064 = vmatpush2.msra.mxu0 0.0
  %5065 = vmatprep.subr.mxu0 0.0
  %5066 = vmatpush2.msra.mxu0 0.0
  %5067 = vmatprep.subr.mxu0 0.0
  %5068 = vmatpush2.msra.mxu0 0.0
  %5069 = vmatprep.subr.mxu0 0.0
  %5070 = vmatpush2.msra.mxu0 0.0
  %5071 = vmatprep.subr.mxu0 0.0
  %5072 = vmatpush2.msra.mxu0 0.0
  %5073 = vmatprep.subr.mxu0 0.0
  %5074 = vmatpush2.msra.mxu0 0.0
  %5075 = vmatprep.subr.mxu0 0.0
  %5076 = vmatpush2.msra.mxu0 0.0
  %5077 = vmatprep.subr.mxu0 0.0
  %5078 = vmatpush2.msra.mxu0 0.0
  %5079 = vmatprep.subr.mxu0 0.0
  %5080 = vmatpush2.msra.mxu0 0.0
  %5081 = vmatprep.subr.mxu0 0.0
  %5082 = vmatpush2.msra.mxu0 0.0
  %5083 = vmatprep.mubr.f32.mxu0 0.0
  %5084 = vmatmul.mubr.f32.gmra.mxu0 %v4995
  %v5085 = vpop.f32.mrf.mxu0
  %v5086 = vadd.f32 %v5017, %v5085
  %v5087 = vpop.f32.mrf.mxu0
  %5088 = vdwg.mxu0
  %v5089 = vtanh.pop %v5086
  %v5091 = vrot.slane %v5089, 1
  %5092 = vrot.lane.b32.xlu0 %v5091, 64
  %v5093 = vpop.permute.xlu0 %5092
  %v5095 = vsel %vm150, %v5089, %v5093
  %5096 = vst [vmem:[%s14 + $0x7] sm:$0x1] %v5095
  // Predicated region
  $region58: #{modal_attention_bidir_gru_decoder.1} parent=0 // pred_check
    _
  $region59: #{modal_attention_bidir_gru_decoder.1} parent=0 // pred_check_branch
    %5098 = sbr.rel (0) target = $region61
  $region60: #{modal_attention_bidir_gru_decoder.1} parent=0 // pred_region
    _
  $region61: #{modal_attention_bidir_gru_decoder.1} parent=0 // pred_fallthru
    _
  // Predicated region
  $region62: #{modal_attention_bidir_gru_decoder.1} parent=0 // pred_check
    _
  $region63: #{modal_attention_bidir_gru_decoder.1} parent=0 // pred_check_branch
    %5100 = sbr.rel (0) target = $region65
  $region64: #{modal_attention_bidir_gru_decoder.1} parent=0 // pred_region
    _
  $region65: #{modal_attention_bidir_gru_decoder.1} parent=0 // pred_fallthru
    _

</llo_original>
